<compile_context>
chip_gen: v6e
topology: v6e:2x2x1
jax: 0.10.0
libtpu: 0.0.40
codegen_flags: <defaults>
</compile_context>

<pallas_src>
import jax
import jax.numpy as jnp
from jax.experimental import pallas as pl
from jax.experimental.pallas import tpu as pltpu

# --- hyperparameters (module-level globals in the original script) ---
vocab_size = 128
n_embd = 32
n_head = 4
n_layer = 2
block_size = 8
dropout = 0.0          # dropout is identity in the kernel (inference semantics)
head_size = n_embd // n_head
LN_EPS = 1e-5          # PyTorch nn.LayerNorm default eps
NEG_INF = -1e30        # large finite negative for the causal mask (no NaN risk)


def _layernorm(x, gamma, beta):
    # x: (..., C), gamma/beta: (1, C); f32 math
    mu = jnp.mean(x, axis=-1, keepdims=True)
    var = jnp.mean((x - mu) ** 2, axis=-1, keepdims=True)
    return (x - mu) * jax.lax.rsqrt(var + LN_EPS) * gamma + beta


def gpt_fused_kernel(idx_ref, tok_ref, pos_ref,
                     wqkv_ref, wo_ref, bo_ref,
                     w1_ref, b1_ref, w2_ref, b2_ref,
                     g1_ref, be1_ref, g2_ref, be2_ref,
                     gf_ref, bf_ref, lmw_ref, lmb_ref,
                     o_ref):
    Bt, T = idx_ref.shape[1], idx_ref.shape[2]
    V, C = tok_ref.shape
    M = Bt * T
    H, hs = n_head, head_size
    f32 = jnp.float32
    bf16 = jnp.bfloat16

    # ---- token + position embedding: gather as one big one-hot matmul over the whole slab ----
    ids = idx_ref[0]                                                     # (Bt, T) int32
    iota_v = jax.lax.broadcasted_iota(jnp.int32, (Bt, T, V), 2)
    one_hot = jnp.where(iota_v == ids[:, :, None], 1.0, 0.0)             # (Bt, T, V) f32
    one_hot = one_hot.reshape(M, V).astype(bf16)
    x = jnp.dot(one_hot, tok_ref[...], preferred_element_type=f32)       # (M, C) f32
    pos_slab = jnp.broadcast_to(pos_ref[...][None], (Bt, T, C)).reshape(M, C)
    x = x + pos_slab

    # ---- causal mask (hoisted out of the layer loop) ----
    row = jax.lax.broadcasted_iota(jnp.int32, (T, T), 0)
    col = jax.lax.broadcasted_iota(jnp.int32, (T, T), 1)
    causal = (row >= col)[None]                                          # (1, T, T) bool

    for l in range(n_layer):                                             # static unroll over layers
        # ---- multi-head causal self-attention on ln1(x) ----
        xn = _layernorm(x, g1_ref[l], be1_ref[l])                        # (M, C) f32
        qkv = jnp.dot(xn.astype(bf16), wqkv_ref[l],
                      preferred_element_type=f32)                        # (M, 3C); Q pre-scaled

        heads = []
        for h in range(H):                                               # tiny per-head step only
            qh = qkv[:, h * hs:(h + 1) * hs].reshape(Bt, T, hs).astype(bf16)
            kh = qkv[:, C + h * hs:C + (h + 1) * hs].reshape(Bt, T, hs).astype(bf16)
            vh = qkv[:, 2 * C + h * hs:2 * C + (h + 1) * hs].reshape(Bt, T, hs).astype(bf16)
            s = jnp.einsum('bqd,bkd->bqk', qh, kh,
                           preferred_element_type=f32)                   # (Bt, T, T) f32
            s = jnp.where(causal, s, NEG_INF)
            s = s - jnp.max(s, axis=-1, keepdims=True)
            e = jnp.exp(s)
            p = e * pl.reciprocal(jnp.sum(e, axis=-1, keepdims=True), approx=True)
            oh = jnp.einsum('bqk,bkd->bqd', p.astype(bf16), vh,
                            preferred_element_type=f32)                  # (Bt, T, hs)
            heads.append(oh.reshape(M, hs))

        ctx = jnp.concatenate(heads, axis=-1).astype(bf16)               # (M, C) lane concat
        sa = jnp.dot(ctx, wo_ref[l], preferred_element_type=f32) + bo_ref[l]
        x = x + sa                                                       # residual

        # ---- feed-forward on ln2(x) ----
        xn2 = _layernorm(x, g2_ref[l], be2_ref[l])
        h1 = jnp.dot(xn2.astype(bf16), w1_ref[l], preferred_element_type=f32) + b1_ref[l]
        h1 = jnp.maximum(h1, 0.0)                                        # ReLU
        x = x + jnp.dot(h1.astype(bf16), w2_ref[l], preferred_element_type=f32) + b2_ref[l]

    # ---- final LayerNorm + lm_head (lane-dense V=128 output store) ----
    xf = _layernorm(x, gf_ref[...], bf_ref[...])
    logits = jnp.dot(xf.astype(bf16), lmw_ref[...], preferred_element_type=f32) + lmb_ref[...]
    o_ref[...] = logits.reshape(Bt, T, V).astype(o_ref.dtype)


def _rep_spec(shape):
    # whole-array block, same (all-zeros) block index for every grid step
    zeros = (0,) * len(shape)
    return pl.BlockSpec(shape, lambda b: zeros)


def _choose_bt(B, T, target_rows=256):
    """Batch-tile size: fill the MXU M dimension (~256 rows) while keeping >=2 parallel
    grid steps when batch allows (v7x two-TensorCore sharding)."""
    cap = max(1, target_rows // T)
    divs = [d for d in range(1, B + 1) if B % d == 0 and d <= cap]
    two_step = [d for d in divs if B // d >= 2]
    return max(two_step) if two_step else max(divs)


def gpt_forward(params, idx, targets=None):
    """Semantics of GPTLanguageModel.forward: returns (logits, loss)."""
    B, T = idx.shape
    C, V, L = n_embd, vocab_size, n_layer
    bt = _choose_bt(B, T)
    nb = B // bt
    idx_r = idx.astype(jnp.int32).reshape(nb, bt, T)                     # (nb, Bt, T)
    pos = params['pos_emb'][:T]                                          # (T, C)

    logits = pl.pallas_call(
        gpt_fused_kernel,
        out_shape=jax.ShapeDtypeStruct((B, T, V), jnp.float32),
        grid=(nb,),
        in_specs=[
            pl.BlockSpec((1, bt, T), lambda b: (b, 0, 0)),   # token ids tile
            _rep_spec((V, C)),                               # token embedding table (bf16)
            _rep_spec((T, C)),                               # position embedding[:T]
            _rep_spec((L, C, 3 * C)),                        # fused Wqkv (Q pre-scaled, bf16)
            _rep_spec((L, C, C)),                            # attention output proj (bf16)
            _rep_spec((L, 1, C)),                            # proj bias
            _rep_spec((L, C, 4 * C)),                        # ffn w1 (bf16)
            _rep_spec((L, 1, 4 * C)),                        # ffn b1
            _rep_spec((L, 4 * C, C)),                        # ffn w2 (bf16)
            _rep_spec((L, 1, C)),                            # ffn b2
            _rep_spec((L, 1, C)),                            # ln1 gamma
            _rep_spec((L, 1, C)),                            # ln1 beta
            _rep_spec((L, 1, C)),                            # ln2 gamma
            _rep_spec((L, 1, C)),                            # ln2 beta
            _rep_spec((1, C)),                               # ln_f gamma
            _rep_spec((1, C)),                               # ln_f beta
            _rep_spec((C, V)),                               # lm_head weight (bf16)
            _rep_spec((1, V)),                               # lm_head bias
        ],
        out_specs=pl.BlockSpec((bt, T, V), lambda b: (b, 0, 0)),
        compiler_params=pltpu.CompilerParams(dimension_semantics=("parallel",)),
    )(idx_r, params['tok_emb'], pos,
      params['wqkv'], params['wo'], params['bo'],
      params['w1'], params['b1'], params['w2'], params['b2'],
      params['ln1_g'], params['ln1_b'], params['ln2_g'], params['ln2_b'],
      params['ln_f_g'], params['ln_f_b'], params['lm_w'], params['lm_b'])

    if targets is None:
        loss = None
    else:
        flat = logits.reshape(B * T, V)
        tgt = targets.reshape(B * T)
        logz = jax.nn.logsumexp(flat, axis=-1)
        loss = jnp.mean(logz - jnp.take_along_axis(flat, tgt[:, None], axis=-1)[:, 0])
    return logits, loss


def init_params(key):
    keys = iter(jax.random.split(key, 24))

    def nrm(shape):
        # mirrors torch.nn.init.normal_(mean=0.0, std=0.02)
        return (0.02 * jax.random.normal(next(keys), shape)).astype(jnp.float32)

    L, C, D, V = n_layer, n_embd, head_size, vocab_size
    scale = D ** -0.5
    # fused QKV weight; 1/sqrt(head_size) attention scale folded into the Q columns
    wq = nrm((L, C, C)) * scale
    wk = nrm((L, C, C))
    wv = nrm((L, C, C))
    return {
        'tok_emb': nrm((V, C)).astype(jnp.bfloat16),
        'pos_emb': nrm((block_size, C)),
        'wqkv': jnp.concatenate([wq, wk, wv], axis=-1).astype(jnp.bfloat16),   # (L, C, 3C)
        'wo': nrm((L, C, C)).astype(jnp.bfloat16),
        'bo': jnp.zeros((L, 1, C), jnp.float32),
        'w1': nrm((L, C, 4 * C)).astype(jnp.bfloat16),
        'b1': jnp.zeros((L, 1, 4 * C), jnp.float32),
        'w2': nrm((L, 4 * C, C)).astype(jnp.bfloat16),
        'b2': jnp.zeros((L, 1, C), jnp.float32),
        'ln1_g': jnp.ones((L, 1, C), jnp.float32),
        'ln1_b': jnp.zeros((L, 1, C), jnp.float32),
        'ln2_g': jnp.ones((L, 1, C), jnp.float32),
        'ln2_b': jnp.zeros((L, 1, C), jnp.float32),
        'ln_f_g': jnp.ones((1, C), jnp.float32),
        'ln_f_b': jnp.zeros((1, C), jnp.float32),
        'lm_w': nrm((C, V)).astype(jnp.bfloat16),
        'lm_b': jnp.zeros((1, V), jnp.float32),
    }


def reference_forward(params, idx):
    """Pure-JAX reference of the same forward (bf16 matmul operands, f32 elsewhere)."""
    f32, bf16 = jnp.float32, jnp.bfloat16
    B, T = idx.shape
    C, H, D = n_embd, n_head, head_size
    x = params['tok_emb'].astype(f32)[idx] + params['pos_emb'][:T]      # (B, T, C)
    tril = jnp.tril(jnp.ones((T, T), dtype=bool))
    for l in range(n_layer):
        xn = _layernorm(x, params['ln1_g'][l], params['ln1_b'][l])
        qkv = jnp.einsum('btc,cd->btd', xn.astype(bf16), params['wqkv'][l],
                         preferred_element_type=f32)                    # (B, T, 3C)
        heads = []
        for h in range(H):
            q = qkv[..., h * D:(h + 1) * D]
            k = qkv[..., C + h * D:C + (h + 1) * D]
            v = qkv[..., 2 * C + h * D:2 * C + (h + 1) * D]
            s = jnp.einsum('btd,bsd->bts', q.astype(bf16), k.astype(bf16),
                           preferred_element_type=f32)
            s = jnp.where(tril, s, NEG_INF)
            p = jax.nn.softmax(s, axis=-1)
            heads.append(jnp.einsum('bts,bsd->btd', p.astype(bf16), v.astype(bf16),
                                    preferred_element_type=f32))
        ctx = jnp.concatenate(heads, axis=-1)
        x = x + jnp.einsum('btc,cd->btd', ctx.astype(bf16), params['wo'][l],
                           preferred_element_type=f32) + params['bo'][l]
        xn2 = _layernorm(x, params['ln2_g'][l], params['ln2_b'][l])
        h1 = jnp.maximum(jnp.einsum('btc,cd->btd', xn2.astype(bf16), params['w1'][l],
                                    preferred_element_type=f32) + params['b1'][l], 0.0)
        x = x + jnp.einsum('btc,cd->btd', h1.astype(bf16), params['w2'][l],
                           preferred_element_type=f32) + params['b2'][l]
    xf = _layernorm(x, params['ln_f_g'], params['ln_f_b'])
    return jnp.einsum('btc,cv->btv', xf.astype(bf16), params['lm_w'],
                      preferred_element_type=f32) + params['lm_b']


if __name__ == "__main__":
    key = jax.random.PRNGKey(0)
    pkey, ikey, tkey = jax.random.split(key, 3)

    params = init_params(pkey)

    B, T = 8, block_size      # 8 batch rows -> 2 parallel grid steps of Bt=4 (32-row matmul slabs)
    idx = jax.random.randint(ikey, (B, T), 0, vocab_size, dtype=jnp.int32)
    targets = jax.random.randint(tkey, (B, T), 0, vocab_size, dtype=jnp.int32)

    logits, loss = gpt_forward(params, idx, targets=None)
    jax.block_until_ready(logits)
    assert logits.shape == (B, T, vocab_size)
    assert loss is None

    # correctness check against a pure-JAX reference
    ref = reference_forward(params, idx)
    assert jnp.allclose(logits, ref, atol=1e-2, rtol=1e-2)

    # also exercise the loss path (cross-entropy computed in plain JAX glue)
    logits2, loss2 = gpt_forward(params, idx, targets=targets)
    jax.block_until_ready(loss2)
    assert logits2.shape == (B, T, vocab_size)
    assert jnp.isfinite(loss2)

    # exercise the tiny-batch path (Bt=1, two parallel steps) as well
    idx_small = idx[:2]
    logits3, _ = gpt_forward(params, idx_small)
    jax.block_until_ready(logits3)
    assert jnp.allclose(logits3, reference_forward(params, idx_small), atol=1e-2, rtol=1e-2)

    print("KERNEL_OK")
</pallas_src>

<mosaic_0001>
module attributes {stable_mosaic.version = 11 : i64} {
  func.func @gpt_fused_kernel(%arg0: i32, %arg1: memref<1x4x8xi32, #tpu.memory_space<vmem>>, %arg2: memref<128x32xbf16, #tpu.memory_space<vmem>>, %arg3: memref<8x32xf32, #tpu.memory_space<vmem>>, %arg4: memref<2x32x96xbf16, #tpu.memory_space<vmem>>, %arg5: memref<2x32x32xbf16, #tpu.memory_space<vmem>>, %arg6: memref<2x1x32xf32, #tpu.memory_space<vmem>>, %arg7: memref<2x32x128xbf16, #tpu.memory_space<vmem>>, %arg8: memref<2x1x128xf32, #tpu.memory_space<vmem>>, %arg9: memref<2x128x32xbf16, #tpu.memory_space<vmem>>, %arg10: memref<2x1x32xf32, #tpu.memory_space<vmem>>, %arg11: memref<2x1x32xf32, #tpu.memory_space<vmem>>, %arg12: memref<2x1x32xf32, #tpu.memory_space<vmem>>, %arg13: memref<2x1x32xf32, #tpu.memory_space<vmem>>, %arg14: memref<2x1x32xf32, #tpu.memory_space<vmem>>, %arg15: memref<1x32xf32, #tpu.memory_space<vmem>>, %arg16: memref<1x32xf32, #tpu.memory_space<vmem>>, %arg17: memref<32x128xbf16, #tpu.memory_space<vmem>>, %arg18: memref<1x128xf32, #tpu.memory_space<vmem>>, %arg19: memref<4x8x128xf32, #tpu.memory_space<vmem>>) attributes {dimension_semantics = [#tpu.dimension_semantics<parallel>], iteration_bounds = array<i64: 2>, scalar_prefetch = 0 : i64, scratch_operands = 0 : i64, tpu.core_type = #tpu.core_type<tc>, window_params = [{transform_indices = @transform_0, window_bounds = array<i64: 1, 4, 8>}, {pipeline_mode = #tpu.pipeline_mode<synchronous>, transform_indices = @transform_1, window_bounds = array<i64: 128, 32>}, {pipeline_mode = #tpu.pipeline_mode<synchronous>, transform_indices = @transform_2, window_bounds = array<i64: 8, 32>}, {pipeline_mode = #tpu.pipeline_mode<synchronous>, transform_indices = @transform_3, window_bounds = array<i64: 2, 32, 96>}, {pipeline_mode = #tpu.pipeline_mode<synchronous>, transform_indices = @transform_4, window_bounds = array<i64: 2, 32, 32>}, {pipeline_mode = #tpu.pipeline_mode<synchronous>, transform_indices = @transform_5, window_bounds = array<i64: 2, 1, 32>}, {pipeline_mode = #tpu.pipeline_mode<synchronous>, transform_indices = @transform_6, window_bounds = array<i64: 2, 32, 128>}, {pipeline_mode = #tpu.pipeline_mode<synchronous>, transform_indices = @transform_7, window_bounds = array<i64: 2, 1, 128>}, {pipeline_mode = #tpu.pipeline_mode<synchronous>, transform_indices = @transform_8, window_bounds = array<i64: 2, 128, 32>}, {pipeline_mode = #tpu.pipeline_mode<synchronous>, transform_indices = @transform_9, window_bounds = array<i64: 2, 1, 32>}, {pipeline_mode = #tpu.pipeline_mode<synchronous>, transform_indices = @transform_10, window_bounds = array<i64: 2, 1, 32>}, {pipeline_mode = #tpu.pipeline_mode<synchronous>, transform_indices = @transform_11, window_bounds = array<i64: 2, 1, 32>}, {pipeline_mode = #tpu.pipeline_mode<synchronous>, transform_indices = @transform_12, window_bounds = array<i64: 2, 1, 32>}, {pipeline_mode = #tpu.pipeline_mode<synchronous>, transform_indices = @transform_13, window_bounds = array<i64: 2, 1, 32>}, {pipeline_mode = #tpu.pipeline_mode<synchronous>, transform_indices = @transform_14, window_bounds = array<i64: 1, 32>}, {pipeline_mode = #tpu.pipeline_mode<synchronous>, transform_indices = @transform_15, window_bounds = array<i64: 1, 32>}, {pipeline_mode = #tpu.pipeline_mode<synchronous>, transform_indices = @transform_16, window_bounds = array<i64: 32, 128>}, {pipeline_mode = #tpu.pipeline_mode<synchronous>, transform_indices = @transform_17, window_bounds = array<i64: 1, 128>}, {transform_indices = @transform_18, window_bounds = array<i64: 4, 8, 128>}]} {
    %c0 = arith.constant 0 : index
    %c0_0 = arith.constant 0 : index
    %c0_1 = arith.constant 0 : index
    %0 = vector.load %arg1[%c0, %c0_0, %c0_1] : memref<1x4x8xi32, #tpu.memory_space<vmem>>, vector<1x4x8xi32>
    %1 = vector.shape_cast %0 : vector<1x4x8xi32> to vector<4x8xi32>
    %2 = tpu.iota {dimensions = array<i32: 2>} : vector<4x8x128xi32>
    %3 = vector.shape_cast %1 : vector<4x8xi32> to vector<4x8x1xi32>
    %4 = vector.broadcast %3 : vector<4x8x1xi32> to vector<4x8x128xi32>
    %5 = arith.cmpi eq, %2, %4 : vector<4x8x128xi32>
    %cst = arith.constant 1.000000e+00 : f32
    %cst_2 = arith.constant 0.000000e+00 : f32
    %6 = vector.broadcast %cst : f32 to vector<4x8x128xf32>
    %7 = vector.broadcast %cst_2 : f32 to vector<4x8x128xf32>
    %8 = arith.select %5, %6, %7 : vector<4x8x128xi1>, vector<4x8x128xf32>
    %9 = vector.shape_cast %8 : vector<4x8x128xf32> to vector<32x128xf32>
    %10 = arith.truncf %9 : vector<32x128xf32> to vector<32x128xbf16>
    %c0_3 = arith.constant 0 : index
    %c0_4 = arith.constant 0 : index
    %11 = vector.load %arg2[%c0_3, %c0_4] : memref<128x32xbf16, #tpu.memory_space<vmem>>, vector<128x32xbf16>
    %cst_5 = arith.constant dense<0.000000e+00> : vector<32x32xf32>
    %12 = tpu.matmul %10, %11, %cst_5 {dimension_numbers = #tpu.dot_dimension_numbers<[1], [0], [0], [1], [0, 0, 1, 1], [], []>} : vector<32x128xbf16>, vector<128x32xbf16>, vector<32x32xf32> -> vector<32x32xf32>
    %c0_6 = arith.constant 0 : index
    %c0_7 = arith.constant 0 : index
    %13 = vector.load %arg3[%c0_6, %c0_7] : memref<8x32xf32, #tpu.memory_space<vmem>>, vector<8x32xf32>
    %14 = vector.shape_cast %13 : vector<8x32xf32> to vector<1x8x32xf32>
    %15 = vector.shape_cast %14 : vector<1x8x32xf32> to vector<1x8x32xf32>
    %16 = vector.broadcast %15 : vector<1x8x32xf32> to vector<4x8x32xf32>
    %17 = vector.shape_cast %16 : vector<4x8x32xf32> to vector<32x32xf32>
    %18 = arith.addf %12, %17 : vector<32x32xf32>
    %19 = tpu.iota {dimensions = array<i32: 0>} : vector<8x8xi32>
    %20 = tpu.iota {dimensions = array<i32: 1>} : vector<8x8xi32>
    %21 = arith.cmpi sge, %19, %20 : vector<8x8xi32>
    %22 = vector.shape_cast %21 : vector<8x8xi1> to vector<1x8x8xi1>
    %c0_8 = arith.constant 0 : index
    %c0_9 = arith.constant 0 : index
    %c0_10 = arith.constant 0 : index
    %23 = vector.load %arg11[%c0_8, %c0_9, %c0_10] : memref<2x1x32xf32, #tpu.memory_space<vmem>>, vector<1x1x32xf32>
    %24 = vector.shape_cast %23 : vector<1x1x32xf32> to vector<1x32xf32>
    %c0_11 = arith.constant 0 : index
    %c0_12 = arith.constant 0 : index
    %c0_13 = arith.constant 0 : index
    %25 = vector.load %arg12[%c0_11, %c0_12, %c0_13] : memref<2x1x32xf32, #tpu.memory_space<vmem>>, vector<1x1x32xf32>
    %26 = vector.shape_cast %25 : vector<1x1x32xf32> to vector<1x32xf32>
    %cst_14 = arith.constant dense<0.000000e+00> : vector<32xf32>
    %27 = vector.multi_reduction <add>, %18, %cst_14 [1] : vector<32x32xf32> to vector<32xf32>
    %28 = vector.shape_cast %27 : vector<32xf32> to vector<32x1xf32>
    %cst_15 = arith.constant 3.200000e+01 : f32
    %29 = vector.broadcast %cst_15 : f32 to vector<32x1xf32>
    %30 = arith.divf %28, %29 : vector<32x1xf32>
    %31 = vector.broadcast %30 : vector<32x1xf32> to vector<32x32xf32>
    %32 = arith.subf %18, %31 : vector<32x32xf32>
    %33 = arith.mulf %32, %32 : vector<32x32xf32>
    %cst_16 = arith.constant dense<0.000000e+00> : vector<32xf32>
    %34 = vector.multi_reduction <add>, %33, %cst_16 [1] : vector<32x32xf32> to vector<32xf32>
    %35 = vector.shape_cast %34 : vector<32xf32> to vector<32x1xf32>
    %cst_17 = arith.constant 3.200000e+01 : f32
    %36 = vector.broadcast %cst_17 : f32 to vector<32x1xf32>
    %37 = arith.divf %35, %36 : vector<32x1xf32>
    %38 = vector.broadcast %30 : vector<32x1xf32> to vector<32x32xf32>
    %39 = arith.subf %18, %38 : vector<32x32xf32>
    %cst_18 = arith.constant 9.99999974E-6 : f32
    %40 = vector.broadcast %cst_18 : f32 to vector<32x1xf32>
    %41 = arith.addf %37, %40 : vector<32x1xf32>
    %42 = math.rsqrt %41 : vector<32x1xf32>
    %43 = vector.broadcast %42 : vector<32x1xf32> to vector<32x32xf32>
    %44 = arith.mulf %39, %43 : vector<32x32xf32>
    %45 = vector.broadcast %24 : vector<1x32xf32> to vector<32x32xf32>
    %46 = arith.mulf %44, %45 : vector<32x32xf32>
    %47 = vector.broadcast %26 : vector<1x32xf32> to vector<32x32xf32>
    %48 = arith.addf %46, %47 : vector<32x32xf32>
    %49 = arith.truncf %48 : vector<32x32xf32> to vector<32x32xbf16>
    %c0_19 = arith.constant 0 : index
    %c0_20 = arith.constant 0 : index
    %c0_21 = arith.constant 0 : index
    %50 = vector.load %arg4[%c0_19, %c0_20, %c0_21] : memref<2x32x96xbf16, #tpu.memory_space<vmem>>, vector<1x32x96xbf16>
    %51 = vector.shape_cast %50 : vector<1x32x96xbf16> to vector<32x96xbf16>
    %cst_22 = arith.constant dense<0.000000e+00> : vector<32x96xf32>
    %52 = tpu.matmul %49, %51, %cst_22 {dimension_numbers = #tpu.dot_dimension_numbers<[1], [0], [0], [1], [0, 0, 1, 1], [], []>} : vector<32x32xbf16>, vector<32x96xbf16>, vector<32x96xf32> -> vector<32x96xf32>
    %53 = vector.extract_strided_slice %52 {offsets = [0, 0], sizes = [32, 8], strides = [1, 1]} : vector<32x96xf32> to vector<32x8xf32>
    %54 = vector.shape_cast %53 : vector<32x8xf32> to vector<4x8x8xf32>
    %55 = arith.truncf %54 : vector<4x8x8xf32> to vector<4x8x8xbf16>
    %56 = vector.extract_strided_slice %52 {offsets = [0, 32], sizes = [32, 8], strides = [1, 1]} : vector<32x96xf32> to vector<32x8xf32>
    %57 = vector.shape_cast %56 : vector<32x8xf32> to vector<4x8x8xf32>
    %58 = arith.truncf %57 : vector<4x8x8xf32> to vector<4x8x8xbf16>
    %59 = vector.extract_strided_slice %52 {offsets = [0, 64], sizes = [32, 8], strides = [1, 1]} : vector<32x96xf32> to vector<32x8xf32>
    %60 = vector.shape_cast %59 : vector<32x8xf32> to vector<4x8x8xf32>
    %61 = arith.truncf %60 : vector<4x8x8xf32> to vector<4x8x8xbf16>
    "tpu.trace_start"() <{level = 10 : i32, message = "bqd,bkd->bqk"}> : () -> ()
    %cst_23 = arith.constant dense<0.000000e+00> : vector<4x8x8xf32>
    %62 = tpu.matmul %55, %58, %cst_23 {dimension_numbers = #tpu.dot_dimension_numbers<[2], [2], [1], [1], [0, 0, 0, 1, 1, 1], [0], [0]>} : vector<4x8x8xbf16>, vector<4x8x8xbf16>, vector<4x8x8xf32> -> vector<4x8x8xf32>
    %cst_24 = arith.constant -1.000000e+30 : f32
    "tpu.trace_stop"() : () -> ()
    %63 = vector.shape_cast %22 : vector<1x8x8xi1> to vector<1x8x8xi1>
    %64 = vector.broadcast %63 : vector<1x8x8xi1> to vector<4x8x8xi1>
    %65 = vector.broadcast %cst_24 : f32 to vector<4x8x8xf32>
    %66 = arith.select %64, %62, %65 : vector<4x8x8xi1>, vector<4x8x8xf32>
    %cst_25 = arith.constant dense<0xFF800000> : vector<4x8xf32>
    %67 = vector.multi_reduction <maximumf>, %66, %cst_25 [2] : vector<4x8x8xf32> to vector<4x8xf32>
    %68 = vector.shape_cast %67 : vector<4x8xf32> to vector<4x8x1xf32>
    %69 = vector.broadcast %68 : vector<4x8x1xf32> to vector<4x8x8xf32>
    %70 = arith.subf %66, %69 : vector<4x8x8xf32>
    %71 = math.exp %70 : vector<4x8x8xf32>
    %cst_26 = arith.constant dense<0.000000e+00> : vector<4x8xf32>
    %72 = vector.multi_reduction <add>, %71, %cst_26 [2] : vector<4x8x8xf32> to vector<4x8xf32>
    %73 = vector.shape_cast %72 : vector<4x8xf32> to vector<4x8x1xf32>
    %74 = tpu.reciprocal %73 {approx = true} : vector<4x8x1xf32> -> vector<4x8x1xf32>
    %75 = vector.broadcast %74 : vector<4x8x1xf32> to vector<4x8x8xf32>
    %76 = arith.mulf %71, %75 : vector<4x8x8xf32>
    %77 = arith.truncf %76 : vector<4x8x8xf32> to vector<4x8x8xbf16>
    "tpu.trace_start"() <{level = 10 : i32, message = "bqk,bkd->bqd"}> : () -> ()
    %cst_27 = arith.constant dense<0.000000e+00> : vector<4x8x8xf32>
    %78 = tpu.matmul %77, %61, %cst_27 {dimension_numbers = #tpu.dot_dimension_numbers<[2], [1], [1], [2], [0, 0, 0, 1, 1, 2], [0], [0]>} : vector<4x8x8xbf16>, vector<4x8x8xbf16>, vector<4x8x8xf32> -> vector<4x8x8xf32>
    "tpu.trace_stop"() : () -> ()
    %79 = vector.shape_cast %78 : vector<4x8x8xf32> to vector<32x8xf32>
    %80 = vector.extract_strided_slice %52 {offsets = [0, 8], sizes = [32, 8], strides = [1, 1]} : vector<32x96xf32> to vector<32x8xf32>
    %81 = vector.shape_cast %80 : vector<32x8xf32> to vector<4x8x8xf32>
    %82 = arith.truncf %81 : vector<4x8x8xf32> to vector<4x8x8xbf16>
    %83 = vector.extract_strided_slice %52 {offsets = [0, 40], sizes = [32, 8], strides = [1, 1]} : vector<32x96xf32> to vector<32x8xf32>
    %84 = vector.shape_cast %83 : vector<32x8xf32> to vector<4x8x8xf32>
    %85 = arith.truncf %84 : vector<4x8x8xf32> to vector<4x8x8xbf16>
    %86 = vector.extract_strided_slice %52 {offsets = [0, 72], sizes = [32, 8], strides = [1, 1]} : vector<32x96xf32> to vector<32x8xf32>
    %87 = vector.shape_cast %86 : vector<32x8xf32> to vector<4x8x8xf32>
    %88 = arith.truncf %87 : vector<4x8x8xf32> to vector<4x8x8xbf16>
    "tpu.trace_start"() <{level = 10 : i32, message = "bqd,bkd->bqk"}> : () -> ()
    %cst_28 = arith.constant dense<0.000000e+00> : vector<4x8x8xf32>
    %89 = tpu.matmul %82, %85, %cst_28 {dimension_numbers = #tpu.dot_dimension_numbers<[2], [2], [1], [1], [0, 0, 0, 1, 1, 1], [0], [0]>} : vector<4x8x8xbf16>, vector<4x8x8xbf16>, vector<4x8x8xf32> -> vector<4x8x8xf32>
    %cst_29 = arith.constant -1.000000e+30 : f32
    "tpu.trace_stop"() : () -> ()
    %90 = vector.shape_cast %22 : vector<1x8x8xi1> to vector<1x8x8xi1>
    %91 = vector.broadcast %90 : vector<1x8x8xi1> to vector<4x8x8xi1>
    %92 = vector.broadcast %cst_29 : f32 to vector<4x8x8xf32>
    %93 = arith.select %91, %89, %92 : vector<4x8x8xi1>, vector<4x8x8xf32>
    %cst_30 = arith.constant dense<0xFF800000> : vector<4x8xf32>
    %94 = vector.multi_reduction <maximumf>, %93, %cst_30 [2] : vector<4x8x8xf32> to vector<4x8xf32>
    %95 = vector.shape_cast %94 : vector<4x8xf32> to vector<4x8x1xf32>
    %96 = vector.broadcast %95 : vector<4x8x1xf32> to vector<4x8x8xf32>
    %97 = arith.subf %93, %96 : vector<4x8x8xf32>
    %98 = math.exp %97 : vector<4x8x8xf32>
    %cst_31 = arith.constant dense<0.000000e+00> : vector<4x8xf32>
    %99 = vector.multi_reduction <add>, %98, %cst_31 [2] : vector<4x8x8xf32> to vector<4x8xf32>
    %100 = vector.shape_cast %99 : vector<4x8xf32> to vector<4x8x1xf32>
    %101 = tpu.reciprocal %100 {approx = true} : vector<4x8x1xf32> -> vector<4x8x1xf32>
    %102 = vector.broadcast %101 : vector<4x8x1xf32> to vector<4x8x8xf32>
    %103 = arith.mulf %98, %102 : vector<4x8x8xf32>
    %104 = arith.truncf %103 : vector<4x8x8xf32> to vector<4x8x8xbf16>
    "tpu.trace_start"() <{level = 10 : i32, message = "bqk,bkd->bqd"}> : () -> ()
    %cst_32 = arith.constant dense<0.000000e+00> : vector<4x8x8xf32>
    %105 = tpu.matmul %104, %88, %cst_32 {dimension_numbers = #tpu.dot_dimension_numbers<[2], [1], [1], [2], [0, 0, 0, 1, 1, 2], [0], [0]>} : vector<4x8x8xbf16>, vector<4x8x8xbf16>, vector<4x8x8xf32> -> vector<4x8x8xf32>
    "tpu.trace_stop"() : () -> ()
    %106 = vector.shape_cast %105 : vector<4x8x8xf32> to vector<32x8xf32>
    %107 = vector.extract_strided_slice %52 {offsets = [0, 16], sizes = [32, 8], strides = [1, 1]} : vector<32x96xf32> to vector<32x8xf32>
    %108 = vector.shape_cast %107 : vector<32x8xf32> to vector<4x8x8xf32>
    %109 = arith.truncf %108 : vector<4x8x8xf32> to vector<4x8x8xbf16>
    %110 = vector.extract_strided_slice %52 {offsets = [0, 48], sizes = [32, 8], strides = [1, 1]} : vector<32x96xf32> to vector<32x8xf32>
    %111 = vector.shape_cast %110 : vector<32x8xf32> to vector<4x8x8xf32>
    %112 = arith.truncf %111 : vector<4x8x8xf32> to vector<4x8x8xbf16>
    %113 = vector.extract_strided_slice %52 {offsets = [0, 80], sizes = [32, 8], strides = [1, 1]} : vector<32x96xf32> to vector<32x8xf32>
    %114 = vector.shape_cast %113 : vector<32x8xf32> to vector<4x8x8xf32>
    %115 = arith.truncf %114 : vector<4x8x8xf32> to vector<4x8x8xbf16>
    "tpu.trace_start"() <{level = 10 : i32, message = "bqd,bkd->bqk"}> : () -> ()
    %cst_33 = arith.constant dense<0.000000e+00> : vector<4x8x8xf32>
    %116 = tpu.matmul %109, %112, %cst_33 {dimension_numbers = #tpu.dot_dimension_numbers<[2], [2], [1], [1], [0, 0, 0, 1, 1, 1], [0], [0]>} : vector<4x8x8xbf16>, vector<4x8x8xbf16>, vector<4x8x8xf32> -> vector<4x8x8xf32>
    %cst_34 = arith.constant -1.000000e+30 : f32
    "tpu.trace_stop"() : () -> ()
    %117 = vector.shape_cast %22 : vector<1x8x8xi1> to vector<1x8x8xi1>
    %118 = vector.broadcast %117 : vector<1x8x8xi1> to vector<4x8x8xi1>
    %119 = vector.broadcast %cst_34 : f32 to vector<4x8x8xf32>
    %120 = arith.select %118, %116, %119 : vector<4x8x8xi1>, vector<4x8x8xf32>
    %cst_35 = arith.constant dense<0xFF800000> : vector<4x8xf32>
    %121 = vector.multi_reduction <maximumf>, %120, %cst_35 [2] : vector<4x8x8xf32> to vector<4x8xf32>
    %122 = vector.shape_cast %121 : vector<4x8xf32> to vector<4x8x1xf32>
    %123 = vector.broadcast %122 : vector<4x8x1xf32> to vector<4x8x8xf32>
    %124 = arith.subf %120, %123 : vector<4x8x8xf32>
    %125 = math.exp %124 : vector<4x8x8xf32>
    %cst_36 = arith.constant dense<0.000000e+00> : vector<4x8xf32>
    %126 = vector.multi_reduction <add>, %125, %cst_36 [2] : vector<4x8x8xf32> to vector<4x8xf32>
    %127 = vector.shape_cast %126 : vector<4x8xf32> to vector<4x8x1xf32>
    %128 = tpu.reciprocal %127 {approx = true} : vector<4x8x1xf32> -> vector<4x8x1xf32>
    %129 = vector.broadcast %128 : vector<4x8x1xf32> to vector<4x8x8xf32>
    %130 = arith.mulf %125, %129 : vector<4x8x8xf32>
    %131 = arith.truncf %130 : vector<4x8x8xf32> to vector<4x8x8xbf16>
    "tpu.trace_start"() <{level = 10 : i32, message = "bqk,bkd->bqd"}> : () -> ()
    %cst_37 = arith.constant dense<0.000000e+00> : vector<4x8x8xf32>
    %132 = tpu.matmul %131, %115, %cst_37 {dimension_numbers = #tpu.dot_dimension_numbers<[2], [1], [1], [2], [0, 0, 0, 1, 1, 2], [0], [0]>} : vector<4x8x8xbf16>, vector<4x8x8xbf16>, vector<4x8x8xf32> -> vector<4x8x8xf32>
    "tpu.trace_stop"() : () -> ()
    %133 = vector.shape_cast %132 : vector<4x8x8xf32> to vector<32x8xf32>
    %134 = vector.extract_strided_slice %52 {offsets = [0, 24], sizes = [32, 8], strides = [1, 1]} : vector<32x96xf32> to vector<32x8xf32>
    %135 = vector.shape_cast %134 : vector<32x8xf32> to vector<4x8x8xf32>
    %136 = arith.truncf %135 : vector<4x8x8xf32> to vector<4x8x8xbf16>
    %137 = vector.extract_strided_slice %52 {offsets = [0, 56], sizes = [32, 8], strides = [1, 1]} : vector<32x96xf32> to vector<32x8xf32>
    %138 = vector.shape_cast %137 : vector<32x8xf32> to vector<4x8x8xf32>
    %139 = arith.truncf %138 : vector<4x8x8xf32> to vector<4x8x8xbf16>
    %140 = vector.extract_strided_slice %52 {offsets = [0, 88], sizes = [32, 8], strides = [1, 1]} : vector<32x96xf32> to vector<32x8xf32>
    %141 = vector.shape_cast %140 : vector<32x8xf32> to vector<4x8x8xf32>
    %142 = arith.truncf %141 : vector<4x8x8xf32> to vector<4x8x8xbf16>
    "tpu.trace_start"() <{level = 10 : i32, message = "bqd,bkd->bqk"}> : () -> ()
    %cst_38 = arith.constant dense<0.000000e+00> : vector<4x8x8xf32>
    %143 = tpu.matmul %136, %139, %cst_38 {dimension_numbers = #tpu.dot_dimension_numbers<[2], [2], [1], [1], [0, 0, 0, 1, 1, 1], [0], [0]>} : vector<4x8x8xbf16>, vector<4x8x8xbf16>, vector<4x8x8xf32> -> vector<4x8x8xf32>
    %cst_39 = arith.constant -1.000000e+30 : f32
    "tpu.trace_stop"() : () -> ()
    %144 = vector.shape_cast %22 : vector<1x8x8xi1> to vector<1x8x8xi1>
    %145 = vector.broadcast %144 : vector<1x8x8xi1> to vector<4x8x8xi1>
    %146 = vector.broadcast %cst_39 : f32 to vector<4x8x8xf32>
    %147 = arith.select %145, %143, %146 : vector<4x8x8xi1>, vector<4x8x8xf32>
    %cst_40 = arith.constant dense<0xFF800000> : vector<4x8xf32>
    %148 = vector.multi_reduction <maximumf>, %147, %cst_40 [2] : vector<4x8x8xf32> to vector<4x8xf32>
    %149 = vector.shape_cast %148 : vector<4x8xf32> to vector<4x8x1xf32>
    %150 = vector.broadcast %149 : vector<4x8x1xf32> to vector<4x8x8xf32>
    %151 = arith.subf %147, %150 : vector<4x8x8xf32>
    %152 = math.exp %151 : vector<4x8x8xf32>
    %cst_41 = arith.constant dense<0.000000e+00> : vector<4x8xf32>
    %153 = vector.multi_reduction <add>, %152, %cst_41 [2] : vector<4x8x8xf32> to vector<4x8xf32>
    %154 = vector.shape_cast %153 : vector<4x8xf32> to vector<4x8x1xf32>
    %155 = tpu.reciprocal %154 {approx = true} : vector<4x8x1xf32> -> vector<4x8x1xf32>
    %156 = vector.broadcast %155 : vector<4x8x1xf32> to vector<4x8x8xf32>
    %157 = arith.mulf %152, %156 : vector<4x8x8xf32>
    %158 = arith.truncf %157 : vector<4x8x8xf32> to vector<4x8x8xbf16>
    "tpu.trace_start"() <{level = 10 : i32, message = "bqk,bkd->bqd"}> : () -> ()
    %cst_42 = arith.constant dense<0.000000e+00> : vector<4x8x8xf32>
    %159 = tpu.matmul %158, %142, %cst_42 {dimension_numbers = #tpu.dot_dimension_numbers<[2], [1], [1], [2], [0, 0, 0, 1, 1, 2], [0], [0]>} : vector<4x8x8xbf16>, vector<4x8x8xbf16>, vector<4x8x8xf32> -> vector<4x8x8xf32>
    "tpu.trace_stop"() : () -> ()
    %160 = vector.shape_cast %159 : vector<4x8x8xf32> to vector<32x8xf32>
    %161 = tpu.concatenate %79, %106, %133, %160 in 1 : vector<32x8xf32>, vector<32x8xf32>, vector<32x8xf32>, vector<32x8xf32> -> vector<32x32xf32>
    %162 = arith.truncf %161 : vector<32x32xf32> to vector<32x32xbf16>
    %c0_43 = arith.constant 0 : index
    %c0_44 = arith.constant 0 : index
    %c0_45 = arith.constant 0 : index
    %163 = vector.load %arg5[%c0_43, %c0_44, %c0_45] : memref<2x32x32xbf16, #tpu.memory_space<vmem>>, vector<1x32x32xbf16>
    %164 = vector.shape_cast %163 : vector<1x32x32xbf16> to vector<32x32xbf16>
    %cst_46 = arith.constant dense<0.000000e+00> : vector<32x32xf32>
    %165 = tpu.matmul %162, %164, %cst_46 {dimension_numbers = #tpu.dot_dimension_numbers<[1], [0], [0], [1], [0, 0, 1, 1], [], []>} : vector<32x32xbf16>, vector<32x32xbf16>, vector<32x32xf32> -> vector<32x32xf32>
    %c0_47 = arith.constant 0 : index
    %c0_48 = arith.constant 0 : index
    %c0_49 = arith.constant 0 : index
    %166 = vector.load %arg6[%c0_47, %c0_48, %c0_49] : memref<2x1x32xf32, #tpu.memory_space<vmem>>, vector<1x1x32xf32>
    %167 = vector.shape_cast %166 : vector<1x1x32xf32> to vector<1x32xf32>
    %168 = vector.broadcast %167 : vector<1x32xf32> to vector<32x32xf32>
    %169 = arith.addf %165, %168 : vector<32x32xf32>
    %170 = arith.addf %18, %169 : vector<32x32xf32>
    %c0_50 = arith.constant 0 : index
    %c0_51 = arith.constant 0 : index
    %c0_52 = arith.constant 0 : index
    %171 = vector.load %arg13[%c0_50, %c0_51, %c0_52] : memref<2x1x32xf32, #tpu.memory_space<vmem>>, vector<1x1x32xf32>
    %172 = vector.shape_cast %171 : vector<1x1x32xf32> to vector<1x32xf32>
    %c0_53 = arith.constant 0 : index
    %c0_54 = arith.constant 0 : index
    %c0_55 = arith.constant 0 : index
    %173 = vector.load %arg14[%c0_53, %c0_54, %c0_55] : memref<2x1x32xf32, #tpu.memory_space<vmem>>, vector<1x1x32xf32>
    %174 = vector.shape_cast %173 : vector<1x1x32xf32> to vector<1x32xf32>
    %cst_56 = arith.constant dense<0.000000e+00> : vector<32xf32>
    %175 = vector.multi_reduction <add>, %170, %cst_56 [1] : vector<32x32xf32> to vector<32xf32>
    %176 = vector.shape_cast %175 : vector<32xf32> to vector<32x1xf32>
    %cst_57 = arith.constant 3.200000e+01 : f32
    %177 = vector.broadcast %cst_57 : f32 to vector<32x1xf32>
    %178 = arith.divf %176, %177 : vector<32x1xf32>
    %179 = vector.broadcast %178 : vector<32x1xf32> to vector<32x32xf32>
    %180 = arith.subf %170, %179 : vector<32x32xf32>
    %181 = arith.mulf %180, %180 : vector<32x32xf32>
    %cst_58 = arith.constant dense<0.000000e+00> : vector<32xf32>
    %182 = vector.multi_reduction <add>, %181, %cst_58 [1] : vector<32x32xf32> to vector<32xf32>
    %183 = vector.shape_cast %182 : vector<32xf32> to vector<32x1xf32>
    %cst_59 = arith.constant 3.200000e+01 : f32
    %184 = vector.broadcast %cst_59 : f32 to vector<32x1xf32>
    %185 = arith.divf %183, %184 : vector<32x1xf32>
    %186 = vector.broadcast %178 : vector<32x1xf32> to vector<32x32xf32>
    %187 = arith.subf %170, %186 : vector<32x32xf32>
    %cst_60 = arith.constant 9.99999974E-6 : f32
    %188 = vector.broadcast %cst_60 : f32 to vector<32x1xf32>
    %189 = arith.addf %185, %188 : vector<32x1xf32>
    %190 = math.rsqrt %189 : vector<32x1xf32>
    %191 = vector.broadcast %190 : vector<32x1xf32> to vector<32x32xf32>
    %192 = arith.mulf %187, %191 : vector<32x32xf32>
    %193 = vector.broadcast %172 : vector<1x32xf32> to vector<32x32xf32>
    %194 = arith.mulf %192, %193 : vector<32x32xf32>
    %195 = vector.broadcast %174 : vector<1x32xf32> to vector<32x32xf32>
    %196 = arith.addf %194, %195 : vector<32x32xf32>
    %197 = arith.truncf %196 : vector<32x32xf32> to vector<32x32xbf16>
    %c0_61 = arith.constant 0 : index
    %c0_62 = arith.constant 0 : index
    %c0_63 = arith.constant 0 : index
    %198 = vector.load %arg7[%c0_61, %c0_62, %c0_63] : memref<2x32x128xbf16, #tpu.memory_space<vmem>>, vector<1x32x128xbf16>
    %199 = vector.shape_cast %198 : vector<1x32x128xbf16> to vector<32x128xbf16>
    %cst_64 = arith.constant dense<0.000000e+00> : vector<32x128xf32>
    %200 = tpu.matmul %197, %199, %cst_64 {dimension_numbers = #tpu.dot_dimension_numbers<[1], [0], [0], [1], [0, 0, 1, 1], [], []>} : vector<32x32xbf16>, vector<32x128xbf16>, vector<32x128xf32> -> vector<32x128xf32>
    %c0_65 = arith.constant 0 : index
    %c0_66 = arith.constant 0 : index
    %c0_67 = arith.constant 0 : index
    %201 = vector.load %arg8[%c0_65, %c0_66, %c0_67] : memref<2x1x128xf32, #tpu.memory_space<vmem>>, vector<1x1x128xf32>
    %202 = vector.shape_cast %201 : vector<1x1x128xf32> to vector<1x128xf32>
    %203 = vector.broadcast %202 : vector<1x128xf32> to vector<32x128xf32>
    %204 = arith.addf %200, %203 : vector<32x128xf32>
    %cst_68 = arith.constant 0.000000e+00 : f32
    %205 = vector.broadcast %cst_68 : f32 to vector<32x128xf32>
    %206 = arith.maximumf %204, %205 : vector<32x128xf32>
    %207 = arith.truncf %206 : vector<32x128xf32> to vector<32x128xbf16>
    %c0_69 = arith.constant 0 : index
    %c0_70 = arith.constant 0 : index
    %c0_71 = arith.constant 0 : index
    %208 = vector.load %arg9[%c0_69, %c0_70, %c0_71] : memref<2x128x32xbf16, #tpu.memory_space<vmem>>, vector<1x128x32xbf16>
    %209 = vector.shape_cast %208 : vector<1x128x32xbf16> to vector<128x32xbf16>
    %cst_72 = arith.constant dense<0.000000e+00> : vector<32x32xf32>
    %210 = tpu.matmul %207, %209, %cst_72 {dimension_numbers = #tpu.dot_dimension_numbers<[1], [0], [0], [1], [0, 0, 1, 1], [], []>} : vector<32x128xbf16>, vector<128x32xbf16>, vector<32x32xf32> -> vector<32x32xf32>
    %211 = arith.addf %170, %210 : vector<32x32xf32>
    %c0_73 = arith.constant 0 : index
    %c0_74 = arith.constant 0 : index
    %c0_75 = arith.constant 0 : index
    %212 = vector.load %arg10[%c0_73, %c0_74, %c0_75] : memref<2x1x32xf32, #tpu.memory_space<vmem>>, vector<1x1x32xf32>
    %213 = vector.shape_cast %212 : vector<1x1x32xf32> to vector<1x32xf32>
    %214 = vector.broadcast %213 : vector<1x32xf32> to vector<32x32xf32>
    %215 = arith.addf %211, %214 : vector<32x32xf32>
    %c1 = arith.constant 1 : index
    %c0_76 = arith.constant 0 : index
    %c0_77 = arith.constant 0 : index
    %216 = vector.load %arg11[%c1, %c0_76, %c0_77] : memref<2x1x32xf32, #tpu.memory_space<vmem>>, vector<1x1x32xf32>
    %217 = vector.shape_cast %216 : vector<1x1x32xf32> to vector<1x32xf32>
    %c1_78 = arith.constant 1 : index
    %c0_79 = arith.constant 0 : index
    %c0_80 = arith.constant 0 : index
    %218 = vector.load %arg12[%c1_78, %c0_79, %c0_80] : memref<2x1x32xf32, #tpu.memory_space<vmem>>, vector<1x1x32xf32>
    %219 = vector.shape_cast %218 : vector<1x1x32xf32> to vector<1x32xf32>
    %cst_81 = arith.constant dense<0.000000e+00> : vector<32xf32>
    %220 = vector.multi_reduction <add>, %215, %cst_81 [1] : vector<32x32xf32> to vector<32xf32>
    %221 = vector.shape_cast %220 : vector<32xf32> to vector<32x1xf32>
    %cst_82 = arith.constant 3.200000e+01 : f32
    %222 = vector.broadcast %cst_82 : f32 to vector<32x1xf32>
    %223 = arith.divf %221, %222 : vector<32x1xf32>
    %224 = vector.broadcast %223 : vector<32x1xf32> to vector<32x32xf32>
    %225 = arith.subf %215, %224 : vector<32x32xf32>
    %226 = arith.mulf %225, %225 : vector<32x32xf32>
    %cst_83 = arith.constant dense<0.000000e+00> : vector<32xf32>
    %227 = vector.multi_reduction <add>, %226, %cst_83 [1] : vector<32x32xf32> to vector<32xf32>
    %228 = vector.shape_cast %227 : vector<32xf32> to vector<32x1xf32>
    %cst_84 = arith.constant 3.200000e+01 : f32
    %229 = vector.broadcast %cst_84 : f32 to vector<32x1xf32>
    %230 = arith.divf %228, %229 : vector<32x1xf32>
    %231 = vector.broadcast %223 : vector<32x1xf32> to vector<32x32xf32>
    %232 = arith.subf %215, %231 : vector<32x32xf32>
    %cst_85 = arith.constant 9.99999974E-6 : f32
    %233 = vector.broadcast %cst_85 : f32 to vector<32x1xf32>
    %234 = arith.addf %230, %233 : vector<32x1xf32>
    %235 = math.rsqrt %234 : vector<32x1xf32>
    %236 = vector.broadcast %235 : vector<32x1xf32> to vector<32x32xf32>
    %237 = arith.mulf %232, %236 : vector<32x32xf32>
    %238 = vector.broadcast %217 : vector<1x32xf32> to vector<32x32xf32>
    %239 = arith.mulf %237, %238 : vector<32x32xf32>
    %240 = vector.broadcast %219 : vector<1x32xf32> to vector<32x32xf32>
    %241 = arith.addf %239, %240 : vector<32x32xf32>
    %242 = arith.truncf %241 : vector<32x32xf32> to vector<32x32xbf16>
    %c1_86 = arith.constant 1 : index
    %c0_87 = arith.constant 0 : index
    %c0_88 = arith.constant 0 : index
    %243 = vector.load %arg4[%c1_86, %c0_87, %c0_88] : memref<2x32x96xbf16, #tpu.memory_space<vmem>>, vector<1x32x96xbf16>
    %244 = vector.shape_cast %243 : vector<1x32x96xbf16> to vector<32x96xbf16>
    %cst_89 = arith.constant dense<0.000000e+00> : vector<32x96xf32>
    %245 = tpu.matmul %242, %244, %cst_89 {dimension_numbers = #tpu.dot_dimension_numbers<[1], [0], [0], [1], [0, 0, 1, 1], [], []>} : vector<32x32xbf16>, vector<32x96xbf16>, vector<32x96xf32> -> vector<32x96xf32>
    %246 = vector.extract_strided_slice %245 {offsets = [0, 0], sizes = [32, 8], strides = [1, 1]} : vector<32x96xf32> to vector<32x8xf32>
    %247 = vector.shape_cast %246 : vector<32x8xf32> to vector<4x8x8xf32>
    %248 = arith.truncf %247 : vector<4x8x8xf32> to vector<4x8x8xbf16>
    %249 = vector.extract_strided_slice %245 {offsets = [0, 32], sizes = [32, 8], strides = [1, 1]} : vector<32x96xf32> to vector<32x8xf32>
    %250 = vector.shape_cast %249 : vector<32x8xf32> to vector<4x8x8xf32>
    %251 = arith.truncf %250 : vector<4x8x8xf32> to vector<4x8x8xbf16>
    %252 = vector.extract_strided_slice %245 {offsets = [0, 64], sizes = [32, 8], strides = [1, 1]} : vector<32x96xf32> to vector<32x8xf32>
    %253 = vector.shape_cast %252 : vector<32x8xf32> to vector<4x8x8xf32>
    %254 = arith.truncf %253 : vector<4x8x8xf32> to vector<4x8x8xbf16>
    "tpu.trace_start"() <{level = 10 : i32, message = "bqd,bkd->bqk"}> : () -> ()
    %cst_90 = arith.constant dense<0.000000e+00> : vector<4x8x8xf32>
    %255 = tpu.matmul %248, %251, %cst_90 {dimension_numbers = #tpu.dot_dimension_numbers<[2], [2], [1], [1], [0, 0, 0, 1, 1, 1], [0], [0]>} : vector<4x8x8xbf16>, vector<4x8x8xbf16>, vector<4x8x8xf32> -> vector<4x8x8xf32>
    %cst_91 = arith.constant -1.000000e+30 : f32
    "tpu.trace_stop"() : () -> ()
    %256 = vector.shape_cast %22 : vector<1x8x8xi1> to vector<1x8x8xi1>
    %257 = vector.broadcast %256 : vector<1x8x8xi1> to vector<4x8x8xi1>
    %258 = vector.broadcast %cst_91 : f32 to vector<4x8x8xf32>
    %259 = arith.select %257, %255, %258 : vector<4x8x8xi1>, vector<4x8x8xf32>
    %cst_92 = arith.constant dense<0xFF800000> : vector<4x8xf32>
    %260 = vector.multi_reduction <maximumf>, %259, %cst_92 [2] : vector<4x8x8xf32> to vector<4x8xf32>
    %261 = vector.shape_cast %260 : vector<4x8xf32> to vector<4x8x1xf32>
    %262 = vector.broadcast %261 : vector<4x8x1xf32> to vector<4x8x8xf32>
    %263 = arith.subf %259, %262 : vector<4x8x8xf32>
    %264 = math.exp %263 : vector<4x8x8xf32>
    %cst_93 = arith.constant dense<0.000000e+00> : vector<4x8xf32>
    %265 = vector.multi_reduction <add>, %264, %cst_93 [2] : vector<4x8x8xf32> to vector<4x8xf32>
    %266 = vector.shape_cast %265 : vector<4x8xf32> to vector<4x8x1xf32>
    %267 = tpu.reciprocal %266 {approx = true} : vector<4x8x1xf32> -> vector<4x8x1xf32>
    %268 = vector.broadcast %267 : vector<4x8x1xf32> to vector<4x8x8xf32>
    %269 = arith.mulf %264, %268 : vector<4x8x8xf32>
    %270 = arith.truncf %269 : vector<4x8x8xf32> to vector<4x8x8xbf16>
    "tpu.trace_start"() <{level = 10 : i32, message = "bqk,bkd->bqd"}> : () -> ()
    %cst_94 = arith.constant dense<0.000000e+00> : vector<4x8x8xf32>
    %271 = tpu.matmul %270, %254, %cst_94 {dimension_numbers = #tpu.dot_dimension_numbers<[2], [1], [1], [2], [0, 0, 0, 1, 1, 2], [0], [0]>} : vector<4x8x8xbf16>, vector<4x8x8xbf16>, vector<4x8x8xf32> -> vector<4x8x8xf32>
    "tpu.trace_stop"() : () -> ()
    %272 = vector.shape_cast %271 : vector<4x8x8xf32> to vector<32x8xf32>
    %273 = vector.extract_strided_slice %245 {offsets = [0, 8], sizes = [32, 8], strides = [1, 1]} : vector<32x96xf32> to vector<32x8xf32>
    %274 = vector.shape_cast %273 : vector<32x8xf32> to vector<4x8x8xf32>
    %275 = arith.truncf %274 : vector<4x8x8xf32> to vector<4x8x8xbf16>
    %276 = vector.extract_strided_slice %245 {offsets = [0, 40], sizes = [32, 8], strides = [1, 1]} : vector<32x96xf32> to vector<32x8xf32>
    %277 = vector.shape_cast %276 : vector<32x8xf32> to vector<4x8x8xf32>
    %278 = arith.truncf %277 : vector<4x8x8xf32> to vector<4x8x8xbf16>
    %279 = vector.extract_strided_slice %245 {offsets = [0, 72], sizes = [32, 8], strides = [1, 1]} : vector<32x96xf32> to vector<32x8xf32>
    %280 = vector.shape_cast %279 : vector<32x8xf32> to vector<4x8x8xf32>
    %281 = arith.truncf %280 : vector<4x8x8xf32> to vector<4x8x8xbf16>
    "tpu.trace_start"() <{level = 10 : i32, message = "bqd,bkd->bqk"}> : () -> ()
    %cst_95 = arith.constant dense<0.000000e+00> : vector<4x8x8xf32>
    %282 = tpu.matmul %275, %278, %cst_95 {dimension_numbers = #tpu.dot_dimension_numbers<[2], [2], [1], [1], [0, 0, 0, 1, 1, 1], [0], [0]>} : vector<4x8x8xbf16>, vector<4x8x8xbf16>, vector<4x8x8xf32> -> vector<4x8x8xf32>
    %cst_96 = arith.constant -1.000000e+30 : f32
    "tpu.trace_stop"() : () -> ()
    %283 = vector.shape_cast %22 : vector<1x8x8xi1> to vector<1x8x8xi1>
    %284 = vector.broadcast %283 : vector<1x8x8xi1> to vector<4x8x8xi1>
    %285 = vector.broadcast %cst_96 : f32 to vector<4x8x8xf32>
    %286 = arith.select %284, %282, %285 : vector<4x8x8xi1>, vector<4x8x8xf32>
    %cst_97 = arith.constant dense<0xFF800000> : vector<4x8xf32>
    %287 = vector.multi_reduction <maximumf>, %286, %cst_97 [2] : vector<4x8x8xf32> to vector<4x8xf32>
    %288 = vector.shape_cast %287 : vector<4x8xf32> to vector<4x8x1xf32>
    %289 = vector.broadcast %288 : vector<4x8x1xf32> to vector<4x8x8xf32>
    %290 = arith.subf %286, %289 : vector<4x8x8xf32>
    %291 = math.exp %290 : vector<4x8x8xf32>
    %cst_98 = arith.constant dense<0.000000e+00> : vector<4x8xf32>
    %292 = vector.multi_reduction <add>, %291, %cst_98 [2] : vector<4x8x8xf32> to vector<4x8xf32>
    %293 = vector.shape_cast %292 : vector<4x8xf32> to vector<4x8x1xf32>
    %294 = tpu.reciprocal %293 {approx = true} : vector<4x8x1xf32> -> vector<4x8x1xf32>
    %295 = vector.broadcast %294 : vector<4x8x1xf32> to vector<4x8x8xf32>
    %296 = arith.mulf %291, %295 : vector<4x8x8xf32>
    %297 = arith.truncf %296 : vector<4x8x8xf32> to vector<4x8x8xbf16>
    "tpu.trace_start"() <{level = 10 : i32, message = "bqk,bkd->bqd"}> : () -> ()
    %cst_99 = arith.constant dense<0.000000e+00> : vector<4x8x8xf32>
    %298 = tpu.matmul %297, %281, %cst_99 {dimension_numbers = #tpu.dot_dimension_numbers<[2], [1], [1], [2], [0, 0, 0, 1, 1, 2], [0], [0]>} : vector<4x8x8xbf16>, vector<4x8x8xbf16>, vector<4x8x8xf32> -> vector<4x8x8xf32>
    "tpu.trace_stop"() : () -> ()
    %299 = vector.shape_cast %298 : vector<4x8x8xf32> to vector<32x8xf32>
    %300 = vector.extract_strided_slice %245 {offsets = [0, 16], sizes = [32, 8], strides = [1, 1]} : vector<32x96xf32> to vector<32x8xf32>
    %301 = vector.shape_cast %300 : vector<32x8xf32> to vector<4x8x8xf32>
    %302 = arith.truncf %301 : vector<4x8x8xf32> to vector<4x8x8xbf16>
    %303 = vector.extract_strided_slice %245 {offsets = [0, 48], sizes = [32, 8], strides = [1, 1]} : vector<32x96xf32> to vector<32x8xf32>
    %304 = vector.shape_cast %303 : vector<32x8xf32> to vector<4x8x8xf32>
    %305 = arith.truncf %304 : vector<4x8x8xf32> to vector<4x8x8xbf16>
    %306 = vector.extract_strided_slice %245 {offsets = [0, 80], sizes = [32, 8], strides = [1, 1]} : vector<32x96xf32> to vector<32x8xf32>
    %307 = vector.shape_cast %306 : vector<32x8xf32> to vector<4x8x8xf32>
    %308 = arith.truncf %307 : vector<4x8x8xf32> to vector<4x8x8xbf16>
    "tpu.trace_start"() <{level = 10 : i32, message = "bqd,bkd->bqk"}> : () -> ()
    %cst_100 = arith.constant dense<0.000000e+00> : vector<4x8x8xf32>
    %309 = tpu.matmul %302, %305, %cst_100 {dimension_numbers = #tpu.dot_dimension_numbers<[2], [2], [1], [1], [0, 0, 0, 1, 1, 1], [0], [0]>} : vector<4x8x8xbf16>, vector<4x8x8xbf16>, vector<4x8x8xf32> -> vector<4x8x8xf32>
    %cst_101 = arith.constant -1.000000e+30 : f32
    "tpu.trace_stop"() : () -> ()
    %310 = vector.shape_cast %22 : vector<1x8x8xi1> to vector<1x8x8xi1>
    %311 = vector.broadcast %310 : vector<1x8x8xi1> to vector<4x8x8xi1>
    %312 = vector.broadcast %cst_101 : f32 to vector<4x8x8xf32>
    %313 = arith.select %311, %309, %312 : vector<4x8x8xi1>, vector<4x8x8xf32>
    %cst_102 = arith.constant dense<0xFF800000> : vector<4x8xf32>
    %314 = vector.multi_reduction <maximumf>, %313, %cst_102 [2] : vector<4x8x8xf32> to vector<4x8xf32>
    %315 = vector.shape_cast %314 : vector<4x8xf32> to vector<4x8x1xf32>
    %316 = vector.broadcast %315 : vector<4x8x1xf32> to vector<4x8x8xf32>
    %317 = arith.subf %313, %316 : vector<4x8x8xf32>
    %318 = math.exp %317 : vector<4x8x8xf32>
    %cst_103 = arith.constant dense<0.000000e+00> : vector<4x8xf32>
    %319 = vector.multi_reduction <add>, %318, %cst_103 [2] : vector<4x8x8xf32> to vector<4x8xf32>
    %320 = vector.shape_cast %319 : vector<4x8xf32> to vector<4x8x1xf32>
    %321 = tpu.reciprocal %320 {approx = true} : vector<4x8x1xf32> -> vector<4x8x1xf32>
    %322 = vector.broadcast %321 : vector<4x8x1xf32> to vector<4x8x8xf32>
    %323 = arith.mulf %318, %322 : vector<4x8x8xf32>
    %324 = arith.truncf %323 : vector<4x8x8xf32> to vector<4x8x8xbf16>
    "tpu.trace_start"() <{level = 10 : i32, message = "bqk,bkd->bqd"}> : () -> ()
    %cst_104 = arith.constant dense<0.000000e+00> : vector<4x8x8xf32>
    %325 = tpu.matmul %324, %308, %cst_104 {dimension_numbers = #tpu.dot_dimension_numbers<[2], [1], [1], [2], [0, 0, 0, 1, 1, 2], [0], [0]>} : vector<4x8x8xbf16>, vector<4x8x8xbf16>, vector<4x8x8xf32> -> vector<4x8x8xf32>
    "tpu.trace_stop"() : () -> ()
    %326 = vector.shape_cast %325 : vector<4x8x8xf32> to vector<32x8xf32>
    %327 = vector.extract_strided_slice %245 {offsets = [0, 24], sizes = [32, 8], strides = [1, 1]} : vector<32x96xf32> to vector<32x8xf32>
    %328 = vector.shape_cast %327 : vector<32x8xf32> to vector<4x8x8xf32>
    %329 = arith.truncf %328 : vector<4x8x8xf32> to vector<4x8x8xbf16>
    %330 = vector.extract_strided_slice %245 {offsets = [0, 56], sizes = [32, 8], strides = [1, 1]} : vector<32x96xf32> to vector<32x8xf32>
    %331 = vector.shape_cast %330 : vector<32x8xf32> to vector<4x8x8xf32>
    %332 = arith.truncf %331 : vector<4x8x8xf32> to vector<4x8x8xbf16>
    %333 = vector.extract_strided_slice %245 {offsets = [0, 88], sizes = [32, 8], strides = [1, 1]} : vector<32x96xf32> to vector<32x8xf32>
    %334 = vector.shape_cast %333 : vector<32x8xf32> to vector<4x8x8xf32>
    %335 = arith.truncf %334 : vector<4x8x8xf32> to vector<4x8x8xbf16>
    "tpu.trace_start"() <{level = 10 : i32, message = "bqd,bkd->bqk"}> : () -> ()
    %cst_105 = arith.constant dense<0.000000e+00> : vector<4x8x8xf32>
    %336 = tpu.matmul %329, %332, %cst_105 {dimension_numbers = #tpu.dot_dimension_numbers<[2], [2], [1], [1], [0, 0, 0, 1, 1, 1], [0], [0]>} : vector<4x8x8xbf16>, vector<4x8x8xbf16>, vector<4x8x8xf32> -> vector<4x8x8xf32>
    %cst_106 = arith.constant -1.000000e+30 : f32
    "tpu.trace_stop"() : () -> ()
    %337 = vector.shape_cast %22 : vector<1x8x8xi1> to vector<1x8x8xi1>
    %338 = vector.broadcast %337 : vector<1x8x8xi1> to vector<4x8x8xi1>
    %339 = vector.broadcast %cst_106 : f32 to vector<4x8x8xf32>
    %340 = arith.select %338, %336, %339 : vector<4x8x8xi1>, vector<4x8x8xf32>
    %cst_107 = arith.constant dense<0xFF800000> : vector<4x8xf32>
    %341 = vector.multi_reduction <maximumf>, %340, %cst_107 [2] : vector<4x8x8xf32> to vector<4x8xf32>
    %342 = vector.shape_cast %341 : vector<4x8xf32> to vector<4x8x1xf32>
    %343 = vector.broadcast %342 : vector<4x8x1xf32> to vector<4x8x8xf32>
    %344 = arith.subf %340, %343 : vector<4x8x8xf32>
    %345 = math.exp %344 : vector<4x8x8xf32>
    %cst_108 = arith.constant dense<0.000000e+00> : vector<4x8xf32>
    %346 = vector.multi_reduction <add>, %345, %cst_108 [2] : vector<4x8x8xf32> to vector<4x8xf32>
    %347 = vector.shape_cast %346 : vector<4x8xf32> to vector<4x8x1xf32>
    %348 = tpu.reciprocal %347 {approx = true} : vector<4x8x1xf32> -> vector<4x8x1xf32>
    %349 = vector.broadcast %348 : vector<4x8x1xf32> to vector<4x8x8xf32>
    %350 = arith.mulf %345, %349 : vector<4x8x8xf32>
    %351 = arith.truncf %350 : vector<4x8x8xf32> to vector<4x8x8xbf16>
    "tpu.trace_start"() <{level = 10 : i32, message = "bqk,bkd->bqd"}> : () -> ()
    %cst_109 = arith.constant dense<0.000000e+00> : vector<4x8x8xf32>
    %352 = tpu.matmul %351, %335, %cst_109 {dimension_numbers = #tpu.dot_dimension_numbers<[2], [1], [1], [2], [0, 0, 0, 1, 1, 2], [0], [0]>} : vector<4x8x8xbf16>, vector<4x8x8xbf16>, vector<4x8x8xf32> -> vector<4x8x8xf32>
    "tpu.trace_stop"() : () -> ()
    %353 = vector.shape_cast %352 : vector<4x8x8xf32> to vector<32x8xf32>
    %354 = tpu.concatenate %272, %299, %326, %353 in 1 : vector<32x8xf32>, vector<32x8xf32>, vector<32x8xf32>, vector<32x8xf32> -> vector<32x32xf32>
    %355 = arith.truncf %354 : vector<32x32xf32> to vector<32x32xbf16>
    %c1_110 = arith.constant 1 : index
    %c0_111 = arith.constant 0 : index
    %c0_112 = arith.constant 0 : index
    %356 = vector.load %arg5[%c1_110, %c0_111, %c0_112] : memref<2x32x32xbf16, #tpu.memory_space<vmem>>, vector<1x32x32xbf16>
    %357 = vector.shape_cast %356 : vector<1x32x32xbf16> to vector<32x32xbf16>
    %cst_113 = arith.constant dense<0.000000e+00> : vector<32x32xf32>
    %358 = tpu.matmul %355, %357, %cst_113 {dimension_numbers = #tpu.dot_dimension_numbers<[1], [0], [0], [1], [0, 0, 1, 1], [], []>} : vector<32x32xbf16>, vector<32x32xbf16>, vector<32x32xf32> -> vector<32x32xf32>
    %c1_114 = arith.constant 1 : index
    %c0_115 = arith.constant 0 : index
    %c0_116 = arith.constant 0 : index
    %359 = vector.load %arg6[%c1_114, %c0_115, %c0_116] : memref<2x1x32xf32, #tpu.memory_space<vmem>>, vector<1x1x32xf32>
    %360 = vector.shape_cast %359 : vector<1x1x32xf32> to vector<1x32xf32>
    %361 = vector.broadcast %360 : vector<1x32xf32> to vector<32x32xf32>
    %362 = arith.addf %358, %361 : vector<32x32xf32>
    %363 = arith.addf %215, %362 : vector<32x32xf32>
    %c1_117 = arith.constant 1 : index
    %c0_118 = arith.constant 0 : index
    %c0_119 = arith.constant 0 : index
    %364 = vector.load %arg13[%c1_117, %c0_118, %c0_119] : memref<2x1x32xf32, #tpu.memory_space<vmem>>, vector<1x1x32xf32>
    %365 = vector.shape_cast %364 : vector<1x1x32xf32> to vector<1x32xf32>
    %c1_120 = arith.constant 1 : index
    %c0_121 = arith.constant 0 : index
    %c0_122 = arith.constant 0 : index
    %366 = vector.load %arg14[%c1_120, %c0_121, %c0_122] : memref<2x1x32xf32, #tpu.memory_space<vmem>>, vector<1x1x32xf32>
    %367 = vector.shape_cast %366 : vector<1x1x32xf32> to vector<1x32xf32>
    %cst_123 = arith.constant dense<0.000000e+00> : vector<32xf32>
    %368 = vector.multi_reduction <add>, %363, %cst_123 [1] : vector<32x32xf32> to vector<32xf32>
    %369 = vector.shape_cast %368 : vector<32xf32> to vector<32x1xf32>
    %cst_124 = arith.constant 3.200000e+01 : f32
    %370 = vector.broadcast %cst_124 : f32 to vector<32x1xf32>
    %371 = arith.divf %369, %370 : vector<32x1xf32>
    %372 = vector.broadcast %371 : vector<32x1xf32> to vector<32x32xf32>
    %373 = arith.subf %363, %372 : vector<32x32xf32>
    %374 = arith.mulf %373, %373 : vector<32x32xf32>
    %cst_125 = arith.constant dense<0.000000e+00> : vector<32xf32>
    %375 = vector.multi_reduction <add>, %374, %cst_125 [1] : vector<32x32xf32> to vector<32xf32>
    %376 = vector.shape_cast %375 : vector<32xf32> to vector<32x1xf32>
    %cst_126 = arith.constant 3.200000e+01 : f32
    %377 = vector.broadcast %cst_126 : f32 to vector<32x1xf32>
    %378 = arith.divf %376, %377 : vector<32x1xf32>
    %379 = vector.broadcast %371 : vector<32x1xf32> to vector<32x32xf32>
    %380 = arith.subf %363, %379 : vector<32x32xf32>
    %cst_127 = arith.constant 9.99999974E-6 : f32
    %381 = vector.broadcast %cst_127 : f32 to vector<32x1xf32>
    %382 = arith.addf %378, %381 : vector<32x1xf32>
    %383 = math.rsqrt %382 : vector<32x1xf32>
    %384 = vector.broadcast %383 : vector<32x1xf32> to vector<32x32xf32>
    %385 = arith.mulf %380, %384 : vector<32x32xf32>
    %386 = vector.broadcast %365 : vector<1x32xf32> to vector<32x32xf32>
    %387 = arith.mulf %385, %386 : vector<32x32xf32>
    %388 = vector.broadcast %367 : vector<1x32xf32> to vector<32x32xf32>
    %389 = arith.addf %387, %388 : vector<32x32xf32>
    %390 = arith.truncf %389 : vector<32x32xf32> to vector<32x32xbf16>
    %c1_128 = arith.constant 1 : index
    %c0_129 = arith.constant 0 : index
    %c0_130 = arith.constant 0 : index
    %391 = vector.load %arg7[%c1_128, %c0_129, %c0_130] : memref<2x32x128xbf16, #tpu.memory_space<vmem>>, vector<1x32x128xbf16>
    %392 = vector.shape_cast %391 : vector<1x32x128xbf16> to vector<32x128xbf16>
    %cst_131 = arith.constant dense<0.000000e+00> : vector<32x128xf32>
    %393 = tpu.matmul %390, %392, %cst_131 {dimension_numbers = #tpu.dot_dimension_numbers<[1], [0], [0], [1], [0, 0, 1, 1], [], []>} : vector<32x32xbf16>, vector<32x128xbf16>, vector<32x128xf32> -> vector<32x128xf32>
    %c1_132 = arith.constant 1 : index
    %c0_133 = arith.constant 0 : index
    %c0_134 = arith.constant 0 : index
    %394 = vector.load %arg8[%c1_132, %c0_133, %c0_134] : memref<2x1x128xf32, #tpu.memory_space<vmem>>, vector<1x1x128xf32>
    %395 = vector.shape_cast %394 : vector<1x1x128xf32> to vector<1x128xf32>
    %396 = vector.broadcast %395 : vector<1x128xf32> to vector<32x128xf32>
    %397 = arith.addf %393, %396 : vector<32x128xf32>
    %cst_135 = arith.constant 0.000000e+00 : f32
    %398 = vector.broadcast %cst_135 : f32 to vector<32x128xf32>
    %399 = arith.maximumf %397, %398 : vector<32x128xf32>
    %400 = arith.truncf %399 : vector<32x128xf32> to vector<32x128xbf16>
    %c1_136 = arith.constant 1 : index
    %c0_137 = arith.constant 0 : index
    %c0_138 = arith.constant 0 : index
    %401 = vector.load %arg9[%c1_136, %c0_137, %c0_138] : memref<2x128x32xbf16, #tpu.memory_space<vmem>>, vector<1x128x32xbf16>
    %402 = vector.shape_cast %401 : vector<1x128x32xbf16> to vector<128x32xbf16>
    %cst_139 = arith.constant dense<0.000000e+00> : vector<32x32xf32>
    %403 = tpu.matmul %400, %402, %cst_139 {dimension_numbers = #tpu.dot_dimension_numbers<[1], [0], [0], [1], [0, 0, 1, 1], [], []>} : vector<32x128xbf16>, vector<128x32xbf16>, vector<32x32xf32> -> vector<32x32xf32>
    %404 = arith.addf %363, %403 : vector<32x32xf32>
    %c1_140 = arith.constant 1 : index
    %c0_141 = arith.constant 0 : index
    %c0_142 = arith.constant 0 : index
    %405 = vector.load %arg10[%c1_140, %c0_141, %c0_142] : memref<2x1x32xf32, #tpu.memory_space<vmem>>, vector<1x1x32xf32>
    %406 = vector.shape_cast %405 : vector<1x1x32xf32> to vector<1x32xf32>
    %407 = vector.broadcast %406 : vector<1x32xf32> to vector<32x32xf32>
    %408 = arith.addf %404, %407 : vector<32x32xf32>
    %c0_143 = arith.constant 0 : index
    %c0_144 = arith.constant 0 : index
    %409 = vector.load %arg15[%c0_143, %c0_144] : memref<1x32xf32, #tpu.memory_space<vmem>>, vector<1x32xf32>
    %c0_145 = arith.constant 0 : index
    %c0_146 = arith.constant 0 : index
    %410 = vector.load %arg16[%c0_145, %c0_146] : memref<1x32xf32, #tpu.memory_space<vmem>>, vector<1x32xf32>
    %cst_147 = arith.constant dense<0.000000e+00> : vector<32xf32>
    %411 = vector.multi_reduction <add>, %408, %cst_147 [1] : vector<32x32xf32> to vector<32xf32>
    %412 = vector.shape_cast %411 : vector<32xf32> to vector<32x1xf32>
    %cst_148 = arith.constant 3.200000e+01 : f32
    %413 = vector.broadcast %cst_148 : f32 to vector<32x1xf32>
    %414 = arith.divf %412, %413 : vector<32x1xf32>
    %415 = vector.broadcast %414 : vector<32x1xf32> to vector<32x32xf32>
    %416 = arith.subf %408, %415 : vector<32x32xf32>
    %417 = arith.mulf %416, %416 : vector<32x32xf32>
    %cst_149 = arith.constant dense<0.000000e+00> : vector<32xf32>
    %418 = vector.multi_reduction <add>, %417, %cst_149 [1] : vector<32x32xf32> to vector<32xf32>
    %419 = vector.shape_cast %418 : vector<32xf32> to vector<32x1xf32>
    %cst_150 = arith.constant 3.200000e+01 : f32
    %420 = vector.broadcast %cst_150 : f32 to vector<32x1xf32>
    %421 = arith.divf %419, %420 : vector<32x1xf32>
    %422 = vector.broadcast %414 : vector<32x1xf32> to vector<32x32xf32>
    %423 = arith.subf %408, %422 : vector<32x32xf32>
    %cst_151 = arith.constant 9.99999974E-6 : f32
    %424 = vector.broadcast %cst_151 : f32 to vector<32x1xf32>
    %425 = arith.addf %421, %424 : vector<32x1xf32>
    %426 = math.rsqrt %425 : vector<32x1xf32>
    %427 = vector.broadcast %426 : vector<32x1xf32> to vector<32x32xf32>
    %428 = arith.mulf %423, %427 : vector<32x32xf32>
    %429 = vector.broadcast %409 : vector<1x32xf32> to vector<32x32xf32>
    %430 = arith.mulf %428, %429 : vector<32x32xf32>
    %431 = vector.broadcast %410 : vector<1x32xf32> to vector<32x32xf32>
    %432 = arith.addf %430, %431 : vector<32x32xf32>
    %433 = arith.truncf %432 : vector<32x32xf32> to vector<32x32xbf16>
    %c0_152 = arith.constant 0 : index
    %c0_153 = arith.constant 0 : index
    %434 = vector.load %arg17[%c0_152, %c0_153] : memref<32x128xbf16, #tpu.memory_space<vmem>>, vector<32x128xbf16>
    %cst_154 = arith.constant dense<0.000000e+00> : vector<32x128xf32>
    %435 = tpu.matmul %433, %434, %cst_154 {dimension_numbers = #tpu.dot_dimension_numbers<[1], [0], [0], [1], [0, 0, 1, 1], [], []>} : vector<32x32xbf16>, vector<32x128xbf16>, vector<32x128xf32> -> vector<32x128xf32>
    %c0_155 = arith.constant 0 : index
    %c0_156 = arith.constant 0 : index
    %436 = vector.load %arg18[%c0_155, %c0_156] : memref<1x128xf32, #tpu.memory_space<vmem>>, vector<1x128xf32>
    %437 = vector.broadcast %436 : vector<1x128xf32> to vector<32x128xf32>
    %438 = arith.addf %435, %437 : vector<32x128xf32>
    %439 = vector.shape_cast %438 : vector<32x128xf32> to vector<4x8x128xf32>
    %c0_157 = arith.constant 0 : index
    %c0_158 = arith.constant 0 : index
    %c0_159 = arith.constant 0 : index
    %440 = vector.load %arg19[%c0_157, %c0_158, %c0_159] : memref<4x8x128xf32, #tpu.memory_space<vmem>>, vector<4x8x128xf32>
    tpu.vector_store %arg19[%c0_157, %c0_158, %c0_159], %439 {strides = array<i32>} : memref<4x8x128xf32, #tpu.memory_space<vmem>>, vector<4x8x128xf32>,
    return
  }
  func.func @transform_0(%arg0: i32) -> (i32, i32, i32) {
    %c0_i32 = arith.constant 0 : i32
    %c0_i32_0 = arith.constant 0 : i32
    %c0_i32_1 = arith.constant 0 : i32
    return %arg0, %c0_i32, %c0_i32_0 : i32, i32, i32
  }
  func.func @transform_1(%arg0: i32) -> (i32, i32) {
    %c0_i32 = arith.constant 0 : i32
    %c0_i32_0 = arith.constant 0 : i32
    %c0_i32_1 = arith.constant 0 : i32
    return %c0_i32, %c0_i32_0 : i32, i32
  }
  func.func @transform_2(%arg0: i32) -> (i32, i32) {
    %c0_i32 = arith.constant 0 : i32
    %c0_i32_0 = arith.constant 0 : i32
    %c0_i32_1 = arith.constant 0 : i32
    return %c0_i32, %c0_i32_0 : i32, i32
  }
  func.func @transform_3(%arg0: i32) -> (i32, i32, i32) {
    %c0_i32 = arith.constant 0 : i32
    %c0_i32_0 = arith.constant 0 : i32
    %c0_i32_1 = arith.constant 0 : i32
    %c0_i32_2 = arith.constant 0 : i32
    return %c0_i32, %c0_i32_0, %c0_i32_1 : i32, i32, i32
  }
  func.func @transform_4(%arg0: i32) -> (i32, i32, i32) {
    %c0_i32 = arith.constant 0 : i32
    %c0_i32_0 = arith.constant 0 : i32
    %c0_i32_1 = arith.constant 0 : i32
    %c0_i32_2 = arith.constant 0 : i32
    return %c0_i32, %c0_i32_0, %c0_i32_1 : i32, i32, i32
  }
  func.func @transform_5(%arg0: i32) -> (i32, i32, i32) {
    %c0_i32 = arith.constant 0 : i32
    %c0_i32_0 = arith.constant 0 : i32
    %c0_i32_1 = arith.constant 0 : i32
    %c0_i32_2 = arith.constant 0 : i32
    return %c0_i32, %c0_i32_0, %c0_i32_1 : i32, i32, i32
  }
  func.func @transform_6(%arg0: i32) -> (i32, i32, i32) {
    %c0_i32 = arith.constant 0 : i32
    %c0_i32_0 = arith.constant 0 : i32
    %c0_i32_1 = arith.constant 0 : i32
    %c0_i32_2 = arith.constant 0 : i32
    return %c0_i32, %c0_i32_0, %c0_i32_1 : i32, i32, i32
  }
  func.func @transform_7(%arg0: i32) -> (i32, i32, i32) {
    %c0_i32 = arith.constant 0 : i32
    %c0_i32_0 = arith.constant 0 : i32
    %c0_i32_1 = arith.constant 0 : i32
    %c0_i32_2 = arith.constant 0 : i32
    return %c0_i32, %c0_i32_0, %c0_i32_1 : i32, i32, i32
  }
  func.func @transform_8(%arg0: i32) -> (i32, i32, i32) {
    %c0_i32 = arith.constant 0 : i32
    %c0_i32_0 = arith.constant 0 : i32
    %c0_i32_1 = arith.constant 0 : i32
    %c0_i32_2 = arith.constant 0 : i32
    return %c0_i32, %c0_i32_0, %c0_i32_1 : i32, i32, i32
  }
  func.func @transform_9(%arg0: i32) -> (i32, i32, i32) {
    %c0_i32 = arith.constant 0 : i32
    %c0_i32_0 = arith.constant 0 : i32
    %c0_i32_1 = arith.constant 0 : i32
    %c0_i32_2 = arith.constant 0 : i32
    return %c0_i32, %c0_i32_0, %c0_i32_1 : i32, i32, i32
  }
  func.func @transform_10(%arg0: i32) -> (i32, i32, i32) {
    %c0_i32 = arith.constant 0 : i32
    %c0_i32_0 = arith.constant 0 : i32
    %c0_i32_1 = arith.constant 0 : i32
    %c0_i32_2 = arith.constant 0 : i32
    return %c0_i32, %c0_i32_0, %c0_i32_1 : i32, i32, i32
  }
  func.func @transform_11(%arg0: i32) -> (i32, i32, i32) {
    %c0_i32 = arith.constant 0 : i32
    %c0_i32_0 = arith.constant 0 : i32
    %c0_i32_1 = arith.constant 0 : i32
    %c0_i32_2 = arith.constant 0 : i32
    return %c0_i32, %c0_i32_0, %c0_i32_1 : i32, i32, i32
  }
  func.func @transform_12(%arg0: i32) -> (i32, i32, i32) {
    %c0_i32 = arith.constant 0 : i32
    %c0_i32_0 = arith.constant 0 : i32
    %c0_i32_1 = arith.constant 0 : i32
    %c0_i32_2 = arith.constant 0 : i32
    return %c0_i32, %c0_i32_0, %c0_i32_1 : i32, i32, i32
  }
  func.func @transform_13(%arg0: i32) -> (i32, i32, i32) {
    %c0_i32 = arith.constant 0 : i32
    %c0_i32_0 = arith.constant 0 : i32
    %c0_i32_1 = arith.constant 0 : i32
    %c0_i32_2 = arith.constant 0 : i32
    return %c0_i32, %c0_i32_0, %c0_i32_1 : i32, i32, i32
  }
  func.func @transform_14(%arg0: i32) -> (i32, i32) {
    %c0_i32 = arith.constant 0 : i32
    %c0_i32_0 = arith.constant 0 : i32
    %c0_i32_1 = arith.constant 0 : i32
    return %c0_i32, %c0_i32_0 : i32, i32
  }
  func.func @transform_15(%arg0: i32) -> (i32, i32) {
    %c0_i32 = arith.constant 0 : i32
    %c0_i32_0 = arith.constant 0 : i32
    %c0_i32_1 = arith.constant 0 : i32
    return %c0_i32, %c0_i32_0 : i32, i32
  }
  func.func @transform_16(%arg0: i32) -> (i32, i32) {
    %c0_i32 = arith.constant 0 : i32
    %c0_i32_0 = arith.constant 0 : i32
    %c0_i32_1 = arith.constant 0 : i32
    return %c0_i32, %c0_i32_0 : i32, i32
  }
  func.func @transform_17(%arg0: i32) -> (i32, i32) {
    %c0_i32 = arith.constant 0 : i32
    %c0_i32_0 = arith.constant 0 : i32
    %c0_i32_1 = arith.constant 0 : i32
    return %c0_i32, %c0_i32_0 : i32, i32
  }
  func.func @transform_18(%arg0: i32) -> (i32, i32, i32) {
    %c0_i32 = arith.constant 0 : i32
    %c0_i32_0 = arith.constant 0 : i32
    %c0_i32_1 = arith.constant 0 : i32
    return %arg0, %c0_i32, %c0_i32_0 : i32, i32, i32
  }
}

</mosaic_0001>

<llo_original>
// kernel: tpu_custom_call.1
$region0: #{tpu_custom_call.1}
  #allocation0 [shape = 'u32[]', space=smem, size = 0x4, offset = 0x4, fixed_abs, tag = 'smem constant byte address 0x4 - core index']
  #allocation1 [shape = 'u32[144,128]{1,0:T(1,128)}', space=vmem, size = 0x12000, scoped, tag = 'internal scratch']
  %s0 = inlined_call_operand.vmem [shape: s32[2,4,8], index: 0, kind: input, shape index: {}]
  %s1 = inlined_call_operand.vmem [shape: bf16[128,32], index: 1, kind: input, shape index: {}]
  %s2 = inlined_call_operand.vmem [shape: f32[8,32], index: 2, kind: input, shape index: {}]
  %s3 = inlined_call_operand.vmem [shape: bf16[2,32,96], index: 3, kind: input, shape index: {}]
  %s4 = inlined_call_operand.vmem [shape: bf16[2,32,32], index: 4, kind: input, shape index: {}]
  %s5 = inlined_call_operand.vmem [shape: f32[2,1,32], index: 5, kind: input, shape index: {}]
  %s6 = inlined_call_operand.vmem [shape: bf16[2,32,128], index: 6, kind: input, shape index: {}]
  %s7 = inlined_call_operand.vmem [shape: f32[2,1,128], index: 7, kind: input, shape index: {}]
  %s8 = inlined_call_operand.vmem [shape: bf16[2,128,32], index: 8, kind: input, shape index: {}]
  %s9 = inlined_call_operand.vmem [shape: f32[2,1,32], index: 9, kind: input, shape index: {}]
  %s10 = inlined_call_operand.vmem [shape: f32[2,1,32], index: 10, kind: input, shape index: {}]
  %s11 = inlined_call_operand.vmem [shape: f32[2,1,32], index: 11, kind: input, shape index: {}]
  %s12 = inlined_call_operand.vmem [shape: f32[2,1,32], index: 12, kind: input, shape index: {}]
  %s13 = inlined_call_operand.vmem [shape: f32[2,1,32], index: 13, kind: input, shape index: {}]
  %s14 = inlined_call_operand.vmem [shape: f32[1,32], index: 14, kind: input, shape index: {}]
  %s15 = inlined_call_operand.vmem [shape: f32[1,32], index: 15, kind: input, shape index: {}]
  %s16 = inlined_call_operand.vmem [shape: bf16[32,128], index: 16, kind: input, shape index: {}]
  %s17 = inlined_call_operand.vmem [shape: f32[1,128], index: 17, kind: input, shape index: {}]
  %s18 = inlined_call_operand.hbm [shape: f32[8,8,128], index: 18, kind: output, shape index: {}]
  %s19 = sld [smem:[#allocation0]]
  $region105: #{tpu_custom_call.1} parent=0
    _
  %s21 = ssub.s32 1, %s19
  %s22 = scalar_select 0, %s21, %s19
  $region1: #{tpu_custom_call.1} parent=0
    #allocation2 [shape = 'u8[32768]{0}', space=vmem, size = 0x8000, scoped, tag = 'output window, operand 0']
    #allocation3 [shape = 's32[2]{0}', space=sflag, size = 0x8, scoped, tag = 'scoped memory for tpu_custom_call.1']
    %23 = vsyncpa [#allocation3], 0
    %s24 = scalar_lea.sflag [#allocation3], 1
    %25 = vsyncpa %s24, 0
    loop: start=0, step=1, limit=4
    $region2: #{tpu_custom_call.1} parent=1 // loop_pre_header
      _
    $region3: #{tpu_custom_call.1} parent=1 // loop_header
      %s27 = sphi 0, %s31
      %p28 = scmp.ge.s32.totalorder %s27, 4
      %s37 = sphi 0, %s39
      %s40 = sphi 0, %s37
      %s41 = sphi 0, %s40
      %s57 = sphi 0, %s41
      %s61 = sphi 0, %s61
      %s63 = sphi 0, %s61
      %s64 = sphi 0, %s63
      %s78 = sphi 0, %s64
      %s82 = sphi 0, %s82
      %s84 = sphi 0, %s82
      %s85 = sphi 0, %s84
      %s99 = sphi 0, %s85
      %s103 = sphi 0, %s103
      %s105 = sphi 0, %s103
      %s106 = sphi 0, %s105
      %s120 = sphi 0, %s106
      %s124 = sphi 0, %s124
      %s126 = sphi 0, %s124
      %s127 = sphi 0, %s126
      %s141 = sphi 0, %s127
      %s145 = sphi 0, %s145
      %s147 = sphi 0, %s145
      %s148 = sphi 0, %s147
      %s162 = sphi 0, %s148
      %s166 = sphi 0, %s166
      %s168 = sphi 0, %s166
      %s169 = sphi 0, %s168
      %s183 = sphi 0, %s169
      %s187 = sphi 0, %s187
      %s189 = sphi 0, %s187
      %s190 = sphi 0, %s189
      %s204 = sphi 0, %s190
      %s208 = sphi 0, %s208
      %s210 = sphi 0, %s208
      %s211 = sphi 0, %s210
      %s225 = sphi 0, %s211
      %s229 = sphi 0, %s229
      %s231 = sphi 0, %s229
      %s232 = sphi 0, %s231
      %s246 = sphi 0, %s232
      %s250 = sphi 0, %s250
      %s252 = sphi 0, %s250
      %s253 = sphi 0, %s252
      %s267 = sphi 0, %s253
      %s271 = sphi 0, %s271
      %s273 = sphi 0, %s271
      %s274 = sphi 0, %s273
      %s288 = sphi 0, %s274
      %s292 = sphi 0, %s292
      %s294 = sphi 0, %s292
      %s295 = sphi 0, %s294
      %s309 = sphi 0, %s295
      %s313 = sphi 0, %s313
      %s315 = sphi 0, %s313
      %s316 = sphi 0, %s315
      %s330 = sphi 0, %s316
      %s334 = sphi 0, %s334
      %s336 = sphi 0, %s334
      %s337 = sphi 0, %s336
      %s351 = sphi 0, %s337
      %s355 = sphi 0, %s355
      %s357 = sphi 0, %s355
      %s358 = sphi 0, %s357
      %s372 = sphi 0, %s358
      %s376 = sphi 0, %s376
      %s378 = sphi 0, %s376
      %s379 = sphi 0, %s378
      %s393 = sphi 0, %s379
      %s397 = sphi 0, %s397
      %s399 = sphi 0, %s397
      %s400 = sphi 0, %s399
      %s414 = sphi 0, %s400
      %s420 = sphi 0, %s422
      %s423 = sphi 0, %s420
      %s424 = sphi 0, %s423
      %s440 = sphi 0, %s424
    $region4: #{tpu_custom_call.1} parent=1 // loop_header_branch
      %30 = sbr.rel (%p28) target = $region8
    $region5: #{tpu_custom_call.1} parent=1 // loop_body
      %s32 = ssub.s32 %s27, 1
      %s33 = ssub.s32 %s27, 2
      %s34 = sadd.s32 %s27, 1
      %s35 = ssub.s32 %s27, %s34
      %p36 = scmp.eq.s32.totalorder %s35, 0
      %s38 = sadd.s32 %s37, 1
      %s39 = scalar_select %p36, %s37, %s38
      %p42 = pneg %p36
      %p43 = scmp.eq.s32.totalorder %s27, 1
      %p44 = por %p42, %p43
      %p45 = scmp.ne.s32.totalorder %s37, %s40
      %p46 = scmp.eq.s32.totalorder %s27, 0
      %p47 = por %p45, %p46
      %p48 = scmp.ne.s32.totalorder %s37, %s40
      %p49 = scmp.eq.s32.totalorder %s32, 1
      %p50 = por %p48, %p49
      %p51 = scmp.ne.s32.totalorder %s40, %s41
      %p52 = scmp.eq.s32.totalorder %s32, 0
      %p53 = por %p51, %p52
      %p54 = scmp.ne.s32.totalorder %s40, %s41
      %p55 = scmp.eq.s32.totalorder %s33, 1
      %p56 = por %p54, %p55
      %p58 = scmp.ne.s32.totalorder %s41, %s57
      %p59 = scmp.eq.s32.totalorder %s33, 0
      %p60 = por %p58, %p59
      %s62 = sadd.s32 %s61, 1
      %p65 = scmp.eq.s32.totalorder %s27, 1
      %p66 = scmp.ne.s32.totalorder %s61, %s63
      %p67 = scmp.eq.s32.totalorder %s27, 0
      %p68 = por %p66, %p67
      %p69 = scmp.ne.s32.totalorder %s61, %s63
      %p70 = scmp.eq.s32.totalorder %s32, 1
      %p71 = por %p69, %p70
      %p72 = scmp.ne.s32.totalorder %s63, %s64
      %p73 = scmp.eq.s32.totalorder %s32, 0
      %p74 = por %p72, %p73
      %p75 = scmp.ne.s32.totalorder %s63, %s64
      %p76 = scmp.eq.s32.totalorder %s33, 1
      %p77 = por %p75, %p76
      %p79 = scmp.ne.s32.totalorder %s64, %s78
      %p80 = scmp.eq.s32.totalorder %s33, 0
      %p81 = por %p79, %p80
      %s83 = sadd.s32 %s82, 1
      %p86 = scmp.eq.s32.totalorder %s27, 1
      %p87 = scmp.ne.s32.totalorder %s82, %s84
      %p88 = scmp.eq.s32.totalorder %s27, 0
      %p89 = por %p87, %p88
      %p90 = scmp.ne.s32.totalorder %s82, %s84
      %p91 = scmp.eq.s32.totalorder %s32, 1
      %p92 = por %p90, %p91
      %p93 = scmp.ne.s32.totalorder %s84, %s85
      %p94 = scmp.eq.s32.totalorder %s32, 0
      %p95 = por %p93, %p94
      %p96 = scmp.ne.s32.totalorder %s84, %s85
      %p97 = scmp.eq.s32.totalorder %s33, 1
      %p98 = por %p96, %p97
      %p100 = scmp.ne.s32.totalorder %s85, %s99
      %p101 = scmp.eq.s32.totalorder %s33, 0
      %p102 = por %p100, %p101
      %s104 = sadd.s32 %s103, 1
      %p107 = scmp.eq.s32.totalorder %s27, 1
      %p108 = scmp.ne.s32.totalorder %s103, %s105
      %p109 = scmp.eq.s32.totalorder %s27, 0
      %p110 = por %p108, %p109
      %p111 = scmp.ne.s32.totalorder %s103, %s105
      %p112 = scmp.eq.s32.totalorder %s32, 1
      %p113 = por %p111, %p112
      %p114 = scmp.ne.s32.totalorder %s105, %s106
      %p115 = scmp.eq.s32.totalorder %s32, 0
      %p116 = por %p114, %p115
      %p117 = scmp.ne.s32.totalorder %s105, %s106
      %p118 = scmp.eq.s32.totalorder %s33, 1
      %p119 = por %p117, %p118
      %p121 = scmp.ne.s32.totalorder %s106, %s120
      %p122 = scmp.eq.s32.totalorder %s33, 0
      %p123 = por %p121, %p122
      %s125 = sadd.s32 %s124, 1
      %p128 = scmp.eq.s32.totalorder %s27, 1
      %p129 = scmp.ne.s32.totalorder %s124, %s126
      %p130 = scmp.eq.s32.totalorder %s27, 0
      %p131 = por %p129, %p130
      %p132 = scmp.ne.s32.totalorder %s124, %s126
      %p133 = scmp.eq.s32.totalorder %s32, 1
      %p134 = por %p132, %p133
      %p135 = scmp.ne.s32.totalorder %s126, %s127
      %p136 = scmp.eq.s32.totalorder %s32, 0
      %p137 = por %p135, %p136
      %p138 = scmp.ne.s32.totalorder %s126, %s127
      %p139 = scmp.eq.s32.totalorder %s33, 1
      %p140 = por %p138, %p139
      %p142 = scmp.ne.s32.totalorder %s127, %s141
      %p143 = scmp.eq.s32.totalorder %s33, 0
      %p144 = por %p142, %p143
      %s146 = sadd.s32 %s145, 1
      %p149 = scmp.eq.s32.totalorder %s27, 1
      %p150 = scmp.ne.s32.totalorder %s145, %s147
      %p151 = scmp.eq.s32.totalorder %s27, 0
      %p152 = por %p150, %p151
      %p153 = scmp.ne.s32.totalorder %s145, %s147
      %p154 = scmp.eq.s32.totalorder %s32, 1
      %p155 = por %p153, %p154
      %p156 = scmp.ne.s32.totalorder %s147, %s148
      %p157 = scmp.eq.s32.totalorder %s32, 0
      %p158 = por %p156, %p157
      %p159 = scmp.ne.s32.totalorder %s147, %s148
      %p160 = scmp.eq.s32.totalorder %s33, 1
      %p161 = por %p159, %p160
      %p163 = scmp.ne.s32.totalorder %s148, %s162
      %p164 = scmp.eq.s32.totalorder %s33, 0
      %p165 = por %p163, %p164
      %s167 = sadd.s32 %s166, 1
      %p170 = scmp.eq.s32.totalorder %s27, 1
      %p171 = scmp.ne.s32.totalorder %s166, %s168
      %p172 = scmp.eq.s32.totalorder %s27, 0
      %p173 = por %p171, %p172
      %p174 = scmp.ne.s32.totalorder %s166, %s168
      %p175 = scmp.eq.s32.totalorder %s32, 1
      %p176 = por %p174, %p175
      %p177 = scmp.ne.s32.totalorder %s168, %s169
      %p178 = scmp.eq.s32.totalorder %s32, 0
      %p179 = por %p177, %p178
      %p180 = scmp.ne.s32.totalorder %s168, %s169
      %p181 = scmp.eq.s32.totalorder %s33, 1
      %p182 = por %p180, %p181
      %p184 = scmp.ne.s32.totalorder %s169, %s183
      %p185 = scmp.eq.s32.totalorder %s33, 0
      %p186 = por %p184, %p185
      %s188 = sadd.s32 %s187, 1
      %p191 = scmp.eq.s32.totalorder %s27, 1
      %p192 = scmp.ne.s32.totalorder %s187, %s189
      %p193 = scmp.eq.s32.totalorder %s27, 0
      %p194 = por %p192, %p193
      %p195 = scmp.ne.s32.totalorder %s187, %s189
      %p196 = scmp.eq.s32.totalorder %s32, 1
      %p197 = por %p195, %p196
      %p198 = scmp.ne.s32.totalorder %s189, %s190
      %p199 = scmp.eq.s32.totalorder %s32, 0
      %p200 = por %p198, %p199
      %p201 = scmp.ne.s32.totalorder %s189, %s190
      %p202 = scmp.eq.s32.totalorder %s33, 1
      %p203 = por %p201, %p202
      %p205 = scmp.ne.s32.totalorder %s190, %s204
      %p206 = scmp.eq.s32.totalorder %s33, 0
      %p207 = por %p205, %p206
      %s209 = sadd.s32 %s208, 1
      %p212 = scmp.eq.s32.totalorder %s27, 1
      %p213 = scmp.ne.s32.totalorder %s208, %s210
      %p214 = scmp.eq.s32.totalorder %s27, 0
      %p215 = por %p213, %p214
      %p216 = scmp.ne.s32.totalorder %s208, %s210
      %p217 = scmp.eq.s32.totalorder %s32, 1
      %p218 = por %p216, %p217
      %p219 = scmp.ne.s32.totalorder %s210, %s211
      %p220 = scmp.eq.s32.totalorder %s32, 0
      %p221 = por %p219, %p220
      %p222 = scmp.ne.s32.totalorder %s210, %s211
      %p223 = scmp.eq.s32.totalorder %s33, 1
      %p224 = por %p222, %p223
      %p226 = scmp.ne.s32.totalorder %s211, %s225
      %p227 = scmp.eq.s32.totalorder %s33, 0
      %p228 = por %p226, %p227
      %s230 = sadd.s32 %s229, 1
      %p233 = scmp.eq.s32.totalorder %s27, 1
      %p234 = scmp.ne.s32.totalorder %s229, %s231
      %p235 = scmp.eq.s32.totalorder %s27, 0
      %p236 = por %p234, %p235
      %p237 = scmp.ne.s32.totalorder %s229, %s231
      %p238 = scmp.eq.s32.totalorder %s32, 1
      %p239 = por %p237, %p238
      %p240 = scmp.ne.s32.totalorder %s231, %s232
      %p241 = scmp.eq.s32.totalorder %s32, 0
      %p242 = por %p240, %p241
      %p243 = scmp.ne.s32.totalorder %s231, %s232
      %p244 = scmp.eq.s32.totalorder %s33, 1
      %p245 = por %p243, %p244
      %p247 = scmp.ne.s32.totalorder %s232, %s246
      %p248 = scmp.eq.s32.totalorder %s33, 0
      %p249 = por %p247, %p248
      %s251 = sadd.s32 %s250, 1
      %p254 = scmp.eq.s32.totalorder %s27, 1
      %p255 = scmp.ne.s32.totalorder %s250, %s252
      %p256 = scmp.eq.s32.totalorder %s27, 0
      %p257 = por %p255, %p256
      %p258 = scmp.ne.s32.totalorder %s250, %s252
      %p259 = scmp.eq.s32.totalorder %s32, 1
      %p260 = por %p258, %p259
      %p261 = scmp.ne.s32.totalorder %s252, %s253
      %p262 = scmp.eq.s32.totalorder %s32, 0
      %p263 = por %p261, %p262
      %p264 = scmp.ne.s32.totalorder %s252, %s253
      %p265 = scmp.eq.s32.totalorder %s33, 1
      %p266 = por %p264, %p265
      %p268 = scmp.ne.s32.totalorder %s253, %s267
      %p269 = scmp.eq.s32.totalorder %s33, 0
      %p270 = por %p268, %p269
      %s272 = sadd.s32 %s271, 1
      %p275 = scmp.eq.s32.totalorder %s27, 1
      %p276 = scmp.ne.s32.totalorder %s271, %s273
      %p277 = scmp.eq.s32.totalorder %s27, 0
      %p278 = por %p276, %p277
      %p279 = scmp.ne.s32.totalorder %s271, %s273
      %p280 = scmp.eq.s32.totalorder %s32, 1
      %p281 = por %p279, %p280
      %p282 = scmp.ne.s32.totalorder %s273, %s274
      %p283 = scmp.eq.s32.totalorder %s32, 0
      %p284 = por %p282, %p283
      %p285 = scmp.ne.s32.totalorder %s273, %s274
      %p286 = scmp.eq.s32.totalorder %s33, 1
      %p287 = por %p285, %p286
      %p289 = scmp.ne.s32.totalorder %s274, %s288
      %p290 = scmp.eq.s32.totalorder %s33, 0
      %p291 = por %p289, %p290
      %s293 = sadd.s32 %s292, 1
      %p296 = scmp.eq.s32.totalorder %s27, 1
      %p297 = scmp.ne.s32.totalorder %s292, %s294
      %p298 = scmp.eq.s32.totalorder %s27, 0
      %p299 = por %p297, %p298
      %p300 = scmp.ne.s32.totalorder %s292, %s294
      %p301 = scmp.eq.s32.totalorder %s32, 1
      %p302 = por %p300, %p301
      %p303 = scmp.ne.s32.totalorder %s294, %s295
      %p304 = scmp.eq.s32.totalorder %s32, 0
      %p305 = por %p303, %p304
      %p306 = scmp.ne.s32.totalorder %s294, %s295
      %p307 = scmp.eq.s32.totalorder %s33, 1
      %p308 = por %p306, %p307
      %p310 = scmp.ne.s32.totalorder %s295, %s309
      %p311 = scmp.eq.s32.totalorder %s33, 0
      %p312 = por %p310, %p311
      %s314 = sadd.s32 %s313, 1
      %p317 = scmp.eq.s32.totalorder %s27, 1
      %p318 = scmp.ne.s32.totalorder %s313, %s315
      %p319 = scmp.eq.s32.totalorder %s27, 0
      %p320 = por %p318, %p319
      %p321 = scmp.ne.s32.totalorder %s313, %s315
      %p322 = scmp.eq.s32.totalorder %s32, 1
      %p323 = por %p321, %p322
      %p324 = scmp.ne.s32.totalorder %s315, %s316
      %p325 = scmp.eq.s32.totalorder %s32, 0
      %p326 = por %p324, %p325
      %p327 = scmp.ne.s32.totalorder %s315, %s316
      %p328 = scmp.eq.s32.totalorder %s33, 1
      %p329 = por %p327, %p328
      %p331 = scmp.ne.s32.totalorder %s316, %s330
      %p332 = scmp.eq.s32.totalorder %s33, 0
      %p333 = por %p331, %p332
      %s335 = sadd.s32 %s334, 1
      %p338 = scmp.eq.s32.totalorder %s27, 1
      %p339 = scmp.ne.s32.totalorder %s334, %s336
      %p340 = scmp.eq.s32.totalorder %s27, 0
      %p341 = por %p339, %p340
      %p342 = scmp.ne.s32.totalorder %s334, %s336
      %p343 = scmp.eq.s32.totalorder %s32, 1
      %p344 = por %p342, %p343
      %p345 = scmp.ne.s32.totalorder %s336, %s337
      %p346 = scmp.eq.s32.totalorder %s32, 0
      %p347 = por %p345, %p346
      %p348 = scmp.ne.s32.totalorder %s336, %s337
      %p349 = scmp.eq.s32.totalorder %s33, 1
      %p350 = por %p348, %p349
      %p352 = scmp.ne.s32.totalorder %s337, %s351
      %p353 = scmp.eq.s32.totalorder %s33, 0
      %p354 = por %p352, %p353
      %s356 = sadd.s32 %s355, 1
      %p359 = scmp.eq.s32.totalorder %s27, 1
      %p360 = scmp.ne.s32.totalorder %s355, %s357
      %p361 = scmp.eq.s32.totalorder %s27, 0
      %p362 = por %p360, %p361
      %p363 = scmp.ne.s32.totalorder %s355, %s357
      %p364 = scmp.eq.s32.totalorder %s32, 1
      %p365 = por %p363, %p364
      %p366 = scmp.ne.s32.totalorder %s357, %s358
      %p367 = scmp.eq.s32.totalorder %s32, 0
      %p368 = por %p366, %p367
      %p369 = scmp.ne.s32.totalorder %s357, %s358
      %p370 = scmp.eq.s32.totalorder %s33, 1
      %p371 = por %p369, %p370
      %p373 = scmp.ne.s32.totalorder %s358, %s372
      %p374 = scmp.eq.s32.totalorder %s33, 0
      %p375 = por %p373, %p374
      %s377 = sadd.s32 %s376, 1
      %p380 = scmp.eq.s32.totalorder %s27, 1
      %p381 = scmp.ne.s32.totalorder %s376, %s378
      %p382 = scmp.eq.s32.totalorder %s27, 0
      %p383 = por %p381, %p382
      %p384 = scmp.ne.s32.totalorder %s376, %s378
      %p385 = scmp.eq.s32.totalorder %s32, 1
      %p386 = por %p384, %p385
      %p387 = scmp.ne.s32.totalorder %s378, %s379
      %p388 = scmp.eq.s32.totalorder %s32, 0
      %p389 = por %p387, %p388
      %p390 = scmp.ne.s32.totalorder %s378, %s379
      %p391 = scmp.eq.s32.totalorder %s33, 1
      %p392 = por %p390, %p391
      %p394 = scmp.ne.s32.totalorder %s379, %s393
      %p395 = scmp.eq.s32.totalorder %s33, 0
      %p396 = por %p394, %p395
      %s398 = sadd.s32 %s397, 1
      %p401 = scmp.eq.s32.totalorder %s27, 1
      %p402 = scmp.ne.s32.totalorder %s397, %s399
      %p403 = scmp.eq.s32.totalorder %s27, 0
      %p404 = por %p402, %p403
      %p405 = scmp.ne.s32.totalorder %s397, %s399
      %p406 = scmp.eq.s32.totalorder %s32, 1
      %p407 = por %p405, %p406
      %p408 = scmp.ne.s32.totalorder %s399, %s400
      %p409 = scmp.eq.s32.totalorder %s32, 0
      %p410 = por %p408, %p409
      %p411 = scmp.ne.s32.totalorder %s399, %s400
      %p412 = scmp.eq.s32.totalorder %s33, 1
      %p413 = por %p411, %p412
      %p415 = scmp.ne.s32.totalorder %s400, %s414
      %p416 = scmp.eq.s32.totalorder %s33, 0
      %p417 = por %p415, %p416
      %s418 = ssub.s32 %s27, %s34
      %p419 = scmp.eq.s32.totalorder %s418, 0
      %s421 = sadd.s32 %s420, 1
      %s422 = scalar_select %p419, %s420, %s421
      %p425 = pneg %p419
      %p426 = scmp.eq.s32.totalorder %s27, 1
      %p427 = por %p425, %p426
      %p428 = scmp.ne.s32.totalorder %s420, %s423
      %p429 = scmp.eq.s32.totalorder %s27, 0
      %p430 = por %p428, %p429
      %p431 = scmp.ne.s32.totalorder %s420, %s423
      %p432 = scmp.eq.s32.totalorder %s32, 1
      %p433 = por %p431, %p432
      %p434 = scmp.ne.s32.totalorder %s423, %s424
      %p435 = scmp.eq.s32.totalorder %s32, 0
      %p436 = por %p434, %p435
      %p437 = scmp.ne.s32.totalorder %s423, %s424
      %p438 = scmp.eq.s32.totalorder %s33, 1
      %p439 = por %p437, %p438
      %p441 = scmp.ne.s32.totalorder %s424, %s440
      %p442 = scmp.eq.s32.totalorder %s33, 0
      %p443 = por %p441, %p442
      %p444 = scmp.le.s32.totalorder 1, %s27
      %p445 = scmp.lt.s32.totalorder %s27, 3
      %p446 = pnand %p444, %p445
      %p447 = pneg %p446
      // Predicated region
      $region9: #{tpu_custom_call.1} parent=5 // pred_check
        _
      $region10: #{tpu_custom_call.1} parent=5 // pred_check_branch
        %449 = sbr.rel (%p446) target = $region12
      $region11: #{tpu_custom_call.1} parent=5 // pred_region
        %s450 = ssub.s32 %s27, 1
        // Predicated region
        $region13: #{tpu_custom_call.1} parent=11 // pred_check
          %p451 = pneg %p74
        $region14: #{tpu_custom_call.1} parent=11 // pred_check_branch
          %453 = sbr.rel (%p451) target = $region16
        $region15: #{tpu_custom_call.1} parent=11 // pred_region
          _
        $region16: #{tpu_custom_call.1} parent=11 // pred_fallthru
          _
        // Predicated region
        $region17: #{tpu_custom_call.1} parent=11 // pred_check
          %p454 = pneg %p95
        $region18: #{tpu_custom_call.1} parent=11 // pred_check_branch
          %456 = sbr.rel (%p454) target = $region20
        $region19: #{tpu_custom_call.1} parent=11 // pred_region
          _
        $region20: #{tpu_custom_call.1} parent=11 // pred_fallthru
          _
        // Predicated region
        $region21: #{tpu_custom_call.1} parent=11 // pred_check
          %p457 = pneg %p116
        $region22: #{tpu_custom_call.1} parent=11 // pred_check_branch
          %459 = sbr.rel (%p457) target = $region24
        $region23: #{tpu_custom_call.1} parent=11 // pred_region
          _
        $region24: #{tpu_custom_call.1} parent=11 // pred_fallthru
          _
        // Predicated region
        $region25: #{tpu_custom_call.1} parent=11 // pred_check
          %p460 = pneg %p137
        $region26: #{tpu_custom_call.1} parent=11 // pred_check_branch
          %462 = sbr.rel (%p460) target = $region28
        $region27: #{tpu_custom_call.1} parent=11 // pred_region
          _
        $region28: #{tpu_custom_call.1} parent=11 // pred_fallthru
          _
        // Predicated region
        $region29: #{tpu_custom_call.1} parent=11 // pred_check
          %p463 = pneg %p158
        $region30: #{tpu_custom_call.1} parent=11 // pred_check_branch
          %465 = sbr.rel (%p463) target = $region32
        $region31: #{tpu_custom_call.1} parent=11 // pred_region
          _
        $region32: #{tpu_custom_call.1} parent=11 // pred_fallthru
          _
        // Predicated region
        $region33: #{tpu_custom_call.1} parent=11 // pred_check
          %p466 = pneg %p179
        $region34: #{tpu_custom_call.1} parent=11 // pred_check_branch
          %468 = sbr.rel (%p466) target = $region36
        $region35: #{tpu_custom_call.1} parent=11 // pred_region
          _
        $region36: #{tpu_custom_call.1} parent=11 // pred_fallthru
          _
        // Predicated region
        $region37: #{tpu_custom_call.1} parent=11 // pred_check
          %p469 = pneg %p200
        $region38: #{tpu_custom_call.1} parent=11 // pred_check_branch
          %471 = sbr.rel (%p469) target = $region40
        $region39: #{tpu_custom_call.1} parent=11 // pred_region
          _
        $region40: #{tpu_custom_call.1} parent=11 // pred_fallthru
          _
        // Predicated region
        $region41: #{tpu_custom_call.1} parent=11 // pred_check
          %p472 = pneg %p221
        $region42: #{tpu_custom_call.1} parent=11 // pred_check_branch
          %474 = sbr.rel (%p472) target = $region44
        $region43: #{tpu_custom_call.1} parent=11 // pred_region
          _
        $region44: #{tpu_custom_call.1} parent=11 // pred_fallthru
          _
        // Predicated region
        $region45: #{tpu_custom_call.1} parent=11 // pred_check
          %p475 = pneg %p242
        $region46: #{tpu_custom_call.1} parent=11 // pred_check_branch
          %477 = sbr.rel (%p475) target = $region48
        $region47: #{tpu_custom_call.1} parent=11 // pred_region
          _
        $region48: #{tpu_custom_call.1} parent=11 // pred_fallthru
          _
        // Predicated region
        $region49: #{tpu_custom_call.1} parent=11 // pred_check
          %p478 = pneg %p263
        $region50: #{tpu_custom_call.1} parent=11 // pred_check_branch
          %480 = sbr.rel (%p478) target = $region52
        $region51: #{tpu_custom_call.1} parent=11 // pred_region
          _
        $region52: #{tpu_custom_call.1} parent=11 // pred_fallthru
          _
        // Predicated region
        $region53: #{tpu_custom_call.1} parent=11 // pred_check
          %p481 = pneg %p284
        $region54: #{tpu_custom_call.1} parent=11 // pred_check_branch
          %483 = sbr.rel (%p481) target = $region56
        $region55: #{tpu_custom_call.1} parent=11 // pred_region
          _
        $region56: #{tpu_custom_call.1} parent=11 // pred_fallthru
          _
        // Predicated region
        $region57: #{tpu_custom_call.1} parent=11 // pred_check
          %p484 = pneg %p305
        $region58: #{tpu_custom_call.1} parent=11 // pred_check_branch
          %486 = sbr.rel (%p484) target = $region60
        $region59: #{tpu_custom_call.1} parent=11 // pred_region
          _
        $region60: #{tpu_custom_call.1} parent=11 // pred_fallthru
          _
        // Predicated region
        $region61: #{tpu_custom_call.1} parent=11 // pred_check
          %p487 = pneg %p326
        $region62: #{tpu_custom_call.1} parent=11 // pred_check_branch
          %489 = sbr.rel (%p487) target = $region64
        $region63: #{tpu_custom_call.1} parent=11 // pred_region
          _
        $region64: #{tpu_custom_call.1} parent=11 // pred_fallthru
          _
        // Predicated region
        $region65: #{tpu_custom_call.1} parent=11 // pred_check
          %p490 = pneg %p347
        $region66: #{tpu_custom_call.1} parent=11 // pred_check_branch
          %492 = sbr.rel (%p490) target = $region68
        $region67: #{tpu_custom_call.1} parent=11 // pred_region
          _
        $region68: #{tpu_custom_call.1} parent=11 // pred_fallthru
          _
        // Predicated region
        $region69: #{tpu_custom_call.1} parent=11 // pred_check
          %p493 = pneg %p368
        $region70: #{tpu_custom_call.1} parent=11 // pred_check_branch
          %495 = sbr.rel (%p493) target = $region72
        $region71: #{tpu_custom_call.1} parent=11 // pred_region
          _
        $region72: #{tpu_custom_call.1} parent=11 // pred_fallthru
          _
        // Predicated region
        $region73: #{tpu_custom_call.1} parent=11 // pred_check
          %p496 = pneg %p389
        $region74: #{tpu_custom_call.1} parent=11 // pred_check_branch
          %498 = sbr.rel (%p496) target = $region76
        $region75: #{tpu_custom_call.1} parent=11 // pred_region
          _
        $region76: #{tpu_custom_call.1} parent=11 // pred_fallthru
          _
        // Predicated region
        $region77: #{tpu_custom_call.1} parent=11 // pred_check
          %p499 = pneg %p410
        $region78: #{tpu_custom_call.1} parent=11 // pred_check_branch
          %501 = sbr.rel (%p499) target = $region80
        $region79: #{tpu_custom_call.1} parent=11 // pred_region
          _
        $region80: #{tpu_custom_call.1} parent=11 // pred_fallthru
          _
      $region12: #{tpu_custom_call.1} parent=5 // pred_fallthru
        _
      %p502 = scmp.lt.s32.totalorder %s27, 2
      // Predicated region
      $region81: #{tpu_custom_call.1} parent=5 // pred_check
        %p503 = pneg %p502
      $region82: #{tpu_custom_call.1} parent=5 // pred_check_branch
        %505 = sbr.rel (%p503) target = $region84
      $region83: #{tpu_custom_call.1} parent=5 // pred_region
        // Predicated region
        $region85: #{tpu_custom_call.1} parent=83 // pred_check
          %p506 = pneg %p47
        $region86: #{tpu_custom_call.1} parent=83 // pred_check_branch
          %508 = sbr.rel (%p506) target = $region88
        $region87: #{tpu_custom_call.1} parent=83 // pred_region
          %p509 = scmp.lt.s32.totalorder %s27, 1
          %s510 = scalar_select %p509, %s27, 1
          %s511 = smul.addr %s510, 4
          %s512 = scalar_lea.vmem %s0, %s511
        $region88: #{tpu_custom_call.1} parent=83 // pred_fallthru
          _
      $region84: #{tpu_custom_call.1} parent=5 // pred_fallthru
        _
      %p513 = scmp.le.s32.totalorder 1, %s27
      %p514 = scmp.lt.s32.totalorder %s27, 3
      %p515 = pnand %p513, %p514
      %p516 = pneg %p515
      // Predicated region
      $region89: #{tpu_custom_call.1} parent=5 // pred_check
        _
      $region90: #{tpu_custom_call.1} parent=5 // pred_check_branch
        %518 = sbr.rel (%p515) target = $region92
      $region91: #{tpu_custom_call.1} parent=5 // pred_region
        %s519 = ssub.s32 %s27, 1
        %p520 = scmp.lt.s32.totalorder %s32, 1
        %s521 = scalar_select %p520, %s32, 1
        %s522 = smul.addr %s521, 4
        %s523 = scalar_lea.vmem %s0, %s522
        %p524 = pneg %p53
        %p525 = pneg %p50
        %p526 = pneg %p74
        %p527 = pneg %p71
        %p528 = pneg %p95
        %p529 = pneg %p92
        %p530 = pneg %p116
        %p531 = pneg %p113
        %p532 = pneg %p137
        %p533 = pneg %p134
        %p534 = pneg %p158
        %p535 = pneg %p155
        %p536 = pneg %p179
        %p537 = pneg %p176
        %p538 = pneg %p200
        %p539 = pneg %p197
        %p540 = pneg %p221
        %p541 = pneg %p218
        %p542 = pneg %p242
        %p543 = pneg %p239
        %p544 = pneg %p263
        %p545 = pneg %p260
        %p546 = pneg %p284
        %p547 = pneg %p281
        %p548 = pneg %p305
        %p549 = pneg %p302
        %p550 = pneg %p326
        %p551 = pneg %p323
        %p552 = pneg %p347
        %p553 = pneg %p344
        %p554 = pneg %p368
        %p555 = pneg %p365
        %p556 = pneg %p389
        %p557 = pneg %p386
        %p558 = pneg %p410
        %p559 = pneg %p407
        %p560 = pneg %p436
        %p561 = pneg %p433
        %s562 = sand.u32 %s423, 1
        %s563 = scalar_lea.sflag [#allocation3], %s562
        %s564 = sand.u32 %s423, 1
        %s565 = smul.addr %s564, 32
        %s566 = scalar_lea.vmem [#allocation2], %s565
        %p567 = scmp.lt.s32.totalorder %s32, 1
        %s568 = scalar_select %p567, %s32, 1
        %s569 = smul.addr %s568, 4
        %s570 = scalar_lea.vmem %s0, %s569
        %s571 = smul.u32 4, %s32
        %v573 = vld [vmem:[%s570] sm:$0xf]
        %v574 = vlaneseq
        %v575 = vand.u32 %v574, 127
        %v576 = vlaneseq
        %v577 = vshrl.u32 %v576, 7
        %v578 = vsub.s32 0, %v577
        %v579 = vrot.slane %v573, %v578
        %581 = vbcast.lane.b32.xlu0 %v579, 256
        %v582 = vpop.permute.xlu0 %581
        %v583 = vlaneseq
        %v584 = vshrl.u32 %v583, 7
        %v585 = vsub.s32 1, %v584
        %v586 = vrot.slane %v573, %v585
        %588 = vbcast.lane.b32.xlu0 %v586, 256
        %v589 = vpop.permute.xlu0 %588
        %v590 = vlaneseq
        %v591 = vshrl.u32 %v590, 7
        %v592 = vsub.s32 2, %v591
        %v593 = vrot.slane %v573, %v592
        %595 = vbcast.lane.b32.xlu0 %v593, 256
        %v596 = vpop.permute.xlu0 %595
        %v597 = vlaneseq
        %v598 = vshrl.u32 %v597, 7
        %v599 = vsub.s32 3, %v598
        %v600 = vrot.slane %v573, %v599
        %602 = vbcast.lane.b32.xlu0 %v600, 256
        %v603 = vpop.permute.xlu0 %602
        %vm604 = vcmp.eq.s32.totalorder %v575, %v582
        %vm605 = vcmp.eq.s32.totalorder %v575, %v589
        %vm606 = vcmp.eq.s32.totalorder %v575, %v596
        %vm607 = vcmp.eq.s32.totalorder %v575, %v603
        %v608 = vsel %vm604, 1.0, 0.0
        %v609 = vsel %vm605, 1.0, 0.0
        %v610 = vsel %vm606, 1.0, 0.0
        %v611 = vsel %vm607, 1.0, 0.0
        %v612 = vpack.c.bf16 %v609, %v608
        %v613 = vpack.c.bf16 %v611, %v610
        %v614 = vld [vmem:[%s1] sm:$0xf]
        %v615 = vld [vmem:[%s1 + $0x4] sm:$0xf]
        %v616 = vld [vmem:[%s1 + $0x8] sm:$0xf]
        %v617 = vld [vmem:[%s1 + $0xc] sm:$0xf]
        %v618 = vld [vmem:[%s1 + $0x10] sm:$0xf]
        %v619 = vld [vmem:[%s1 + $0x14] sm:$0xf]
        %v620 = vld [vmem:[%s1 + $0x18] sm:$0xf]
        %v621 = vld [vmem:[%s1 + $0x1c] sm:$0xf]
        %v622 = vld [vmem:[%s1 + $0x20] sm:$0xf]
        %v623 = vld [vmem:[%s1 + $0x24] sm:$0xf]
        %v624 = vld [vmem:[%s1 + $0x28] sm:$0xf]
        %v625 = vld [vmem:[%s1 + $0x2c] sm:$0xf]
        %v626 = vld [vmem:[%s1 + $0x30] sm:$0xf]
        %v627 = vld [vmem:[%s1 + $0x34] sm:$0xf]
        %v628 = vld [vmem:[%s1 + $0x38] sm:$0xf]
        %v629 = vld [vmem:[%s1 + $0x3c] sm:$0xf]
        %v630 = vld [vmem:[%s2] sm:$0xff]
        %v647 = vunpack.c.l.b16 %v614
        %v648 = vunpack.c.l.b16 %v615
        %v649 = vunpack.c.l.b16 %v616
        %v650 = vunpack.c.l.b16 %v617
        %v651 = vunpack.c.l.b16 %v618
        %v652 = vunpack.c.l.b16 %v619
        %v653 = vunpack.c.l.b16 %v620
        %v654 = vunpack.c.l.b16 %v621
        %v655 = vunpack.c.l.b16 %v622
        %v656 = vunpack.c.l.b16 %v623
        %v657 = vunpack.c.l.b16 %v624
        %v658 = vunpack.c.l.b16 %v625
        %v659 = vunpack.c.l.b16 %v626
        %v660 = vunpack.c.l.b16 %v627
        %v661 = vunpack.c.l.b16 %v628
        %v662 = vunpack.c.l.b16 %v629
        %v663 = vpack.c.b16 %v648, %v647
        %v664 = vpack.c.b16 %v650, %v649
        %v665 = vpack.c.b16 %v652, %v651
        %v666 = vpack.c.b16 %v654, %v653
        %v667 = vpack.c.b16 %v656, %v655
        %v668 = vpack.c.b16 %v658, %v657
        %v669 = vpack.c.b16 %v660, %v659
        %v670 = vpack.c.b16 %v662, %v661
        %679 = vmatprep.subr.bf16.mxu0 0
        %680 = vmatpush1.bf16.msra.mxu0 %v670
        %681 = vmatprep.subr.bf16.mxu0 0
        %682 = vmatpush1.bf16.msra.mxu0 %v669
        %683 = vmatprep.subr.bf16.mxu0 0
        %684 = vmatpush1.bf16.msra.mxu0 %v668
        %685 = vmatprep.subr.bf16.mxu0 0
        %686 = vmatpush1.bf16.msra.mxu0 %v667
        %687 = vmatprep.subr.bf16.mxu0 0
        %688 = vmatpush1.bf16.msra.mxu0 %v666
        %689 = vmatprep.subr.bf16.mxu0 0
        %690 = vmatpush1.bf16.msra.mxu0 %v665
        %691 = vmatprep.subr.bf16.mxu0 0
        %692 = vmatpush1.bf16.msra.mxu0 %v664
        %693 = vmatprep.subr.bf16.mxu0 0
        %694 = vmatpush1.bf16.msra.mxu0 %v663
        %695 = vmatprep.subr.bf16.mxu0 0
        %696 = vmatpush2.bf16.msra.mxu0 0
        %697 = vmatprep.subr.bf16.mxu0 0
        %698 = vmatpush2.bf16.msra.mxu0 0
        %699 = vmatprep.subr.bf16.mxu0 0
        %700 = vmatpush2.bf16.msra.mxu0 0
        %701 = vmatprep.subr.bf16.mxu0 0
        %702 = vmatpush2.bf16.msra.mxu0 0
        %703 = vmatprep.subr.bf16.mxu0 0
        %704 = vmatpush2.bf16.msra.mxu0 0
        %705 = vmatprep.subr.bf16.mxu0 0
        %706 = vmatpush2.bf16.msra.mxu0 0
        %707 = vmatprep.subr.bf16.mxu0 0
        %708 = vmatpush2.bf16.msra.mxu0 0
        %709 = vmatprep.subr.bf16.mxu0 0
        %710 = vmatpush2.bf16.msra.mxu0 0
        %711 = vmatprep.mubr.bf16.mxu0 0
        %712 = vmatmul.mubr.bf16.gmra.mxu0 %v612
        %v713 = vpop.f32.mrf.mxu0
        %v714 = vadd.f32 %v630, %v713
        %v715 = vpop.f32.mrf.mxu0
        %v716 = vpop.f32.mrf.mxu0
        %v717 = vadd.f32 %v630, %v716
        %v718 = vpop.f32.mrf.mxu0
        %719 = vmatprep.mubr.bf16.mxu0 0
        %720 = vmatmul.mubr.bf16.gmra.mxu0 %v613
        %v721 = vpop.f32.mrf.mxu0
        %v722 = vadd.f32 %v630, %v721
        %v723 = vpop.f32.mrf.mxu0
        %v724 = vpop.f32.mrf.mxu0
        %v725 = vadd.f32 %v630, %v724
        %v726 = vpop.f32.mrf.mxu0
        %727 = vdwg.mxu0
        %v728 = vlaneseq
        %v729 = vshrl.u32 %v728, 7
        %vm730 = vcmp.ge.s32.totalorder %v729, %v575
        %v731 = vld [vmem:[%s10] sm:$0x1]
        %v732 = vld [vmem:[%s11] sm:$0x1]
        %vm733 = vcmask 261120
        %v734 = vsel %vm733, %v714, 0.0
        %735 = vadd.xlane.f32.xlu0 %v734
        %v736 = vpop.xlane.xlu0 %735
        %v737 = vsel %vm733, %v717, 0.0
        %738 = vadd.xlane.f32.xlu0 %v737
        %v739 = vpop.xlane.xlu0 %738
        %v740 = vsel %vm733, %v722, 0.0
        %741 = vadd.xlane.f32.xlu0 %v740
        %v742 = vpop.xlane.xlu0 %741
        %v743 = vsel %vm733, %v725, 0.0
        %744 = vadd.xlane.f32.xlu0 %v743
        %v745 = vpop.xlane.xlu0 %744
        %v746 = vrcp.pop 32.0
        %v747 = vmul.f32 %v736, %v746
        %v748 = vmul.f32 %v739, %v746
        %v749 = vmul.f32 %v742, %v746
        %v750 = vmul.f32 %v745, %v746
        %v751 = vsub.f32 %v714, %v747
        %v752 = vsub.f32 %v717, %v748
        %v753 = vsub.f32 %v722, %v749
        %v754 = vsub.f32 %v725, %v750
        %v755 = vmul.f32 %v751, %v751
        %v756 = vmul.f32 %v752, %v752
        %v757 = vmul.f32 %v753, %v753
        %v758 = vmul.f32 %v754, %v754
        %v759 = vsel %vm733, %v755, 0.0
        %760 = vadd.xlane.f32.xlu0 %v759
        %v761 = vpop.xlane.xlu0 %760
        %v762 = vsel %vm733, %v756, 0.0
        %763 = vadd.xlane.f32.xlu0 %v762
        %v764 = vpop.xlane.xlu0 %763
        %v765 = vsel %vm733, %v757, 0.0
        %766 = vadd.xlane.f32.xlu0 %v765
        %v767 = vpop.xlane.xlu0 %766
        %v768 = vsel %vm733, %v758, 0.0
        %769 = vadd.xlane.f32.xlu0 %v768
        %v770 = vpop.xlane.xlu0 %769
        %v771 = vmul.f32 %v761, %v746
        %v772 = vmul.f32 %v764, %v746
        %v773 = vmul.f32 %v767, %v746
        %v774 = vmul.f32 %v770, %v746
        %v775 = vadd.f32 %v771, 1e-05
        %v776 = vadd.f32 %v772, 1e-05
        %v777 = vadd.f32 %v773, 1e-05
        %v778 = vadd.f32 %v774, 1e-05
        %v779 = vrsqrt.pop %v775
        %v780 = vrsqrt.pop %v776
        %v781 = vrsqrt.pop %v777
        %v782 = vrsqrt.pop %v778
        %v783 = vmul.f32 %v751, %v779
        %v784 = vmul.f32 %v752, %v780
        %v785 = vmul.f32 %v753, %v781
        %v786 = vmul.f32 %v754, %v782
        %v788 = vlaneseq
        %v789 = vshrl.u32 %v788, 7
        %v790 = vsub.s32 0, %v789
        %v791 = vrot.slane %v731, %v790
        %v793 = vmul.f32 %v783, %v791
        %v794 = vmul.f32 %v784, %v791
        %v795 = vmul.f32 %v785, %v791
        %v796 = vmul.f32 %v786, %v791
        %v798 = vlaneseq
        %v799 = vshrl.u32 %v798, 7
        %v800 = vsub.s32 0, %v799
        %v801 = vrot.slane %v732, %v800
        %v803 = vadd.f32 %v793, %v801
        %v804 = vadd.f32 %v794, %v801
        %v805 = vadd.f32 %v795, %v801
        %v806 = vadd.f32 %v796, %v801
        %v807 = vpack.c.bf16 %v804, %v803
        %v808 = vpack.c.bf16 %v806, %v805
        %v809 = vld [vmem:[%s3] sm:$0xf]
        %v810 = vld [vmem:[%s3 + $0x4] sm:$0xf]
        %v811 = vld [vmem:[%s3 + $0x8] sm:$0xf]
        %v812 = vld [vmem:[%s3 + $0xc] sm:$0xf]
        %v817 = vunpack.c.l.b16 %v809
        %v818 = vunpack.c.l.b16 %v810
        %v819 = vunpack.c.l.b16 %v811
        %v820 = vunpack.c.l.b16 %v812
        %v821 = vpack.c.b16 %v818, %v817
        %v822 = vpack.c.b16 %v820, %v819
        %v826 = vsel %vm733, %v807, 0
        %v829 = vsel %vm733, %v808, 0
        %831 = vmatprep.subr.bf16.mxu0 0
        %832 = vmatpush1.bf16.msra.mxu0 0
        %833 = vmatprep.subr.bf16.mxu0 0
        %834 = vmatpush1.bf16.msra.mxu0 0
        %835 = vmatprep.subr.bf16.mxu0 0
        %836 = vmatpush1.bf16.msra.mxu0 0
        %837 = vmatprep.subr.bf16.mxu0 0
        %838 = vmatpush1.bf16.msra.mxu0 0
        %839 = vmatprep.subr.bf16.mxu0 0
        %840 = vmatpush1.bf16.msra.mxu0 0
        %841 = vmatprep.subr.bf16.mxu0 0
        %842 = vmatpush1.bf16.msra.mxu0 0
        %843 = vmatprep.subr.bf16.mxu0 0
        %844 = vmatpush1.bf16.msra.mxu0 %v822
        %845 = vmatprep.subr.bf16.mxu0 0
        %846 = vmatpush1.bf16.msra.mxu0 %v821
        %847 = vmatprep.subr.bf16.mxu0 0
        %848 = vmatpush2.bf16.msra.mxu0 0
        %849 = vmatprep.subr.bf16.mxu0 0
        %850 = vmatpush2.bf16.msra.mxu0 0
        %851 = vmatprep.subr.bf16.mxu0 0
        %852 = vmatpush2.bf16.msra.mxu0 0
        %853 = vmatprep.subr.bf16.mxu0 0
        %854 = vmatpush2.bf16.msra.mxu0 0
        %855 = vmatprep.subr.bf16.mxu0 0
        %856 = vmatpush2.bf16.msra.mxu0 0
        %857 = vmatprep.subr.bf16.mxu0 0
        %858 = vmatpush2.bf16.msra.mxu0 0
        %859 = vmatprep.subr.bf16.mxu0 0
        %860 = vmatpush2.bf16.msra.mxu0 0
        %861 = vmatprep.subr.bf16.mxu0 0
        %862 = vmatpush2.bf16.msra.mxu0 0
        %863 = vmatprep.mubr.bf16.mxu0 0
        %864 = vmatmul.mubr.bf16.gmra.mxu0 %v826
        %v865 = vpop.f32.mrf.mxu0
        %v866 = vadd.f32 0.0, %v865
        %v867 = vpop.f32.mrf.mxu0
        %v868 = vpop.f32.mrf.mxu0
        %v869 = vadd.f32 0.0, %v868
        %v870 = vpop.f32.mrf.mxu0
        %871 = vmatprep.mubr.bf16.mxu0 0
        %872 = vmatmul.mubr.bf16.gmra.mxu0 %v829
        %v873 = vpop.f32.mrf.mxu0
        %v874 = vadd.f32 0.0, %v873
        %v875 = vpop.f32.mrf.mxu0
        %v876 = vpop.f32.mrf.mxu0
        %v877 = vadd.f32 0.0, %v876
        %v878 = vpop.f32.mrf.mxu0
        %879 = vdwg.mxu0
        %v880 = vpack.c.bf16 %v866, %v866
        %v881 = vpack.c.bf16 %v869, %v869
        %v882 = vpack.c.bf16 %v874, %v874
        %v883 = vpack.c.bf16 %v877, %v877
        %885 = vrot.lane.b32.xlu0 %v880, 96
        %v886 = vpop.permute.xlu0 %885
        %vm887 = vcmask 64512
        %v889 = vsel %vm887, %v880, 0
        %v892 = vsel %vm887, %v886, 0
        %894 = vmatprep.subr.bf16.mxu0 0
        %895 = vmatpush1.bf16.xpose.msra.mxu0 0
        %896 = vmatprep.subr.bf16.mxu0 0
        %897 = vmatpush1.bf16.xpose.msra.mxu0 0
        %898 = vmatprep.subr.bf16.mxu0 0
        %899 = vmatpush1.bf16.xpose.msra.mxu0 0
        %900 = vmatprep.subr.bf16.mxu0 0
        %901 = vmatpush1.bf16.xpose.msra.mxu0 0
        %902 = vmatprep.subr.bf16.mxu0 0
        %903 = vmatpush1.bf16.xpose.msra.mxu0 0
        %904 = vmatprep.subr.bf16.mxu0 0
        %905 = vmatpush1.bf16.xpose.msra.mxu0 0
        %906 = vmatprep.subr.bf16.mxu0 0
        %907 = vmatpush1.bf16.xpose.msra.mxu0 0
        %908 = vmatprep.subr.bf16.mxu0 0
        %909 = vmatpush1.bf16.xpose.msra.mxu0 %v892
        %910 = vmatprep.subr.bf16.mxu0 0
        %911 = vmatpush2.bf16.xpose.msra.mxu0 0
        %912 = vmatprep.subr.bf16.mxu0 0
        %913 = vmatpush2.bf16.xpose.msra.mxu0 0
        %914 = vmatprep.subr.bf16.mxu0 0
        %915 = vmatpush2.bf16.xpose.msra.mxu0 0
        %916 = vmatprep.subr.bf16.mxu0 0
        %917 = vmatpush2.bf16.xpose.msra.mxu0 0
        %918 = vmatprep.subr.bf16.mxu0 0
        %919 = vmatpush2.bf16.xpose.msra.mxu0 0
        %920 = vmatprep.subr.bf16.mxu0 0
        %921 = vmatpush2.bf16.xpose.msra.mxu0 0
        %922 = vmatprep.subr.bf16.mxu0 0
        %923 = vmatpush2.bf16.xpose.msra.mxu0 0
        %924 = vmatprep.subr.bf16.mxu0 0
        %925 = vmatpush2.bf16.xpose.msra.mxu0 0
        %926 = vmatprep.mubr.bf16.mxu0 0
        %927 = vmatmul.mubr.bf16.gmra.mxu0 %v889
        %v928 = vpop.f32.mrf.mxu0
        %v929 = vadd.f32 0.0, %v928
        %v930 = vpop.f32.mrf.mxu0
        %v931 = vpop.f32.mrf.mxu0
        %v932 = vpop.f32.mrf.mxu0
        %933 = vdwg.mxu0
        %935 = vrot.lane.b32.xlu0 %v881, 96
        %v936 = vpop.permute.xlu0 %935
        %v938 = vsel %vm887, %v881, 0
        %v941 = vsel %vm887, %v936, 0
        %943 = vmatprep.subr.bf16.mxu0 0
        %944 = vmatpush1.bf16.xpose.msra.mxu0 0
        %945 = vmatprep.subr.bf16.mxu0 0
        %946 = vmatpush1.bf16.xpose.msra.mxu0 0
        %947 = vmatprep.subr.bf16.mxu0 0
        %948 = vmatpush1.bf16.xpose.msra.mxu0 0
        %949 = vmatprep.subr.bf16.mxu0 0
        %950 = vmatpush1.bf16.xpose.msra.mxu0 0
        %951 = vmatprep.subr.bf16.mxu0 0
        %952 = vmatpush1.bf16.xpose.msra.mxu0 0
        %953 = vmatprep.subr.bf16.mxu0 0
        %954 = vmatpush1.bf16.xpose.msra.mxu0 0
        %955 = vmatprep.subr.bf16.mxu0 0
        %956 = vmatpush1.bf16.xpose.msra.mxu0 0
        %957 = vmatprep.subr.bf16.mxu0 0
        %958 = vmatpush1.bf16.xpose.msra.mxu0 %v941
        %959 = vmatprep.subr.bf16.mxu0 0
        %960 = vmatpush2.bf16.xpose.msra.mxu0 0
        %961 = vmatprep.subr.bf16.mxu0 0
        %962 = vmatpush2.bf16.xpose.msra.mxu0 0
        %963 = vmatprep.subr.bf16.mxu0 0
        %964 = vmatpush2.bf16.xpose.msra.mxu0 0
        %965 = vmatprep.subr.bf16.mxu0 0
        %966 = vmatpush2.bf16.xpose.msra.mxu0 0
        %967 = vmatprep.subr.bf16.mxu0 0
        %968 = vmatpush2.bf16.xpose.msra.mxu0 0
        %969 = vmatprep.subr.bf16.mxu0 0
        %970 = vmatpush2.bf16.xpose.msra.mxu0 0
        %971 = vmatprep.subr.bf16.mxu0 0
        %972 = vmatpush2.bf16.xpose.msra.mxu0 0
        %973 = vmatprep.subr.bf16.mxu0 0
        %974 = vmatpush2.bf16.xpose.msra.mxu0 0
        %975 = vmatprep.mubr.bf16.mxu0 0
        %976 = vmatmul.mubr.bf16.gmra.mxu0 %v938
        %v977 = vpop.f32.mrf.mxu0
        %v978 = vadd.f32 0.0, %v977
        %v979 = vpop.f32.mrf.mxu0
        %v980 = vpop.f32.mrf.mxu0
        %v981 = vpop.f32.mrf.mxu0
        %982 = vdwg.mxu0
        %984 = vrot.lane.b32.xlu0 %v882, 96
        %v985 = vpop.permute.xlu0 %984
        %v987 = vsel %vm887, %v882, 0
        %v990 = vsel %vm887, %v985, 0
        %992 = vmatprep.subr.bf16.mxu0 0
        %993 = vmatpush1.bf16.xpose.msra.mxu0 0
        %994 = vmatprep.subr.bf16.mxu0 0
        %995 = vmatpush1.bf16.xpose.msra.mxu0 0
        %996 = vmatprep.subr.bf16.mxu0 0
        %997 = vmatpush1.bf16.xpose.msra.mxu0 0
        %998 = vmatprep.subr.bf16.mxu0 0
        %999 = vmatpush1.bf16.xpose.msra.mxu0 0
        %1000 = vmatprep.subr.bf16.mxu0 0
        %1001 = vmatpush1.bf16.xpose.msra.mxu0 0
        %1002 = vmatprep.subr.bf16.mxu0 0
        %1003 = vmatpush1.bf16.xpose.msra.mxu0 0
        %1004 = vmatprep.subr.bf16.mxu0 0
        %1005 = vmatpush1.bf16.xpose.msra.mxu0 0
        %1006 = vmatprep.subr.bf16.mxu0 0
        %1007 = vmatpush1.bf16.xpose.msra.mxu0 %v990
        %1008 = vmatprep.subr.bf16.mxu0 0
        %1009 = vmatpush2.bf16.xpose.msra.mxu0 0
        %1010 = vmatprep.subr.bf16.mxu0 0
        %1011 = vmatpush2.bf16.xpose.msra.mxu0 0
        %1012 = vmatprep.subr.bf16.mxu0 0
        %1013 = vmatpush2.bf16.xpose.msra.mxu0 0
        %1014 = vmatprep.subr.bf16.mxu0 0
        %1015 = vmatpush2.bf16.xpose.msra.mxu0 0
        %1016 = vmatprep.subr.bf16.mxu0 0
        %1017 = vmatpush2.bf16.xpose.msra.mxu0 0
        %1018 = vmatprep.subr.bf16.mxu0 0
        %1019 = vmatpush2.bf16.xpose.msra.mxu0 0
        %1020 = vmatprep.subr.bf16.mxu0 0
        %1021 = vmatpush2.bf16.xpose.msra.mxu0 0
        %1022 = vmatprep.subr.bf16.mxu0 0
        %1023 = vmatpush2.bf16.xpose.msra.mxu0 0
        %1024 = vmatprep.mubr.bf16.mxu0 0
        %1025 = vmatmul.mubr.bf16.gmra.mxu0 %v987
        %v1026 = vpop.f32.mrf.mxu0
        %v1027 = vadd.f32 0.0, %v1026
        %v1028 = vpop.f32.mrf.mxu0
        %v1029 = vpop.f32.mrf.mxu0
        %v1030 = vpop.f32.mrf.mxu0
        %1031 = vdwg.mxu0
        %1033 = vrot.lane.b32.xlu0 %v883, 96
        %v1034 = vpop.permute.xlu0 %1033
        %v1036 = vsel %vm887, %v883, 0
        %v1039 = vsel %vm887, %v1034, 0
        %1041 = vmatprep.subr.bf16.mxu0 0
        %1042 = vmatpush1.bf16.xpose.msra.mxu0 0
        %1043 = vmatprep.subr.bf16.mxu0 0
        %1044 = vmatpush1.bf16.xpose.msra.mxu0 0
        %1045 = vmatprep.subr.bf16.mxu0 0
        %1046 = vmatpush1.bf16.xpose.msra.mxu0 0
        %1047 = vmatprep.subr.bf16.mxu0 0
        %1048 = vmatpush1.bf16.xpose.msra.mxu0 0
        %1049 = vmatprep.subr.bf16.mxu0 0
        %1050 = vmatpush1.bf16.xpose.msra.mxu0 0
        %1051 = vmatprep.subr.bf16.mxu0 0
        %1052 = vmatpush1.bf16.xpose.msra.mxu0 0
        %1053 = vmatprep.subr.bf16.mxu0 0
        %1054 = vmatpush1.bf16.xpose.msra.mxu0 0
        %1055 = vmatprep.subr.bf16.mxu0 0
        %1056 = vmatpush1.bf16.xpose.msra.mxu0 %v1039
        %1057 = vmatprep.subr.bf16.mxu0 0
        %1058 = vmatpush2.bf16.xpose.msra.mxu0 0
        %1059 = vmatprep.subr.bf16.mxu0 0
        %1060 = vmatpush2.bf16.xpose.msra.mxu0 0
        %1061 = vmatprep.subr.bf16.mxu0 0
        %1062 = vmatpush2.bf16.xpose.msra.mxu0 0
        %1063 = vmatprep.subr.bf16.mxu0 0
        %1064 = vmatpush2.bf16.xpose.msra.mxu0 0
        %1065 = vmatprep.subr.bf16.mxu0 0
        %1066 = vmatpush2.bf16.xpose.msra.mxu0 0
        %1067 = vmatprep.subr.bf16.mxu0 0
        %1068 = vmatpush2.bf16.xpose.msra.mxu0 0
        %1069 = vmatprep.subr.bf16.mxu0 0
        %1070 = vmatpush2.bf16.xpose.msra.mxu0 0
        %1071 = vmatprep.subr.bf16.mxu0 0
        %1072 = vmatpush2.bf16.xpose.msra.mxu0 0
        %1073 = vmatprep.mubr.bf16.mxu0 0
        %1074 = vmatmul.mubr.bf16.gmra.mxu0 %v1036
        %v1075 = vpop.f32.mrf.mxu0
        %v1076 = vadd.f32 0.0, %v1075
        %v1077 = vpop.f32.mrf.mxu0
        %v1078 = vpop.f32.mrf.mxu0
        %v1079 = vpop.f32.mrf.mxu0
        %1080 = vdwg.mxu0
        %v1081 = vsel %vm730, 1, 0
        %vm1082 = vcmp.eq.s32.totalorder %v1081, 1
        %v1083 = vsel %vm1082, %v929, -1e+30
        %v1084 = vsel %vm1082, %v978, -1e+30
        %v1085 = vsel %vm1082, %v1027, -1e+30
        %v1086 = vsel %vm1082, %v1076, -1e+30
        %v1087 = vsel %vm887, %v1083, -inf
        %1088 = vmax.xlane.f32.xlu0 %v1087
        %v1089 = vpop.xlane.xlu0 %1088
        %v1090 = vsel %vm887, %v1084, -inf
        %1091 = vmax.xlane.f32.xlu0 %v1090
        %v1092 = vpop.xlane.xlu0 %1091
        %v1093 = vsel %vm887, %v1085, -inf
        %1094 = vmax.xlane.f32.xlu0 %v1093
        %v1095 = vpop.xlane.xlu0 %1094
        %v1096 = vsel %vm887, %v1086, -inf
        %1097 = vmax.xlane.f32.xlu0 %v1096
        %v1098 = vpop.xlane.xlu0 %1097
        %v1099 = vsub.f32 %v1083, %v1089
        %v1100 = vsub.f32 %v1084, %v1092
        %v1101 = vsub.f32 %v1085, %v1095
        %v1102 = vsub.f32 %v1086, %v1098
        %v1103 = vmul.f32 %v1099, 1.442695
        %v1104 = vpow.pop %v1103
        %v1105 = vmul.f32 %v1100, 1.442695
        %v1106 = vpow.pop %v1105
        %v1107 = vmul.f32 %v1101, 1.442695
        %v1108 = vpow.pop %v1107
        %v1109 = vmul.f32 %v1102, 1.442695
        %v1110 = vpow.pop %v1109
        %v1111 = vsel %vm887, %v1104, 0.0
        %1112 = vadd.xlane.f32.xlu0 %v1111
        %v1113 = vpop.xlane.xlu0 %1112
        %v1114 = vsel %vm887, %v1106, 0.0
        %1115 = vadd.xlane.f32.xlu0 %v1114
        %v1116 = vpop.xlane.xlu0 %1115
        %v1117 = vsel %vm887, %v1108, 0.0
        %1118 = vadd.xlane.f32.xlu0 %v1117
        %v1119 = vpop.xlane.xlu0 %1118
        %v1120 = vsel %vm887, %v1110, 0.0
        %1121 = vadd.xlane.f32.xlu0 %v1120
        %v1122 = vpop.xlane.xlu0 %1121
        %v1123 = vrcp.pop %v1113
        %v1124 = vrcp.pop %v1116
        %v1125 = vrcp.pop %v1119
        %v1126 = vrcp.pop %v1122
        %v1127 = vmul.f32 %v1104, %v1123
        %v1128 = vmul.f32 %v1106, %v1124
        %v1129 = vmul.f32 %v1108, %v1125
        %v1130 = vmul.f32 %v1110, %v1126
        %v1131 = vpack.c.bf16 %v1127, %v1127
        %v1132 = vpack.c.bf16 %v1128, %v1128
        %v1133 = vpack.c.bf16 %v1129, %v1129
        %v1134 = vpack.c.bf16 %v1130, %v1130
        %1135 = vrot.lane.b32.xlu0 %v880, 64
        %v1136 = vpop.permute.xlu0 %1135
        %v1138 = vsel %vm887, %v1131, 0
        %vm1140 = vcmask 1043456
        %v1142 = vsel %vm1140, %v1136, 0
        %1144 = vmatprep.subr.bf16.mxu0 0
        %1145 = vmatpush1.bf16.msra.mxu0 0
        %1146 = vmatprep.subr.bf16.mxu0 0
        %1147 = vmatpush1.bf16.msra.mxu0 0
        %1148 = vmatprep.subr.bf16.mxu0 0
        %1149 = vmatpush1.bf16.msra.mxu0 0
        %1150 = vmatprep.subr.bf16.mxu0 0
        %1151 = vmatpush1.bf16.msra.mxu0 0
        %1152 = vmatprep.subr.bf16.mxu0 0
        %1153 = vmatpush1.bf16.msra.mxu0 0
        %1154 = vmatprep.subr.bf16.mxu0 0
        %1155 = vmatpush1.bf16.msra.mxu0 0
        %1156 = vmatprep.subr.bf16.mxu0 0
        %1157 = vmatpush1.bf16.msra.mxu0 0
        %1158 = vmatprep.subr.bf16.mxu0 0
        %1159 = vmatpush1.bf16.msra.mxu0 %v1142
        %1160 = vmatprep.subr.bf16.mxu0 0
        %1161 = vmatpush2.bf16.msra.mxu0 0
        %1162 = vmatprep.subr.bf16.mxu0 0
        %1163 = vmatpush2.bf16.msra.mxu0 0
        %1164 = vmatprep.subr.bf16.mxu0 0
        %1165 = vmatpush2.bf16.msra.mxu0 0
        %1166 = vmatprep.subr.bf16.mxu0 0
        %1167 = vmatpush2.bf16.msra.mxu0 0
        %1168 = vmatprep.subr.bf16.mxu0 0
        %1169 = vmatpush2.bf16.msra.mxu0 0
        %1170 = vmatprep.subr.bf16.mxu0 0
        %1171 = vmatpush2.bf16.msra.mxu0 0
        %1172 = vmatprep.subr.bf16.mxu0 0
        %1173 = vmatpush2.bf16.msra.mxu0 0
        %1174 = vmatprep.subr.bf16.mxu0 0
        %1175 = vmatpush2.bf16.msra.mxu0 0
        %1176 = vmatprep.mubr.bf16.mxu0 0
        %1177 = vmatmul.mubr.bf16.gmra.mxu0 %v1138
        %v1178 = vpop.f32.mrf.mxu0
        %v1179 = vadd.f32 0.0, %v1178
        %v1180 = vpop.f32.mrf.mxu0
        %v1181 = vpop.f32.mrf.mxu0
        %v1182 = vpop.f32.mrf.mxu0
        %1183 = vdwg.mxu0
        %1184 = vrot.lane.b32.xlu0 %v881, 64
        %v1185 = vpop.permute.xlu0 %1184
        %v1187 = vsel %vm887, %v1132, 0
        %v1190 = vsel %vm1140, %v1185, 0
        %1192 = vmatprep.subr.bf16.mxu0 0
        %1193 = vmatpush1.bf16.msra.mxu0 0
        %1194 = vmatprep.subr.bf16.mxu0 0
        %1195 = vmatpush1.bf16.msra.mxu0 0
        %1196 = vmatprep.subr.bf16.mxu0 0
        %1197 = vmatpush1.bf16.msra.mxu0 0
        %1198 = vmatprep.subr.bf16.mxu0 0
        %1199 = vmatpush1.bf16.msra.mxu0 0
        %1200 = vmatprep.subr.bf16.mxu0 0
        %1201 = vmatpush1.bf16.msra.mxu0 0
        %1202 = vmatprep.subr.bf16.mxu0 0
        %1203 = vmatpush1.bf16.msra.mxu0 0
        %1204 = vmatprep.subr.bf16.mxu0 0
        %1205 = vmatpush1.bf16.msra.mxu0 0
        %1206 = vmatprep.subr.bf16.mxu0 0
        %1207 = vmatpush1.bf16.msra.mxu0 %v1190
        %1208 = vmatprep.subr.bf16.mxu0 0
        %1209 = vmatpush2.bf16.msra.mxu0 0
        %1210 = vmatprep.subr.bf16.mxu0 0
        %1211 = vmatpush2.bf16.msra.mxu0 0
        %1212 = vmatprep.subr.bf16.mxu0 0
        %1213 = vmatpush2.bf16.msra.mxu0 0
        %1214 = vmatprep.subr.bf16.mxu0 0
        %1215 = vmatpush2.bf16.msra.mxu0 0
        %1216 = vmatprep.subr.bf16.mxu0 0
        %1217 = vmatpush2.bf16.msra.mxu0 0
        %1218 = vmatprep.subr.bf16.mxu0 0
        %1219 = vmatpush2.bf16.msra.mxu0 0
        %1220 = vmatprep.subr.bf16.mxu0 0
        %1221 = vmatpush2.bf16.msra.mxu0 0
        %1222 = vmatprep.subr.bf16.mxu0 0
        %1223 = vmatpush2.bf16.msra.mxu0 0
        %1224 = vmatprep.mubr.bf16.mxu0 0
        %1225 = vmatmul.mubr.bf16.gmra.mxu0 %v1187
        %v1226 = vpop.f32.mrf.mxu0
        %v1227 = vadd.f32 0.0, %v1226
        %v1228 = vpop.f32.mrf.mxu0
        %v1229 = vpop.f32.mrf.mxu0
        %v1230 = vpop.f32.mrf.mxu0
        %1231 = vdwg.mxu0
        %1232 = vrot.lane.b32.xlu0 %v882, 64
        %v1233 = vpop.permute.xlu0 %1232
        %v1235 = vsel %vm887, %v1133, 0
        %v1238 = vsel %vm1140, %v1233, 0
        %1240 = vmatprep.subr.bf16.mxu0 0
        %1241 = vmatpush1.bf16.msra.mxu0 0
        %1242 = vmatprep.subr.bf16.mxu0 0
        %1243 = vmatpush1.bf16.msra.mxu0 0
        %1244 = vmatprep.subr.bf16.mxu0 0
        %1245 = vmatpush1.bf16.msra.mxu0 0
        %1246 = vmatprep.subr.bf16.mxu0 0
        %1247 = vmatpush1.bf16.msra.mxu0 0
        %1248 = vmatprep.subr.bf16.mxu0 0
        %1249 = vmatpush1.bf16.msra.mxu0 0
        %1250 = vmatprep.subr.bf16.mxu0 0
        %1251 = vmatpush1.bf16.msra.mxu0 0
        %1252 = vmatprep.subr.bf16.mxu0 0
        %1253 = vmatpush1.bf16.msra.mxu0 0
        %1254 = vmatprep.subr.bf16.mxu0 0
        %1255 = vmatpush1.bf16.msra.mxu0 %v1238
        %1256 = vmatprep.subr.bf16.mxu0 0
        %1257 = vmatpush2.bf16.msra.mxu0 0
        %1258 = vmatprep.subr.bf16.mxu0 0
        %1259 = vmatpush2.bf16.msra.mxu0 0
        %1260 = vmatprep.subr.bf16.mxu0 0
        %1261 = vmatpush2.bf16.msra.mxu0 0
        %1262 = vmatprep.subr.bf16.mxu0 0
        %1263 = vmatpush2.bf16.msra.mxu0 0
        %1264 = vmatprep.subr.bf16.mxu0 0
        %1265 = vmatpush2.bf16.msra.mxu0 0
        %1266 = vmatprep.subr.bf16.mxu0 0
        %1267 = vmatpush2.bf16.msra.mxu0 0
        %1268 = vmatprep.subr.bf16.mxu0 0
        %1269 = vmatpush2.bf16.msra.mxu0 0
        %1270 = vmatprep.subr.bf16.mxu0 0
        %1271 = vmatpush2.bf16.msra.mxu0 0
        %1272 = vmatprep.mubr.bf16.mxu0 0
        %1273 = vmatmul.mubr.bf16.gmra.mxu0 %v1235
        %v1274 = vpop.f32.mrf.mxu0
        %v1275 = vadd.f32 0.0, %v1274
        %v1276 = vpop.f32.mrf.mxu0
        %v1277 = vpop.f32.mrf.mxu0
        %v1278 = vpop.f32.mrf.mxu0
        %1279 = vdwg.mxu0
        %1280 = vrot.lane.b32.xlu0 %v883, 64
        %v1281 = vpop.permute.xlu0 %1280
        %v1283 = vsel %vm887, %v1134, 0
        %v1286 = vsel %vm1140, %v1281, 0
        %1288 = vmatprep.subr.bf16.mxu0 0
        %1289 = vmatpush1.bf16.msra.mxu0 0
        %1290 = vmatprep.subr.bf16.mxu0 0
        %1291 = vmatpush1.bf16.msra.mxu0 0
        %1292 = vmatprep.subr.bf16.mxu0 0
        %1293 = vmatpush1.bf16.msra.mxu0 0
        %1294 = vmatprep.subr.bf16.mxu0 0
        %1295 = vmatpush1.bf16.msra.mxu0 0
        %1296 = vmatprep.subr.bf16.mxu0 0
        %1297 = vmatpush1.bf16.msra.mxu0 0
        %1298 = vmatprep.subr.bf16.mxu0 0
        %1299 = vmatpush1.bf16.msra.mxu0 0
        %1300 = vmatprep.subr.bf16.mxu0 0
        %1301 = vmatpush1.bf16.msra.mxu0 0
        %1302 = vmatprep.subr.bf16.mxu0 0
        %1303 = vmatpush1.bf16.msra.mxu0 %v1286
        %1304 = vmatprep.subr.bf16.mxu0 0
        %1305 = vmatpush2.bf16.msra.mxu0 0
        %1306 = vmatprep.subr.bf16.mxu0 0
        %1307 = vmatpush2.bf16.msra.mxu0 0
        %1308 = vmatprep.subr.bf16.mxu0 0
        %1309 = vmatpush2.bf16.msra.mxu0 0
        %1310 = vmatprep.subr.bf16.mxu0 0
        %1311 = vmatpush2.bf16.msra.mxu0 0
        %1312 = vmatprep.subr.bf16.mxu0 0
        %1313 = vmatpush2.bf16.msra.mxu0 0
        %1314 = vmatprep.subr.bf16.mxu0 0
        %1315 = vmatpush2.bf16.msra.mxu0 0
        %1316 = vmatprep.subr.bf16.mxu0 0
        %1317 = vmatpush2.bf16.msra.mxu0 0
        %1318 = vmatprep.subr.bf16.mxu0 0
        %1319 = vmatpush2.bf16.msra.mxu0 0
        %1320 = vmatprep.mubr.bf16.mxu0 0
        %1321 = vmatmul.mubr.bf16.gmra.mxu0 %v1283
        %v1322 = vpop.f32.mrf.mxu0
        %v1323 = vadd.f32 0.0, %v1322
        %v1324 = vpop.f32.mrf.mxu0
        %v1325 = vpop.f32.mrf.mxu0
        %v1326 = vpop.f32.mrf.mxu0
        %1327 = vdwg.mxu0
        %1328 = vrot.lane.b32.xlu0 %v880, 120
        %v1329 = vpop.permute.xlu0 %1328
        %1330 = vrot.lane.b32.xlu0 %v880, 88
        %v1331 = vpop.permute.xlu0 %1330
        %v1333 = vsel %vm887, %v1329, 0
        %v1336 = vsel %vm887, %v1331, 0
        %1338 = vmatprep.subr.bf16.mxu0 0
        %1339 = vmatpush1.bf16.xpose.msra.mxu0 0
        %1340 = vmatprep.subr.bf16.mxu0 0
        %1341 = vmatpush1.bf16.xpose.msra.mxu0 0
        %1342 = vmatprep.subr.bf16.mxu0 0
        %1343 = vmatpush1.bf16.xpose.msra.mxu0 0
        %1344 = vmatprep.subr.bf16.mxu0 0
        %1345 = vmatpush1.bf16.xpose.msra.mxu0 0
        %1346 = vmatprep.subr.bf16.mxu0 0
        %1347 = vmatpush1.bf16.xpose.msra.mxu0 0
        %1348 = vmatprep.subr.bf16.mxu0 0
        %1349 = vmatpush1.bf16.xpose.msra.mxu0 0
        %1350 = vmatprep.subr.bf16.mxu0 0
        %1351 = vmatpush1.bf16.xpose.msra.mxu0 0
        %1352 = vmatprep.subr.bf16.mxu0 0
        %1353 = vmatpush1.bf16.xpose.msra.mxu0 %v1336
        %1354 = vmatprep.subr.bf16.mxu0 0
        %1355 = vmatpush2.bf16.xpose.msra.mxu0 0
        %1356 = vmatprep.subr.bf16.mxu0 0
        %1357 = vmatpush2.bf16.xpose.msra.mxu0 0
        %1358 = vmatprep.subr.bf16.mxu0 0
        %1359 = vmatpush2.bf16.xpose.msra.mxu0 0
        %1360 = vmatprep.subr.bf16.mxu0 0
        %1361 = vmatpush2.bf16.xpose.msra.mxu0 0
        %1362 = vmatprep.subr.bf16.mxu0 0
        %1363 = vmatpush2.bf16.xpose.msra.mxu0 0
        %1364 = vmatprep.subr.bf16.mxu0 0
        %1365 = vmatpush2.bf16.xpose.msra.mxu0 0
        %1366 = vmatprep.subr.bf16.mxu0 0
        %1367 = vmatpush2.bf16.xpose.msra.mxu0 0
        %1368 = vmatprep.subr.bf16.mxu0 0
        %1369 = vmatpush2.bf16.xpose.msra.mxu0 0
        %1370 = vmatprep.mubr.bf16.mxu0 0
        %1371 = vmatmul.mubr.bf16.gmra.mxu0 %v1333
        %v1372 = vpop.f32.mrf.mxu0
        %v1373 = vadd.f32 0.0, %v1372
        %v1374 = vpop.f32.mrf.mxu0
        %v1375 = vpop.f32.mrf.mxu0
        %v1376 = vpop.f32.mrf.mxu0
        %1377 = vdwg.mxu0
        %1378 = vrot.lane.b32.xlu0 %v881, 120
        %v1379 = vpop.permute.xlu0 %1378
        %1380 = vrot.lane.b32.xlu0 %v881, 88
        %v1381 = vpop.permute.xlu0 %1380
        %v1383 = vsel %vm887, %v1379, 0
        %v1386 = vsel %vm887, %v1381, 0
        %1388 = vmatprep.subr.bf16.mxu0 0
        %1389 = vmatpush1.bf16.xpose.msra.mxu0 0
        %1390 = vmatprep.subr.bf16.mxu0 0
        %1391 = vmatpush1.bf16.xpose.msra.mxu0 0
        %1392 = vmatprep.subr.bf16.mxu0 0
        %1393 = vmatpush1.bf16.xpose.msra.mxu0 0
        %1394 = vmatprep.subr.bf16.mxu0 0
        %1395 = vmatpush1.bf16.xpose.msra.mxu0 0
        %1396 = vmatprep.subr.bf16.mxu0 0
        %1397 = vmatpush1.bf16.xpose.msra.mxu0 0
        %1398 = vmatprep.subr.bf16.mxu0 0
        %1399 = vmatpush1.bf16.xpose.msra.mxu0 0
        %1400 = vmatprep.subr.bf16.mxu0 0
        %1401 = vmatpush1.bf16.xpose.msra.mxu0 0
        %1402 = vmatprep.subr.bf16.mxu0 0
        %1403 = vmatpush1.bf16.xpose.msra.mxu0 %v1386
        %1404 = vmatprep.subr.bf16.mxu0 0
        %1405 = vmatpush2.bf16.xpose.msra.mxu0 0
        %1406 = vmatprep.subr.bf16.mxu0 0
        %1407 = vmatpush2.bf16.xpose.msra.mxu0 0
        %1408 = vmatprep.subr.bf16.mxu0 0
        %1409 = vmatpush2.bf16.xpose.msra.mxu0 0
        %1410 = vmatprep.subr.bf16.mxu0 0
        %1411 = vmatpush2.bf16.xpose.msra.mxu0 0
        %1412 = vmatprep.subr.bf16.mxu0 0
        %1413 = vmatpush2.bf16.xpose.msra.mxu0 0
        %1414 = vmatprep.subr.bf16.mxu0 0
        %1415 = vmatpush2.bf16.xpose.msra.mxu0 0
        %1416 = vmatprep.subr.bf16.mxu0 0
        %1417 = vmatpush2.bf16.xpose.msra.mxu0 0
        %1418 = vmatprep.subr.bf16.mxu0 0
        %1419 = vmatpush2.bf16.xpose.msra.mxu0 0
        %1420 = vmatprep.mubr.bf16.mxu0 0
        %1421 = vmatmul.mubr.bf16.gmra.mxu0 %v1383
        %v1422 = vpop.f32.mrf.mxu0
        %v1423 = vadd.f32 0.0, %v1422
        %v1424 = vpop.f32.mrf.mxu0
        %v1425 = vpop.f32.mrf.mxu0
        %v1426 = vpop.f32.mrf.mxu0
        %1427 = vdwg.mxu0
        %1428 = vrot.lane.b32.xlu0 %v882, 120
        %v1429 = vpop.permute.xlu0 %1428
        %1430 = vrot.lane.b32.xlu0 %v882, 88
        %v1431 = vpop.permute.xlu0 %1430
        %v1433 = vsel %vm887, %v1429, 0
        %v1436 = vsel %vm887, %v1431, 0
        %1438 = vmatprep.subr.bf16.mxu0 0
        %1439 = vmatpush1.bf16.xpose.msra.mxu0 0
        %1440 = vmatprep.subr.bf16.mxu0 0
        %1441 = vmatpush1.bf16.xpose.msra.mxu0 0
        %1442 = vmatprep.subr.bf16.mxu0 0
        %1443 = vmatpush1.bf16.xpose.msra.mxu0 0
        %1444 = vmatprep.subr.bf16.mxu0 0
        %1445 = vmatpush1.bf16.xpose.msra.mxu0 0
        %1446 = vmatprep.subr.bf16.mxu0 0
        %1447 = vmatpush1.bf16.xpose.msra.mxu0 0
        %1448 = vmatprep.subr.bf16.mxu0 0
        %1449 = vmatpush1.bf16.xpose.msra.mxu0 0
        %1450 = vmatprep.subr.bf16.mxu0 0
        %1451 = vmatpush1.bf16.xpose.msra.mxu0 0
        %1452 = vmatprep.subr.bf16.mxu0 0
        %1453 = vmatpush1.bf16.xpose.msra.mxu0 %v1436
        %1454 = vmatprep.subr.bf16.mxu0 0
        %1455 = vmatpush2.bf16.xpose.msra.mxu0 0
        %1456 = vmatprep.subr.bf16.mxu0 0
        %1457 = vmatpush2.bf16.xpose.msra.mxu0 0
        %1458 = vmatprep.subr.bf16.mxu0 0
        %1459 = vmatpush2.bf16.xpose.msra.mxu0 0
        %1460 = vmatprep.subr.bf16.mxu0 0
        %1461 = vmatpush2.bf16.xpose.msra.mxu0 0
        %1462 = vmatprep.subr.bf16.mxu0 0
        %1463 = vmatpush2.bf16.xpose.msra.mxu0 0
        %1464 = vmatprep.subr.bf16.mxu0 0
        %1465 = vmatpush2.bf16.xpose.msra.mxu0 0
        %1466 = vmatprep.subr.bf16.mxu0 0
        %1467 = vmatpush2.bf16.xpose.msra.mxu0 0
        %1468 = vmatprep.subr.bf16.mxu0 0
        %1469 = vmatpush2.bf16.xpose.msra.mxu0 0
        %1470 = vmatprep.mubr.bf16.mxu0 0
        %1471 = vmatmul.mubr.bf16.gmra.mxu0 %v1433
        %v1472 = vpop.f32.mrf.mxu0
        %v1473 = vadd.f32 0.0, %v1472
        %v1474 = vpop.f32.mrf.mxu0
        %v1475 = vpop.f32.mrf.mxu0
        %v1476 = vpop.f32.mrf.mxu0
        %1477 = vdwg.mxu0
        %1478 = vrot.lane.b32.xlu0 %v883, 120
        %v1479 = vpop.permute.xlu0 %1478
        %1480 = vrot.lane.b32.xlu0 %v883, 88
        %v1481 = vpop.permute.xlu0 %1480
        %v1483 = vsel %vm887, %v1479, 0
        %v1486 = vsel %vm887, %v1481, 0
        %1488 = vmatprep.subr.bf16.mxu0 0
        %1489 = vmatpush1.bf16.xpose.msra.mxu0 0
        %1490 = vmatprep.subr.bf16.mxu0 0
        %1491 = vmatpush1.bf16.xpose.msra.mxu0 0
        %1492 = vmatprep.subr.bf16.mxu0 0
        %1493 = vmatpush1.bf16.xpose.msra.mxu0 0
        %1494 = vmatprep.subr.bf16.mxu0 0
        %1495 = vmatpush1.bf16.xpose.msra.mxu0 0
        %1496 = vmatprep.subr.bf16.mxu0 0
        %1497 = vmatpush1.bf16.xpose.msra.mxu0 0
        %1498 = vmatprep.subr.bf16.mxu0 0
        %1499 = vmatpush1.bf16.xpose.msra.mxu0 0
        %1500 = vmatprep.subr.bf16.mxu0 0
        %1501 = vmatpush1.bf16.xpose.msra.mxu0 0
        %1502 = vmatprep.subr.bf16.mxu0 0
        %1503 = vmatpush1.bf16.xpose.msra.mxu0 %v1486
        %1504 = vmatprep.subr.bf16.mxu0 0
        %1505 = vmatpush2.bf16.xpose.msra.mxu0 0
        %1506 = vmatprep.subr.bf16.mxu0 0
        %1507 = vmatpush2.bf16.xpose.msra.mxu0 0
        %1508 = vmatprep.subr.bf16.mxu0 0
        %1509 = vmatpush2.bf16.xpose.msra.mxu0 0
        %1510 = vmatprep.subr.bf16.mxu0 0
        %1511 = vmatpush2.bf16.xpose.msra.mxu0 0
        %1512 = vmatprep.subr.bf16.mxu0 0
        %1513 = vmatpush2.bf16.xpose.msra.mxu0 0
        %1514 = vmatprep.subr.bf16.mxu0 0
        %1515 = vmatpush2.bf16.xpose.msra.mxu0 0
        %1516 = vmatprep.subr.bf16.mxu0 0
        %1517 = vmatpush2.bf16.xpose.msra.mxu0 0
        %1518 = vmatprep.subr.bf16.mxu0 0
        %1519 = vmatpush2.bf16.xpose.msra.mxu0 0
        %1520 = vmatprep.mubr.bf16.mxu0 0
        %1521 = vmatmul.mubr.bf16.gmra.mxu0 %v1483
        %v1522 = vpop.f32.mrf.mxu0
        %v1523 = vadd.f32 0.0, %v1522
        %v1524 = vpop.f32.mrf.mxu0
        %v1525 = vpop.f32.mrf.mxu0
        %v1526 = vpop.f32.mrf.mxu0
        %1527 = vdwg.mxu0
        %v1528 = vsel %vm1082, %v1373, -1e+30
        %v1529 = vsel %vm1082, %v1423, -1e+30
        %v1530 = vsel %vm1082, %v1473, -1e+30
        %v1531 = vsel %vm1082, %v1523, -1e+30
        %v1532 = vsel %vm887, %v1528, -inf
        %1533 = vmax.xlane.f32.xlu0 %v1532
        %v1534 = vpop.xlane.xlu0 %1533
        %v1535 = vsel %vm887, %v1529, -inf
        %1536 = vmax.xlane.f32.xlu0 %v1535
        %v1537 = vpop.xlane.xlu0 %1536
        %v1538 = vsel %vm887, %v1530, -inf
        %1539 = vmax.xlane.f32.xlu0 %v1538
        %v1540 = vpop.xlane.xlu0 %1539
        %v1541 = vsel %vm887, %v1531, -inf
        %1542 = vmax.xlane.f32.xlu0 %v1541
        %v1543 = vpop.xlane.xlu0 %1542
        %v1544 = vsub.f32 %v1528, %v1534
        %v1545 = vsub.f32 %v1529, %v1537
        %v1546 = vsub.f32 %v1530, %v1540
        %v1547 = vsub.f32 %v1531, %v1543
        %v1548 = vmul.f32 %v1544, 1.442695
        %v1549 = vpow.pop %v1548
        %v1550 = vmul.f32 %v1545, 1.442695
        %v1551 = vpow.pop %v1550
        %v1552 = vmul.f32 %v1546, 1.442695
        %v1553 = vpow.pop %v1552
        %v1554 = vmul.f32 %v1547, 1.442695
        %v1555 = vpow.pop %v1554
        %v1556 = vsel %vm887, %v1549, 0.0
        %1557 = vadd.xlane.f32.xlu0 %v1556
        %v1558 = vpop.xlane.xlu0 %1557
        %v1559 = vsel %vm887, %v1551, 0.0
        %1560 = vadd.xlane.f32.xlu0 %v1559
        %v1561 = vpop.xlane.xlu0 %1560
        %v1562 = vsel %vm887, %v1553, 0.0
        %1563 = vadd.xlane.f32.xlu0 %v1562
        %v1564 = vpop.xlane.xlu0 %1563
        %v1565 = vsel %vm887, %v1555, 0.0
        %1566 = vadd.xlane.f32.xlu0 %v1565
        %v1567 = vpop.xlane.xlu0 %1566
        %v1568 = vrcp.pop %v1558
        %v1569 = vrcp.pop %v1561
        %v1570 = vrcp.pop %v1564
        %v1571 = vrcp.pop %v1567
        %v1572 = vmul.f32 %v1549, %v1568
        %v1573 = vmul.f32 %v1551, %v1569
        %v1574 = vmul.f32 %v1553, %v1570
        %v1575 = vmul.f32 %v1555, %v1571
        %v1576 = vpack.c.bf16 %v1572, %v1572
        %v1577 = vpack.c.bf16 %v1573, %v1573
        %v1578 = vpack.c.bf16 %v1574, %v1574
        %v1579 = vpack.c.bf16 %v1575, %v1575
        %1580 = vrot.lane.b32.xlu0 %v880, 56
        %v1581 = vpop.permute.xlu0 %1580
        %v1583 = vsel %vm887, %v1576, 0
        %v1586 = vsel %vm1140, %v1581, 0
        %1588 = vmatprep.subr.bf16.mxu0 0
        %1589 = vmatpush1.bf16.msra.mxu0 0
        %1590 = vmatprep.subr.bf16.mxu0 0
        %1591 = vmatpush1.bf16.msra.mxu0 0
        %1592 = vmatprep.subr.bf16.mxu0 0
        %1593 = vmatpush1.bf16.msra.mxu0 0
        %1594 = vmatprep.subr.bf16.mxu0 0
        %1595 = vmatpush1.bf16.msra.mxu0 0
        %1596 = vmatprep.subr.bf16.mxu0 0
        %1597 = vmatpush1.bf16.msra.mxu0 0
        %1598 = vmatprep.subr.bf16.mxu0 0
        %1599 = vmatpush1.bf16.msra.mxu0 0
        %1600 = vmatprep.subr.bf16.mxu0 0
        %1601 = vmatpush1.bf16.msra.mxu0 0
        %1602 = vmatprep.subr.bf16.mxu0 0
        %1603 = vmatpush1.bf16.msra.mxu0 %v1586
        %1604 = vmatprep.subr.bf16.mxu0 0
        %1605 = vmatpush2.bf16.msra.mxu0 0
        %1606 = vmatprep.subr.bf16.mxu0 0
        %1607 = vmatpush2.bf16.msra.mxu0 0
        %1608 = vmatprep.subr.bf16.mxu0 0
        %1609 = vmatpush2.bf16.msra.mxu0 0
        %1610 = vmatprep.subr.bf16.mxu0 0
        %1611 = vmatpush2.bf16.msra.mxu0 0
        %1612 = vmatprep.subr.bf16.mxu0 0
        %1613 = vmatpush2.bf16.msra.mxu0 0
        %1614 = vmatprep.subr.bf16.mxu0 0
        %1615 = vmatpush2.bf16.msra.mxu0 0
        %1616 = vmatprep.subr.bf16.mxu0 0
        %1617 = vmatpush2.bf16.msra.mxu0 0
        %1618 = vmatprep.subr.bf16.mxu0 0
        %1619 = vmatpush2.bf16.msra.mxu0 0
        %1620 = vmatprep.mubr.bf16.mxu0 0
        %1621 = vmatmul.mubr.bf16.gmra.mxu0 %v1583
        %v1622 = vpop.f32.mrf.mxu0
        %v1623 = vadd.f32 0.0, %v1622
        %v1624 = vpop.f32.mrf.mxu0
        %v1625 = vpop.f32.mrf.mxu0
        %v1626 = vpop.f32.mrf.mxu0
        %1627 = vdwg.mxu0
        %1628 = vrot.lane.b32.xlu0 %v881, 56
        %v1629 = vpop.permute.xlu0 %1628
        %v1631 = vsel %vm887, %v1577, 0
        %v1634 = vsel %vm1140, %v1629, 0
        %1636 = vmatprep.subr.bf16.mxu0 0
        %1637 = vmatpush1.bf16.msra.mxu0 0
        %1638 = vmatprep.subr.bf16.mxu0 0
        %1639 = vmatpush1.bf16.msra.mxu0 0
        %1640 = vmatprep.subr.bf16.mxu0 0
        %1641 = vmatpush1.bf16.msra.mxu0 0
        %1642 = vmatprep.subr.bf16.mxu0 0
        %1643 = vmatpush1.bf16.msra.mxu0 0
        %1644 = vmatprep.subr.bf16.mxu0 0
        %1645 = vmatpush1.bf16.msra.mxu0 0
        %1646 = vmatprep.subr.bf16.mxu0 0
        %1647 = vmatpush1.bf16.msra.mxu0 0
        %1648 = vmatprep.subr.bf16.mxu0 0
        %1649 = vmatpush1.bf16.msra.mxu0 0
        %1650 = vmatprep.subr.bf16.mxu0 0
        %1651 = vmatpush1.bf16.msra.mxu0 %v1634
        %1652 = vmatprep.subr.bf16.mxu0 0
        %1653 = vmatpush2.bf16.msra.mxu0 0
        %1654 = vmatprep.subr.bf16.mxu0 0
        %1655 = vmatpush2.bf16.msra.mxu0 0
        %1656 = vmatprep.subr.bf16.mxu0 0
        %1657 = vmatpush2.bf16.msra.mxu0 0
        %1658 = vmatprep.subr.bf16.mxu0 0
        %1659 = vmatpush2.bf16.msra.mxu0 0
        %1660 = vmatprep.subr.bf16.mxu0 0
        %1661 = vmatpush2.bf16.msra.mxu0 0
        %1662 = vmatprep.subr.bf16.mxu0 0
        %1663 = vmatpush2.bf16.msra.mxu0 0
        %1664 = vmatprep.subr.bf16.mxu0 0
        %1665 = vmatpush2.bf16.msra.mxu0 0
        %1666 = vmatprep.subr.bf16.mxu0 0
        %1667 = vmatpush2.bf16.msra.mxu0 0
        %1668 = vmatprep.mubr.bf16.mxu0 0
        %1669 = vmatmul.mubr.bf16.gmra.mxu0 %v1631
        %v1670 = vpop.f32.mrf.mxu0
        %v1671 = vadd.f32 0.0, %v1670
        %v1672 = vpop.f32.mrf.mxu0
        %v1673 = vpop.f32.mrf.mxu0
        %v1674 = vpop.f32.mrf.mxu0
        %1675 = vdwg.mxu0
        %1676 = vrot.lane.b32.xlu0 %v882, 56
        %v1677 = vpop.permute.xlu0 %1676
        %v1679 = vsel %vm887, %v1578, 0
        %v1682 = vsel %vm1140, %v1677, 0
        %1684 = vmatprep.subr.bf16.mxu0 0
        %1685 = vmatpush1.bf16.msra.mxu0 0
        %1686 = vmatprep.subr.bf16.mxu0 0
        %1687 = vmatpush1.bf16.msra.mxu0 0
        %1688 = vmatprep.subr.bf16.mxu0 0
        %1689 = vmatpush1.bf16.msra.mxu0 0
        %1690 = vmatprep.subr.bf16.mxu0 0
        %1691 = vmatpush1.bf16.msra.mxu0 0
        %1692 = vmatprep.subr.bf16.mxu0 0
        %1693 = vmatpush1.bf16.msra.mxu0 0
        %1694 = vmatprep.subr.bf16.mxu0 0
        %1695 = vmatpush1.bf16.msra.mxu0 0
        %1696 = vmatprep.subr.bf16.mxu0 0
        %1697 = vmatpush1.bf16.msra.mxu0 0
        %1698 = vmatprep.subr.bf16.mxu0 0
        %1699 = vmatpush1.bf16.msra.mxu0 %v1682
        %1700 = vmatprep.subr.bf16.mxu0 0
        %1701 = vmatpush2.bf16.msra.mxu0 0
        %1702 = vmatprep.subr.bf16.mxu0 0
        %1703 = vmatpush2.bf16.msra.mxu0 0
        %1704 = vmatprep.subr.bf16.mxu0 0
        %1705 = vmatpush2.bf16.msra.mxu0 0
        %1706 = vmatprep.subr.bf16.mxu0 0
        %1707 = vmatpush2.bf16.msra.mxu0 0
        %1708 = vmatprep.subr.bf16.mxu0 0
        %1709 = vmatpush2.bf16.msra.mxu0 0
        %1710 = vmatprep.subr.bf16.mxu0 0
        %1711 = vmatpush2.bf16.msra.mxu0 0
        %1712 = vmatprep.subr.bf16.mxu0 0
        %1713 = vmatpush2.bf16.msra.mxu0 0
        %1714 = vmatprep.subr.bf16.mxu0 0
        %1715 = vmatpush2.bf16.msra.mxu0 0
        %1716 = vmatprep.mubr.bf16.mxu0 0
        %1717 = vmatmul.mubr.bf16.gmra.mxu0 %v1679
        %v1718 = vpop.f32.mrf.mxu0
        %v1719 = vadd.f32 0.0, %v1718
        %v1720 = vpop.f32.mrf.mxu0
        %v1721 = vpop.f32.mrf.mxu0
        %v1722 = vpop.f32.mrf.mxu0
        %1723 = vdwg.mxu0
        %1724 = vrot.lane.b32.xlu0 %v883, 56
        %v1725 = vpop.permute.xlu0 %1724
        %v1727 = vsel %vm887, %v1579, 0
        %v1730 = vsel %vm1140, %v1725, 0
        %1732 = vmatprep.subr.bf16.mxu0 0
        %1733 = vmatpush1.bf16.msra.mxu0 0
        %1734 = vmatprep.subr.bf16.mxu0 0
        %1735 = vmatpush1.bf16.msra.mxu0 0
        %1736 = vmatprep.subr.bf16.mxu0 0
        %1737 = vmatpush1.bf16.msra.mxu0 0
        %1738 = vmatprep.subr.bf16.mxu0 0
        %1739 = vmatpush1.bf16.msra.mxu0 0
        %1740 = vmatprep.subr.bf16.mxu0 0
        %1741 = vmatpush1.bf16.msra.mxu0 0
        %1742 = vmatprep.subr.bf16.mxu0 0
        %1743 = vmatpush1.bf16.msra.mxu0 0
        %1744 = vmatprep.subr.bf16.mxu0 0
        %1745 = vmatpush1.bf16.msra.mxu0 0
        %1746 = vmatprep.subr.bf16.mxu0 0
        %1747 = vmatpush1.bf16.msra.mxu0 %v1730
        %1748 = vmatprep.subr.bf16.mxu0 0
        %1749 = vmatpush2.bf16.msra.mxu0 0
        %1750 = vmatprep.subr.bf16.mxu0 0
        %1751 = vmatpush2.bf16.msra.mxu0 0
        %1752 = vmatprep.subr.bf16.mxu0 0
        %1753 = vmatpush2.bf16.msra.mxu0 0
        %1754 = vmatprep.subr.bf16.mxu0 0
        %1755 = vmatpush2.bf16.msra.mxu0 0
        %1756 = vmatprep.subr.bf16.mxu0 0
        %1757 = vmatpush2.bf16.msra.mxu0 0
        %1758 = vmatprep.subr.bf16.mxu0 0
        %1759 = vmatpush2.bf16.msra.mxu0 0
        %1760 = vmatprep.subr.bf16.mxu0 0
        %1761 = vmatpush2.bf16.msra.mxu0 0
        %1762 = vmatprep.subr.bf16.mxu0 0
        %1763 = vmatpush2.bf16.msra.mxu0 0
        %1764 = vmatprep.mubr.bf16.mxu0 0
        %1765 = vmatmul.mubr.bf16.gmra.mxu0 %v1727
        %v1766 = vpop.f32.mrf.mxu0
        %v1767 = vadd.f32 0.0, %v1766
        %v1768 = vpop.f32.mrf.mxu0
        %v1769 = vpop.f32.mrf.mxu0
        %v1770 = vpop.f32.mrf.mxu0
        %1771 = vdwg.mxu0
        %1772 = vrot.lane.b32.xlu0 %v880, 112
        %v1773 = vpop.permute.xlu0 %1772
        %1774 = vrot.lane.b32.xlu0 %v880, 80
        %v1775 = vpop.permute.xlu0 %1774
        %v1777 = vsel %vm887, %v1773, 0
        %v1780 = vsel %vm887, %v1775, 0
        %1782 = vmatprep.subr.bf16.mxu0 0
        %1783 = vmatpush1.bf16.xpose.msra.mxu0 0
        %1784 = vmatprep.subr.bf16.mxu0 0
        %1785 = vmatpush1.bf16.xpose.msra.mxu0 0
        %1786 = vmatprep.subr.bf16.mxu0 0
        %1787 = vmatpush1.bf16.xpose.msra.mxu0 0
        %1788 = vmatprep.subr.bf16.mxu0 0
        %1789 = vmatpush1.bf16.xpose.msra.mxu0 0
        %1790 = vmatprep.subr.bf16.mxu0 0
        %1791 = vmatpush1.bf16.xpose.msra.mxu0 0
        %1792 = vmatprep.subr.bf16.mxu0 0
        %1793 = vmatpush1.bf16.xpose.msra.mxu0 0
        %1794 = vmatprep.subr.bf16.mxu0 0
        %1795 = vmatpush1.bf16.xpose.msra.mxu0 0
        %1796 = vmatprep.subr.bf16.mxu0 0
        %1797 = vmatpush1.bf16.xpose.msra.mxu0 %v1780
        %1798 = vmatprep.subr.bf16.mxu0 0
        %1799 = vmatpush2.bf16.xpose.msra.mxu0 0
        %1800 = vmatprep.subr.bf16.mxu0 0
        %1801 = vmatpush2.bf16.xpose.msra.mxu0 0
        %1802 = vmatprep.subr.bf16.mxu0 0
        %1803 = vmatpush2.bf16.xpose.msra.mxu0 0
        %1804 = vmatprep.subr.bf16.mxu0 0
        %1805 = vmatpush2.bf16.xpose.msra.mxu0 0
        %1806 = vmatprep.subr.bf16.mxu0 0
        %1807 = vmatpush2.bf16.xpose.msra.mxu0 0
        %1808 = vmatprep.subr.bf16.mxu0 0
        %1809 = vmatpush2.bf16.xpose.msra.mxu0 0
        %1810 = vmatprep.subr.bf16.mxu0 0
        %1811 = vmatpush2.bf16.xpose.msra.mxu0 0
        %1812 = vmatprep.subr.bf16.mxu0 0
        %1813 = vmatpush2.bf16.xpose.msra.mxu0 0
        %1814 = vmatprep.mubr.bf16.mxu0 0
        %1815 = vmatmul.mubr.bf16.gmra.mxu0 %v1777
        %v1816 = vpop.f32.mrf.mxu0
        %v1817 = vadd.f32 0.0, %v1816
        %v1818 = vpop.f32.mrf.mxu0
        %v1819 = vpop.f32.mrf.mxu0
        %v1820 = vpop.f32.mrf.mxu0
        %1821 = vdwg.mxu0
        %1822 = vrot.lane.b32.xlu0 %v881, 112
        %v1823 = vpop.permute.xlu0 %1822
        %1824 = vrot.lane.b32.xlu0 %v881, 80
        %v1825 = vpop.permute.xlu0 %1824
        %v1827 = vsel %vm887, %v1823, 0
        %v1830 = vsel %vm887, %v1825, 0
        %1832 = vmatprep.subr.bf16.mxu0 0
        %1833 = vmatpush1.bf16.xpose.msra.mxu0 0
        %1834 = vmatprep.subr.bf16.mxu0 0
        %1835 = vmatpush1.bf16.xpose.msra.mxu0 0
        %1836 = vmatprep.subr.bf16.mxu0 0
        %1837 = vmatpush1.bf16.xpose.msra.mxu0 0
        %1838 = vmatprep.subr.bf16.mxu0 0
        %1839 = vmatpush1.bf16.xpose.msra.mxu0 0
        %1840 = vmatprep.subr.bf16.mxu0 0
        %1841 = vmatpush1.bf16.xpose.msra.mxu0 0
        %1842 = vmatprep.subr.bf16.mxu0 0
        %1843 = vmatpush1.bf16.xpose.msra.mxu0 0
        %1844 = vmatprep.subr.bf16.mxu0 0
        %1845 = vmatpush1.bf16.xpose.msra.mxu0 0
        %1846 = vmatprep.subr.bf16.mxu0 0
        %1847 = vmatpush1.bf16.xpose.msra.mxu0 %v1830
        %1848 = vmatprep.subr.bf16.mxu0 0
        %1849 = vmatpush2.bf16.xpose.msra.mxu0 0
        %1850 = vmatprep.subr.bf16.mxu0 0
        %1851 = vmatpush2.bf16.xpose.msra.mxu0 0
        %1852 = vmatprep.subr.bf16.mxu0 0
        %1853 = vmatpush2.bf16.xpose.msra.mxu0 0
        %1854 = vmatprep.subr.bf16.mxu0 0
        %1855 = vmatpush2.bf16.xpose.msra.mxu0 0
        %1856 = vmatprep.subr.bf16.mxu0 0
        %1857 = vmatpush2.bf16.xpose.msra.mxu0 0
        %1858 = vmatprep.subr.bf16.mxu0 0
        %1859 = vmatpush2.bf16.xpose.msra.mxu0 0
        %1860 = vmatprep.subr.bf16.mxu0 0
        %1861 = vmatpush2.bf16.xpose.msra.mxu0 0
        %1862 = vmatprep.subr.bf16.mxu0 0
        %1863 = vmatpush2.bf16.xpose.msra.mxu0 0
        %1864 = vmatprep.mubr.bf16.mxu0 0
        %1865 = vmatmul.mubr.bf16.gmra.mxu0 %v1827
        %v1866 = vpop.f32.mrf.mxu0
        %v1867 = vadd.f32 0.0, %v1866
        %v1868 = vpop.f32.mrf.mxu0
        %v1869 = vpop.f32.mrf.mxu0
        %v1870 = vpop.f32.mrf.mxu0
        %1871 = vdwg.mxu0
        %1872 = vrot.lane.b32.xlu0 %v882, 112
        %v1873 = vpop.permute.xlu0 %1872
        %1874 = vrot.lane.b32.xlu0 %v882, 80
        %v1875 = vpop.permute.xlu0 %1874
        %v1877 = vsel %vm887, %v1873, 0
        %v1880 = vsel %vm887, %v1875, 0
        %1882 = vmatprep.subr.bf16.mxu0 0
        %1883 = vmatpush1.bf16.xpose.msra.mxu0 0
        %1884 = vmatprep.subr.bf16.mxu0 0
        %1885 = vmatpush1.bf16.xpose.msra.mxu0 0
        %1886 = vmatprep.subr.bf16.mxu0 0
        %1887 = vmatpush1.bf16.xpose.msra.mxu0 0
        %1888 = vmatprep.subr.bf16.mxu0 0
        %1889 = vmatpush1.bf16.xpose.msra.mxu0 0
        %1890 = vmatprep.subr.bf16.mxu0 0
        %1891 = vmatpush1.bf16.xpose.msra.mxu0 0
        %1892 = vmatprep.subr.bf16.mxu0 0
        %1893 = vmatpush1.bf16.xpose.msra.mxu0 0
        %1894 = vmatprep.subr.bf16.mxu0 0
        %1895 = vmatpush1.bf16.xpose.msra.mxu0 0
        %1896 = vmatprep.subr.bf16.mxu0 0
        %1897 = vmatpush1.bf16.xpose.msra.mxu0 %v1880
        %1898 = vmatprep.subr.bf16.mxu0 0
        %1899 = vmatpush2.bf16.xpose.msra.mxu0 0
        %1900 = vmatprep.subr.bf16.mxu0 0
        %1901 = vmatpush2.bf16.xpose.msra.mxu0 0
        %1902 = vmatprep.subr.bf16.mxu0 0
        %1903 = vmatpush2.bf16.xpose.msra.mxu0 0
        %1904 = vmatprep.subr.bf16.mxu0 0
        %1905 = vmatpush2.bf16.xpose.msra.mxu0 0
        %1906 = vmatprep.subr.bf16.mxu0 0
        %1907 = vmatpush2.bf16.xpose.msra.mxu0 0
        %1908 = vmatprep.subr.bf16.mxu0 0
        %1909 = vmatpush2.bf16.xpose.msra.mxu0 0
        %1910 = vmatprep.subr.bf16.mxu0 0
        %1911 = vmatpush2.bf16.xpose.msra.mxu0 0
        %1912 = vmatprep.subr.bf16.mxu0 0
        %1913 = vmatpush2.bf16.xpose.msra.mxu0 0
        %1914 = vmatprep.mubr.bf16.mxu0 0
        %1915 = vmatmul.mubr.bf16.gmra.mxu0 %v1877
        %v1916 = vpop.f32.mrf.mxu0
        %v1917 = vadd.f32 0.0, %v1916
        %v1918 = vpop.f32.mrf.mxu0
        %v1919 = vpop.f32.mrf.mxu0
        %v1920 = vpop.f32.mrf.mxu0
        %1921 = vdwg.mxu0
        %1922 = vrot.lane.b32.xlu0 %v883, 112
        %v1923 = vpop.permute.xlu0 %1922
        %1924 = vrot.lane.b32.xlu0 %v883, 80
        %v1925 = vpop.permute.xlu0 %1924
        %v1927 = vsel %vm887, %v1923, 0
        %v1930 = vsel %vm887, %v1925, 0
        %1932 = vmatprep.subr.bf16.mxu0 0
        %1933 = vmatpush1.bf16.xpose.msra.mxu0 0
        %1934 = vmatprep.subr.bf16.mxu0 0
        %1935 = vmatpush1.bf16.xpose.msra.mxu0 0
        %1936 = vmatprep.subr.bf16.mxu0 0
        %1937 = vmatpush1.bf16.xpose.msra.mxu0 0
        %1938 = vmatprep.subr.bf16.mxu0 0
        %1939 = vmatpush1.bf16.xpose.msra.mxu0 0
        %1940 = vmatprep.subr.bf16.mxu0 0
        %1941 = vmatpush1.bf16.xpose.msra.mxu0 0
        %1942 = vmatprep.subr.bf16.mxu0 0
        %1943 = vmatpush1.bf16.xpose.msra.mxu0 0
        %1944 = vmatprep.subr.bf16.mxu0 0
        %1945 = vmatpush1.bf16.xpose.msra.mxu0 0
        %1946 = vmatprep.subr.bf16.mxu0 0
        %1947 = vmatpush1.bf16.xpose.msra.mxu0 %v1930
        %1948 = vmatprep.subr.bf16.mxu0 0
        %1949 = vmatpush2.bf16.xpose.msra.mxu0 0
        %1950 = vmatprep.subr.bf16.mxu0 0
        %1951 = vmatpush2.bf16.xpose.msra.mxu0 0
        %1952 = vmatprep.subr.bf16.mxu0 0
        %1953 = vmatpush2.bf16.xpose.msra.mxu0 0
        %1954 = vmatprep.subr.bf16.mxu0 0
        %1955 = vmatpush2.bf16.xpose.msra.mxu0 0
        %1956 = vmatprep.subr.bf16.mxu0 0
        %1957 = vmatpush2.bf16.xpose.msra.mxu0 0
        %1958 = vmatprep.subr.bf16.mxu0 0
        %1959 = vmatpush2.bf16.xpose.msra.mxu0 0
        %1960 = vmatprep.subr.bf16.mxu0 0
        %1961 = vmatpush2.bf16.xpose.msra.mxu0 0
        %1962 = vmatprep.subr.bf16.mxu0 0
        %1963 = vmatpush2.bf16.xpose.msra.mxu0 0
        %1964 = vmatprep.mubr.bf16.mxu0 0
        %1965 = vmatmul.mubr.bf16.gmra.mxu0 %v1927
        %v1966 = vpop.f32.mrf.mxu0
        %v1967 = vadd.f32 0.0, %v1966
        %v1968 = vpop.f32.mrf.mxu0
        %v1969 = vpop.f32.mrf.mxu0
        %v1970 = vpop.f32.mrf.mxu0
        %1971 = vdwg.mxu0
        %v1972 = vsel %vm1082, %v1817, -1e+30
        %v1973 = vsel %vm1082, %v1867, -1e+30
        %v1974 = vsel %vm1082, %v1917, -1e+30
        %v1975 = vsel %vm1082, %v1967, -1e+30
        %v1976 = vsel %vm887, %v1972, -inf
        %1977 = vmax.xlane.f32.xlu0 %v1976
        %v1978 = vpop.xlane.xlu0 %1977
        %v1979 = vsel %vm887, %v1973, -inf
        %1980 = vmax.xlane.f32.xlu0 %v1979
        %v1981 = vpop.xlane.xlu0 %1980
        %v1982 = vsel %vm887, %v1974, -inf
        %1983 = vmax.xlane.f32.xlu0 %v1982
        %v1984 = vpop.xlane.xlu0 %1983
        %v1985 = vsel %vm887, %v1975, -inf
        %1986 = vmax.xlane.f32.xlu0 %v1985
        %v1987 = vpop.xlane.xlu0 %1986
        %v1988 = vsub.f32 %v1972, %v1978
        %v1989 = vsub.f32 %v1973, %v1981
        %v1990 = vsub.f32 %v1974, %v1984
        %v1991 = vsub.f32 %v1975, %v1987
        %v1992 = vmul.f32 %v1988, 1.442695
        %v1993 = vpow.pop %v1992
        %v1994 = vmul.f32 %v1989, 1.442695
        %v1995 = vpow.pop %v1994
        %v1996 = vmul.f32 %v1990, 1.442695
        %v1997 = vpow.pop %v1996
        %v1998 = vmul.f32 %v1991, 1.442695
        %v1999 = vpow.pop %v1998
        %v2000 = vsel %vm887, %v1993, 0.0
        %2001 = vadd.xlane.f32.xlu0 %v2000
        %v2002 = vpop.xlane.xlu0 %2001
        %v2003 = vsel %vm887, %v1995, 0.0
        %2004 = vadd.xlane.f32.xlu0 %v2003
        %v2005 = vpop.xlane.xlu0 %2004
        %v2006 = vsel %vm887, %v1997, 0.0
        %2007 = vadd.xlane.f32.xlu0 %v2006
        %v2008 = vpop.xlane.xlu0 %2007
        %v2009 = vsel %vm887, %v1999, 0.0
        %2010 = vadd.xlane.f32.xlu0 %v2009
        %v2011 = vpop.xlane.xlu0 %2010
        %v2012 = vrcp.pop %v2002
        %v2013 = vrcp.pop %v2005
        %v2014 = vrcp.pop %v2008
        %v2015 = vrcp.pop %v2011
        %v2016 = vmul.f32 %v1993, %v2012
        %v2017 = vmul.f32 %v1995, %v2013
        %v2018 = vmul.f32 %v1997, %v2014
        %v2019 = vmul.f32 %v1999, %v2015
        %v2020 = vpack.c.bf16 %v2016, %v2016
        %v2021 = vpack.c.bf16 %v2017, %v2017
        %v2022 = vpack.c.bf16 %v2018, %v2018
        %v2023 = vpack.c.bf16 %v2019, %v2019
        %2024 = vrot.lane.b32.xlu0 %v880, 48
        %v2025 = vpop.permute.xlu0 %2024
        %v2027 = vsel %vm887, %v2020, 0
        %v2030 = vsel %vm1140, %v2025, 0
        %2032 = vmatprep.subr.bf16.mxu0 0
        %2033 = vmatpush1.bf16.msra.mxu0 0
        %2034 = vmatprep.subr.bf16.mxu0 0
        %2035 = vmatpush1.bf16.msra.mxu0 0
        %2036 = vmatprep.subr.bf16.mxu0 0
        %2037 = vmatpush1.bf16.msra.mxu0 0
        %2038 = vmatprep.subr.bf16.mxu0 0
        %2039 = vmatpush1.bf16.msra.mxu0 0
        %2040 = vmatprep.subr.bf16.mxu0 0
        %2041 = vmatpush1.bf16.msra.mxu0 0
        %2042 = vmatprep.subr.bf16.mxu0 0
        %2043 = vmatpush1.bf16.msra.mxu0 0
        %2044 = vmatprep.subr.bf16.mxu0 0
        %2045 = vmatpush1.bf16.msra.mxu0 0
        %2046 = vmatprep.subr.bf16.mxu0 0
        %2047 = vmatpush1.bf16.msra.mxu0 %v2030
        %2048 = vmatprep.subr.bf16.mxu0 0
        %2049 = vmatpush2.bf16.msra.mxu0 0
        %2050 = vmatprep.subr.bf16.mxu0 0
        %2051 = vmatpush2.bf16.msra.mxu0 0
        %2052 = vmatprep.subr.bf16.mxu0 0
        %2053 = vmatpush2.bf16.msra.mxu0 0
        %2054 = vmatprep.subr.bf16.mxu0 0
        %2055 = vmatpush2.bf16.msra.mxu0 0
        %2056 = vmatprep.subr.bf16.mxu0 0
        %2057 = vmatpush2.bf16.msra.mxu0 0
        %2058 = vmatprep.subr.bf16.mxu0 0
        %2059 = vmatpush2.bf16.msra.mxu0 0
        %2060 = vmatprep.subr.bf16.mxu0 0
        %2061 = vmatpush2.bf16.msra.mxu0 0
        %2062 = vmatprep.subr.bf16.mxu0 0
        %2063 = vmatpush2.bf16.msra.mxu0 0
        %2064 = vmatprep.mubr.bf16.mxu0 0
        %2065 = vmatmul.mubr.bf16.gmra.mxu0 %v2027
        %v2066 = vpop.f32.mrf.mxu0
        %v2067 = vadd.f32 0.0, %v2066
        %v2068 = vpop.f32.mrf.mxu0
        %v2069 = vpop.f32.mrf.mxu0
        %v2070 = vpop.f32.mrf.mxu0
        %2071 = vdwg.mxu0
        %2072 = vrot.lane.b32.xlu0 %v881, 48
        %v2073 = vpop.permute.xlu0 %2072
        %v2075 = vsel %vm887, %v2021, 0
        %v2078 = vsel %vm1140, %v2073, 0
        %2080 = vmatprep.subr.bf16.mxu0 0
        %2081 = vmatpush1.bf16.msra.mxu0 0
        %2082 = vmatprep.subr.bf16.mxu0 0
        %2083 = vmatpush1.bf16.msra.mxu0 0
        %2084 = vmatprep.subr.bf16.mxu0 0
        %2085 = vmatpush1.bf16.msra.mxu0 0
        %2086 = vmatprep.subr.bf16.mxu0 0
        %2087 = vmatpush1.bf16.msra.mxu0 0
        %2088 = vmatprep.subr.bf16.mxu0 0
        %2089 = vmatpush1.bf16.msra.mxu0 0
        %2090 = vmatprep.subr.bf16.mxu0 0
        %2091 = vmatpush1.bf16.msra.mxu0 0
        %2092 = vmatprep.subr.bf16.mxu0 0
        %2093 = vmatpush1.bf16.msra.mxu0 0
        %2094 = vmatprep.subr.bf16.mxu0 0
        %2095 = vmatpush1.bf16.msra.mxu0 %v2078
        %2096 = vmatprep.subr.bf16.mxu0 0
        %2097 = vmatpush2.bf16.msra.mxu0 0
        %2098 = vmatprep.subr.bf16.mxu0 0
        %2099 = vmatpush2.bf16.msra.mxu0 0
        %2100 = vmatprep.subr.bf16.mxu0 0
        %2101 = vmatpush2.bf16.msra.mxu0 0
        %2102 = vmatprep.subr.bf16.mxu0 0
        %2103 = vmatpush2.bf16.msra.mxu0 0
        %2104 = vmatprep.subr.bf16.mxu0 0
        %2105 = vmatpush2.bf16.msra.mxu0 0
        %2106 = vmatprep.subr.bf16.mxu0 0
        %2107 = vmatpush2.bf16.msra.mxu0 0
        %2108 = vmatprep.subr.bf16.mxu0 0
        %2109 = vmatpush2.bf16.msra.mxu0 0
        %2110 = vmatprep.subr.bf16.mxu0 0
        %2111 = vmatpush2.bf16.msra.mxu0 0
        %2112 = vmatprep.mubr.bf16.mxu0 0
        %2113 = vmatmul.mubr.bf16.gmra.mxu0 %v2075
        %v2114 = vpop.f32.mrf.mxu0
        %v2115 = vadd.f32 0.0, %v2114
        %v2116 = vpop.f32.mrf.mxu0
        %v2117 = vpop.f32.mrf.mxu0
        %v2118 = vpop.f32.mrf.mxu0
        %2119 = vdwg.mxu0
        %2120 = vrot.lane.b32.xlu0 %v882, 48
        %v2121 = vpop.permute.xlu0 %2120
        %v2123 = vsel %vm887, %v2022, 0
        %v2126 = vsel %vm1140, %v2121, 0
        %2128 = vmatprep.subr.bf16.mxu0 0
        %2129 = vmatpush1.bf16.msra.mxu0 0
        %2130 = vmatprep.subr.bf16.mxu0 0
        %2131 = vmatpush1.bf16.msra.mxu0 0
        %2132 = vmatprep.subr.bf16.mxu0 0
        %2133 = vmatpush1.bf16.msra.mxu0 0
        %2134 = vmatprep.subr.bf16.mxu0 0
        %2135 = vmatpush1.bf16.msra.mxu0 0
        %2136 = vmatprep.subr.bf16.mxu0 0
        %2137 = vmatpush1.bf16.msra.mxu0 0
        %2138 = vmatprep.subr.bf16.mxu0 0
        %2139 = vmatpush1.bf16.msra.mxu0 0
        %2140 = vmatprep.subr.bf16.mxu0 0
        %2141 = vmatpush1.bf16.msra.mxu0 0
        %2142 = vmatprep.subr.bf16.mxu0 0
        %2143 = vmatpush1.bf16.msra.mxu0 %v2126
        %2144 = vmatprep.subr.bf16.mxu0 0
        %2145 = vmatpush2.bf16.msra.mxu0 0
        %2146 = vmatprep.subr.bf16.mxu0 0
        %2147 = vmatpush2.bf16.msra.mxu0 0
        %2148 = vmatprep.subr.bf16.mxu0 0
        %2149 = vmatpush2.bf16.msra.mxu0 0
        %2150 = vmatprep.subr.bf16.mxu0 0
        %2151 = vmatpush2.bf16.msra.mxu0 0
        %2152 = vmatprep.subr.bf16.mxu0 0
        %2153 = vmatpush2.bf16.msra.mxu0 0
        %2154 = vmatprep.subr.bf16.mxu0 0
        %2155 = vmatpush2.bf16.msra.mxu0 0
        %2156 = vmatprep.subr.bf16.mxu0 0
        %2157 = vmatpush2.bf16.msra.mxu0 0
        %2158 = vmatprep.subr.bf16.mxu0 0
        %2159 = vmatpush2.bf16.msra.mxu0 0
        %2160 = vmatprep.mubr.bf16.mxu0 0
        %2161 = vmatmul.mubr.bf16.gmra.mxu0 %v2123
        %v2162 = vpop.f32.mrf.mxu0
        %v2163 = vadd.f32 0.0, %v2162
        %v2164 = vpop.f32.mrf.mxu0
        %v2165 = vpop.f32.mrf.mxu0
        %v2166 = vpop.f32.mrf.mxu0
        %2167 = vdwg.mxu0
        %2168 = vrot.lane.b32.xlu0 %v883, 48
        %v2169 = vpop.permute.xlu0 %2168
        %v2171 = vsel %vm887, %v2023, 0
        %v2174 = vsel %vm1140, %v2169, 0
        %2176 = vmatprep.subr.bf16.mxu0 0
        %2177 = vmatpush1.bf16.msra.mxu0 0
        %2178 = vmatprep.subr.bf16.mxu0 0
        %2179 = vmatpush1.bf16.msra.mxu0 0
        %2180 = vmatprep.subr.bf16.mxu0 0
        %2181 = vmatpush1.bf16.msra.mxu0 0
        %2182 = vmatprep.subr.bf16.mxu0 0
        %2183 = vmatpush1.bf16.msra.mxu0 0
        %2184 = vmatprep.subr.bf16.mxu0 0
        %2185 = vmatpush1.bf16.msra.mxu0 0
        %2186 = vmatprep.subr.bf16.mxu0 0
        %2187 = vmatpush1.bf16.msra.mxu0 0
        %2188 = vmatprep.subr.bf16.mxu0 0
        %2189 = vmatpush1.bf16.msra.mxu0 0
        %2190 = vmatprep.subr.bf16.mxu0 0
        %2191 = vmatpush1.bf16.msra.mxu0 %v2174
        %2192 = vmatprep.subr.bf16.mxu0 0
        %2193 = vmatpush2.bf16.msra.mxu0 0
        %2194 = vmatprep.subr.bf16.mxu0 0
        %2195 = vmatpush2.bf16.msra.mxu0 0
        %2196 = vmatprep.subr.bf16.mxu0 0
        %2197 = vmatpush2.bf16.msra.mxu0 0
        %2198 = vmatprep.subr.bf16.mxu0 0
        %2199 = vmatpush2.bf16.msra.mxu0 0
        %2200 = vmatprep.subr.bf16.mxu0 0
        %2201 = vmatpush2.bf16.msra.mxu0 0
        %2202 = vmatprep.subr.bf16.mxu0 0
        %2203 = vmatpush2.bf16.msra.mxu0 0
        %2204 = vmatprep.subr.bf16.mxu0 0
        %2205 = vmatpush2.bf16.msra.mxu0 0
        %2206 = vmatprep.subr.bf16.mxu0 0
        %2207 = vmatpush2.bf16.msra.mxu0 0
        %2208 = vmatprep.mubr.bf16.mxu0 0
        %2209 = vmatmul.mubr.bf16.gmra.mxu0 %v2171
        %v2210 = vpop.f32.mrf.mxu0
        %v2211 = vadd.f32 0.0, %v2210
        %v2212 = vpop.f32.mrf.mxu0
        %v2213 = vpop.f32.mrf.mxu0
        %v2214 = vpop.f32.mrf.mxu0
        %2215 = vdwg.mxu0
        %2216 = vrot.lane.b32.xlu0 %v880, 104
        %v2217 = vpop.permute.xlu0 %2216
        %2218 = vrot.lane.b32.xlu0 %v880, 72
        %v2219 = vpop.permute.xlu0 %2218
        %v2221 = vsel %vm887, %v2217, 0
        %v2224 = vsel %vm887, %v2219, 0
        %2226 = vmatprep.subr.bf16.mxu0 0
        %2227 = vmatpush1.bf16.xpose.msra.mxu0 0
        %2228 = vmatprep.subr.bf16.mxu0 0
        %2229 = vmatpush1.bf16.xpose.msra.mxu0 0
        %2230 = vmatprep.subr.bf16.mxu0 0
        %2231 = vmatpush1.bf16.xpose.msra.mxu0 0
        %2232 = vmatprep.subr.bf16.mxu0 0
        %2233 = vmatpush1.bf16.xpose.msra.mxu0 0
        %2234 = vmatprep.subr.bf16.mxu0 0
        %2235 = vmatpush1.bf16.xpose.msra.mxu0 0
        %2236 = vmatprep.subr.bf16.mxu0 0
        %2237 = vmatpush1.bf16.xpose.msra.mxu0 0
        %2238 = vmatprep.subr.bf16.mxu0 0
        %2239 = vmatpush1.bf16.xpose.msra.mxu0 0
        %2240 = vmatprep.subr.bf16.mxu0 0
        %2241 = vmatpush1.bf16.xpose.msra.mxu0 %v2224
        %2242 = vmatprep.subr.bf16.mxu0 0
        %2243 = vmatpush2.bf16.xpose.msra.mxu0 0
        %2244 = vmatprep.subr.bf16.mxu0 0
        %2245 = vmatpush2.bf16.xpose.msra.mxu0 0
        %2246 = vmatprep.subr.bf16.mxu0 0
        %2247 = vmatpush2.bf16.xpose.msra.mxu0 0
        %2248 = vmatprep.subr.bf16.mxu0 0
        %2249 = vmatpush2.bf16.xpose.msra.mxu0 0
        %2250 = vmatprep.subr.bf16.mxu0 0
        %2251 = vmatpush2.bf16.xpose.msra.mxu0 0
        %2252 = vmatprep.subr.bf16.mxu0 0
        %2253 = vmatpush2.bf16.xpose.msra.mxu0 0
        %2254 = vmatprep.subr.bf16.mxu0 0
        %2255 = vmatpush2.bf16.xpose.msra.mxu0 0
        %2256 = vmatprep.subr.bf16.mxu0 0
        %2257 = vmatpush2.bf16.xpose.msra.mxu0 0
        %2258 = vmatprep.mubr.bf16.mxu0 0
        %2259 = vmatmul.mubr.bf16.gmra.mxu0 %v2221
        %v2260 = vpop.f32.mrf.mxu0
        %v2261 = vadd.f32 0.0, %v2260
        %v2262 = vpop.f32.mrf.mxu0
        %v2263 = vpop.f32.mrf.mxu0
        %v2264 = vpop.f32.mrf.mxu0
        %2265 = vdwg.mxu0
        %2266 = vrot.lane.b32.xlu0 %v881, 104
        %v2267 = vpop.permute.xlu0 %2266
        %2268 = vrot.lane.b32.xlu0 %v881, 72
        %v2269 = vpop.permute.xlu0 %2268
        %v2271 = vsel %vm887, %v2267, 0
        %v2274 = vsel %vm887, %v2269, 0
        %2276 = vmatprep.subr.bf16.mxu0 0
        %2277 = vmatpush1.bf16.xpose.msra.mxu0 0
        %2278 = vmatprep.subr.bf16.mxu0 0
        %2279 = vmatpush1.bf16.xpose.msra.mxu0 0
        %2280 = vmatprep.subr.bf16.mxu0 0
        %2281 = vmatpush1.bf16.xpose.msra.mxu0 0
        %2282 = vmatprep.subr.bf16.mxu0 0
        %2283 = vmatpush1.bf16.xpose.msra.mxu0 0
        %2284 = vmatprep.subr.bf16.mxu0 0
        %2285 = vmatpush1.bf16.xpose.msra.mxu0 0
        %2286 = vmatprep.subr.bf16.mxu0 0
        %2287 = vmatpush1.bf16.xpose.msra.mxu0 0
        %2288 = vmatprep.subr.bf16.mxu0 0
        %2289 = vmatpush1.bf16.xpose.msra.mxu0 0
        %2290 = vmatprep.subr.bf16.mxu0 0
        %2291 = vmatpush1.bf16.xpose.msra.mxu0 %v2274
        %2292 = vmatprep.subr.bf16.mxu0 0
        %2293 = vmatpush2.bf16.xpose.msra.mxu0 0
        %2294 = vmatprep.subr.bf16.mxu0 0
        %2295 = vmatpush2.bf16.xpose.msra.mxu0 0
        %2296 = vmatprep.subr.bf16.mxu0 0
        %2297 = vmatpush2.bf16.xpose.msra.mxu0 0
        %2298 = vmatprep.subr.bf16.mxu0 0
        %2299 = vmatpush2.bf16.xpose.msra.mxu0 0
        %2300 = vmatprep.subr.bf16.mxu0 0
        %2301 = vmatpush2.bf16.xpose.msra.mxu0 0
        %2302 = vmatprep.subr.bf16.mxu0 0
        %2303 = vmatpush2.bf16.xpose.msra.mxu0 0
        %2304 = vmatprep.subr.bf16.mxu0 0
        %2305 = vmatpush2.bf16.xpose.msra.mxu0 0
        %2306 = vmatprep.subr.bf16.mxu0 0
        %2307 = vmatpush2.bf16.xpose.msra.mxu0 0
        %2308 = vmatprep.mubr.bf16.mxu0 0
        %2309 = vmatmul.mubr.bf16.gmra.mxu0 %v2271
        %v2310 = vpop.f32.mrf.mxu0
        %v2311 = vadd.f32 0.0, %v2310
        %v2312 = vpop.f32.mrf.mxu0
        %v2313 = vpop.f32.mrf.mxu0
        %v2314 = vpop.f32.mrf.mxu0
        %2315 = vdwg.mxu0
        %2316 = vrot.lane.b32.xlu0 %v882, 104
        %v2317 = vpop.permute.xlu0 %2316
        %2318 = vrot.lane.b32.xlu0 %v882, 72
        %v2319 = vpop.permute.xlu0 %2318
        %v2321 = vsel %vm887, %v2317, 0
        %v2324 = vsel %vm887, %v2319, 0
        %2326 = vmatprep.subr.bf16.mxu0 0
        %2327 = vmatpush1.bf16.xpose.msra.mxu0 0
        %2328 = vmatprep.subr.bf16.mxu0 0
        %2329 = vmatpush1.bf16.xpose.msra.mxu0 0
        %2330 = vmatprep.subr.bf16.mxu0 0
        %2331 = vmatpush1.bf16.xpose.msra.mxu0 0
        %2332 = vmatprep.subr.bf16.mxu0 0
        %2333 = vmatpush1.bf16.xpose.msra.mxu0 0
        %2334 = vmatprep.subr.bf16.mxu0 0
        %2335 = vmatpush1.bf16.xpose.msra.mxu0 0
        %2336 = vmatprep.subr.bf16.mxu0 0
        %2337 = vmatpush1.bf16.xpose.msra.mxu0 0
        %2338 = vmatprep.subr.bf16.mxu0 0
        %2339 = vmatpush1.bf16.xpose.msra.mxu0 0
        %2340 = vmatprep.subr.bf16.mxu0 0
        %2341 = vmatpush1.bf16.xpose.msra.mxu0 %v2324
        %2342 = vmatprep.subr.bf16.mxu0 0
        %2343 = vmatpush2.bf16.xpose.msra.mxu0 0
        %2344 = vmatprep.subr.bf16.mxu0 0
        %2345 = vmatpush2.bf16.xpose.msra.mxu0 0
        %2346 = vmatprep.subr.bf16.mxu0 0
        %2347 = vmatpush2.bf16.xpose.msra.mxu0 0
        %2348 = vmatprep.subr.bf16.mxu0 0
        %2349 = vmatpush2.bf16.xpose.msra.mxu0 0
        %2350 = vmatprep.subr.bf16.mxu0 0
        %2351 = vmatpush2.bf16.xpose.msra.mxu0 0
        %2352 = vmatprep.subr.bf16.mxu0 0
        %2353 = vmatpush2.bf16.xpose.msra.mxu0 0
        %2354 = vmatprep.subr.bf16.mxu0 0
        %2355 = vmatpush2.bf16.xpose.msra.mxu0 0
        %2356 = vmatprep.subr.bf16.mxu0 0
        %2357 = vmatpush2.bf16.xpose.msra.mxu0 0
        %2358 = vmatprep.mubr.bf16.mxu0 0
        %2359 = vmatmul.mubr.bf16.gmra.mxu0 %v2321
        %v2360 = vpop.f32.mrf.mxu0
        %v2361 = vadd.f32 0.0, %v2360
        %v2362 = vpop.f32.mrf.mxu0
        %v2363 = vpop.f32.mrf.mxu0
        %v2364 = vpop.f32.mrf.mxu0
        %2365 = vdwg.mxu0
        %2366 = vrot.lane.b32.xlu0 %v883, 104
        %v2367 = vpop.permute.xlu0 %2366
        %2368 = vrot.lane.b32.xlu0 %v883, 72
        %v2369 = vpop.permute.xlu0 %2368
        %v2371 = vsel %vm887, %v2367, 0
        %v2374 = vsel %vm887, %v2369, 0
        %2376 = vmatprep.subr.bf16.mxu0 0
        %2377 = vmatpush1.bf16.xpose.msra.mxu0 0
        %2378 = vmatprep.subr.bf16.mxu0 0
        %2379 = vmatpush1.bf16.xpose.msra.mxu0 0
        %2380 = vmatprep.subr.bf16.mxu0 0
        %2381 = vmatpush1.bf16.xpose.msra.mxu0 0
        %2382 = vmatprep.subr.bf16.mxu0 0
        %2383 = vmatpush1.bf16.xpose.msra.mxu0 0
        %2384 = vmatprep.subr.bf16.mxu0 0
        %2385 = vmatpush1.bf16.xpose.msra.mxu0 0
        %2386 = vmatprep.subr.bf16.mxu0 0
        %2387 = vmatpush1.bf16.xpose.msra.mxu0 0
        %2388 = vmatprep.subr.bf16.mxu0 0
        %2389 = vmatpush1.bf16.xpose.msra.mxu0 0
        %2390 = vmatprep.subr.bf16.mxu0 0
        %2391 = vmatpush1.bf16.xpose.msra.mxu0 %v2374
        %2392 = vmatprep.subr.bf16.mxu0 0
        %2393 = vmatpush2.bf16.xpose.msra.mxu0 0
        %2394 = vmatprep.subr.bf16.mxu0 0
        %2395 = vmatpush2.bf16.xpose.msra.mxu0 0
        %2396 = vmatprep.subr.bf16.mxu0 0
        %2397 = vmatpush2.bf16.xpose.msra.mxu0 0
        %2398 = vmatprep.subr.bf16.mxu0 0
        %2399 = vmatpush2.bf16.xpose.msra.mxu0 0
        %2400 = vmatprep.subr.bf16.mxu0 0
        %2401 = vmatpush2.bf16.xpose.msra.mxu0 0
        %2402 = vmatprep.subr.bf16.mxu0 0
        %2403 = vmatpush2.bf16.xpose.msra.mxu0 0
        %2404 = vmatprep.subr.bf16.mxu0 0
        %2405 = vmatpush2.bf16.xpose.msra.mxu0 0
        %2406 = vmatprep.subr.bf16.mxu0 0
        %2407 = vmatpush2.bf16.xpose.msra.mxu0 0
        %2408 = vmatprep.mubr.bf16.mxu0 0
        %2409 = vmatmul.mubr.bf16.gmra.mxu0 %v2371
        %v2410 = vpop.f32.mrf.mxu0
        %v2411 = vadd.f32 0.0, %v2410
        %v2412 = vpop.f32.mrf.mxu0
        %v2413 = vpop.f32.mrf.mxu0
        %v2414 = vpop.f32.mrf.mxu0
        %2415 = vdwg.mxu0
        %v2416 = vsel %vm1082, %v2261, -1e+30
        %v2417 = vsel %vm1082, %v2311, -1e+30
        %v2418 = vsel %vm1082, %v2361, -1e+30
        %v2419 = vsel %vm1082, %v2411, -1e+30
        %v2420 = vsel %vm887, %v2416, -inf
        %2421 = vmax.xlane.f32.xlu0 %v2420
        %v2422 = vpop.xlane.xlu0 %2421
        %v2423 = vsel %vm887, %v2417, -inf
        %2424 = vmax.xlane.f32.xlu0 %v2423
        %v2425 = vpop.xlane.xlu0 %2424
        %v2426 = vsel %vm887, %v2418, -inf
        %2427 = vmax.xlane.f32.xlu0 %v2426
        %v2428 = vpop.xlane.xlu0 %2427
        %v2429 = vsel %vm887, %v2419, -inf
        %2430 = vmax.xlane.f32.xlu0 %v2429
        %v2431 = vpop.xlane.xlu0 %2430
        %v2432 = vsub.f32 %v2416, %v2422
        %v2433 = vsub.f32 %v2417, %v2425
        %v2434 = vsub.f32 %v2418, %v2428
        %v2435 = vsub.f32 %v2419, %v2431
        %v2436 = vmul.f32 %v2432, 1.442695
        %v2437 = vpow.pop %v2436
        %v2438 = vmul.f32 %v2433, 1.442695
        %v2439 = vpow.pop %v2438
        %v2440 = vmul.f32 %v2434, 1.442695
        %v2441 = vpow.pop %v2440
        %v2442 = vmul.f32 %v2435, 1.442695
        %v2443 = vpow.pop %v2442
        %v2444 = vsel %vm887, %v2437, 0.0
        %2445 = vadd.xlane.f32.xlu0 %v2444
        %v2446 = vpop.xlane.xlu0 %2445
        %v2447 = vsel %vm887, %v2439, 0.0
        %2448 = vadd.xlane.f32.xlu0 %v2447
        %v2449 = vpop.xlane.xlu0 %2448
        %v2450 = vsel %vm887, %v2441, 0.0
        %2451 = vadd.xlane.f32.xlu0 %v2450
        %v2452 = vpop.xlane.xlu0 %2451
        %v2453 = vsel %vm887, %v2443, 0.0
        %2454 = vadd.xlane.f32.xlu0 %v2453
        %v2455 = vpop.xlane.xlu0 %2454
        %v2456 = vrcp.pop %v2446
        %v2457 = vrcp.pop %v2449
        %v2458 = vrcp.pop %v2452
        %v2459 = vrcp.pop %v2455
        %v2460 = vmul.f32 %v2437, %v2456
        %v2461 = vmul.f32 %v2439, %v2457
        %v2462 = vmul.f32 %v2441, %v2458
        %v2463 = vmul.f32 %v2443, %v2459
        %v2464 = vpack.c.bf16 %v2460, %v2460
        %v2465 = vpack.c.bf16 %v2461, %v2461
        %v2466 = vpack.c.bf16 %v2462, %v2462
        %v2467 = vpack.c.bf16 %v2463, %v2463
        %2468 = vrot.lane.b32.xlu0 %v880, 40
        %v2469 = vpop.permute.xlu0 %2468
        %v2471 = vsel %vm887, %v2464, 0
        %v2474 = vsel %vm1140, %v2469, 0
        %2476 = vmatprep.subr.bf16.mxu0 0
        %2477 = vmatpush1.bf16.msra.mxu0 0
        %2478 = vmatprep.subr.bf16.mxu0 0
        %2479 = vmatpush1.bf16.msra.mxu0 0
        %2480 = vmatprep.subr.bf16.mxu0 0
        %2481 = vmatpush1.bf16.msra.mxu0 0
        %2482 = vmatprep.subr.bf16.mxu0 0
        %2483 = vmatpush1.bf16.msra.mxu0 0
        %2484 = vmatprep.subr.bf16.mxu0 0
        %2485 = vmatpush1.bf16.msra.mxu0 0
        %2486 = vmatprep.subr.bf16.mxu0 0
        %2487 = vmatpush1.bf16.msra.mxu0 0
        %2488 = vmatprep.subr.bf16.mxu0 0
        %2489 = vmatpush1.bf16.msra.mxu0 0
        %2490 = vmatprep.subr.bf16.mxu0 0
        %2491 = vmatpush1.bf16.msra.mxu0 %v2474
        %2492 = vmatprep.subr.bf16.mxu0 0
        %2493 = vmatpush2.bf16.msra.mxu0 0
        %2494 = vmatprep.subr.bf16.mxu0 0
        %2495 = vmatpush2.bf16.msra.mxu0 0
        %2496 = vmatprep.subr.bf16.mxu0 0
        %2497 = vmatpush2.bf16.msra.mxu0 0
        %2498 = vmatprep.subr.bf16.mxu0 0
        %2499 = vmatpush2.bf16.msra.mxu0 0
        %2500 = vmatprep.subr.bf16.mxu0 0
        %2501 = vmatpush2.bf16.msra.mxu0 0
        %2502 = vmatprep.subr.bf16.mxu0 0
        %2503 = vmatpush2.bf16.msra.mxu0 0
        %2504 = vmatprep.subr.bf16.mxu0 0
        %2505 = vmatpush2.bf16.msra.mxu0 0
        %2506 = vmatprep.subr.bf16.mxu0 0
        %2507 = vmatpush2.bf16.msra.mxu0 0
        %2508 = vmatprep.mubr.bf16.mxu0 0
        %2509 = vmatmul.mubr.bf16.gmra.mxu0 %v2471
        %v2510 = vpop.f32.mrf.mxu0
        %v2511 = vadd.f32 0.0, %v2510
        %v2512 = vpop.f32.mrf.mxu0
        %v2513 = vpop.f32.mrf.mxu0
        %v2514 = vpop.f32.mrf.mxu0
        %2515 = vdwg.mxu0
        %2516 = vrot.lane.b32.xlu0 %v881, 40
        %v2517 = vpop.permute.xlu0 %2516
        %v2519 = vsel %vm887, %v2465, 0
        %v2522 = vsel %vm1140, %v2517, 0
        %2524 = vmatprep.subr.bf16.mxu0 0
        %2525 = vmatpush1.bf16.msra.mxu0 0
        %2526 = vmatprep.subr.bf16.mxu0 0
        %2527 = vmatpush1.bf16.msra.mxu0 0
        %2528 = vmatprep.subr.bf16.mxu0 0
        %2529 = vmatpush1.bf16.msra.mxu0 0
        %2530 = vmatprep.subr.bf16.mxu0 0
        %2531 = vmatpush1.bf16.msra.mxu0 0
        %2532 = vmatprep.subr.bf16.mxu0 0
        %2533 = vmatpush1.bf16.msra.mxu0 0
        %2534 = vmatprep.subr.bf16.mxu0 0
        %2535 = vmatpush1.bf16.msra.mxu0 0
        %2536 = vmatprep.subr.bf16.mxu0 0
        %2537 = vmatpush1.bf16.msra.mxu0 0
        %2538 = vmatprep.subr.bf16.mxu0 0
        %2539 = vmatpush1.bf16.msra.mxu0 %v2522
        %2540 = vmatprep.subr.bf16.mxu0 0
        %2541 = vmatpush2.bf16.msra.mxu0 0
        %2542 = vmatprep.subr.bf16.mxu0 0
        %2543 = vmatpush2.bf16.msra.mxu0 0
        %2544 = vmatprep.subr.bf16.mxu0 0
        %2545 = vmatpush2.bf16.msra.mxu0 0
        %2546 = vmatprep.subr.bf16.mxu0 0
        %2547 = vmatpush2.bf16.msra.mxu0 0
        %2548 = vmatprep.subr.bf16.mxu0 0
        %2549 = vmatpush2.bf16.msra.mxu0 0
        %2550 = vmatprep.subr.bf16.mxu0 0
        %2551 = vmatpush2.bf16.msra.mxu0 0
        %2552 = vmatprep.subr.bf16.mxu0 0
        %2553 = vmatpush2.bf16.msra.mxu0 0
        %2554 = vmatprep.subr.bf16.mxu0 0
        %2555 = vmatpush2.bf16.msra.mxu0 0
        %2556 = vmatprep.mubr.bf16.mxu0 0
        %2557 = vmatmul.mubr.bf16.gmra.mxu0 %v2519
        %v2558 = vpop.f32.mrf.mxu0
        %v2559 = vadd.f32 0.0, %v2558
        %v2560 = vpop.f32.mrf.mxu0
        %v2561 = vpop.f32.mrf.mxu0
        %v2562 = vpop.f32.mrf.mxu0
        %2563 = vdwg.mxu0
        %2564 = vrot.lane.b32.xlu0 %v882, 40
        %v2565 = vpop.permute.xlu0 %2564
        %v2567 = vsel %vm887, %v2466, 0
        %v2570 = vsel %vm1140, %v2565, 0
        %2572 = vmatprep.subr.bf16.mxu0 0
        %2573 = vmatpush1.bf16.msra.mxu0 0
        %2574 = vmatprep.subr.bf16.mxu0 0
        %2575 = vmatpush1.bf16.msra.mxu0 0
        %2576 = vmatprep.subr.bf16.mxu0 0
        %2577 = vmatpush1.bf16.msra.mxu0 0
        %2578 = vmatprep.subr.bf16.mxu0 0
        %2579 = vmatpush1.bf16.msra.mxu0 0
        %2580 = vmatprep.subr.bf16.mxu0 0
        %2581 = vmatpush1.bf16.msra.mxu0 0
        %2582 = vmatprep.subr.bf16.mxu0 0
        %2583 = vmatpush1.bf16.msra.mxu0 0
        %2584 = vmatprep.subr.bf16.mxu0 0
        %2585 = vmatpush1.bf16.msra.mxu0 0
        %2586 = vmatprep.subr.bf16.mxu0 0
        %2587 = vmatpush1.bf16.msra.mxu0 %v2570
        %2588 = vmatprep.subr.bf16.mxu0 0
        %2589 = vmatpush2.bf16.msra.mxu0 0
        %2590 = vmatprep.subr.bf16.mxu0 0
        %2591 = vmatpush2.bf16.msra.mxu0 0
        %2592 = vmatprep.subr.bf16.mxu0 0
        %2593 = vmatpush2.bf16.msra.mxu0 0
        %2594 = vmatprep.subr.bf16.mxu0 0
        %2595 = vmatpush2.bf16.msra.mxu0 0
        %2596 = vmatprep.subr.bf16.mxu0 0
        %2597 = vmatpush2.bf16.msra.mxu0 0
        %2598 = vmatprep.subr.bf16.mxu0 0
        %2599 = vmatpush2.bf16.msra.mxu0 0
        %2600 = vmatprep.subr.bf16.mxu0 0
        %2601 = vmatpush2.bf16.msra.mxu0 0
        %2602 = vmatprep.subr.bf16.mxu0 0
        %2603 = vmatpush2.bf16.msra.mxu0 0
        %2604 = vmatprep.mubr.bf16.mxu0 0
        %2605 = vmatmul.mubr.bf16.gmra.mxu0 %v2567
        %v2606 = vpop.f32.mrf.mxu0
        %v2607 = vadd.f32 0.0, %v2606
        %v2608 = vpop.f32.mrf.mxu0
        %v2609 = vpop.f32.mrf.mxu0
        %v2610 = vpop.f32.mrf.mxu0
        %2611 = vdwg.mxu0
        %2612 = vrot.lane.b32.xlu0 %v883, 40
        %v2613 = vpop.permute.xlu0 %2612
        %v2615 = vsel %vm887, %v2467, 0
        %v2618 = vsel %vm1140, %v2613, 0
        %2620 = vmatprep.subr.bf16.mxu0 0
        %2621 = vmatpush1.bf16.msra.mxu0 0
        %2622 = vmatprep.subr.bf16.mxu0 0
        %2623 = vmatpush1.bf16.msra.mxu0 0
        %2624 = vmatprep.subr.bf16.mxu0 0
        %2625 = vmatpush1.bf16.msra.mxu0 0
        %2626 = vmatprep.subr.bf16.mxu0 0
        %2627 = vmatpush1.bf16.msra.mxu0 0
        %2628 = vmatprep.subr.bf16.mxu0 0
        %2629 = vmatpush1.bf16.msra.mxu0 0
        %2630 = vmatprep.subr.bf16.mxu0 0
        %2631 = vmatpush1.bf16.msra.mxu0 0
        %2632 = vmatprep.subr.bf16.mxu0 0
        %2633 = vmatpush1.bf16.msra.mxu0 0
        %2634 = vmatprep.subr.bf16.mxu0 0
        %2635 = vmatpush1.bf16.msra.mxu0 %v2618
        %2636 = vmatprep.subr.bf16.mxu0 0
        %2637 = vmatpush2.bf16.msra.mxu0 0
        %2638 = vmatprep.subr.bf16.mxu0 0
        %2639 = vmatpush2.bf16.msra.mxu0 0
        %2640 = vmatprep.subr.bf16.mxu0 0
        %2641 = vmatpush2.bf16.msra.mxu0 0
        %2642 = vmatprep.subr.bf16.mxu0 0
        %2643 = vmatpush2.bf16.msra.mxu0 0
        %2644 = vmatprep.subr.bf16.mxu0 0
        %2645 = vmatpush2.bf16.msra.mxu0 0
        %2646 = vmatprep.subr.bf16.mxu0 0
        %2647 = vmatpush2.bf16.msra.mxu0 0
        %2648 = vmatprep.subr.bf16.mxu0 0
        %2649 = vmatpush2.bf16.msra.mxu0 0
        %2650 = vmatprep.subr.bf16.mxu0 0
        %2651 = vmatpush2.bf16.msra.mxu0 0
        %2652 = vmatprep.mubr.bf16.mxu0 0
        %2653 = vmatmul.mubr.bf16.gmra.mxu0 %v2615
        %v2654 = vpop.f32.mrf.mxu0
        %v2655 = vadd.f32 0.0, %v2654
        %v2656 = vpop.f32.mrf.mxu0
        %v2657 = vpop.f32.mrf.mxu0
        %v2658 = vpop.f32.mrf.mxu0
        %2659 = vdwg.mxu0
        %2664 = vrot.lane.b32.xlu0 %v1623, 8
        %v2665 = vpop.permute.xlu0 %2664
        %2666 = vrot.lane.b32.xlu0 %v1671, 8
        %v2667 = vpop.permute.xlu0 %2666
        %2668 = vrot.lane.b32.xlu0 %v1719, 8
        %v2669 = vpop.permute.xlu0 %2668
        %2670 = vrot.lane.b32.xlu0 %v1767, 8
        %v2671 = vpop.permute.xlu0 %2670
        %2680 = vrot.lane.b32.xlu0 %v2067, 16
        %v2681 = vpop.permute.xlu0 %2680
        %2682 = vrot.lane.b32.xlu0 %v2115, 16
        %v2683 = vpop.permute.xlu0 %2682
        %2684 = vrot.lane.b32.xlu0 %v2163, 16
        %v2685 = vpop.permute.xlu0 %2684
        %2686 = vrot.lane.b32.xlu0 %v2211, 16
        %v2687 = vpop.permute.xlu0 %2686
        %2696 = vrot.lane.b32.xlu0 %v2511, 24
        %v2697 = vpop.permute.xlu0 %2696
        %2698 = vrot.lane.b32.xlu0 %v2559, 24
        %v2699 = vpop.permute.xlu0 %2698
        %2700 = vrot.lane.b32.xlu0 %v2607, 24
        %v2701 = vpop.permute.xlu0 %2700
        %2702 = vrot.lane.b32.xlu0 %v2655, 24
        %v2703 = vpop.permute.xlu0 %2702
        %v2708 = vsel %vm887, %v1179, %v2665
        %v2709 = vsel %vm887, %v1227, %v2667
        %v2710 = vsel %vm887, %v1275, %v2669
        %v2711 = vsel %vm887, %v1323, %v2671
        %vm2712 = vcmask 130048
        %v2713 = vsel %vm2712, %v2708, %v2681
        %v2714 = vsel %vm2712, %v2709, %v2683
        %v2715 = vsel %vm2712, %v2710, %v2685
        %v2716 = vsel %vm2712, %v2711, %v2687
        %vm2717 = vcmask 195584
        %v2718 = vsel %vm2717, %v2713, %v2697
        %v2719 = vsel %vm2717, %v2714, %v2699
        %v2720 = vsel %vm2717, %v2715, %v2701
        %v2721 = vsel %vm2717, %v2716, %v2703
        %v2722 = vpack.c.bf16 %v2719, %v2718
        %v2723 = vpack.c.bf16 %v2721, %v2720
        %v2724 = vld [vmem:[%s4] sm:$0xf]
        %v2725 = vld [vmem:[%s4 + $0x4] sm:$0xf]
        %v2726 = vld [vmem:[%s4 + $0x8] sm:$0xf]
        %v2727 = vld [vmem:[%s4 + $0xc] sm:$0xf]
        %v2728 = vld [vmem:[%s5] sm:$0x1]
        %v2730 = vlaneseq
        %v2731 = vshrl.u32 %v2730, 7
        %v2732 = vsub.s32 0, %v2731
        %v2733 = vrot.slane %v2728, %v2732
        %v2739 = vunpack.c.l.b16 %v2724
        %v2740 = vunpack.c.l.b16 %v2725
        %v2741 = vunpack.c.l.b16 %v2726
        %v2742 = vunpack.c.l.b16 %v2727
        %v2743 = vpack.c.b16 %v2740, %v2739
        %v2744 = vpack.c.b16 %v2742, %v2741
        %v2748 = vsel %vm733, %v2722, 0
        %v2751 = vsel %vm733, %v2723, 0
        %2753 = vmatprep.subr.bf16.mxu0 0
        %2754 = vmatpush1.bf16.msra.mxu0 0
        %2755 = vmatprep.subr.bf16.mxu0 0
        %2756 = vmatpush1.bf16.msra.mxu0 0
        %2757 = vmatprep.subr.bf16.mxu0 0
        %2758 = vmatpush1.bf16.msra.mxu0 0
        %2759 = vmatprep.subr.bf16.mxu0 0
        %2760 = vmatpush1.bf16.msra.mxu0 0
        %2761 = vmatprep.subr.bf16.mxu0 0
        %2762 = vmatpush1.bf16.msra.mxu0 0
        %2763 = vmatprep.subr.bf16.mxu0 0
        %2764 = vmatpush1.bf16.msra.mxu0 0
        %2765 = vmatprep.subr.bf16.mxu0 0
        %2766 = vmatpush1.bf16.msra.mxu0 %v2744
        %2767 = vmatprep.subr.bf16.mxu0 0
        %2768 = vmatpush1.bf16.msra.mxu0 %v2743
        %2769 = vmatprep.subr.bf16.mxu0 0
        %2770 = vmatpush2.bf16.msra.mxu0 0
        %2771 = vmatprep.subr.bf16.mxu0 0
        %2772 = vmatpush2.bf16.msra.mxu0 0
        %2773 = vmatprep.subr.bf16.mxu0 0
        %2774 = vmatpush2.bf16.msra.mxu0 0
        %2775 = vmatprep.subr.bf16.mxu0 0
        %2776 = vmatpush2.bf16.msra.mxu0 0
        %2777 = vmatprep.subr.bf16.mxu0 0
        %2778 = vmatpush2.bf16.msra.mxu0 0
        %2779 = vmatprep.subr.bf16.mxu0 0
        %2780 = vmatpush2.bf16.msra.mxu0 0
        %2781 = vmatprep.subr.bf16.mxu0 0
        %2782 = vmatpush2.bf16.msra.mxu0 0
        %2783 = vmatprep.subr.bf16.mxu0 0
        %2784 = vmatpush2.bf16.msra.mxu0 0
        %2785 = vmatprep.mubr.bf16.mxu0 0
        %2786 = vmatmul.mubr.bf16.gmra.mxu0 %v2748
        %v2787 = vpop.f32.mrf.mxu0
        %v2788 = vadd.f32 %v2733, %v2787
        %v2789 = vpop.f32.mrf.mxu0
        %v2790 = vpop.f32.mrf.mxu0
        %v2791 = vadd.f32 %v2733, %v2790
        %v2792 = vpop.f32.mrf.mxu0
        %2793 = vmatprep.mubr.bf16.mxu0 0
        %2794 = vmatmul.mubr.bf16.gmra.mxu0 %v2751
        %v2795 = vpop.f32.mrf.mxu0
        %v2796 = vadd.f32 %v2733, %v2795
        %v2797 = vpop.f32.mrf.mxu0
        %v2798 = vpop.f32.mrf.mxu0
        %v2799 = vadd.f32 %v2733, %v2798
        %v2800 = vpop.f32.mrf.mxu0
        %2801 = vdwg.mxu0
        %v2802 = vadd.f32 %v714, %v2788
        %v2803 = vadd.f32 %v717, %v2791
        %v2804 = vadd.f32 %v722, %v2796
        %v2805 = vadd.f32 %v725, %v2799
        %v2806 = vld [vmem:[%s12] sm:$0x1]
        %v2807 = vld [vmem:[%s13] sm:$0x1]
        %v2808 = vsel %vm733, %v2802, 0.0
        %2809 = vadd.xlane.f32.xlu0 %v2808
        %v2810 = vpop.xlane.xlu0 %2809
        %v2811 = vsel %vm733, %v2803, 0.0
        %2812 = vadd.xlane.f32.xlu0 %v2811
        %v2813 = vpop.xlane.xlu0 %2812
        %v2814 = vsel %vm733, %v2804, 0.0
        %2815 = vadd.xlane.f32.xlu0 %v2814
        %v2816 = vpop.xlane.xlu0 %2815
        %v2817 = vsel %vm733, %v2805, 0.0
        %2818 = vadd.xlane.f32.xlu0 %v2817
        %v2819 = vpop.xlane.xlu0 %2818
        %v2820 = vmul.f32 %v2810, %v746
        %v2821 = vmul.f32 %v2813, %v746
        %v2822 = vmul.f32 %v2816, %v746
        %v2823 = vmul.f32 %v2819, %v746
        %v2824 = vsub.f32 %v2802, %v2820
        %v2825 = vsub.f32 %v2803, %v2821
        %v2826 = vsub.f32 %v2804, %v2822
        %v2827 = vsub.f32 %v2805, %v2823
        %v2828 = vmul.f32 %v2824, %v2824
        %v2829 = vmul.f32 %v2825, %v2825
        %v2830 = vmul.f32 %v2826, %v2826
        %v2831 = vmul.f32 %v2827, %v2827
        %v2832 = vsel %vm733, %v2828, 0.0
        %2833 = vadd.xlane.f32.xlu0 %v2832
        %v2834 = vpop.xlane.xlu0 %2833
        %v2835 = vsel %vm733, %v2829, 0.0
        %2836 = vadd.xlane.f32.xlu0 %v2835
        %v2837 = vpop.xlane.xlu0 %2836
        %v2838 = vsel %vm733, %v2830, 0.0
        %2839 = vadd.xlane.f32.xlu0 %v2838
        %v2840 = vpop.xlane.xlu0 %2839
        %v2841 = vsel %vm733, %v2831, 0.0
        %2842 = vadd.xlane.f32.xlu0 %v2841
        %v2843 = vpop.xlane.xlu0 %2842
        %v2844 = vmul.f32 %v2834, %v746
        %v2845 = vmul.f32 %v2837, %v746
        %v2846 = vmul.f32 %v2840, %v746
        %v2847 = vmul.f32 %v2843, %v746
        %v2848 = vadd.f32 %v2844, 1e-05
        %v2849 = vadd.f32 %v2845, 1e-05
        %v2850 = vadd.f32 %v2846, 1e-05
        %v2851 = vadd.f32 %v2847, 1e-05
        %v2852 = vrsqrt.pop %v2848
        %v2853 = vrsqrt.pop %v2849
        %v2854 = vrsqrt.pop %v2850
        %v2855 = vrsqrt.pop %v2851
        %v2856 = vmul.f32 %v2824, %v2852
        %v2857 = vmul.f32 %v2825, %v2853
        %v2858 = vmul.f32 %v2826, %v2854
        %v2859 = vmul.f32 %v2827, %v2855
        %v2861 = vlaneseq
        %v2862 = vshrl.u32 %v2861, 7
        %v2863 = vsub.s32 0, %v2862
        %v2864 = vrot.slane %v2806, %v2863
        %v2866 = vmul.f32 %v2856, %v2864
        %v2867 = vmul.f32 %v2857, %v2864
        %v2868 = vmul.f32 %v2858, %v2864
        %v2869 = vmul.f32 %v2859, %v2864
        %v2871 = vlaneseq
        %v2872 = vshrl.u32 %v2871, 7
        %v2873 = vsub.s32 0, %v2872
        %v2874 = vrot.slane %v2807, %v2873
        %v2876 = vadd.f32 %v2866, %v2874
        %v2877 = vadd.f32 %v2867, %v2874
        %v2878 = vadd.f32 %v2868, %v2874
        %v2879 = vadd.f32 %v2869, %v2874
        %v2880 = vpack.c.bf16 %v2877, %v2876
        %v2881 = vpack.c.bf16 %v2879, %v2878
        %v2882 = vld [vmem:[%s6] sm:$0xf]
        %v2883 = vld [vmem:[%s6 + $0x4] sm:$0xf]
        %v2884 = vld [vmem:[%s6 + $0x8] sm:$0xf]
        %v2885 = vld [vmem:[%s6 + $0xc] sm:$0xf]
        %v2886 = vld [vmem:[%s7] sm:$0x1]
        %v2888 = vlaneseq
        %v2889 = vshrl.u32 %v2888, 7
        %v2890 = vsub.s32 0, %v2889
        %v2891 = vrot.slane %v2886, %v2890
        %v2897 = vunpack.c.l.b16 %v2882
        %v2898 = vunpack.c.l.b16 %v2883
        %v2899 = vunpack.c.l.b16 %v2884
        %v2900 = vunpack.c.l.b16 %v2885
        %v2901 = vpack.c.b16 %v2898, %v2897
        %v2902 = vpack.c.b16 %v2900, %v2899
        %v2906 = vsel %vm733, %v2880, 0
        %v2909 = vsel %vm733, %v2881, 0
        %2911 = vmatprep.subr.bf16.mxu0 0
        %2912 = vmatpush1.bf16.msra.mxu0 0
        %2913 = vmatprep.subr.bf16.mxu0 0
        %2914 = vmatpush1.bf16.msra.mxu0 0
        %2915 = vmatprep.subr.bf16.mxu0 0
        %2916 = vmatpush1.bf16.msra.mxu0 0
        %2917 = vmatprep.subr.bf16.mxu0 0
        %2918 = vmatpush1.bf16.msra.mxu0 0
        %2919 = vmatprep.subr.bf16.mxu0 0
        %2920 = vmatpush1.bf16.msra.mxu0 0
        %2921 = vmatprep.subr.bf16.mxu0 0
        %2922 = vmatpush1.bf16.msra.mxu0 0
        %2923 = vmatprep.subr.bf16.mxu0 0
        %2924 = vmatpush1.bf16.msra.mxu0 %v2902
        %2925 = vmatprep.subr.bf16.mxu0 0
        %2926 = vmatpush1.bf16.msra.mxu0 %v2901
        %2927 = vmatprep.subr.bf16.mxu0 0
        %2928 = vmatpush2.bf16.msra.mxu0 0
        %2929 = vmatprep.subr.bf16.mxu0 0
        %2930 = vmatpush2.bf16.msra.mxu0 0
        %2931 = vmatprep.subr.bf16.mxu0 0
        %2932 = vmatpush2.bf16.msra.mxu0 0
        %2933 = vmatprep.subr.bf16.mxu0 0
        %2934 = vmatpush2.bf16.msra.mxu0 0
        %2935 = vmatprep.subr.bf16.mxu0 0
        %2936 = vmatpush2.bf16.msra.mxu0 0
        %2937 = vmatprep.subr.bf16.mxu0 0
        %2938 = vmatpush2.bf16.msra.mxu0 0
        %2939 = vmatprep.subr.bf16.mxu0 0
        %2940 = vmatpush2.bf16.msra.mxu0 0
        %2941 = vmatprep.subr.bf16.mxu0 0
        %2942 = vmatpush2.bf16.msra.mxu0 0
        %2943 = vmatprep.mubr.bf16.mxu0 0
        %2944 = vmatmul.mubr.bf16.gmra.mxu0 %v2906
        %v2945 = vpop.f32.mrf.mxu0
        %v2946 = vadd.f32 %v2891, %v2945
        %v2947 = vpop.f32.mrf.mxu0
        %v2948 = vpop.f32.mrf.mxu0
        %v2949 = vadd.f32 %v2891, %v2948
        %v2950 = vpop.f32.mrf.mxu0
        %2951 = vmatprep.mubr.bf16.mxu0 0
        %2952 = vmatmul.mubr.bf16.gmra.mxu0 %v2909
        %v2953 = vpop.f32.mrf.mxu0
        %v2954 = vadd.f32 %v2891, %v2953
        %v2955 = vpop.f32.mrf.mxu0
        %v2956 = vpop.f32.mrf.mxu0
        %v2957 = vadd.f32 %v2891, %v2956
        %v2958 = vpop.f32.mrf.mxu0
        %2959 = vdwg.mxu0
        %v2960 = vmax.f32 %v2946, 0.0
        %v2961 = vmax.f32 %v2949, 0.0
        %v2962 = vmax.f32 %v2954, 0.0
        %v2963 = vmax.f32 %v2957, 0.0
        %v2964 = vpack.c.bf16 %v2961, %v2960
        %v2965 = vpack.c.bf16 %v2963, %v2962
        %v2966 = vld [vmem:[%s8] sm:$0xf]
        %v2967 = vld [vmem:[%s8 + $0x4] sm:$0xf]
        %v2968 = vld [vmem:[%s8 + $0x8] sm:$0xf]
        %v2969 = vld [vmem:[%s8 + $0xc] sm:$0xf]
        %v2970 = vld [vmem:[%s8 + $0x10] sm:$0xf]
        %v2971 = vld [vmem:[%s8 + $0x14] sm:$0xf]
        %v2972 = vld [vmem:[%s8 + $0x18] sm:$0xf]
        %v2973 = vld [vmem:[%s8 + $0x1c] sm:$0xf]
        %v2974 = vld [vmem:[%s8 + $0x20] sm:$0xf]
        %v2975 = vld [vmem:[%s8 + $0x24] sm:$0xf]
        %v2976 = vld [vmem:[%s8 + $0x28] sm:$0xf]
        %v2977 = vld [vmem:[%s8 + $0x2c] sm:$0xf]
        %v2978 = vld [vmem:[%s8 + $0x30] sm:$0xf]
        %v2979 = vld [vmem:[%s8 + $0x34] sm:$0xf]
        %v2980 = vld [vmem:[%s8 + $0x38] sm:$0xf]
        %v2981 = vld [vmem:[%s8 + $0x3c] sm:$0xf]
        %v2998 = vunpack.c.l.b16 %v2966
        %v2999 = vunpack.c.l.b16 %v2967
        %v3000 = vunpack.c.l.b16 %v2968
        %v3001 = vunpack.c.l.b16 %v2969
        %v3002 = vunpack.c.l.b16 %v2970
        %v3003 = vunpack.c.l.b16 %v2971
        %v3004 = vunpack.c.l.b16 %v2972
        %v3005 = vunpack.c.l.b16 %v2973
        %v3006 = vunpack.c.l.b16 %v2974
        %v3007 = vunpack.c.l.b16 %v2975
        %v3008 = vunpack.c.l.b16 %v2976
        %v3009 = vunpack.c.l.b16 %v2977
        %v3010 = vunpack.c.l.b16 %v2978
        %v3011 = vunpack.c.l.b16 %v2979
        %v3012 = vunpack.c.l.b16 %v2980
        %v3013 = vunpack.c.l.b16 %v2981
        %v3014 = vpack.c.b16 %v2999, %v2998
        %v3015 = vpack.c.b16 %v3001, %v3000
        %v3016 = vpack.c.b16 %v3003, %v3002
        %v3017 = vpack.c.b16 %v3005, %v3004
        %v3018 = vpack.c.b16 %v3007, %v3006
        %v3019 = vpack.c.b16 %v3009, %v3008
        %v3020 = vpack.c.b16 %v3011, %v3010
        %v3021 = vpack.c.b16 %v3013, %v3012
        %3030 = vmatprep.subr.bf16.mxu0 0
        %3031 = vmatpush1.bf16.msra.mxu0 %v3021
        %3032 = vmatprep.subr.bf16.mxu0 0
        %3033 = vmatpush1.bf16.msra.mxu0 %v3020
        %3034 = vmatprep.subr.bf16.mxu0 0
        %3035 = vmatpush1.bf16.msra.mxu0 %v3019
        %3036 = vmatprep.subr.bf16.mxu0 0
        %3037 = vmatpush1.bf16.msra.mxu0 %v3018
        %3038 = vmatprep.subr.bf16.mxu0 0
        %3039 = vmatpush1.bf16.msra.mxu0 %v3017
        %3040 = vmatprep.subr.bf16.mxu0 0
        %3041 = vmatpush1.bf16.msra.mxu0 %v3016
        %3042 = vmatprep.subr.bf16.mxu0 0
        %3043 = vmatpush1.bf16.msra.mxu0 %v3015
        %3044 = vmatprep.subr.bf16.mxu0 0
        %3045 = vmatpush1.bf16.msra.mxu0 %v3014
        %3046 = vmatprep.subr.bf16.mxu0 0
        %3047 = vmatpush2.bf16.msra.mxu0 0
        %3048 = vmatprep.subr.bf16.mxu0 0
        %3049 = vmatpush2.bf16.msra.mxu0 0
        %3050 = vmatprep.subr.bf16.mxu0 0
        %3051 = vmatpush2.bf16.msra.mxu0 0
        %3052 = vmatprep.subr.bf16.mxu0 0
        %3053 = vmatpush2.bf16.msra.mxu0 0
        %3054 = vmatprep.subr.bf16.mxu0 0
        %3055 = vmatpush2.bf16.msra.mxu0 0
        %3056 = vmatprep.subr.bf16.mxu0 0
        %3057 = vmatpush2.bf16.msra.mxu0 0
        %3058 = vmatprep.subr.bf16.mxu0 0
        %3059 = vmatpush2.bf16.msra.mxu0 0
        %3060 = vmatprep.subr.bf16.mxu0 0
        %3061 = vmatpush2.bf16.msra.mxu0 0
        %3062 = vmatprep.mubr.bf16.mxu0 0
        %3063 = vmatmul.mubr.bf16.gmra.mxu0 %v2964
        %v3064 = vpop.f32.mrf.mxu0
        %v3065 = vadd.f32 0.0, %v3064
        %v3066 = vpop.f32.mrf.mxu0
        %v3067 = vpop.f32.mrf.mxu0
        %v3068 = vadd.f32 0.0, %v3067
        %v3069 = vpop.f32.mrf.mxu0
        %3070 = vmatprep.mubr.bf16.mxu0 0
        %3071 = vmatmul.mubr.bf16.gmra.mxu0 %v2965
        %v3072 = vpop.f32.mrf.mxu0
        %v3073 = vadd.f32 0.0, %v3072
        %v3074 = vpop.f32.mrf.mxu0
        %v3075 = vpop.f32.mrf.mxu0
        %v3076 = vadd.f32 0.0, %v3075
        %v3077 = vpop.f32.mrf.mxu0
        %3078 = vdwg.mxu0
        %v3079 = vadd.f32 %v2802, %v3065
        %v3080 = vadd.f32 %v2803, %v3068
        %v3081 = vadd.f32 %v2804, %v3073
        %v3082 = vadd.f32 %v2805, %v3076
        %v3083 = vld [vmem:[%s9] sm:$0x1]
        %v3085 = vlaneseq
        %v3086 = vshrl.u32 %v3085, 7
        %v3087 = vsub.s32 0, %v3086
        %v3088 = vrot.slane %v3083, %v3087
        %v3090 = vadd.f32 %v3079, %v3088
        %v3091 = vadd.f32 %v3080, %v3088
        %v3092 = vadd.f32 %v3081, %v3088
        %v3093 = vadd.f32 %v3082, %v3088
        %s3094 = scalar_lea.vmem %s10, 1
        %v3095 = vld [vmem:[%s3094] sm:$0x1]
        %s3096 = scalar_lea.vmem %s11, 1
        %v3097 = vld [vmem:[%s3096] sm:$0x1]
        %v3098 = vsel %vm733, %v3090, 0.0
        %3099 = vadd.xlane.f32.xlu0 %v3098
        %v3100 = vpop.xlane.xlu0 %3099
        %v3101 = vsel %vm733, %v3091, 0.0
        %3102 = vadd.xlane.f32.xlu0 %v3101
        %v3103 = vpop.xlane.xlu0 %3102
        %v3104 = vsel %vm733, %v3092, 0.0
        %3105 = vadd.xlane.f32.xlu0 %v3104
        %v3106 = vpop.xlane.xlu0 %3105
        %v3107 = vsel %vm733, %v3093, 0.0
        %3108 = vadd.xlane.f32.xlu0 %v3107
        %v3109 = vpop.xlane.xlu0 %3108
        %v3110 = vmul.f32 %v3100, %v746
        %v3111 = vmul.f32 %v3103, %v746
        %v3112 = vmul.f32 %v3106, %v746
        %v3113 = vmul.f32 %v3109, %v746
        %v3114 = vsub.f32 %v3090, %v3110
        %v3115 = vsub.f32 %v3091, %v3111
        %v3116 = vsub.f32 %v3092, %v3112
        %v3117 = vsub.f32 %v3093, %v3113
        %v3118 = vmul.f32 %v3114, %v3114
        %v3119 = vmul.f32 %v3115, %v3115
        %v3120 = vmul.f32 %v3116, %v3116
        %v3121 = vmul.f32 %v3117, %v3117
        %v3122 = vsel %vm733, %v3118, 0.0
        %3123 = vadd.xlane.f32.xlu0 %v3122
        %v3124 = vpop.xlane.xlu0 %3123
        %v3125 = vsel %vm733, %v3119, 0.0
        %3126 = vadd.xlane.f32.xlu0 %v3125
        %v3127 = vpop.xlane.xlu0 %3126
        %v3128 = vsel %vm733, %v3120, 0.0
        %3129 = vadd.xlane.f32.xlu0 %v3128
        %v3130 = vpop.xlane.xlu0 %3129
        %v3131 = vsel %vm733, %v3121, 0.0
        %3132 = vadd.xlane.f32.xlu0 %v3131
        %v3133 = vpop.xlane.xlu0 %3132
        %v3134 = vmul.f32 %v3124, %v746
        %v3135 = vmul.f32 %v3127, %v746
        %v3136 = vmul.f32 %v3130, %v746
        %v3137 = vmul.f32 %v3133, %v746
        %v3138 = vadd.f32 %v3134, 1e-05
        %v3139 = vadd.f32 %v3135, 1e-05
        %v3140 = vadd.f32 %v3136, 1e-05
        %v3141 = vadd.f32 %v3137, 1e-05
        %v3142 = vrsqrt.pop %v3138
        %v3143 = vrsqrt.pop %v3139
        %v3144 = vrsqrt.pop %v3140
        %v3145 = vrsqrt.pop %v3141
        %v3146 = vmul.f32 %v3114, %v3142
        %v3147 = vmul.f32 %v3115, %v3143
        %v3148 = vmul.f32 %v3116, %v3144
        %v3149 = vmul.f32 %v3117, %v3145
        %v3151 = vlaneseq
        %v3152 = vshrl.u32 %v3151, 7
        %v3153 = vsub.s32 0, %v3152
        %v3154 = vrot.slane %v3095, %v3153
        %v3156 = vmul.f32 %v3146, %v3154
        %v3157 = vmul.f32 %v3147, %v3154
        %v3158 = vmul.f32 %v3148, %v3154
        %v3159 = vmul.f32 %v3149, %v3154
        %v3161 = vlaneseq
        %v3162 = vshrl.u32 %v3161, 7
        %v3163 = vsub.s32 0, %v3162
        %v3164 = vrot.slane %v3097, %v3163
        %v3166 = vadd.f32 %v3156, %v3164
        %v3167 = vadd.f32 %v3157, %v3164
        %v3168 = vadd.f32 %v3158, %v3164
        %v3169 = vadd.f32 %v3159, %v3164
        %v3170 = vpack.c.bf16 %v3167, %v3166
        %v3171 = vpack.c.bf16 %v3169, %v3168
        %s3172 = scalar_lea.vmem %s3, 16
        %v3173 = vld [vmem:[%s3172] sm:$0xf]
        %v3174 = vld [vmem:[%s3172 + $0x4] sm:$0xf]
        %v3175 = vld [vmem:[%s3172 + $0x8] sm:$0xf]
        %v3176 = vld [vmem:[%s3172 + $0xc] sm:$0xf]
        %v3181 = vunpack.c.l.b16 %v3173
        %v3182 = vunpack.c.l.b16 %v3174
        %v3183 = vunpack.c.l.b16 %v3175
        %v3184 = vunpack.c.l.b16 %v3176
        %v3185 = vpack.c.b16 %v3182, %v3181
        %v3186 = vpack.c.b16 %v3184, %v3183
        %v3190 = vsel %vm733, %v3170, 0
        %v3193 = vsel %vm733, %v3171, 0
        %3195 = vmatprep.subr.bf16.mxu0 0
        %3196 = vmatpush1.bf16.msra.mxu0 0
        %3197 = vmatprep.subr.bf16.mxu0 0
        %3198 = vmatpush1.bf16.msra.mxu0 0
        %3199 = vmatprep.subr.bf16.mxu0 0
        %3200 = vmatpush1.bf16.msra.mxu0 0
        %3201 = vmatprep.subr.bf16.mxu0 0
        %3202 = vmatpush1.bf16.msra.mxu0 0
        %3203 = vmatprep.subr.bf16.mxu0 0
        %3204 = vmatpush1.bf16.msra.mxu0 0
        %3205 = vmatprep.subr.bf16.mxu0 0
        %3206 = vmatpush1.bf16.msra.mxu0 0
        %3207 = vmatprep.subr.bf16.mxu0 0
        %3208 = vmatpush1.bf16.msra.mxu0 %v3186
        %3209 = vmatprep.subr.bf16.mxu0 0
        %3210 = vmatpush1.bf16.msra.mxu0 %v3185
        %3211 = vmatprep.subr.bf16.mxu0 0
        %3212 = vmatpush2.bf16.msra.mxu0 0
        %3213 = vmatprep.subr.bf16.mxu0 0
        %3214 = vmatpush2.bf16.msra.mxu0 0
        %3215 = vmatprep.subr.bf16.mxu0 0
        %3216 = vmatpush2.bf16.msra.mxu0 0
        %3217 = vmatprep.subr.bf16.mxu0 0
        %3218 = vmatpush2.bf16.msra.mxu0 0
        %3219 = vmatprep.subr.bf16.mxu0 0
        %3220 = vmatpush2.bf16.msra.mxu0 0
        %3221 = vmatprep.subr.bf16.mxu0 0
        %3222 = vmatpush2.bf16.msra.mxu0 0
        %3223 = vmatprep.subr.bf16.mxu0 0
        %3224 = vmatpush2.bf16.msra.mxu0 0
        %3225 = vmatprep.subr.bf16.mxu0 0
        %3226 = vmatpush2.bf16.msra.mxu0 0
        %3227 = vmatprep.mubr.bf16.mxu0 0
        %3228 = vmatmul.mubr.bf16.gmra.mxu0 %v3190
        %v3229 = vpop.f32.mrf.mxu0
        %v3230 = vadd.f32 0.0, %v3229
        %v3231 = vpop.f32.mrf.mxu0
        %v3232 = vpop.f32.mrf.mxu0
        %v3233 = vadd.f32 0.0, %v3232
        %v3234 = vpop.f32.mrf.mxu0
        %3235 = vmatprep.mubr.bf16.mxu0 0
        %3236 = vmatmul.mubr.bf16.gmra.mxu0 %v3193
        %v3237 = vpop.f32.mrf.mxu0
        %v3238 = vadd.f32 0.0, %v3237
        %v3239 = vpop.f32.mrf.mxu0
        %v3240 = vpop.f32.mrf.mxu0
        %v3241 = vadd.f32 0.0, %v3240
        %v3242 = vpop.f32.mrf.mxu0
        %3243 = vdwg.mxu0
        %v3244 = vpack.c.bf16 %v3230, %v3230
        %v3245 = vpack.c.bf16 %v3233, %v3233
        %v3246 = vpack.c.bf16 %v3238, %v3238
        %v3247 = vpack.c.bf16 %v3241, %v3241
        %3249 = vrot.lane.b32.xlu0 %v3244, 96
        %v3250 = vpop.permute.xlu0 %3249
        %v3252 = vsel %vm887, %v3244, 0
        %v3255 = vsel %vm887, %v3250, 0
        %3257 = vmatprep.subr.bf16.mxu0 0
        %3258 = vmatpush1.bf16.xpose.msra.mxu0 0
        %3259 = vmatprep.subr.bf16.mxu0 0
        %3260 = vmatpush1.bf16.xpose.msra.mxu0 0
        %3261 = vmatprep.subr.bf16.mxu0 0
        %3262 = vmatpush1.bf16.xpose.msra.mxu0 0
        %3263 = vmatprep.subr.bf16.mxu0 0
        %3264 = vmatpush1.bf16.xpose.msra.mxu0 0
        %3265 = vmatprep.subr.bf16.mxu0 0
        %3266 = vmatpush1.bf16.xpose.msra.mxu0 0
        %3267 = vmatprep.subr.bf16.mxu0 0
        %3268 = vmatpush1.bf16.xpose.msra.mxu0 0
        %3269 = vmatprep.subr.bf16.mxu0 0
        %3270 = vmatpush1.bf16.xpose.msra.mxu0 0
        %3271 = vmatprep.subr.bf16.mxu0 0
        %3272 = vmatpush1.bf16.xpose.msra.mxu0 %v3255
        %3273 = vmatprep.subr.bf16.mxu0 0
        %3274 = vmatpush2.bf16.xpose.msra.mxu0 0
        %3275 = vmatprep.subr.bf16.mxu0 0
        %3276 = vmatpush2.bf16.xpose.msra.mxu0 0
        %3277 = vmatprep.subr.bf16.mxu0 0
        %3278 = vmatpush2.bf16.xpose.msra.mxu0 0
        %3279 = vmatprep.subr.bf16.mxu0 0
        %3280 = vmatpush2.bf16.xpose.msra.mxu0 0
        %3281 = vmatprep.subr.bf16.mxu0 0
        %3282 = vmatpush2.bf16.xpose.msra.mxu0 0
        %3283 = vmatprep.subr.bf16.mxu0 0
        %3284 = vmatpush2.bf16.xpose.msra.mxu0 0
        %3285 = vmatprep.subr.bf16.mxu0 0
        %3286 = vmatpush2.bf16.xpose.msra.mxu0 0
        %3287 = vmatprep.subr.bf16.mxu0 0
        %3288 = vmatpush2.bf16.xpose.msra.mxu0 0
        %3289 = vmatprep.mubr.bf16.mxu0 0
        %3290 = vmatmul.mubr.bf16.gmra.mxu0 %v3252
        %v3291 = vpop.f32.mrf.mxu0
        %v3292 = vadd.f32 0.0, %v3291
        %v3293 = vpop.f32.mrf.mxu0
        %v3294 = vpop.f32.mrf.mxu0
        %v3295 = vpop.f32.mrf.mxu0
        %3296 = vdwg.mxu0
        %3298 = vrot.lane.b32.xlu0 %v3245, 96
        %v3299 = vpop.permute.xlu0 %3298
        %v3301 = vsel %vm887, %v3245, 0
        %v3304 = vsel %vm887, %v3299, 0
        %3306 = vmatprep.subr.bf16.mxu0 0
        %3307 = vmatpush1.bf16.xpose.msra.mxu0 0
        %3308 = vmatprep.subr.bf16.mxu0 0
        %3309 = vmatpush1.bf16.xpose.msra.mxu0 0
        %3310 = vmatprep.subr.bf16.mxu0 0
        %3311 = vmatpush1.bf16.xpose.msra.mxu0 0
        %3312 = vmatprep.subr.bf16.mxu0 0
        %3313 = vmatpush1.bf16.xpose.msra.mxu0 0
        %3314 = vmatprep.subr.bf16.mxu0 0
        %3315 = vmatpush1.bf16.xpose.msra.mxu0 0
        %3316 = vmatprep.subr.bf16.mxu0 0
        %3317 = vmatpush1.bf16.xpose.msra.mxu0 0
        %3318 = vmatprep.subr.bf16.mxu0 0
        %3319 = vmatpush1.bf16.xpose.msra.mxu0 0
        %3320 = vmatprep.subr.bf16.mxu0 0
        %3321 = vmatpush1.bf16.xpose.msra.mxu0 %v3304
        %3322 = vmatprep.subr.bf16.mxu0 0
        %3323 = vmatpush2.bf16.xpose.msra.mxu0 0
        %3324 = vmatprep.subr.bf16.mxu0 0
        %3325 = vmatpush2.bf16.xpose.msra.mxu0 0
        %3326 = vmatprep.subr.bf16.mxu0 0
        %3327 = vmatpush2.bf16.xpose.msra.mxu0 0
        %3328 = vmatprep.subr.bf16.mxu0 0
        %3329 = vmatpush2.bf16.xpose.msra.mxu0 0
        %3330 = vmatprep.subr.bf16.mxu0 0
        %3331 = vmatpush2.bf16.xpose.msra.mxu0 0
        %3332 = vmatprep.subr.bf16.mxu0 0
        %3333 = vmatpush2.bf16.xpose.msra.mxu0 0
        %3334 = vmatprep.subr.bf16.mxu0 0
        %3335 = vmatpush2.bf16.xpose.msra.mxu0 0
        %3336 = vmatprep.subr.bf16.mxu0 0
        %3337 = vmatpush2.bf16.xpose.msra.mxu0 0
        %3338 = vmatprep.mubr.bf16.mxu0 0
        %3339 = vmatmul.mubr.bf16.gmra.mxu0 %v3301
        %v3340 = vpop.f32.mrf.mxu0
        %v3341 = vadd.f32 0.0, %v3340
        %v3342 = vpop.f32.mrf.mxu0
        %v3343 = vpop.f32.mrf.mxu0
        %v3344 = vpop.f32.mrf.mxu0
        %3345 = vdwg.mxu0
        %3347 = vrot.lane.b32.xlu0 %v3246, 96
        %v3348 = vpop.permute.xlu0 %3347
        %v3350 = vsel %vm887, %v3246, 0
        %v3353 = vsel %vm887, %v3348, 0
        %3355 = vmatprep.subr.bf16.mxu0 0
        %3356 = vmatpush1.bf16.xpose.msra.mxu0 0
        %3357 = vmatprep.subr.bf16.mxu0 0
        %3358 = vmatpush1.bf16.xpose.msra.mxu0 0
        %3359 = vmatprep.subr.bf16.mxu0 0
        %3360 = vmatpush1.bf16.xpose.msra.mxu0 0
        %3361 = vmatprep.subr.bf16.mxu0 0
        %3362 = vmatpush1.bf16.xpose.msra.mxu0 0
        %3363 = vmatprep.subr.bf16.mxu0 0
        %3364 = vmatpush1.bf16.xpose.msra.mxu0 0
        %3365 = vmatprep.subr.bf16.mxu0 0
        %3366 = vmatpush1.bf16.xpose.msra.mxu0 0
        %3367 = vmatprep.subr.bf16.mxu0 0
        %3368 = vmatpush1.bf16.xpose.msra.mxu0 0
        %3369 = vmatprep.subr.bf16.mxu0 0
        %3370 = vmatpush1.bf16.xpose.msra.mxu0 %v3353
        %3371 = vmatprep.subr.bf16.mxu0 0
        %3372 = vmatpush2.bf16.xpose.msra.mxu0 0
        %3373 = vmatprep.subr.bf16.mxu0 0
        %3374 = vmatpush2.bf16.xpose.msra.mxu0 0
        %3375 = vmatprep.subr.bf16.mxu0 0
        %3376 = vmatpush2.bf16.xpose.msra.mxu0 0
        %3377 = vmatprep.subr.bf16.mxu0 0
        %3378 = vmatpush2.bf16.xpose.msra.mxu0 0
        %3379 = vmatprep.subr.bf16.mxu0 0
        %3380 = vmatpush2.bf16.xpose.msra.mxu0 0
        %3381 = vmatprep.subr.bf16.mxu0 0
        %3382 = vmatpush2.bf16.xpose.msra.mxu0 0
        %3383 = vmatprep.subr.bf16.mxu0 0
        %3384 = vmatpush2.bf16.xpose.msra.mxu0 0
        %3385 = vmatprep.subr.bf16.mxu0 0
        %3386 = vmatpush2.bf16.xpose.msra.mxu0 0
        %3387 = vmatprep.mubr.bf16.mxu0 0
        %3388 = vmatmul.mubr.bf16.gmra.mxu0 %v3350
        %v3389 = vpop.f32.mrf.mxu0
        %v3390 = vadd.f32 0.0, %v3389
        %v3391 = vpop.f32.mrf.mxu0
        %v3392 = vpop.f32.mrf.mxu0
        %v3393 = vpop.f32.mrf.mxu0
        %3394 = vdwg.mxu0
        %3396 = vrot.lane.b32.xlu0 %v3247, 96
        %v3397 = vpop.permute.xlu0 %3396
        %v3399 = vsel %vm887, %v3247, 0
        %v3402 = vsel %vm887, %v3397, 0
        %3404 = vmatprep.subr.bf16.mxu0 0
        %3405 = vmatpush1.bf16.xpose.msra.mxu0 0
        %3406 = vmatprep.subr.bf16.mxu0 0
        %3407 = vmatpush1.bf16.xpose.msra.mxu0 0
        %3408 = vmatprep.subr.bf16.mxu0 0
        %3409 = vmatpush1.bf16.xpose.msra.mxu0 0
        %3410 = vmatprep.subr.bf16.mxu0 0
        %3411 = vmatpush1.bf16.xpose.msra.mxu0 0
        %3412 = vmatprep.subr.bf16.mxu0 0
        %3413 = vmatpush1.bf16.xpose.msra.mxu0 0
        %3414 = vmatprep.subr.bf16.mxu0 0
        %3415 = vmatpush1.bf16.xpose.msra.mxu0 0
        %3416 = vmatprep.subr.bf16.mxu0 0
        %3417 = vmatpush1.bf16.xpose.msra.mxu0 0
        %3418 = vmatprep.subr.bf16.mxu0 0
        %3419 = vmatpush1.bf16.xpose.msra.mxu0 %v3402
        %3420 = vmatprep.subr.bf16.mxu0 0
        %3421 = vmatpush2.bf16.xpose.msra.mxu0 0
        %3422 = vmatprep.subr.bf16.mxu0 0
        %3423 = vmatpush2.bf16.xpose.msra.mxu0 0
        %3424 = vmatprep.subr.bf16.mxu0 0
        %3425 = vmatpush2.bf16.xpose.msra.mxu0 0
        %3426 = vmatprep.subr.bf16.mxu0 0
        %3427 = vmatpush2.bf16.xpose.msra.mxu0 0
        %3428 = vmatprep.subr.bf16.mxu0 0
        %3429 = vmatpush2.bf16.xpose.msra.mxu0 0
        %3430 = vmatprep.subr.bf16.mxu0 0
        %3431 = vmatpush2.bf16.xpose.msra.mxu0 0
        %3432 = vmatprep.subr.bf16.mxu0 0
        %3433 = vmatpush2.bf16.xpose.msra.mxu0 0
        %3434 = vmatprep.subr.bf16.mxu0 0
        %3435 = vmatpush2.bf16.xpose.msra.mxu0 0
        %3436 = vmatprep.mubr.bf16.mxu0 0
        %3437 = vmatmul.mubr.bf16.gmra.mxu0 %v3399
        %v3438 = vpop.f32.mrf.mxu0
        %v3439 = vadd.f32 0.0, %v3438
        %v3440 = vpop.f32.mrf.mxu0
        %v3441 = vpop.f32.mrf.mxu0
        %v3442 = vpop.f32.mrf.mxu0
        %3443 = vdwg.mxu0
        %v3444 = vsel %vm1082, %v3292, -1e+30
        %v3445 = vsel %vm1082, %v3341, -1e+30
        %v3446 = vsel %vm1082, %v3390, -1e+30
        %v3447 = vsel %vm1082, %v3439, -1e+30
        %v3448 = vsel %vm887, %v3444, -inf
        %3449 = vmax.xlane.f32.xlu0 %v3448
        %v3450 = vpop.xlane.xlu0 %3449
        %v3451 = vsel %vm887, %v3445, -inf
        %3452 = vmax.xlane.f32.xlu0 %v3451
        %v3453 = vpop.xlane.xlu0 %3452
        %v3454 = vsel %vm887, %v3446, -inf
        %3455 = vmax.xlane.f32.xlu0 %v3454
        %v3456 = vpop.xlane.xlu0 %3455
        %v3457 = vsel %vm887, %v3447, -inf
        %3458 = vmax.xlane.f32.xlu0 %v3457
        %v3459 = vpop.xlane.xlu0 %3458
        %v3460 = vsub.f32 %v3444, %v3450
        %v3461 = vsub.f32 %v3445, %v3453
        %v3462 = vsub.f32 %v3446, %v3456
        %v3463 = vsub.f32 %v3447, %v3459
        %v3464 = vmul.f32 %v3460, 1.442695
        %v3465 = vpow.pop %v3464
        %v3466 = vmul.f32 %v3461, 1.442695
        %v3467 = vpow.pop %v3466
        %v3468 = vmul.f32 %v3462, 1.442695
        %v3469 = vpow.pop %v3468
        %v3470 = vmul.f32 %v3463, 1.442695
        %v3471 = vpow.pop %v3470
        %v3472 = vsel %vm887, %v3465, 0.0
        %3473 = vadd.xlane.f32.xlu0 %v3472
        %v3474 = vpop.xlane.xlu0 %3473
        %v3475 = vsel %vm887, %v3467, 0.0
        %3476 = vadd.xlane.f32.xlu0 %v3475
        %v3477 = vpop.xlane.xlu0 %3476
        %v3478 = vsel %vm887, %v3469, 0.0
        %3479 = vadd.xlane.f32.xlu0 %v3478
        %v3480 = vpop.xlane.xlu0 %3479
        %v3481 = vsel %vm887, %v3471, 0.0
        %3482 = vadd.xlane.f32.xlu0 %v3481
        %v3483 = vpop.xlane.xlu0 %3482
        %v3484 = vrcp.pop %v3474
        %v3485 = vrcp.pop %v3477
        %v3486 = vrcp.pop %v3480
        %v3487 = vrcp.pop %v3483
        %v3488 = vmul.f32 %v3465, %v3484
        %v3489 = vmul.f32 %v3467, %v3485
        %v3490 = vmul.f32 %v3469, %v3486
        %v3491 = vmul.f32 %v3471, %v3487
        %v3492 = vpack.c.bf16 %v3488, %v3488
        %v3493 = vpack.c.bf16 %v3489, %v3489
        %v3494 = vpack.c.bf16 %v3490, %v3490
        %v3495 = vpack.c.bf16 %v3491, %v3491
        %3496 = vrot.lane.b32.xlu0 %v3244, 64
        %v3497 = vpop.permute.xlu0 %3496
        %v3499 = vsel %vm887, %v3492, 0
        %v3502 = vsel %vm1140, %v3497, 0
        %3504 = vmatprep.subr.bf16.mxu0 0
        %3505 = vmatpush1.bf16.msra.mxu0 0
        %3506 = vmatprep.subr.bf16.mxu0 0
        %3507 = vmatpush1.bf16.msra.mxu0 0
        %3508 = vmatprep.subr.bf16.mxu0 0
        %3509 = vmatpush1.bf16.msra.mxu0 0
        %3510 = vmatprep.subr.bf16.mxu0 0
        %3511 = vmatpush1.bf16.msra.mxu0 0
        %3512 = vmatprep.subr.bf16.mxu0 0
        %3513 = vmatpush1.bf16.msra.mxu0 0
        %3514 = vmatprep.subr.bf16.mxu0 0
        %3515 = vmatpush1.bf16.msra.mxu0 0
        %3516 = vmatprep.subr.bf16.mxu0 0
        %3517 = vmatpush1.bf16.msra.mxu0 0
        %3518 = vmatprep.subr.bf16.mxu0 0
        %3519 = vmatpush1.bf16.msra.mxu0 %v3502
        %3520 = vmatprep.subr.bf16.mxu0 0
        %3521 = vmatpush2.bf16.msra.mxu0 0
        %3522 = vmatprep.subr.bf16.mxu0 0
        %3523 = vmatpush2.bf16.msra.mxu0 0
        %3524 = vmatprep.subr.bf16.mxu0 0
        %3525 = vmatpush2.bf16.msra.mxu0 0
        %3526 = vmatprep.subr.bf16.mxu0 0
        %3527 = vmatpush2.bf16.msra.mxu0 0
        %3528 = vmatprep.subr.bf16.mxu0 0
        %3529 = vmatpush2.bf16.msra.mxu0 0
        %3530 = vmatprep.subr.bf16.mxu0 0
        %3531 = vmatpush2.bf16.msra.mxu0 0
        %3532 = vmatprep.subr.bf16.mxu0 0
        %3533 = vmatpush2.bf16.msra.mxu0 0
        %3534 = vmatprep.subr.bf16.mxu0 0
        %3535 = vmatpush2.bf16.msra.mxu0 0
        %3536 = vmatprep.mubr.bf16.mxu0 0
        %3537 = vmatmul.mubr.bf16.gmra.mxu0 %v3499
        %v3538 = vpop.f32.mrf.mxu0
        %v3539 = vadd.f32 0.0, %v3538
        %v3540 = vpop.f32.mrf.mxu0
        %v3541 = vpop.f32.mrf.mxu0
        %v3542 = vpop.f32.mrf.mxu0
        %3543 = vdwg.mxu0
        %3544 = vrot.lane.b32.xlu0 %v3245, 64
        %v3545 = vpop.permute.xlu0 %3544
        %v3547 = vsel %vm887, %v3493, 0
        %v3550 = vsel %vm1140, %v3545, 0
        %3552 = vmatprep.subr.bf16.mxu0 0
        %3553 = vmatpush1.bf16.msra.mxu0 0
        %3554 = vmatprep.subr.bf16.mxu0 0
        %3555 = vmatpush1.bf16.msra.mxu0 0
        %3556 = vmatprep.subr.bf16.mxu0 0
        %3557 = vmatpush1.bf16.msra.mxu0 0
        %3558 = vmatprep.subr.bf16.mxu0 0
        %3559 = vmatpush1.bf16.msra.mxu0 0
        %3560 = vmatprep.subr.bf16.mxu0 0
        %3561 = vmatpush1.bf16.msra.mxu0 0
        %3562 = vmatprep.subr.bf16.mxu0 0
        %3563 = vmatpush1.bf16.msra.mxu0 0
        %3564 = vmatprep.subr.bf16.mxu0 0
        %3565 = vmatpush1.bf16.msra.mxu0 0
        %3566 = vmatprep.subr.bf16.mxu0 0
        %3567 = vmatpush1.bf16.msra.mxu0 %v3550
        %3568 = vmatprep.subr.bf16.mxu0 0
        %3569 = vmatpush2.bf16.msra.mxu0 0
        %3570 = vmatprep.subr.bf16.mxu0 0
        %3571 = vmatpush2.bf16.msra.mxu0 0
        %3572 = vmatprep.subr.bf16.mxu0 0
        %3573 = vmatpush2.bf16.msra.mxu0 0
        %3574 = vmatprep.subr.bf16.mxu0 0
        %3575 = vmatpush2.bf16.msra.mxu0 0
        %3576 = vmatprep.subr.bf16.mxu0 0
        %3577 = vmatpush2.bf16.msra.mxu0 0
        %3578 = vmatprep.subr.bf16.mxu0 0
        %3579 = vmatpush2.bf16.msra.mxu0 0
        %3580 = vmatprep.subr.bf16.mxu0 0
        %3581 = vmatpush2.bf16.msra.mxu0 0
        %3582 = vmatprep.subr.bf16.mxu0 0
        %3583 = vmatpush2.bf16.msra.mxu0 0
        %3584 = vmatprep.mubr.bf16.mxu0 0
        %3585 = vmatmul.mubr.bf16.gmra.mxu0 %v3547
        %v3586 = vpop.f32.mrf.mxu0
        %v3587 = vadd.f32 0.0, %v3586
        %v3588 = vpop.f32.mrf.mxu0
        %v3589 = vpop.f32.mrf.mxu0
        %v3590 = vpop.f32.mrf.mxu0
        %3591 = vdwg.mxu0
        %3592 = vrot.lane.b32.xlu0 %v3246, 64
        %v3593 = vpop.permute.xlu0 %3592
        %v3595 = vsel %vm887, %v3494, 0
        %v3598 = vsel %vm1140, %v3593, 0
        %3600 = vmatprep.subr.bf16.mxu0 0
        %3601 = vmatpush1.bf16.msra.mxu0 0
        %3602 = vmatprep.subr.bf16.mxu0 0
        %3603 = vmatpush1.bf16.msra.mxu0 0
        %3604 = vmatprep.subr.bf16.mxu0 0
        %3605 = vmatpush1.bf16.msra.mxu0 0
        %3606 = vmatprep.subr.bf16.mxu0 0
        %3607 = vmatpush1.bf16.msra.mxu0 0
        %3608 = vmatprep.subr.bf16.mxu0 0
        %3609 = vmatpush1.bf16.msra.mxu0 0
        %3610 = vmatprep.subr.bf16.mxu0 0
        %3611 = vmatpush1.bf16.msra.mxu0 0
        %3612 = vmatprep.subr.bf16.mxu0 0
        %3613 = vmatpush1.bf16.msra.mxu0 0
        %3614 = vmatprep.subr.bf16.mxu0 0
        %3615 = vmatpush1.bf16.msra.mxu0 %v3598
        %3616 = vmatprep.subr.bf16.mxu0 0
        %3617 = vmatpush2.bf16.msra.mxu0 0
        %3618 = vmatprep.subr.bf16.mxu0 0
        %3619 = vmatpush2.bf16.msra.mxu0 0
        %3620 = vmatprep.subr.bf16.mxu0 0
        %3621 = vmatpush2.bf16.msra.mxu0 0
        %3622 = vmatprep.subr.bf16.mxu0 0
        %3623 = vmatpush2.bf16.msra.mxu0 0
        %3624 = vmatprep.subr.bf16.mxu0 0
        %3625 = vmatpush2.bf16.msra.mxu0 0
        %3626 = vmatprep.subr.bf16.mxu0 0
        %3627 = vmatpush2.bf16.msra.mxu0 0
        %3628 = vmatprep.subr.bf16.mxu0 0
        %3629 = vmatpush2.bf16.msra.mxu0 0
        %3630 = vmatprep.subr.bf16.mxu0 0
        %3631 = vmatpush2.bf16.msra.mxu0 0
        %3632 = vmatprep.mubr.bf16.mxu0 0
        %3633 = vmatmul.mubr.bf16.gmra.mxu0 %v3595
        %v3634 = vpop.f32.mrf.mxu0
        %v3635 = vadd.f32 0.0, %v3634
        %v3636 = vpop.f32.mrf.mxu0
        %v3637 = vpop.f32.mrf.mxu0
        %v3638 = vpop.f32.mrf.mxu0
        %3639 = vdwg.mxu0
        %3640 = vrot.lane.b32.xlu0 %v3247, 64
        %v3641 = vpop.permute.xlu0 %3640
        %v3643 = vsel %vm887, %v3495, 0
        %v3646 = vsel %vm1140, %v3641, 0
        %3648 = vmatprep.subr.bf16.mxu0 0
        %3649 = vmatpush1.bf16.msra.mxu0 0
        %3650 = vmatprep.subr.bf16.mxu0 0
        %3651 = vmatpush1.bf16.msra.mxu0 0
        %3652 = vmatprep.subr.bf16.mxu0 0
        %3653 = vmatpush1.bf16.msra.mxu0 0
        %3654 = vmatprep.subr.bf16.mxu0 0
        %3655 = vmatpush1.bf16.msra.mxu0 0
        %3656 = vmatprep.subr.bf16.mxu0 0
        %3657 = vmatpush1.bf16.msra.mxu0 0
        %3658 = vmatprep.subr.bf16.mxu0 0
        %3659 = vmatpush1.bf16.msra.mxu0 0
        %3660 = vmatprep.subr.bf16.mxu0 0
        %3661 = vmatpush1.bf16.msra.mxu0 0
        %3662 = vmatprep.subr.bf16.mxu0 0
        %3663 = vmatpush1.bf16.msra.mxu0 %v3646
        %3664 = vmatprep.subr.bf16.mxu0 0
        %3665 = vmatpush2.bf16.msra.mxu0 0
        %3666 = vmatprep.subr.bf16.mxu0 0
        %3667 = vmatpush2.bf16.msra.mxu0 0
        %3668 = vmatprep.subr.bf16.mxu0 0
        %3669 = vmatpush2.bf16.msra.mxu0 0
        %3670 = vmatprep.subr.bf16.mxu0 0
        %3671 = vmatpush2.bf16.msra.mxu0 0
        %3672 = vmatprep.subr.bf16.mxu0 0
        %3673 = vmatpush2.bf16.msra.mxu0 0
        %3674 = vmatprep.subr.bf16.mxu0 0
        %3675 = vmatpush2.bf16.msra.mxu0 0
        %3676 = vmatprep.subr.bf16.mxu0 0
        %3677 = vmatpush2.bf16.msra.mxu0 0
        %3678 = vmatprep.subr.bf16.mxu0 0
        %3679 = vmatpush2.bf16.msra.mxu0 0
        %3680 = vmatprep.mubr.bf16.mxu0 0
        %3681 = vmatmul.mubr.bf16.gmra.mxu0 %v3643
        %v3682 = vpop.f32.mrf.mxu0
        %v3683 = vadd.f32 0.0, %v3682
        %v3684 = vpop.f32.mrf.mxu0
        %v3685 = vpop.f32.mrf.mxu0
        %v3686 = vpop.f32.mrf.mxu0
        %3687 = vdwg.mxu0
        %3688 = vrot.lane.b32.xlu0 %v3244, 120
        %v3689 = vpop.permute.xlu0 %3688
        %3690 = vrot.lane.b32.xlu0 %v3244, 88
        %v3691 = vpop.permute.xlu0 %3690
        %v3693 = vsel %vm887, %v3689, 0
        %v3696 = vsel %vm887, %v3691, 0
        %3698 = vmatprep.subr.bf16.mxu0 0
        %3699 = vmatpush1.bf16.xpose.msra.mxu0 0
        %3700 = vmatprep.subr.bf16.mxu0 0
        %3701 = vmatpush1.bf16.xpose.msra.mxu0 0
        %3702 = vmatprep.subr.bf16.mxu0 0
        %3703 = vmatpush1.bf16.xpose.msra.mxu0 0
        %3704 = vmatprep.subr.bf16.mxu0 0
        %3705 = vmatpush1.bf16.xpose.msra.mxu0 0
        %3706 = vmatprep.subr.bf16.mxu0 0
        %3707 = vmatpush1.bf16.xpose.msra.mxu0 0
        %3708 = vmatprep.subr.bf16.mxu0 0
        %3709 = vmatpush1.bf16.xpose.msra.mxu0 0
        %3710 = vmatprep.subr.bf16.mxu0 0
        %3711 = vmatpush1.bf16.xpose.msra.mxu0 0
        %3712 = vmatprep.subr.bf16.mxu0 0
        %3713 = vmatpush1.bf16.xpose.msra.mxu0 %v3696
        %3714 = vmatprep.subr.bf16.mxu0 0
        %3715 = vmatpush2.bf16.xpose.msra.mxu0 0
        %3716 = vmatprep.subr.bf16.mxu0 0
        %3717 = vmatpush2.bf16.xpose.msra.mxu0 0
        %3718 = vmatprep.subr.bf16.mxu0 0
        %3719 = vmatpush2.bf16.xpose.msra.mxu0 0
        %3720 = vmatprep.subr.bf16.mxu0 0
        %3721 = vmatpush2.bf16.xpose.msra.mxu0 0
        %3722 = vmatprep.subr.bf16.mxu0 0
        %3723 = vmatpush2.bf16.xpose.msra.mxu0 0
        %3724 = vmatprep.subr.bf16.mxu0 0
        %3725 = vmatpush2.bf16.xpose.msra.mxu0 0
        %3726 = vmatprep.subr.bf16.mxu0 0
        %3727 = vmatpush2.bf16.xpose.msra.mxu0 0
        %3728 = vmatprep.subr.bf16.mxu0 0
        %3729 = vmatpush2.bf16.xpose.msra.mxu0 0
        %3730 = vmatprep.mubr.bf16.mxu0 0
        %3731 = vmatmul.mubr.bf16.gmra.mxu0 %v3693
        %v3732 = vpop.f32.mrf.mxu0
        %v3733 = vadd.f32 0.0, %v3732
        %v3734 = vpop.f32.mrf.mxu0
        %v3735 = vpop.f32.mrf.mxu0
        %v3736 = vpop.f32.mrf.mxu0
        %3737 = vdwg.mxu0
        %3738 = vrot.lane.b32.xlu0 %v3245, 120
        %v3739 = vpop.permute.xlu0 %3738
        %3740 = vrot.lane.b32.xlu0 %v3245, 88
        %v3741 = vpop.permute.xlu0 %3740
        %v3743 = vsel %vm887, %v3739, 0
        %v3746 = vsel %vm887, %v3741, 0
        %3748 = vmatprep.subr.bf16.mxu0 0
        %3749 = vmatpush1.bf16.xpose.msra.mxu0 0
        %3750 = vmatprep.subr.bf16.mxu0 0
        %3751 = vmatpush1.bf16.xpose.msra.mxu0 0
        %3752 = vmatprep.subr.bf16.mxu0 0
        %3753 = vmatpush1.bf16.xpose.msra.mxu0 0
        %3754 = vmatprep.subr.bf16.mxu0 0
        %3755 = vmatpush1.bf16.xpose.msra.mxu0 0
        %3756 = vmatprep.subr.bf16.mxu0 0
        %3757 = vmatpush1.bf16.xpose.msra.mxu0 0
        %3758 = vmatprep.subr.bf16.mxu0 0
        %3759 = vmatpush1.bf16.xpose.msra.mxu0 0
        %3760 = vmatprep.subr.bf16.mxu0 0
        %3761 = vmatpush1.bf16.xpose.msra.mxu0 0
        %3762 = vmatprep.subr.bf16.mxu0 0
        %3763 = vmatpush1.bf16.xpose.msra.mxu0 %v3746
        %3764 = vmatprep.subr.bf16.mxu0 0
        %3765 = vmatpush2.bf16.xpose.msra.mxu0 0
        %3766 = vmatprep.subr.bf16.mxu0 0
        %3767 = vmatpush2.bf16.xpose.msra.mxu0 0
        %3768 = vmatprep.subr.bf16.mxu0 0
        %3769 = vmatpush2.bf16.xpose.msra.mxu0 0
        %3770 = vmatprep.subr.bf16.mxu0 0
        %3771 = vmatpush2.bf16.xpose.msra.mxu0 0
        %3772 = vmatprep.subr.bf16.mxu0 0
        %3773 = vmatpush2.bf16.xpose.msra.mxu0 0
        %3774 = vmatprep.subr.bf16.mxu0 0
        %3775 = vmatpush2.bf16.xpose.msra.mxu0 0
        %3776 = vmatprep.subr.bf16.mxu0 0
        %3777 = vmatpush2.bf16.xpose.msra.mxu0 0
        %3778 = vmatprep.subr.bf16.mxu0 0
        %3779 = vmatpush2.bf16.xpose.msra.mxu0 0
        %3780 = vmatprep.mubr.bf16.mxu0 0
        %3781 = vmatmul.mubr.bf16.gmra.mxu0 %v3743
        %v3782 = vpop.f32.mrf.mxu0
        %v3783 = vadd.f32 0.0, %v3782
        %v3784 = vpop.f32.mrf.mxu0
        %v3785 = vpop.f32.mrf.mxu0
        %v3786 = vpop.f32.mrf.mxu0
        %3787 = vdwg.mxu0
        %3788 = vrot.lane.b32.xlu0 %v3246, 120
        %v3789 = vpop.permute.xlu0 %3788
        %3790 = vrot.lane.b32.xlu0 %v3246, 88
        %v3791 = vpop.permute.xlu0 %3790
        %v3793 = vsel %vm887, %v3789, 0
        %v3796 = vsel %vm887, %v3791, 0
        %3798 = vmatprep.subr.bf16.mxu0 0
        %3799 = vmatpush1.bf16.xpose.msra.mxu0 0
        %3800 = vmatprep.subr.bf16.mxu0 0
        %3801 = vmatpush1.bf16.xpose.msra.mxu0 0
        %3802 = vmatprep.subr.bf16.mxu0 0
        %3803 = vmatpush1.bf16.xpose.msra.mxu0 0
        %3804 = vmatprep.subr.bf16.mxu0 0
        %3805 = vmatpush1.bf16.xpose.msra.mxu0 0
        %3806 = vmatprep.subr.bf16.mxu0 0
        %3807 = vmatpush1.bf16.xpose.msra.mxu0 0
        %3808 = vmatprep.subr.bf16.mxu0 0
        %3809 = vmatpush1.bf16.xpose.msra.mxu0 0
        %3810 = vmatprep.subr.bf16.mxu0 0
        %3811 = vmatpush1.bf16.xpose.msra.mxu0 0
        %3812 = vmatprep.subr.bf16.mxu0 0
        %3813 = vmatpush1.bf16.xpose.msra.mxu0 %v3796
        %3814 = vmatprep.subr.bf16.mxu0 0
        %3815 = vmatpush2.bf16.xpose.msra.mxu0 0
        %3816 = vmatprep.subr.bf16.mxu0 0
        %3817 = vmatpush2.bf16.xpose.msra.mxu0 0
        %3818 = vmatprep.subr.bf16.mxu0 0
        %3819 = vmatpush2.bf16.xpose.msra.mxu0 0
        %3820 = vmatprep.subr.bf16.mxu0 0
        %3821 = vmatpush2.bf16.xpose.msra.mxu0 0
        %3822 = vmatprep.subr.bf16.mxu0 0
        %3823 = vmatpush2.bf16.xpose.msra.mxu0 0
        %3824 = vmatprep.subr.bf16.mxu0 0
        %3825 = vmatpush2.bf16.xpose.msra.mxu0 0
        %3826 = vmatprep.subr.bf16.mxu0 0
        %3827 = vmatpush2.bf16.xpose.msra.mxu0 0
        %3828 = vmatprep.subr.bf16.mxu0 0
        %3829 = vmatpush2.bf16.xpose.msra.mxu0 0
        %3830 = vmatprep.mubr.bf16.mxu0 0
        %3831 = vmatmul.mubr.bf16.gmra.mxu0 %v3793
        %v3832 = vpop.f32.mrf.mxu0
        %v3833 = vadd.f32 0.0, %v3832
        %v3834 = vpop.f32.mrf.mxu0
        %v3835 = vpop.f32.mrf.mxu0
        %v3836 = vpop.f32.mrf.mxu0
        %3837 = vdwg.mxu0
        %3838 = vrot.lane.b32.xlu0 %v3247, 120
        %v3839 = vpop.permute.xlu0 %3838
        %3840 = vrot.lane.b32.xlu0 %v3247, 88
        %v3841 = vpop.permute.xlu0 %3840
        %v3843 = vsel %vm887, %v3839, 0
        %v3846 = vsel %vm887, %v3841, 0
        %3848 = vmatprep.subr.bf16.mxu0 0
        %3849 = vmatpush1.bf16.xpose.msra.mxu0 0
        %3850 = vmatprep.subr.bf16.mxu0 0
        %3851 = vmatpush1.bf16.xpose.msra.mxu0 0
        %3852 = vmatprep.subr.bf16.mxu0 0
        %3853 = vmatpush1.bf16.xpose.msra.mxu0 0
        %3854 = vmatprep.subr.bf16.mxu0 0
        %3855 = vmatpush1.bf16.xpose.msra.mxu0 0
        %3856 = vmatprep.subr.bf16.mxu0 0
        %3857 = vmatpush1.bf16.xpose.msra.mxu0 0
        %3858 = vmatprep.subr.bf16.mxu0 0
        %3859 = vmatpush1.bf16.xpose.msra.mxu0 0
        %3860 = vmatprep.subr.bf16.mxu0 0
        %3861 = vmatpush1.bf16.xpose.msra.mxu0 0
        %3862 = vmatprep.subr.bf16.mxu0 0
        %3863 = vmatpush1.bf16.xpose.msra.mxu0 %v3846
        %3864 = vmatprep.subr.bf16.mxu0 0
        %3865 = vmatpush2.bf16.xpose.msra.mxu0 0
        %3866 = vmatprep.subr.bf16.mxu0 0
        %3867 = vmatpush2.bf16.xpose.msra.mxu0 0
        %3868 = vmatprep.subr.bf16.mxu0 0
        %3869 = vmatpush2.bf16.xpose.msra.mxu0 0
        %3870 = vmatprep.subr.bf16.mxu0 0
        %3871 = vmatpush2.bf16.xpose.msra.mxu0 0
        %3872 = vmatprep.subr.bf16.mxu0 0
        %3873 = vmatpush2.bf16.xpose.msra.mxu0 0
        %3874 = vmatprep.subr.bf16.mxu0 0
        %3875 = vmatpush2.bf16.xpose.msra.mxu0 0
        %3876 = vmatprep.subr.bf16.mxu0 0
        %3877 = vmatpush2.bf16.xpose.msra.mxu0 0
        %3878 = vmatprep.subr.bf16.mxu0 0
        %3879 = vmatpush2.bf16.xpose.msra.mxu0 0
        %3880 = vmatprep.mubr.bf16.mxu0 0
        %3881 = vmatmul.mubr.bf16.gmra.mxu0 %v3843
        %v3882 = vpop.f32.mrf.mxu0
        %v3883 = vadd.f32 0.0, %v3882
        %v3884 = vpop.f32.mrf.mxu0
        %v3885 = vpop.f32.mrf.mxu0
        %v3886 = vpop.f32.mrf.mxu0
        %3887 = vdwg.mxu0
        %v3888 = vsel %vm1082, %v3733, -1e+30
        %v3889 = vsel %vm1082, %v3783, -1e+30
        %v3890 = vsel %vm1082, %v3833, -1e+30
        %v3891 = vsel %vm1082, %v3883, -1e+30
        %v3892 = vsel %vm887, %v3888, -inf
        %3893 = vmax.xlane.f32.xlu0 %v3892
        %v3894 = vpop.xlane.xlu0 %3893
        %v3895 = vsel %vm887, %v3889, -inf
        %3896 = vmax.xlane.f32.xlu0 %v3895
        %v3897 = vpop.xlane.xlu0 %3896
        %v3898 = vsel %vm887, %v3890, -inf
        %3899 = vmax.xlane.f32.xlu0 %v3898
        %v3900 = vpop.xlane.xlu0 %3899
        %v3901 = vsel %vm887, %v3891, -inf
        %3902 = vmax.xlane.f32.xlu0 %v3901
        %v3903 = vpop.xlane.xlu0 %3902
        %v3904 = vsub.f32 %v3888, %v3894
        %v3905 = vsub.f32 %v3889, %v3897
        %v3906 = vsub.f32 %v3890, %v3900
        %v3907 = vsub.f32 %v3891, %v3903
        %v3908 = vmul.f32 %v3904, 1.442695
        %v3909 = vpow.pop %v3908
        %v3910 = vmul.f32 %v3905, 1.442695
        %v3911 = vpow.pop %v3910
        %v3912 = vmul.f32 %v3906, 1.442695
        %v3913 = vpow.pop %v3912
        %v3914 = vmul.f32 %v3907, 1.442695
        %v3915 = vpow.pop %v3914
        %v3916 = vsel %vm887, %v3909, 0.0
        %3917 = vadd.xlane.f32.xlu0 %v3916
        %v3918 = vpop.xlane.xlu0 %3917
        %v3919 = vsel %vm887, %v3911, 0.0
        %3920 = vadd.xlane.f32.xlu0 %v3919
        %v3921 = vpop.xlane.xlu0 %3920
        %v3922 = vsel %vm887, %v3913, 0.0
        %3923 = vadd.xlane.f32.xlu0 %v3922
        %v3924 = vpop.xlane.xlu0 %3923
        %v3925 = vsel %vm887, %v3915, 0.0
        %3926 = vadd.xlane.f32.xlu0 %v3925
        %v3927 = vpop.xlane.xlu0 %3926
        %v3928 = vrcp.pop %v3918
        %v3929 = vrcp.pop %v3921
        %v3930 = vrcp.pop %v3924
        %v3931 = vrcp.pop %v3927
        %v3932 = vmul.f32 %v3909, %v3928
        %v3933 = vmul.f32 %v3911, %v3929
        %v3934 = vmul.f32 %v3913, %v3930
        %v3935 = vmul.f32 %v3915, %v3931
        %v3936 = vpack.c.bf16 %v3932, %v3932
        %v3937 = vpack.c.bf16 %v3933, %v3933
        %v3938 = vpack.c.bf16 %v3934, %v3934
        %v3939 = vpack.c.bf16 %v3935, %v3935
        %3940 = vrot.lane.b32.xlu0 %v3244, 56
        %v3941 = vpop.permute.xlu0 %3940
        %v3943 = vsel %vm887, %v3936, 0
        %v3946 = vsel %vm1140, %v3941, 0
        %3948 = vmatprep.subr.bf16.mxu0 0
        %3949 = vmatpush1.bf16.msra.mxu0 0
        %3950 = vmatprep.subr.bf16.mxu0 0
        %3951 = vmatpush1.bf16.msra.mxu0 0
        %3952 = vmatprep.subr.bf16.mxu0 0
        %3953 = vmatpush1.bf16.msra.mxu0 0
        %3954 = vmatprep.subr.bf16.mxu0 0
        %3955 = vmatpush1.bf16.msra.mxu0 0
        %3956 = vmatprep.subr.bf16.mxu0 0
        %3957 = vmatpush1.bf16.msra.mxu0 0
        %3958 = vmatprep.subr.bf16.mxu0 0
        %3959 = vmatpush1.bf16.msra.mxu0 0
        %3960 = vmatprep.subr.bf16.mxu0 0
        %3961 = vmatpush1.bf16.msra.mxu0 0
        %3962 = vmatprep.subr.bf16.mxu0 0
        %3963 = vmatpush1.bf16.msra.mxu0 %v3946
        %3964 = vmatprep.subr.bf16.mxu0 0
        %3965 = vmatpush2.bf16.msra.mxu0 0
        %3966 = vmatprep.subr.bf16.mxu0 0
        %3967 = vmatpush2.bf16.msra.mxu0 0
        %3968 = vmatprep.subr.bf16.mxu0 0
        %3969 = vmatpush2.bf16.msra.mxu0 0
        %3970 = vmatprep.subr.bf16.mxu0 0
        %3971 = vmatpush2.bf16.msra.mxu0 0
        %3972 = vmatprep.subr.bf16.mxu0 0
        %3973 = vmatpush2.bf16.msra.mxu0 0
        %3974 = vmatprep.subr.bf16.mxu0 0
        %3975 = vmatpush2.bf16.msra.mxu0 0
        %3976 = vmatprep.subr.bf16.mxu0 0
        %3977 = vmatpush2.bf16.msra.mxu0 0
        %3978 = vmatprep.subr.bf16.mxu0 0
        %3979 = vmatpush2.bf16.msra.mxu0 0
        %3980 = vmatprep.mubr.bf16.mxu0 0
        %3981 = vmatmul.mubr.bf16.gmra.mxu0 %v3943
        %v3982 = vpop.f32.mrf.mxu0
        %v3983 = vadd.f32 0.0, %v3982
        %v3984 = vpop.f32.mrf.mxu0
        %v3985 = vpop.f32.mrf.mxu0
        %v3986 = vpop.f32.mrf.mxu0
        %3987 = vdwg.mxu0
        %3988 = vrot.lane.b32.xlu0 %v3245, 56
        %v3989 = vpop.permute.xlu0 %3988
        %v3991 = vsel %vm887, %v3937, 0
        %v3994 = vsel %vm1140, %v3989, 0
        %3996 = vmatprep.subr.bf16.mxu0 0
        %3997 = vmatpush1.bf16.msra.mxu0 0
        %3998 = vmatprep.subr.bf16.mxu0 0
        %3999 = vmatpush1.bf16.msra.mxu0 0
        %4000 = vmatprep.subr.bf16.mxu0 0
        %4001 = vmatpush1.bf16.msra.mxu0 0
        %4002 = vmatprep.subr.bf16.mxu0 0
        %4003 = vmatpush1.bf16.msra.mxu0 0
        %4004 = vmatprep.subr.bf16.mxu0 0
        %4005 = vmatpush1.bf16.msra.mxu0 0
        %4006 = vmatprep.subr.bf16.mxu0 0
        %4007 = vmatpush1.bf16.msra.mxu0 0
        %4008 = vmatprep.subr.bf16.mxu0 0
        %4009 = vmatpush1.bf16.msra.mxu0 0
        %4010 = vmatprep.subr.bf16.mxu0 0
        %4011 = vmatpush1.bf16.msra.mxu0 %v3994
        %4012 = vmatprep.subr.bf16.mxu0 0
        %4013 = vmatpush2.bf16.msra.mxu0 0
        %4014 = vmatprep.subr.bf16.mxu0 0
        %4015 = vmatpush2.bf16.msra.mxu0 0
        %4016 = vmatprep.subr.bf16.mxu0 0
        %4017 = vmatpush2.bf16.msra.mxu0 0
        %4018 = vmatprep.subr.bf16.mxu0 0
        %4019 = vmatpush2.bf16.msra.mxu0 0
        %4020 = vmatprep.subr.bf16.mxu0 0
        %4021 = vmatpush2.bf16.msra.mxu0 0
        %4022 = vmatprep.subr.bf16.mxu0 0
        %4023 = vmatpush2.bf16.msra.mxu0 0
        %4024 = vmatprep.subr.bf16.mxu0 0
        %4025 = vmatpush2.bf16.msra.mxu0 0
        %4026 = vmatprep.subr.bf16.mxu0 0
        %4027 = vmatpush2.bf16.msra.mxu0 0
        %4028 = vmatprep.mubr.bf16.mxu0 0
        %4029 = vmatmul.mubr.bf16.gmra.mxu0 %v3991
        %v4030 = vpop.f32.mrf.mxu0
        %v4031 = vadd.f32 0.0, %v4030
        %v4032 = vpop.f32.mrf.mxu0
        %v4033 = vpop.f32.mrf.mxu0
        %v4034 = vpop.f32.mrf.mxu0
        %4035 = vdwg.mxu0
        %4036 = vrot.lane.b32.xlu0 %v3246, 56
        %v4037 = vpop.permute.xlu0 %4036
        %v4039 = vsel %vm887, %v3938, 0
        %v4042 = vsel %vm1140, %v4037, 0
        %4044 = vmatprep.subr.bf16.mxu0 0
        %4045 = vmatpush1.bf16.msra.mxu0 0
        %4046 = vmatprep.subr.bf16.mxu0 0
        %4047 = vmatpush1.bf16.msra.mxu0 0
        %4048 = vmatprep.subr.bf16.mxu0 0
        %4049 = vmatpush1.bf16.msra.mxu0 0
        %4050 = vmatprep.subr.bf16.mxu0 0
        %4051 = vmatpush1.bf16.msra.mxu0 0
        %4052 = vmatprep.subr.bf16.mxu0 0
        %4053 = vmatpush1.bf16.msra.mxu0 0
        %4054 = vmatprep.subr.bf16.mxu0 0
        %4055 = vmatpush1.bf16.msra.mxu0 0
        %4056 = vmatprep.subr.bf16.mxu0 0
        %4057 = vmatpush1.bf16.msra.mxu0 0
        %4058 = vmatprep.subr.bf16.mxu0 0
        %4059 = vmatpush1.bf16.msra.mxu0 %v4042
        %4060 = vmatprep.subr.bf16.mxu0 0
        %4061 = vmatpush2.bf16.msra.mxu0 0
        %4062 = vmatprep.subr.bf16.mxu0 0
        %4063 = vmatpush2.bf16.msra.mxu0 0
        %4064 = vmatprep.subr.bf16.mxu0 0
        %4065 = vmatpush2.bf16.msra.mxu0 0
        %4066 = vmatprep.subr.bf16.mxu0 0
        %4067 = vmatpush2.bf16.msra.mxu0 0
        %4068 = vmatprep.subr.bf16.mxu0 0
        %4069 = vmatpush2.bf16.msra.mxu0 0
        %4070 = vmatprep.subr.bf16.mxu0 0
        %4071 = vmatpush2.bf16.msra.mxu0 0
        %4072 = vmatprep.subr.bf16.mxu0 0
        %4073 = vmatpush2.bf16.msra.mxu0 0
        %4074 = vmatprep.subr.bf16.mxu0 0
        %4075 = vmatpush2.bf16.msra.mxu0 0
        %4076 = vmatprep.mubr.bf16.mxu0 0
        %4077 = vmatmul.mubr.bf16.gmra.mxu0 %v4039
        %v4078 = vpop.f32.mrf.mxu0
        %v4079 = vadd.f32 0.0, %v4078
        %v4080 = vpop.f32.mrf.mxu0
        %v4081 = vpop.f32.mrf.mxu0
        %v4082 = vpop.f32.mrf.mxu0
        %4083 = vdwg.mxu0
        %4084 = vrot.lane.b32.xlu0 %v3247, 56
        %v4085 = vpop.permute.xlu0 %4084
        %v4087 = vsel %vm887, %v3939, 0
        %v4090 = vsel %vm1140, %v4085, 0
        %4092 = vmatprep.subr.bf16.mxu0 0
        %4093 = vmatpush1.bf16.msra.mxu0 0
        %4094 = vmatprep.subr.bf16.mxu0 0
        %4095 = vmatpush1.bf16.msra.mxu0 0
        %4096 = vmatprep.subr.bf16.mxu0 0
        %4097 = vmatpush1.bf16.msra.mxu0 0
        %4098 = vmatprep.subr.bf16.mxu0 0
        %4099 = vmatpush1.bf16.msra.mxu0 0
        %4100 = vmatprep.subr.bf16.mxu0 0
        %4101 = vmatpush1.bf16.msra.mxu0 0
        %4102 = vmatprep.subr.bf16.mxu0 0
        %4103 = vmatpush1.bf16.msra.mxu0 0
        %4104 = vmatprep.subr.bf16.mxu0 0
        %4105 = vmatpush1.bf16.msra.mxu0 0
        %4106 = vmatprep.subr.bf16.mxu0 0
        %4107 = vmatpush1.bf16.msra.mxu0 %v4090
        %4108 = vmatprep.subr.bf16.mxu0 0
        %4109 = vmatpush2.bf16.msra.mxu0 0
        %4110 = vmatprep.subr.bf16.mxu0 0
        %4111 = vmatpush2.bf16.msra.mxu0 0
        %4112 = vmatprep.subr.bf16.mxu0 0
        %4113 = vmatpush2.bf16.msra.mxu0 0
        %4114 = vmatprep.subr.bf16.mxu0 0
        %4115 = vmatpush2.bf16.msra.mxu0 0
        %4116 = vmatprep.subr.bf16.mxu0 0
        %4117 = vmatpush2.bf16.msra.mxu0 0
        %4118 = vmatprep.subr.bf16.mxu0 0
        %4119 = vmatpush2.bf16.msra.mxu0 0
        %4120 = vmatprep.subr.bf16.mxu0 0
        %4121 = vmatpush2.bf16.msra.mxu0 0
        %4122 = vmatprep.subr.bf16.mxu0 0
        %4123 = vmatpush2.bf16.msra.mxu0 0
        %4124 = vmatprep.mubr.bf16.mxu0 0
        %4125 = vmatmul.mubr.bf16.gmra.mxu0 %v4087
        %v4126 = vpop.f32.mrf.mxu0
        %v4127 = vadd.f32 0.0, %v4126
        %v4128 = vpop.f32.mrf.mxu0
        %v4129 = vpop.f32.mrf.mxu0
        %v4130 = vpop.f32.mrf.mxu0
        %4131 = vdwg.mxu0
        %4132 = vrot.lane.b32.xlu0 %v3244, 112
        %v4133 = vpop.permute.xlu0 %4132
        %4134 = vrot.lane.b32.xlu0 %v3244, 80
        %v4135 = vpop.permute.xlu0 %4134
        %v4137 = vsel %vm887, %v4133, 0
        %v4140 = vsel %vm887, %v4135, 0
        %4142 = vmatprep.subr.bf16.mxu0 0
        %4143 = vmatpush1.bf16.xpose.msra.mxu0 0
        %4144 = vmatprep.subr.bf16.mxu0 0
        %4145 = vmatpush1.bf16.xpose.msra.mxu0 0
        %4146 = vmatprep.subr.bf16.mxu0 0
        %4147 = vmatpush1.bf16.xpose.msra.mxu0 0
        %4148 = vmatprep.subr.bf16.mxu0 0
        %4149 = vmatpush1.bf16.xpose.msra.mxu0 0
        %4150 = vmatprep.subr.bf16.mxu0 0
        %4151 = vmatpush1.bf16.xpose.msra.mxu0 0
        %4152 = vmatprep.subr.bf16.mxu0 0
        %4153 = vmatpush1.bf16.xpose.msra.mxu0 0
        %4154 = vmatprep.subr.bf16.mxu0 0
        %4155 = vmatpush1.bf16.xpose.msra.mxu0 0
        %4156 = vmatprep.subr.bf16.mxu0 0
        %4157 = vmatpush1.bf16.xpose.msra.mxu0 %v4140
        %4158 = vmatprep.subr.bf16.mxu0 0
        %4159 = vmatpush2.bf16.xpose.msra.mxu0 0
        %4160 = vmatprep.subr.bf16.mxu0 0
        %4161 = vmatpush2.bf16.xpose.msra.mxu0 0
        %4162 = vmatprep.subr.bf16.mxu0 0
        %4163 = vmatpush2.bf16.xpose.msra.mxu0 0
        %4164 = vmatprep.subr.bf16.mxu0 0
        %4165 = vmatpush2.bf16.xpose.msra.mxu0 0
        %4166 = vmatprep.subr.bf16.mxu0 0
        %4167 = vmatpush2.bf16.xpose.msra.mxu0 0
        %4168 = vmatprep.subr.bf16.mxu0 0
        %4169 = vmatpush2.bf16.xpose.msra.mxu0 0
        %4170 = vmatprep.subr.bf16.mxu0 0
        %4171 = vmatpush2.bf16.xpose.msra.mxu0 0
        %4172 = vmatprep.subr.bf16.mxu0 0
        %4173 = vmatpush2.bf16.xpose.msra.mxu0 0
        %4174 = vmatprep.mubr.bf16.mxu0 0
        %4175 = vmatmul.mubr.bf16.gmra.mxu0 %v4137
        %v4176 = vpop.f32.mrf.mxu0
        %v4177 = vadd.f32 0.0, %v4176
        %v4178 = vpop.f32.mrf.mxu0
        %v4179 = vpop.f32.mrf.mxu0
        %v4180 = vpop.f32.mrf.mxu0
        %4181 = vdwg.mxu0
        %4182 = vrot.lane.b32.xlu0 %v3245, 112
        %v4183 = vpop.permute.xlu0 %4182
        %4184 = vrot.lane.b32.xlu0 %v3245, 80
        %v4185 = vpop.permute.xlu0 %4184
        %v4187 = vsel %vm887, %v4183, 0
        %v4190 = vsel %vm887, %v4185, 0
        %4192 = vmatprep.subr.bf16.mxu0 0
        %4193 = vmatpush1.bf16.xpose.msra.mxu0 0
        %4194 = vmatprep.subr.bf16.mxu0 0
        %4195 = vmatpush1.bf16.xpose.msra.mxu0 0
        %4196 = vmatprep.subr.bf16.mxu0 0
        %4197 = vmatpush1.bf16.xpose.msra.mxu0 0
        %4198 = vmatprep.subr.bf16.mxu0 0
        %4199 = vmatpush1.bf16.xpose.msra.mxu0 0
        %4200 = vmatprep.subr.bf16.mxu0 0
        %4201 = vmatpush1.bf16.xpose.msra.mxu0 0
        %4202 = vmatprep.subr.bf16.mxu0 0
        %4203 = vmatpush1.bf16.xpose.msra.mxu0 0
        %4204 = vmatprep.subr.bf16.mxu0 0
        %4205 = vmatpush1.bf16.xpose.msra.mxu0 0
        %4206 = vmatprep.subr.bf16.mxu0 0
        %4207 = vmatpush1.bf16.xpose.msra.mxu0 %v4190
        %4208 = vmatprep.subr.bf16.mxu0 0
        %4209 = vmatpush2.bf16.xpose.msra.mxu0 0
        %4210 = vmatprep.subr.bf16.mxu0 0
        %4211 = vmatpush2.bf16.xpose.msra.mxu0 0
        %4212 = vmatprep.subr.bf16.mxu0 0
        %4213 = vmatpush2.bf16.xpose.msra.mxu0 0
        %4214 = vmatprep.subr.bf16.mxu0 0
        %4215 = vmatpush2.bf16.xpose.msra.mxu0 0
        %4216 = vmatprep.subr.bf16.mxu0 0
        %4217 = vmatpush2.bf16.xpose.msra.mxu0 0
        %4218 = vmatprep.subr.bf16.mxu0 0
        %4219 = vmatpush2.bf16.xpose.msra.mxu0 0
        %4220 = vmatprep.subr.bf16.mxu0 0
        %4221 = vmatpush2.bf16.xpose.msra.mxu0 0
        %4222 = vmatprep.subr.bf16.mxu0 0
        %4223 = vmatpush2.bf16.xpose.msra.mxu0 0
        %4224 = vmatprep.mubr.bf16.mxu0 0
        %4225 = vmatmul.mubr.bf16.gmra.mxu0 %v4187
        %v4226 = vpop.f32.mrf.mxu0
        %v4227 = vadd.f32 0.0, %v4226
        %v4228 = vpop.f32.mrf.mxu0
        %v4229 = vpop.f32.mrf.mxu0
        %v4230 = vpop.f32.mrf.mxu0
        %4231 = vdwg.mxu0
        %4232 = vrot.lane.b32.xlu0 %v3246, 112
        %v4233 = vpop.permute.xlu0 %4232
        %4234 = vrot.lane.b32.xlu0 %v3246, 80
        %v4235 = vpop.permute.xlu0 %4234
        %v4237 = vsel %vm887, %v4233, 0
        %v4240 = vsel %vm887, %v4235, 0
        %4242 = vmatprep.subr.bf16.mxu0 0
        %4243 = vmatpush1.bf16.xpose.msra.mxu0 0
        %4244 = vmatprep.subr.bf16.mxu0 0
        %4245 = vmatpush1.bf16.xpose.msra.mxu0 0
        %4246 = vmatprep.subr.bf16.mxu0 0
        %4247 = vmatpush1.bf16.xpose.msra.mxu0 0
        %4248 = vmatprep.subr.bf16.mxu0 0
        %4249 = vmatpush1.bf16.xpose.msra.mxu0 0
        %4250 = vmatprep.subr.bf16.mxu0 0
        %4251 = vmatpush1.bf16.xpose.msra.mxu0 0
        %4252 = vmatprep.subr.bf16.mxu0 0
        %4253 = vmatpush1.bf16.xpose.msra.mxu0 0
        %4254 = vmatprep.subr.bf16.mxu0 0
        %4255 = vmatpush1.bf16.xpose.msra.mxu0 0
        %4256 = vmatprep.subr.bf16.mxu0 0
        %4257 = vmatpush1.bf16.xpose.msra.mxu0 %v4240
        %4258 = vmatprep.subr.bf16.mxu0 0
        %4259 = vmatpush2.bf16.xpose.msra.mxu0 0
        %4260 = vmatprep.subr.bf16.mxu0 0
        %4261 = vmatpush2.bf16.xpose.msra.mxu0 0
        %4262 = vmatprep.subr.bf16.mxu0 0
        %4263 = vmatpush2.bf16.xpose.msra.mxu0 0
        %4264 = vmatprep.subr.bf16.mxu0 0
        %4265 = vmatpush2.bf16.xpose.msra.mxu0 0
        %4266 = vmatprep.subr.bf16.mxu0 0
        %4267 = vmatpush2.bf16.xpose.msra.mxu0 0
        %4268 = vmatprep.subr.bf16.mxu0 0
        %4269 = vmatpush2.bf16.xpose.msra.mxu0 0
        %4270 = vmatprep.subr.bf16.mxu0 0
        %4271 = vmatpush2.bf16.xpose.msra.mxu0 0
        %4272 = vmatprep.subr.bf16.mxu0 0
        %4273 = vmatpush2.bf16.xpose.msra.mxu0 0
        %4274 = vmatprep.mubr.bf16.mxu0 0
        %4275 = vmatmul.mubr.bf16.gmra.mxu0 %v4237
        %v4276 = vpop.f32.mrf.mxu0
        %v4277 = vadd.f32 0.0, %v4276
        %v4278 = vpop.f32.mrf.mxu0
        %v4279 = vpop.f32.mrf.mxu0
        %v4280 = vpop.f32.mrf.mxu0
        %4281 = vdwg.mxu0
        %4282 = vrot.lane.b32.xlu0 %v3247, 112
        %v4283 = vpop.permute.xlu0 %4282
        %4284 = vrot.lane.b32.xlu0 %v3247, 80
        %v4285 = vpop.permute.xlu0 %4284
        %v4287 = vsel %vm887, %v4283, 0
        %v4290 = vsel %vm887, %v4285, 0
        %4292 = vmatprep.subr.bf16.mxu0 0
        %4293 = vmatpush1.bf16.xpose.msra.mxu0 0
        %4294 = vmatprep.subr.bf16.mxu0 0
        %4295 = vmatpush1.bf16.xpose.msra.mxu0 0
        %4296 = vmatprep.subr.bf16.mxu0 0
        %4297 = vmatpush1.bf16.xpose.msra.mxu0 0
        %4298 = vmatprep.subr.bf16.mxu0 0
        %4299 = vmatpush1.bf16.xpose.msra.mxu0 0
        %4300 = vmatprep.subr.bf16.mxu0 0
        %4301 = vmatpush1.bf16.xpose.msra.mxu0 0
        %4302 = vmatprep.subr.bf16.mxu0 0
        %4303 = vmatpush1.bf16.xpose.msra.mxu0 0
        %4304 = vmatprep.subr.bf16.mxu0 0
        %4305 = vmatpush1.bf16.xpose.msra.mxu0 0
        %4306 = vmatprep.subr.bf16.mxu0 0
        %4307 = vmatpush1.bf16.xpose.msra.mxu0 %v4290
        %4308 = vmatprep.subr.bf16.mxu0 0
        %4309 = vmatpush2.bf16.xpose.msra.mxu0 0
        %4310 = vmatprep.subr.bf16.mxu0 0
        %4311 = vmatpush2.bf16.xpose.msra.mxu0 0
        %4312 = vmatprep.subr.bf16.mxu0 0
        %4313 = vmatpush2.bf16.xpose.msra.mxu0 0
        %4314 = vmatprep.subr.bf16.mxu0 0
        %4315 = vmatpush2.bf16.xpose.msra.mxu0 0
        %4316 = vmatprep.subr.bf16.mxu0 0
        %4317 = vmatpush2.bf16.xpose.msra.mxu0 0
        %4318 = vmatprep.subr.bf16.mxu0 0
        %4319 = vmatpush2.bf16.xpose.msra.mxu0 0
        %4320 = vmatprep.subr.bf16.mxu0 0
        %4321 = vmatpush2.bf16.xpose.msra.mxu0 0
        %4322 = vmatprep.subr.bf16.mxu0 0
        %4323 = vmatpush2.bf16.xpose.msra.mxu0 0
        %4324 = vmatprep.mubr.bf16.mxu0 0
        %4325 = vmatmul.mubr.bf16.gmra.mxu0 %v4287
        %v4326 = vpop.f32.mrf.mxu0
        %v4327 = vadd.f32 0.0, %v4326
        %v4328 = vpop.f32.mrf.mxu0
        %v4329 = vpop.f32.mrf.mxu0
        %v4330 = vpop.f32.mrf.mxu0
        %4331 = vdwg.mxu0
        %v4332 = vsel %vm1082, %v4177, -1e+30
        %v4333 = vsel %vm1082, %v4227, -1e+30
        %v4334 = vsel %vm1082, %v4277, -1e+30
        %v4335 = vsel %vm1082, %v4327, -1e+30
        %v4336 = vsel %vm887, %v4332, -inf
        %4337 = vmax.xlane.f32.xlu0 %v4336
        %v4338 = vpop.xlane.xlu0 %4337
        %v4339 = vsel %vm887, %v4333, -inf
        %4340 = vmax.xlane.f32.xlu0 %v4339
        %v4341 = vpop.xlane.xlu0 %4340
        %v4342 = vsel %vm887, %v4334, -inf
        %4343 = vmax.xlane.f32.xlu0 %v4342
        %v4344 = vpop.xlane.xlu0 %4343
        %v4345 = vsel %vm887, %v4335, -inf
        %4346 = vmax.xlane.f32.xlu0 %v4345
        %v4347 = vpop.xlane.xlu0 %4346
        %v4348 = vsub.f32 %v4332, %v4338
        %v4349 = vsub.f32 %v4333, %v4341
        %v4350 = vsub.f32 %v4334, %v4344
        %v4351 = vsub.f32 %v4335, %v4347
        %v4352 = vmul.f32 %v4348, 1.442695
        %v4353 = vpow.pop %v4352
        %v4354 = vmul.f32 %v4349, 1.442695
        %v4355 = vpow.pop %v4354
        %v4356 = vmul.f32 %v4350, 1.442695
        %v4357 = vpow.pop %v4356
        %v4358 = vmul.f32 %v4351, 1.442695
        %v4359 = vpow.pop %v4358
        %v4360 = vsel %vm887, %v4353, 0.0
        %4361 = vadd.xlane.f32.xlu0 %v4360
        %v4362 = vpop.xlane.xlu0 %4361
        %v4363 = vsel %vm887, %v4355, 0.0
        %4364 = vadd.xlane.f32.xlu0 %v4363
        %v4365 = vpop.xlane.xlu0 %4364
        %v4366 = vsel %vm887, %v4357, 0.0
        %4367 = vadd.xlane.f32.xlu0 %v4366
        %v4368 = vpop.xlane.xlu0 %4367
        %v4369 = vsel %vm887, %v4359, 0.0
        %4370 = vadd.xlane.f32.xlu0 %v4369
        %v4371 = vpop.xlane.xlu0 %4370
        %v4372 = vrcp.pop %v4362
        %v4373 = vrcp.pop %v4365
        %v4374 = vrcp.pop %v4368
        %v4375 = vrcp.pop %v4371
        %v4376 = vmul.f32 %v4353, %v4372
        %v4377 = vmul.f32 %v4355, %v4373
        %v4378 = vmul.f32 %v4357, %v4374
        %v4379 = vmul.f32 %v4359, %v4375
        %v4380 = vpack.c.bf16 %v4376, %v4376
        %v4381 = vpack.c.bf16 %v4377, %v4377
        %v4382 = vpack.c.bf16 %v4378, %v4378
        %v4383 = vpack.c.bf16 %v4379, %v4379
        %4384 = vrot.lane.b32.xlu0 %v3244, 48
        %v4385 = vpop.permute.xlu0 %4384
        %v4387 = vsel %vm887, %v4380, 0
        %v4390 = vsel %vm1140, %v4385, 0
        %4392 = vmatprep.subr.bf16.mxu0 0
        %4393 = vmatpush1.bf16.msra.mxu0 0
        %4394 = vmatprep.subr.bf16.mxu0 0
        %4395 = vmatpush1.bf16.msra.mxu0 0
        %4396 = vmatprep.subr.bf16.mxu0 0
        %4397 = vmatpush1.bf16.msra.mxu0 0
        %4398 = vmatprep.subr.bf16.mxu0 0
        %4399 = vmatpush1.bf16.msra.mxu0 0
        %4400 = vmatprep.subr.bf16.mxu0 0
        %4401 = vmatpush1.bf16.msra.mxu0 0
        %4402 = vmatprep.subr.bf16.mxu0 0
        %4403 = vmatpush1.bf16.msra.mxu0 0
        %4404 = vmatprep.subr.bf16.mxu0 0
        %4405 = vmatpush1.bf16.msra.mxu0 0
        %4406 = vmatprep.subr.bf16.mxu0 0
        %4407 = vmatpush1.bf16.msra.mxu0 %v4390
        %4408 = vmatprep.subr.bf16.mxu0 0
        %4409 = vmatpush2.bf16.msra.mxu0 0
        %4410 = vmatprep.subr.bf16.mxu0 0
        %4411 = vmatpush2.bf16.msra.mxu0 0
        %4412 = vmatprep.subr.bf16.mxu0 0
        %4413 = vmatpush2.bf16.msra.mxu0 0
        %4414 = vmatprep.subr.bf16.mxu0 0
        %4415 = vmatpush2.bf16.msra.mxu0 0
        %4416 = vmatprep.subr.bf16.mxu0 0
        %4417 = vmatpush2.bf16.msra.mxu0 0
        %4418 = vmatprep.subr.bf16.mxu0 0
        %4419 = vmatpush2.bf16.msra.mxu0 0
        %4420 = vmatprep.subr.bf16.mxu0 0
        %4421 = vmatpush2.bf16.msra.mxu0 0
        %4422 = vmatprep.subr.bf16.mxu0 0
        %4423 = vmatpush2.bf16.msra.mxu0 0
        %4424 = vmatprep.mubr.bf16.mxu0 0
        %4425 = vmatmul.mubr.bf16.gmra.mxu0 %v4387
        %v4426 = vpop.f32.mrf.mxu0
        %v4427 = vadd.f32 0.0, %v4426
        %v4428 = vpop.f32.mrf.mxu0
        %v4429 = vpop.f32.mrf.mxu0
        %v4430 = vpop.f32.mrf.mxu0
        %4431 = vdwg.mxu0
        %4432 = vrot.lane.b32.xlu0 %v3245, 48
        %v4433 = vpop.permute.xlu0 %4432
        %v4435 = vsel %vm887, %v4381, 0
        %v4438 = vsel %vm1140, %v4433, 0
        %4440 = vmatprep.subr.bf16.mxu0 0
        %4441 = vmatpush1.bf16.msra.mxu0 0
        %4442 = vmatprep.subr.bf16.mxu0 0
        %4443 = vmatpush1.bf16.msra.mxu0 0
        %4444 = vmatprep.subr.bf16.mxu0 0
        %4445 = vmatpush1.bf16.msra.mxu0 0
        %4446 = vmatprep.subr.bf16.mxu0 0
        %4447 = vmatpush1.bf16.msra.mxu0 0
        %4448 = vmatprep.subr.bf16.mxu0 0
        %4449 = vmatpush1.bf16.msra.mxu0 0
        %4450 = vmatprep.subr.bf16.mxu0 0
        %4451 = vmatpush1.bf16.msra.mxu0 0
        %4452 = vmatprep.subr.bf16.mxu0 0
        %4453 = vmatpush1.bf16.msra.mxu0 0
        %4454 = vmatprep.subr.bf16.mxu0 0
        %4455 = vmatpush1.bf16.msra.mxu0 %v4438
        %4456 = vmatprep.subr.bf16.mxu0 0
        %4457 = vmatpush2.bf16.msra.mxu0 0
        %4458 = vmatprep.subr.bf16.mxu0 0
        %4459 = vmatpush2.bf16.msra.mxu0 0
        %4460 = vmatprep.subr.bf16.mxu0 0
        %4461 = vmatpush2.bf16.msra.mxu0 0
        %4462 = vmatprep.subr.bf16.mxu0 0
        %4463 = vmatpush2.bf16.msra.mxu0 0
        %4464 = vmatprep.subr.bf16.mxu0 0
        %4465 = vmatpush2.bf16.msra.mxu0 0
        %4466 = vmatprep.subr.bf16.mxu0 0
        %4467 = vmatpush2.bf16.msra.mxu0 0
        %4468 = vmatprep.subr.bf16.mxu0 0
        %4469 = vmatpush2.bf16.msra.mxu0 0
        %4470 = vmatprep.subr.bf16.mxu0 0
        %4471 = vmatpush2.bf16.msra.mxu0 0
        %4472 = vmatprep.mubr.bf16.mxu0 0
        %4473 = vmatmul.mubr.bf16.gmra.mxu0 %v4435
        %v4474 = vpop.f32.mrf.mxu0
        %v4475 = vadd.f32 0.0, %v4474
        %v4476 = vpop.f32.mrf.mxu0
        %v4477 = vpop.f32.mrf.mxu0
        %v4478 = vpop.f32.mrf.mxu0
        %4479 = vdwg.mxu0
        %4480 = vrot.lane.b32.xlu0 %v3246, 48
        %v4481 = vpop.permute.xlu0 %4480
        %v4483 = vsel %vm887, %v4382, 0
        %v4486 = vsel %vm1140, %v4481, 0
        %4488 = vmatprep.subr.bf16.mxu0 0
        %4489 = vmatpush1.bf16.msra.mxu0 0
        %4490 = vmatprep.subr.bf16.mxu0 0
        %4491 = vmatpush1.bf16.msra.mxu0 0
        %4492 = vmatprep.subr.bf16.mxu0 0
        %4493 = vmatpush1.bf16.msra.mxu0 0
        %4494 = vmatprep.subr.bf16.mxu0 0
        %4495 = vmatpush1.bf16.msra.mxu0 0
        %4496 = vmatprep.subr.bf16.mxu0 0
        %4497 = vmatpush1.bf16.msra.mxu0 0
        %4498 = vmatprep.subr.bf16.mxu0 0
        %4499 = vmatpush1.bf16.msra.mxu0 0
        %4500 = vmatprep.subr.bf16.mxu0 0
        %4501 = vmatpush1.bf16.msra.mxu0 0
        %4502 = vmatprep.subr.bf16.mxu0 0
        %4503 = vmatpush1.bf16.msra.mxu0 %v4486
        %4504 = vmatprep.subr.bf16.mxu0 0
        %4505 = vmatpush2.bf16.msra.mxu0 0
        %4506 = vmatprep.subr.bf16.mxu0 0
        %4507 = vmatpush2.bf16.msra.mxu0 0
        %4508 = vmatprep.subr.bf16.mxu0 0
        %4509 = vmatpush2.bf16.msra.mxu0 0
        %4510 = vmatprep.subr.bf16.mxu0 0
        %4511 = vmatpush2.bf16.msra.mxu0 0
        %4512 = vmatprep.subr.bf16.mxu0 0
        %4513 = vmatpush2.bf16.msra.mxu0 0
        %4514 = vmatprep.subr.bf16.mxu0 0
        %4515 = vmatpush2.bf16.msra.mxu0 0
        %4516 = vmatprep.subr.bf16.mxu0 0
        %4517 = vmatpush2.bf16.msra.mxu0 0
        %4518 = vmatprep.subr.bf16.mxu0 0
        %4519 = vmatpush2.bf16.msra.mxu0 0
        %4520 = vmatprep.mubr.bf16.mxu0 0
        %4521 = vmatmul.mubr.bf16.gmra.mxu0 %v4483
        %v4522 = vpop.f32.mrf.mxu0
        %v4523 = vadd.f32 0.0, %v4522
        %v4524 = vpop.f32.mrf.mxu0
        %v4525 = vpop.f32.mrf.mxu0
        %v4526 = vpop.f32.mrf.mxu0
        %4527 = vdwg.mxu0
        %4528 = vrot.lane.b32.xlu0 %v3247, 48
        %v4529 = vpop.permute.xlu0 %4528
        %v4531 = vsel %vm887, %v4383, 0
        %v4534 = vsel %vm1140, %v4529, 0
        %4536 = vmatprep.subr.bf16.mxu0 0
        %4537 = vmatpush1.bf16.msra.mxu0 0
        %4538 = vmatprep.subr.bf16.mxu0 0
        %4539 = vmatpush1.bf16.msra.mxu0 0
        %4540 = vmatprep.subr.bf16.mxu0 0
        %4541 = vmatpush1.bf16.msra.mxu0 0
        %4542 = vmatprep.subr.bf16.mxu0 0
        %4543 = vmatpush1.bf16.msra.mxu0 0
        %4544 = vmatprep.subr.bf16.mxu0 0
        %4545 = vmatpush1.bf16.msra.mxu0 0
        %4546 = vmatprep.subr.bf16.mxu0 0
        %4547 = vmatpush1.bf16.msra.mxu0 0
        %4548 = vmatprep.subr.bf16.mxu0 0
        %4549 = vmatpush1.bf16.msra.mxu0 0
        %4550 = vmatprep.subr.bf16.mxu0 0
        %4551 = vmatpush1.bf16.msra.mxu0 %v4534
        %4552 = vmatprep.subr.bf16.mxu0 0
        %4553 = vmatpush2.bf16.msra.mxu0 0
        %4554 = vmatprep.subr.bf16.mxu0 0
        %4555 = vmatpush2.bf16.msra.mxu0 0
        %4556 = vmatprep.subr.bf16.mxu0 0
        %4557 = vmatpush2.bf16.msra.mxu0 0
        %4558 = vmatprep.subr.bf16.mxu0 0
        %4559 = vmatpush2.bf16.msra.mxu0 0
        %4560 = vmatprep.subr.bf16.mxu0 0
        %4561 = vmatpush2.bf16.msra.mxu0 0
        %4562 = vmatprep.subr.bf16.mxu0 0
        %4563 = vmatpush2.bf16.msra.mxu0 0
        %4564 = vmatprep.subr.bf16.mxu0 0
        %4565 = vmatpush2.bf16.msra.mxu0 0
        %4566 = vmatprep.subr.bf16.mxu0 0
        %4567 = vmatpush2.bf16.msra.mxu0 0
        %4568 = vmatprep.mubr.bf16.mxu0 0
        %4569 = vmatmul.mubr.bf16.gmra.mxu0 %v4531
        %v4570 = vpop.f32.mrf.mxu0
        %v4571 = vadd.f32 0.0, %v4570
        %v4572 = vpop.f32.mrf.mxu0
        %v4573 = vpop.f32.mrf.mxu0
        %v4574 = vpop.f32.mrf.mxu0
        %4575 = vdwg.mxu0
        %4576 = vrot.lane.b32.xlu0 %v3244, 104
        %v4577 = vpop.permute.xlu0 %4576
        %4578 = vrot.lane.b32.xlu0 %v3244, 72
        %v4579 = vpop.permute.xlu0 %4578
        %v4581 = vsel %vm887, %v4577, 0
        %v4584 = vsel %vm887, %v4579, 0
        %4586 = vmatprep.subr.bf16.mxu0 0
        %4587 = vmatpush1.bf16.xpose.msra.mxu0 0
        %4588 = vmatprep.subr.bf16.mxu0 0
        %4589 = vmatpush1.bf16.xpose.msra.mxu0 0
        %4590 = vmatprep.subr.bf16.mxu0 0
        %4591 = vmatpush1.bf16.xpose.msra.mxu0 0
        %4592 = vmatprep.subr.bf16.mxu0 0
        %4593 = vmatpush1.bf16.xpose.msra.mxu0 0
        %4594 = vmatprep.subr.bf16.mxu0 0
        %4595 = vmatpush1.bf16.xpose.msra.mxu0 0
        %4596 = vmatprep.subr.bf16.mxu0 0
        %4597 = vmatpush1.bf16.xpose.msra.mxu0 0
        %4598 = vmatprep.subr.bf16.mxu0 0
        %4599 = vmatpush1.bf16.xpose.msra.mxu0 0
        %4600 = vmatprep.subr.bf16.mxu0 0
        %4601 = vmatpush1.bf16.xpose.msra.mxu0 %v4584
        %4602 = vmatprep.subr.bf16.mxu0 0
        %4603 = vmatpush2.bf16.xpose.msra.mxu0 0
        %4604 = vmatprep.subr.bf16.mxu0 0
        %4605 = vmatpush2.bf16.xpose.msra.mxu0 0
        %4606 = vmatprep.subr.bf16.mxu0 0
        %4607 = vmatpush2.bf16.xpose.msra.mxu0 0
        %4608 = vmatprep.subr.bf16.mxu0 0
        %4609 = vmatpush2.bf16.xpose.msra.mxu0 0
        %4610 = vmatprep.subr.bf16.mxu0 0
        %4611 = vmatpush2.bf16.xpose.msra.mxu0 0
        %4612 = vmatprep.subr.bf16.mxu0 0
        %4613 = vmatpush2.bf16.xpose.msra.mxu0 0
        %4614 = vmatprep.subr.bf16.mxu0 0
        %4615 = vmatpush2.bf16.xpose.msra.mxu0 0
        %4616 = vmatprep.subr.bf16.mxu0 0
        %4617 = vmatpush2.bf16.xpose.msra.mxu0 0
        %4618 = vmatprep.mubr.bf16.mxu0 0
        %4619 = vmatmul.mubr.bf16.gmra.mxu0 %v4581
        %v4620 = vpop.f32.mrf.mxu0
        %v4621 = vadd.f32 0.0, %v4620
        %v4622 = vpop.f32.mrf.mxu0
        %v4623 = vpop.f32.mrf.mxu0
        %v4624 = vpop.f32.mrf.mxu0
        %4625 = vdwg.mxu0
        %4626 = vrot.lane.b32.xlu0 %v3245, 104
        %v4627 = vpop.permute.xlu0 %4626
        %4628 = vrot.lane.b32.xlu0 %v3245, 72
        %v4629 = vpop.permute.xlu0 %4628
        %v4631 = vsel %vm887, %v4627, 0
        %v4634 = vsel %vm887, %v4629, 0
        %4636 = vmatprep.subr.bf16.mxu0 0
        %4637 = vmatpush1.bf16.xpose.msra.mxu0 0
        %4638 = vmatprep.subr.bf16.mxu0 0
        %4639 = vmatpush1.bf16.xpose.msra.mxu0 0
        %4640 = vmatprep.subr.bf16.mxu0 0
        %4641 = vmatpush1.bf16.xpose.msra.mxu0 0
        %4642 = vmatprep.subr.bf16.mxu0 0
        %4643 = vmatpush1.bf16.xpose.msra.mxu0 0
        %4644 = vmatprep.subr.bf16.mxu0 0
        %4645 = vmatpush1.bf16.xpose.msra.mxu0 0
        %4646 = vmatprep.subr.bf16.mxu0 0
        %4647 = vmatpush1.bf16.xpose.msra.mxu0 0
        %4648 = vmatprep.subr.bf16.mxu0 0
        %4649 = vmatpush1.bf16.xpose.msra.mxu0 0
        %4650 = vmatprep.subr.bf16.mxu0 0
        %4651 = vmatpush1.bf16.xpose.msra.mxu0 %v4634
        %4652 = vmatprep.subr.bf16.mxu0 0
        %4653 = vmatpush2.bf16.xpose.msra.mxu0 0
        %4654 = vmatprep.subr.bf16.mxu0 0
        %4655 = vmatpush2.bf16.xpose.msra.mxu0 0
        %4656 = vmatprep.subr.bf16.mxu0 0
        %4657 = vmatpush2.bf16.xpose.msra.mxu0 0
        %4658 = vmatprep.subr.bf16.mxu0 0
        %4659 = vmatpush2.bf16.xpose.msra.mxu0 0
        %4660 = vmatprep.subr.bf16.mxu0 0
        %4661 = vmatpush2.bf16.xpose.msra.mxu0 0
        %4662 = vmatprep.subr.bf16.mxu0 0
        %4663 = vmatpush2.bf16.xpose.msra.mxu0 0
        %4664 = vmatprep.subr.bf16.mxu0 0
        %4665 = vmatpush2.bf16.xpose.msra.mxu0 0
        %4666 = vmatprep.subr.bf16.mxu0 0
        %4667 = vmatpush2.bf16.xpose.msra.mxu0 0
        %4668 = vmatprep.mubr.bf16.mxu0 0
        %4669 = vmatmul.mubr.bf16.gmra.mxu0 %v4631
        %v4670 = vpop.f32.mrf.mxu0
        %v4671 = vadd.f32 0.0, %v4670
        %v4672 = vpop.f32.mrf.mxu0
        %v4673 = vpop.f32.mrf.mxu0
        %v4674 = vpop.f32.mrf.mxu0
        %4675 = vdwg.mxu0
        %4676 = vrot.lane.b32.xlu0 %v3246, 104
        %v4677 = vpop.permute.xlu0 %4676
        %4678 = vrot.lane.b32.xlu0 %v3246, 72
        %v4679 = vpop.permute.xlu0 %4678
        %v4681 = vsel %vm887, %v4677, 0
        %v4684 = vsel %vm887, %v4679, 0
        %4686 = vmatprep.subr.bf16.mxu0 0
        %4687 = vmatpush1.bf16.xpose.msra.mxu0 0
        %4688 = vmatprep.subr.bf16.mxu0 0
        %4689 = vmatpush1.bf16.xpose.msra.mxu0 0
        %4690 = vmatprep.subr.bf16.mxu0 0
        %4691 = vmatpush1.bf16.xpose.msra.mxu0 0
        %4692 = vmatprep.subr.bf16.mxu0 0
        %4693 = vmatpush1.bf16.xpose.msra.mxu0 0
        %4694 = vmatprep.subr.bf16.mxu0 0
        %4695 = vmatpush1.bf16.xpose.msra.mxu0 0
        %4696 = vmatprep.subr.bf16.mxu0 0
        %4697 = vmatpush1.bf16.xpose.msra.mxu0 0
        %4698 = vmatprep.subr.bf16.mxu0 0
        %4699 = vmatpush1.bf16.xpose.msra.mxu0 0
        %4700 = vmatprep.subr.bf16.mxu0 0
        %4701 = vmatpush1.bf16.xpose.msra.mxu0 %v4684
        %4702 = vmatprep.subr.bf16.mxu0 0
        %4703 = vmatpush2.bf16.xpose.msra.mxu0 0
        %4704 = vmatprep.subr.bf16.mxu0 0
        %4705 = vmatpush2.bf16.xpose.msra.mxu0 0
        %4706 = vmatprep.subr.bf16.mxu0 0
        %4707 = vmatpush2.bf16.xpose.msra.mxu0 0
        %4708 = vmatprep.subr.bf16.mxu0 0
        %4709 = vmatpush2.bf16.xpose.msra.mxu0 0
        %4710 = vmatprep.subr.bf16.mxu0 0
        %4711 = vmatpush2.bf16.xpose.msra.mxu0 0
        %4712 = vmatprep.subr.bf16.mxu0 0
        %4713 = vmatpush2.bf16.xpose.msra.mxu0 0
        %4714 = vmatprep.subr.bf16.mxu0 0
        %4715 = vmatpush2.bf16.xpose.msra.mxu0 0
        %4716 = vmatprep.subr.bf16.mxu0 0
        %4717 = vmatpush2.bf16.xpose.msra.mxu0 0
        %4718 = vmatprep.mubr.bf16.mxu0 0
        %4719 = vmatmul.mubr.bf16.gmra.mxu0 %v4681
        %v4720 = vpop.f32.mrf.mxu0
        %v4721 = vadd.f32 0.0, %v4720
        %v4722 = vpop.f32.mrf.mxu0
        %v4723 = vpop.f32.mrf.mxu0
        %v4724 = vpop.f32.mrf.mxu0
        %4725 = vdwg.mxu0
        %4726 = vrot.lane.b32.xlu0 %v3247, 104
        %v4727 = vpop.permute.xlu0 %4726
        %4728 = vrot.lane.b32.xlu0 %v3247, 72
        %v4729 = vpop.permute.xlu0 %4728
        %v4731 = vsel %vm887, %v4727, 0
        %v4734 = vsel %vm887, %v4729, 0
        %4736 = vmatprep.subr.bf16.mxu0 0
        %4737 = vmatpush1.bf16.xpose.msra.mxu0 0
        %4738 = vmatprep.subr.bf16.mxu0 0
        %4739 = vmatpush1.bf16.xpose.msra.mxu0 0
        %4740 = vmatprep.subr.bf16.mxu0 0
        %4741 = vmatpush1.bf16.xpose.msra.mxu0 0
        %4742 = vmatprep.subr.bf16.mxu0 0
        %4743 = vmatpush1.bf16.xpose.msra.mxu0 0
        %4744 = vmatprep.subr.bf16.mxu0 0
        %4745 = vmatpush1.bf16.xpose.msra.mxu0 0
        %4746 = vmatprep.subr.bf16.mxu0 0
        %4747 = vmatpush1.bf16.xpose.msra.mxu0 0
        %4748 = vmatprep.subr.bf16.mxu0 0
        %4749 = vmatpush1.bf16.xpose.msra.mxu0 0
        %4750 = vmatprep.subr.bf16.mxu0 0
        %4751 = vmatpush1.bf16.xpose.msra.mxu0 %v4734
        %4752 = vmatprep.subr.bf16.mxu0 0
        %4753 = vmatpush2.bf16.xpose.msra.mxu0 0
        %4754 = vmatprep.subr.bf16.mxu0 0
        %4755 = vmatpush2.bf16.xpose.msra.mxu0 0
        %4756 = vmatprep.subr.bf16.mxu0 0
        %4757 = vmatpush2.bf16.xpose.msra.mxu0 0
        %4758 = vmatprep.subr.bf16.mxu0 0
        %4759 = vmatpush2.bf16.xpose.msra.mxu0 0
        %4760 = vmatprep.subr.bf16.mxu0 0
        %4761 = vmatpush2.bf16.xpose.msra.mxu0 0
        %4762 = vmatprep.subr.bf16.mxu0 0
        %4763 = vmatpush2.bf16.xpose.msra.mxu0 0
        %4764 = vmatprep.subr.bf16.mxu0 0
        %4765 = vmatpush2.bf16.xpose.msra.mxu0 0
        %4766 = vmatprep.subr.bf16.mxu0 0
        %4767 = vmatpush2.bf16.xpose.msra.mxu0 0
        %4768 = vmatprep.mubr.bf16.mxu0 0
        %4769 = vmatmul.mubr.bf16.gmra.mxu0 %v4731
        %v4770 = vpop.f32.mrf.mxu0
        %v4771 = vadd.f32 0.0, %v4770
        %v4772 = vpop.f32.mrf.mxu0
        %v4773 = vpop.f32.mrf.mxu0
        %v4774 = vpop.f32.mrf.mxu0
        %4775 = vdwg.mxu0
        %v4776 = vsel %vm1082, %v4621, -1e+30
        %v4777 = vsel %vm1082, %v4671, -1e+30
        %v4778 = vsel %vm1082, %v4721, -1e+30
        %v4779 = vsel %vm1082, %v4771, -1e+30
        %v4780 = vsel %vm887, %v4776, -inf
        %4781 = vmax.xlane.f32.xlu0 %v4780
        %v4782 = vpop.xlane.xlu0 %4781
        %v4783 = vsel %vm887, %v4777, -inf
        %4784 = vmax.xlane.f32.xlu0 %v4783
        %v4785 = vpop.xlane.xlu0 %4784
        %v4786 = vsel %vm887, %v4778, -inf
        %4787 = vmax.xlane.f32.xlu0 %v4786
        %v4788 = vpop.xlane.xlu0 %4787
        %v4789 = vsel %vm887, %v4779, -inf
        %4790 = vmax.xlane.f32.xlu0 %v4789
        %v4791 = vpop.xlane.xlu0 %4790
        %v4792 = vsub.f32 %v4776, %v4782
        %v4793 = vsub.f32 %v4777, %v4785
        %v4794 = vsub.f32 %v4778, %v4788
        %v4795 = vsub.f32 %v4779, %v4791
        %v4796 = vmul.f32 %v4792, 1.442695
        %v4797 = vpow.pop %v4796
        %v4798 = vmul.f32 %v4793, 1.442695
        %v4799 = vpow.pop %v4798
        %v4800 = vmul.f32 %v4794, 1.442695
        %v4801 = vpow.pop %v4800
        %v4802 = vmul.f32 %v4795, 1.442695
        %v4803 = vpow.pop %v4802
        %v4804 = vsel %vm887, %v4797, 0.0
        %4805 = vadd.xlane.f32.xlu0 %v4804
        %v4806 = vpop.xlane.xlu0 %4805
        %v4807 = vsel %vm887, %v4799, 0.0
        %4808 = vadd.xlane.f32.xlu0 %v4807
        %v4809 = vpop.xlane.xlu0 %4808
        %v4810 = vsel %vm887, %v4801, 0.0
        %4811 = vadd.xlane.f32.xlu0 %v4810
        %v4812 = vpop.xlane.xlu0 %4811
        %v4813 = vsel %vm887, %v4803, 0.0
        %4814 = vadd.xlane.f32.xlu0 %v4813
        %v4815 = vpop.xlane.xlu0 %4814
        %v4816 = vrcp.pop %v4806
        %v4817 = vrcp.pop %v4809
        %v4818 = vrcp.pop %v4812
        %v4819 = vrcp.pop %v4815
        %v4820 = vmul.f32 %v4797, %v4816
        %v4821 = vmul.f32 %v4799, %v4817
        %v4822 = vmul.f32 %v4801, %v4818
        %v4823 = vmul.f32 %v4803, %v4819
        %v4824 = vpack.c.bf16 %v4820, %v4820
        %v4825 = vpack.c.bf16 %v4821, %v4821
        %v4826 = vpack.c.bf16 %v4822, %v4822
        %v4827 = vpack.c.bf16 %v4823, %v4823
        %4828 = vrot.lane.b32.xlu0 %v3244, 40
        %v4829 = vpop.permute.xlu0 %4828
        %v4831 = vsel %vm887, %v4824, 0
        %v4834 = vsel %vm1140, %v4829, 0
        %4836 = vmatprep.subr.bf16.mxu0 0
        %4837 = vmatpush1.bf16.msra.mxu0 0
        %4838 = vmatprep.subr.bf16.mxu0 0
        %4839 = vmatpush1.bf16.msra.mxu0 0
        %4840 = vmatprep.subr.bf16.mxu0 0
        %4841 = vmatpush1.bf16.msra.mxu0 0
        %4842 = vmatprep.subr.bf16.mxu0 0
        %4843 = vmatpush1.bf16.msra.mxu0 0
        %4844 = vmatprep.subr.bf16.mxu0 0
        %4845 = vmatpush1.bf16.msra.mxu0 0
        %4846 = vmatprep.subr.bf16.mxu0 0
        %4847 = vmatpush1.bf16.msra.mxu0 0
        %4848 = vmatprep.subr.bf16.mxu0 0
        %4849 = vmatpush1.bf16.msra.mxu0 0
        %4850 = vmatprep.subr.bf16.mxu0 0
        %4851 = vmatpush1.bf16.msra.mxu0 %v4834
        %4852 = vmatprep.subr.bf16.mxu0 0
        %4853 = vmatpush2.bf16.msra.mxu0 0
        %4854 = vmatprep.subr.bf16.mxu0 0
        %4855 = vmatpush2.bf16.msra.mxu0 0
        %4856 = vmatprep.subr.bf16.mxu0 0
        %4857 = vmatpush2.bf16.msra.mxu0 0
        %4858 = vmatprep.subr.bf16.mxu0 0
        %4859 = vmatpush2.bf16.msra.mxu0 0
        %4860 = vmatprep.subr.bf16.mxu0 0
        %4861 = vmatpush2.bf16.msra.mxu0 0
        %4862 = vmatprep.subr.bf16.mxu0 0
        %4863 = vmatpush2.bf16.msra.mxu0 0
        %4864 = vmatprep.subr.bf16.mxu0 0
        %4865 = vmatpush2.bf16.msra.mxu0 0
        %4866 = vmatprep.subr.bf16.mxu0 0
        %4867 = vmatpush2.bf16.msra.mxu0 0
        %4868 = vmatprep.mubr.bf16.mxu0 0
        %4869 = vmatmul.mubr.bf16.gmra.mxu0 %v4831
        %v4870 = vpop.f32.mrf.mxu0
        %v4871 = vadd.f32 0.0, %v4870
        %v4872 = vpop.f32.mrf.mxu0
        %v4873 = vpop.f32.mrf.mxu0
        %v4874 = vpop.f32.mrf.mxu0
        %4875 = vdwg.mxu0
        %4876 = vrot.lane.b32.xlu0 %v3245, 40
        %v4877 = vpop.permute.xlu0 %4876
        %v4879 = vsel %vm887, %v4825, 0
        %v4882 = vsel %vm1140, %v4877, 0
        %4884 = vmatprep.subr.bf16.mxu0 0
        %4885 = vmatpush1.bf16.msra.mxu0 0
        %4886 = vmatprep.subr.bf16.mxu0 0
        %4887 = vmatpush1.bf16.msra.mxu0 0
        %4888 = vmatprep.subr.bf16.mxu0 0
        %4889 = vmatpush1.bf16.msra.mxu0 0
        %4890 = vmatprep.subr.bf16.mxu0 0
        %4891 = vmatpush1.bf16.msra.mxu0 0
        %4892 = vmatprep.subr.bf16.mxu0 0
        %4893 = vmatpush1.bf16.msra.mxu0 0
        %4894 = vmatprep.subr.bf16.mxu0 0
        %4895 = vmatpush1.bf16.msra.mxu0 0
        %4896 = vmatprep.subr.bf16.mxu0 0
        %4897 = vmatpush1.bf16.msra.mxu0 0
        %4898 = vmatprep.subr.bf16.mxu0 0
        %4899 = vmatpush1.bf16.msra.mxu0 %v4882
        %4900 = vmatprep.subr.bf16.mxu0 0
        %4901 = vmatpush2.bf16.msra.mxu0 0
        %4902 = vmatprep.subr.bf16.mxu0 0
        %4903 = vmatpush2.bf16.msra.mxu0 0
        %4904 = vmatprep.subr.bf16.mxu0 0
        %4905 = vmatpush2.bf16.msra.mxu0 0
        %4906 = vmatprep.subr.bf16.mxu0 0
        %4907 = vmatpush2.bf16.msra.mxu0 0
        %4908 = vmatprep.subr.bf16.mxu0 0
        %4909 = vmatpush2.bf16.msra.mxu0 0
        %4910 = vmatprep.subr.bf16.mxu0 0
        %4911 = vmatpush2.bf16.msra.mxu0 0
        %4912 = vmatprep.subr.bf16.mxu0 0
        %4913 = vmatpush2.bf16.msra.mxu0 0
        %4914 = vmatprep.subr.bf16.mxu0 0
        %4915 = vmatpush2.bf16.msra.mxu0 0
        %4916 = vmatprep.mubr.bf16.mxu0 0
        %4917 = vmatmul.mubr.bf16.gmra.mxu0 %v4879
        %v4918 = vpop.f32.mrf.mxu0
        %v4919 = vadd.f32 0.0, %v4918
        %v4920 = vpop.f32.mrf.mxu0
        %v4921 = vpop.f32.mrf.mxu0
        %v4922 = vpop.f32.mrf.mxu0
        %4923 = vdwg.mxu0
        %4924 = vrot.lane.b32.xlu0 %v3246, 40
        %v4925 = vpop.permute.xlu0 %4924
        %v4927 = vsel %vm887, %v4826, 0
        %v4930 = vsel %vm1140, %v4925, 0
        %4932 = vmatprep.subr.bf16.mxu0 0
        %4933 = vmatpush1.bf16.msra.mxu0 0
        %4934 = vmatprep.subr.bf16.mxu0 0
        %4935 = vmatpush1.bf16.msra.mxu0 0
        %4936 = vmatprep.subr.bf16.mxu0 0
        %4937 = vmatpush1.bf16.msra.mxu0 0
        %4938 = vmatprep.subr.bf16.mxu0 0
        %4939 = vmatpush1.bf16.msra.mxu0 0
        %4940 = vmatprep.subr.bf16.mxu0 0
        %4941 = vmatpush1.bf16.msra.mxu0 0
        %4942 = vmatprep.subr.bf16.mxu0 0
        %4943 = vmatpush1.bf16.msra.mxu0 0
        %4944 = vmatprep.subr.bf16.mxu0 0
        %4945 = vmatpush1.bf16.msra.mxu0 0
        %4946 = vmatprep.subr.bf16.mxu0 0
        %4947 = vmatpush1.bf16.msra.mxu0 %v4930
        %4948 = vmatprep.subr.bf16.mxu0 0
        %4949 = vmatpush2.bf16.msra.mxu0 0
        %4950 = vmatprep.subr.bf16.mxu0 0
        %4951 = vmatpush2.bf16.msra.mxu0 0
        %4952 = vmatprep.subr.bf16.mxu0 0
        %4953 = vmatpush2.bf16.msra.mxu0 0
        %4954 = vmatprep.subr.bf16.mxu0 0
        %4955 = vmatpush2.bf16.msra.mxu0 0
        %4956 = vmatprep.subr.bf16.mxu0 0
        %4957 = vmatpush2.bf16.msra.mxu0 0
        %4958 = vmatprep.subr.bf16.mxu0 0
        %4959 = vmatpush2.bf16.msra.mxu0 0
        %4960 = vmatprep.subr.bf16.mxu0 0
        %4961 = vmatpush2.bf16.msra.mxu0 0
        %4962 = vmatprep.subr.bf16.mxu0 0
        %4963 = vmatpush2.bf16.msra.mxu0 0
        %4964 = vmatprep.mubr.bf16.mxu0 0
        %4965 = vmatmul.mubr.bf16.gmra.mxu0 %v4927
        %v4966 = vpop.f32.mrf.mxu0
        %v4967 = vadd.f32 0.0, %v4966
        %v4968 = vpop.f32.mrf.mxu0
        %v4969 = vpop.f32.mrf.mxu0
        %v4970 = vpop.f32.mrf.mxu0
        %4971 = vdwg.mxu0
        %4972 = vrot.lane.b32.xlu0 %v3247, 40
        %v4973 = vpop.permute.xlu0 %4972
        %v4975 = vsel %vm887, %v4827, 0
        %v4978 = vsel %vm1140, %v4973, 0
        %4980 = vmatprep.subr.bf16.mxu0 0
        %4981 = vmatpush1.bf16.msra.mxu0 0
        %4982 = vmatprep.subr.bf16.mxu0 0
        %4983 = vmatpush1.bf16.msra.mxu0 0
        %4984 = vmatprep.subr.bf16.mxu0 0
        %4985 = vmatpush1.bf16.msra.mxu0 0
        %4986 = vmatprep.subr.bf16.mxu0 0
        %4987 = vmatpush1.bf16.msra.mxu0 0
        %4988 = vmatprep.subr.bf16.mxu0 0
        %4989 = vmatpush1.bf16.msra.mxu0 0
        %4990 = vmatprep.subr.bf16.mxu0 0
        %4991 = vmatpush1.bf16.msra.mxu0 0
        %4992 = vmatprep.subr.bf16.mxu0 0
        %4993 = vmatpush1.bf16.msra.mxu0 0
        %4994 = vmatprep.subr.bf16.mxu0 0
        %4995 = vmatpush1.bf16.msra.mxu0 %v4978
        %4996 = vmatprep.subr.bf16.mxu0 0
        %4997 = vmatpush2.bf16.msra.mxu0 0
        %4998 = vmatprep.subr.bf16.mxu0 0
        %4999 = vmatpush2.bf16.msra.mxu0 0
        %5000 = vmatprep.subr.bf16.mxu0 0
        %5001 = vmatpush2.bf16.msra.mxu0 0
        %5002 = vmatprep.subr.bf16.mxu0 0
        %5003 = vmatpush2.bf16.msra.mxu0 0
        %5004 = vmatprep.subr.bf16.mxu0 0
        %5005 = vmatpush2.bf16.msra.mxu0 0
        %5006 = vmatprep.subr.bf16.mxu0 0
        %5007 = vmatpush2.bf16.msra.mxu0 0
        %5008 = vmatprep.subr.bf16.mxu0 0
        %5009 = vmatpush2.bf16.msra.mxu0 0
        %5010 = vmatprep.subr.bf16.mxu0 0
        %5011 = vmatpush2.bf16.msra.mxu0 0
        %5012 = vmatprep.mubr.bf16.mxu0 0
        %5013 = vmatmul.mubr.bf16.gmra.mxu0 %v4975
        %v5014 = vpop.f32.mrf.mxu0
        %v5015 = vadd.f32 0.0, %v5014
        %v5016 = vpop.f32.mrf.mxu0
        %v5017 = vpop.f32.mrf.mxu0
        %v5018 = vpop.f32.mrf.mxu0
        %5019 = vdwg.mxu0
        %5024 = vrot.lane.b32.xlu0 %v3983, 8
        %v5025 = vpop.permute.xlu0 %5024
        %5026 = vrot.lane.b32.xlu0 %v4031, 8
        %v5027 = vpop.permute.xlu0 %5026
        %5028 = vrot.lane.b32.xlu0 %v4079, 8
        %v5029 = vpop.permute.xlu0 %5028
        %5030 = vrot.lane.b32.xlu0 %v4127, 8
        %v5031 = vpop.permute.xlu0 %5030
        %5040 = vrot.lane.b32.xlu0 %v4427, 16
        %v5041 = vpop.permute.xlu0 %5040
        %5042 = vrot.lane.b32.xlu0 %v4475, 16
        %v5043 = vpop.permute.xlu0 %5042
        %5044 = vrot.lane.b32.xlu0 %v4523, 16
        %v5045 = vpop.permute.xlu0 %5044
        %5046 = vrot.lane.b32.xlu0 %v4571, 16
        %v5047 = vpop.permute.xlu0 %5046
        %5056 = vrot.lane.b32.xlu0 %v4871, 24
        %v5057 = vpop.permute.xlu0 %5056
        %5058 = vrot.lane.b32.xlu0 %v4919, 24
        %v5059 = vpop.permute.xlu0 %5058
        %5060 = vrot.lane.b32.xlu0 %v4967, 24
        %v5061 = vpop.permute.xlu0 %5060
        %5062 = vrot.lane.b32.xlu0 %v5015, 24
        %v5063 = vpop.permute.xlu0 %5062
        %v5068 = vsel %vm887, %v3539, %v5025
        %v5069 = vsel %vm887, %v3587, %v5027
        %v5070 = vsel %vm887, %v3635, %v5029
        %v5071 = vsel %vm887, %v3683, %v5031
        %v5072 = vsel %vm2712, %v5068, %v5041
        %v5073 = vsel %vm2712, %v5069, %v5043
        %v5074 = vsel %vm2712, %v5070, %v5045
        %v5075 = vsel %vm2712, %v5071, %v5047
        %v5076 = vsel %vm2717, %v5072, %v5057
        %v5077 = vsel %vm2717, %v5073, %v5059
        %v5078 = vsel %vm2717, %v5074, %v5061
        %v5079 = vsel %vm2717, %v5075, %v5063
        %v5080 = vpack.c.bf16 %v5077, %v5076
        %v5081 = vpack.c.bf16 %v5079, %v5078
        %s5082 = scalar_lea.vmem %s4, 16
        %v5083 = vld [vmem:[%s5082] sm:$0xf]
        %v5084 = vld [vmem:[%s5082 + $0x4] sm:$0xf]
        %v5085 = vld [vmem:[%s5082 + $0x8] sm:$0xf]
        %v5086 = vld [vmem:[%s5082 + $0xc] sm:$0xf]
        %s5087 = scalar_lea.vmem %s5, 1
        %v5088 = vld [vmem:[%s5087] sm:$0x1]
        %v5090 = vlaneseq
        %v5091 = vshrl.u32 %v5090, 7
        %v5092 = vsub.s32 0, %v5091
        %v5093 = vrot.slane %v5088, %v5092
        %v5099 = vunpack.c.l.b16 %v5083
        %v5100 = vunpack.c.l.b16 %v5084
        %v5101 = vunpack.c.l.b16 %v5085
        %v5102 = vunpack.c.l.b16 %v5086
        %v5103 = vpack.c.b16 %v5100, %v5099
        %v5104 = vpack.c.b16 %v5102, %v5101
        %v5108 = vsel %vm733, %v5080, 0
        %v5111 = vsel %vm733, %v5081, 0
        %5113 = vmatprep.subr.bf16.mxu0 0
        %5114 = vmatpush1.bf16.msra.mxu0 0
        %5115 = vmatprep.subr.bf16.mxu0 0
        %5116 = vmatpush1.bf16.msra.mxu0 0
        %5117 = vmatprep.subr.bf16.mxu0 0
        %5118 = vmatpush1.bf16.msra.mxu0 0
        %5119 = vmatprep.subr.bf16.mxu0 0
        %5120 = vmatpush1.bf16.msra.mxu0 0
        %5121 = vmatprep.subr.bf16.mxu0 0
        %5122 = vmatpush1.bf16.msra.mxu0 0
        %5123 = vmatprep.subr.bf16.mxu0 0
        %5124 = vmatpush1.bf16.msra.mxu0 0
        %5125 = vmatprep.subr.bf16.mxu0 0
        %5126 = vmatpush1.bf16.msra.mxu0 %v5104
        %5127 = vmatprep.subr.bf16.mxu0 0
        %5128 = vmatpush1.bf16.msra.mxu0 %v5103
        %5129 = vmatprep.subr.bf16.mxu0 0
        %5130 = vmatpush2.bf16.msra.mxu0 0
        %5131 = vmatprep.subr.bf16.mxu0 0
        %5132 = vmatpush2.bf16.msra.mxu0 0
        %5133 = vmatprep.subr.bf16.mxu0 0
        %5134 = vmatpush2.bf16.msra.mxu0 0
        %5135 = vmatprep.subr.bf16.mxu0 0
        %5136 = vmatpush2.bf16.msra.mxu0 0
        %5137 = vmatprep.subr.bf16.mxu0 0
        %5138 = vmatpush2.bf16.msra.mxu0 0
        %5139 = vmatprep.subr.bf16.mxu0 0
        %5140 = vmatpush2.bf16.msra.mxu0 0
        %5141 = vmatprep.subr.bf16.mxu0 0
        %5142 = vmatpush2.bf16.msra.mxu0 0
        %5143 = vmatprep.subr.bf16.mxu0 0
        %5144 = vmatpush2.bf16.msra.mxu0 0
        %5145 = vmatprep.mubr.bf16.mxu0 0
        %5146 = vmatmul.mubr.bf16.gmra.mxu0 %v5108
        %v5147 = vpop.f32.mrf.mxu0
        %v5148 = vadd.f32 %v5093, %v5147
        %v5149 = vpop.f32.mrf.mxu0
        %v5150 = vpop.f32.mrf.mxu0
        %v5151 = vadd.f32 %v5093, %v5150
        %v5152 = vpop.f32.mrf.mxu0
        %5153 = vmatprep.mubr.bf16.mxu0 0
        %5154 = vmatmul.mubr.bf16.gmra.mxu0 %v5111
        %v5155 = vpop.f32.mrf.mxu0
        %v5156 = vadd.f32 %v5093, %v5155
        %v5157 = vpop.f32.mrf.mxu0
        %v5158 = vpop.f32.mrf.mxu0
        %v5159 = vadd.f32 %v5093, %v5158
        %v5160 = vpop.f32.mrf.mxu0
        %5161 = vdwg.mxu0
        %v5162 = vadd.f32 %v3090, %v5148
        %v5163 = vadd.f32 %v3091, %v5151
        %v5164 = vadd.f32 %v3092, %v5156
        %v5165 = vadd.f32 %v3093, %v5159
        %s5166 = scalar_lea.vmem %s12, 1
        %v5167 = vld [vmem:[%s5166] sm:$0x1]
        %s5168 = scalar_lea.vmem %s13, 1
        %v5169 = vld [vmem:[%s5168] sm:$0x1]
        %v5170 = vsel %vm733, %v5162, 0.0
        %5171 = vadd.xlane.f32.xlu0 %v5170
        %v5172 = vpop.xlane.xlu0 %5171
        %v5173 = vsel %vm733, %v5163, 0.0
        %5174 = vadd.xlane.f32.xlu0 %v5173
        %v5175 = vpop.xlane.xlu0 %5174
        %v5176 = vsel %vm733, %v5164, 0.0
        %5177 = vadd.xlane.f32.xlu0 %v5176
        %v5178 = vpop.xlane.xlu0 %5177
        %v5179 = vsel %vm733, %v5165, 0.0
        %5180 = vadd.xlane.f32.xlu0 %v5179
        %v5181 = vpop.xlane.xlu0 %5180
        %v5182 = vmul.f32 %v5172, %v746
        %v5183 = vmul.f32 %v5175, %v746
        %v5184 = vmul.f32 %v5178, %v746
        %v5185 = vmul.f32 %v5181, %v746
        %v5186 = vsub.f32 %v5162, %v5182
        %v5187 = vsub.f32 %v5163, %v5183
        %v5188 = vsub.f32 %v5164, %v5184
        %v5189 = vsub.f32 %v5165, %v5185
        %v5190 = vmul.f32 %v5186, %v5186
        %v5191 = vmul.f32 %v5187, %v5187
        %v5192 = vmul.f32 %v5188, %v5188
        %v5193 = vmul.f32 %v5189, %v5189
        %v5194 = vsel %vm733, %v5190, 0.0
        %5195 = vadd.xlane.f32.xlu0 %v5194
        %v5196 = vpop.xlane.xlu0 %5195
        %v5197 = vsel %vm733, %v5191, 0.0
        %5198 = vadd.xlane.f32.xlu0 %v5197
        %v5199 = vpop.xlane.xlu0 %5198
        %v5200 = vsel %vm733, %v5192, 0.0
        %5201 = vadd.xlane.f32.xlu0 %v5200
        %v5202 = vpop.xlane.xlu0 %5201
        %v5203 = vsel %vm733, %v5193, 0.0
        %5204 = vadd.xlane.f32.xlu0 %v5203
        %v5205 = vpop.xlane.xlu0 %5204
        %v5206 = vmul.f32 %v5196, %v746
        %v5207 = vmul.f32 %v5199, %v746
        %v5208 = vmul.f32 %v5202, %v746
        %v5209 = vmul.f32 %v5205, %v746
        %v5210 = vadd.f32 %v5206, 1e-05
        %v5211 = vadd.f32 %v5207, 1e-05
        %v5212 = vadd.f32 %v5208, 1e-05
        %v5213 = vadd.f32 %v5209, 1e-05
        %v5214 = vrsqrt.pop %v5210
        %v5215 = vrsqrt.pop %v5211
        %v5216 = vrsqrt.pop %v5212
        %v5217 = vrsqrt.pop %v5213
        %v5218 = vmul.f32 %v5186, %v5214
        %v5219 = vmul.f32 %v5187, %v5215
        %v5220 = vmul.f32 %v5188, %v5216
        %v5221 = vmul.f32 %v5189, %v5217
        %v5223 = vlaneseq
        %v5224 = vshrl.u32 %v5223, 7
        %v5225 = vsub.s32 0, %v5224
        %v5226 = vrot.slane %v5167, %v5225
        %v5228 = vmul.f32 %v5218, %v5226
        %v5229 = vmul.f32 %v5219, %v5226
        %v5230 = vmul.f32 %v5220, %v5226
        %v5231 = vmul.f32 %v5221, %v5226
        %v5233 = vlaneseq
        %v5234 = vshrl.u32 %v5233, 7
        %v5235 = vsub.s32 0, %v5234
        %v5236 = vrot.slane %v5169, %v5235
        %v5238 = vadd.f32 %v5228, %v5236
        %v5239 = vadd.f32 %v5229, %v5236
        %v5240 = vadd.f32 %v5230, %v5236
        %v5241 = vadd.f32 %v5231, %v5236
        %v5242 = vpack.c.bf16 %v5239, %v5238
        %v5243 = vpack.c.bf16 %v5241, %v5240
        %s5244 = scalar_lea.vmem %s6, 16
        %v5245 = vld [vmem:[%s5244] sm:$0xf]
        %v5246 = vld [vmem:[%s5244 + $0x4] sm:$0xf]
        %v5247 = vld [vmem:[%s5244 + $0x8] sm:$0xf]
        %v5248 = vld [vmem:[%s5244 + $0xc] sm:$0xf]
        %s5249 = scalar_lea.vmem %s7, 1
        %v5250 = vld [vmem:[%s5249] sm:$0x1]
        %v5252 = vlaneseq
        %v5253 = vshrl.u32 %v5252, 7
        %v5254 = vsub.s32 0, %v5253
        %v5255 = vrot.slane %v5250, %v5254
        %v5261 = vunpack.c.l.b16 %v5245
        %v5262 = vunpack.c.l.b16 %v5246
        %v5263 = vunpack.c.l.b16 %v5247
        %v5264 = vunpack.c.l.b16 %v5248
        %v5265 = vpack.c.b16 %v5262, %v5261
        %v5266 = vpack.c.b16 %v5264, %v5263
        %v5270 = vsel %vm733, %v5242, 0
        %v5273 = vsel %vm733, %v5243, 0
        %5275 = vmatprep.subr.bf16.mxu0 0
        %5276 = vmatpush1.bf16.msra.mxu0 0
        %5277 = vmatprep.subr.bf16.mxu0 0
        %5278 = vmatpush1.bf16.msra.mxu0 0
        %5279 = vmatprep.subr.bf16.mxu0 0
        %5280 = vmatpush1.bf16.msra.mxu0 0
        %5281 = vmatprep.subr.bf16.mxu0 0
        %5282 = vmatpush1.bf16.msra.mxu0 0
        %5283 = vmatprep.subr.bf16.mxu0 0
        %5284 = vmatpush1.bf16.msra.mxu0 0
        %5285 = vmatprep.subr.bf16.mxu0 0
        %5286 = vmatpush1.bf16.msra.mxu0 0
        %5287 = vmatprep.subr.bf16.mxu0 0
        %5288 = vmatpush1.bf16.msra.mxu0 %v5266
        %5289 = vmatprep.subr.bf16.mxu0 0
        %5290 = vmatpush1.bf16.msra.mxu0 %v5265
        %5291 = vmatprep.subr.bf16.mxu0 0
        %5292 = vmatpush2.bf16.msra.mxu0 0
        %5293 = vmatprep.subr.bf16.mxu0 0
        %5294 = vmatpush2.bf16.msra.mxu0 0
        %5295 = vmatprep.subr.bf16.mxu0 0
        %5296 = vmatpush2.bf16.msra.mxu0 0
        %5297 = vmatprep.subr.bf16.mxu0 0
        %5298 = vmatpush2.bf16.msra.mxu0 0
        %5299 = vmatprep.subr.bf16.mxu0 0
        %5300 = vmatpush2.bf16.msra.mxu0 0
        %5301 = vmatprep.subr.bf16.mxu0 0
        %5302 = vmatpush2.bf16.msra.mxu0 0
        %5303 = vmatprep.subr.bf16.mxu0 0
        %5304 = vmatpush2.bf16.msra.mxu0 0
        %5305 = vmatprep.subr.bf16.mxu0 0
        %5306 = vmatpush2.bf16.msra.mxu0 0
        %5307 = vmatprep.mubr.bf16.mxu0 0
        %5308 = vmatmul.mubr.bf16.gmra.mxu0 %v5270
        %v5309 = vpop.f32.mrf.mxu0
        %v5310 = vadd.f32 %v5255, %v5309
        %v5311 = vpop.f32.mrf.mxu0
        %v5312 = vpop.f32.mrf.mxu0
        %v5313 = vadd.f32 %v5255, %v5312
        %v5314 = vpop.f32.mrf.mxu0
        %5315 = vmatprep.mubr.bf16.mxu0 0
        %5316 = vmatmul.mubr.bf16.gmra.mxu0 %v5273
        %v5317 = vpop.f32.mrf.mxu0
        %v5318 = vadd.f32 %v5255, %v5317
        %v5319 = vpop.f32.mrf.mxu0
        %v5320 = vpop.f32.mrf.mxu0
        %v5321 = vadd.f32 %v5255, %v5320
        %v5322 = vpop.f32.mrf.mxu0
        %5323 = vdwg.mxu0
        %v5324 = vmax.f32 %v5310, 0.0
        %v5325 = vmax.f32 %v5313, 0.0
        %v5326 = vmax.f32 %v5318, 0.0
        %v5327 = vmax.f32 %v5321, 0.0
        %v5328 = vpack.c.bf16 %v5325, %v5324
        %v5329 = vpack.c.bf16 %v5327, %v5326
        %s5330 = scalar_lea.vmem %s8, 64
        %v5331 = vld [vmem:[%s5330] sm:$0xf]
        %v5332 = vld [vmem:[%s5330 + $0x4] sm:$0xf]
        %v5333 = vld [vmem:[%s5330 + $0x8] sm:$0xf]
        %v5334 = vld [vmem:[%s5330 + $0xc] sm:$0xf]
        %v5335 = vld [vmem:[%s5330 + $0x10] sm:$0xf]
        %v5336 = vld [vmem:[%s5330 + $0x14] sm:$0xf]
        %v5337 = vld [vmem:[%s5330 + $0x18] sm:$0xf]
        %v5338 = vld [vmem:[%s5330 + $0x1c] sm:$0xf]
        %v5339 = vld [vmem:[%s5330 + $0x20] sm:$0xf]
        %v5340 = vld [vmem:[%s5330 + $0x24] sm:$0xf]
        %v5341 = vld [vmem:[%s5330 + $0x28] sm:$0xf]
        %v5342 = vld [vmem:[%s5330 + $0x2c] sm:$0xf]
        %v5343 = vld [vmem:[%s5330 + $0x30] sm:$0xf]
        %v5344 = vld [vmem:[%s5330 + $0x34] sm:$0xf]
        %v5345 = vld [vmem:[%s5330 + $0x38] sm:$0xf]
        %v5346 = vld [vmem:[%s5330 + $0x3c] sm:$0xf]
        %v5363 = vunpack.c.l.b16 %v5331
        %v5364 = vunpack.c.l.b16 %v5332
        %v5365 = vunpack.c.l.b16 %v5333
        %v5366 = vunpack.c.l.b16 %v5334
        %v5367 = vunpack.c.l.b16 %v5335
        %v5368 = vunpack.c.l.b16 %v5336
        %v5369 = vunpack.c.l.b16 %v5337
        %v5370 = vunpack.c.l.b16 %v5338
        %v5371 = vunpack.c.l.b16 %v5339
        %v5372 = vunpack.c.l.b16 %v5340
        %v5373 = vunpack.c.l.b16 %v5341
        %v5374 = vunpack.c.l.b16 %v5342
        %v5375 = vunpack.c.l.b16 %v5343
        %v5376 = vunpack.c.l.b16 %v5344
        %v5377 = vunpack.c.l.b16 %v5345
        %v5378 = vunpack.c.l.b16 %v5346
        %v5379 = vpack.c.b16 %v5364, %v5363
        %v5380 = vpack.c.b16 %v5366, %v5365
        %v5381 = vpack.c.b16 %v5368, %v5367
        %v5382 = vpack.c.b16 %v5370, %v5369
        %v5383 = vpack.c.b16 %v5372, %v5371
        %v5384 = vpack.c.b16 %v5374, %v5373
        %v5385 = vpack.c.b16 %v5376, %v5375
        %v5386 = vpack.c.b16 %v5378, %v5377
        %5395 = vmatprep.subr.bf16.mxu0 0
        %5396 = vmatpush1.bf16.msra.mxu0 %v5386
        %5397 = vmatprep.subr.bf16.mxu0 0
        %5398 = vmatpush1.bf16.msra.mxu0 %v5385
        %5399 = vmatprep.subr.bf16.mxu0 0
        %5400 = vmatpush1.bf16.msra.mxu0 %v5384
        %5401 = vmatprep.subr.bf16.mxu0 0
        %5402 = vmatpush1.bf16.msra.mxu0 %v5383
        %5403 = vmatprep.subr.bf16.mxu0 0
        %5404 = vmatpush1.bf16.msra.mxu0 %v5382
        %5405 = vmatprep.subr.bf16.mxu0 0
        %5406 = vmatpush1.bf16.msra.mxu0 %v5381
        %5407 = vmatprep.subr.bf16.mxu0 0
        %5408 = vmatpush1.bf16.msra.mxu0 %v5380
        %5409 = vmatprep.subr.bf16.mxu0 0
        %5410 = vmatpush1.bf16.msra.mxu0 %v5379
        %5411 = vmatprep.subr.bf16.mxu0 0
        %5412 = vmatpush2.bf16.msra.mxu0 0
        %5413 = vmatprep.subr.bf16.mxu0 0
        %5414 = vmatpush2.bf16.msra.mxu0 0
        %5415 = vmatprep.subr.bf16.mxu0 0
        %5416 = vmatpush2.bf16.msra.mxu0 0
        %5417 = vmatprep.subr.bf16.mxu0 0
        %5418 = vmatpush2.bf16.msra.mxu0 0
        %5419 = vmatprep.subr.bf16.mxu0 0
        %5420 = vmatpush2.bf16.msra.mxu0 0
        %5421 = vmatprep.subr.bf16.mxu0 0
        %5422 = vmatpush2.bf16.msra.mxu0 0
        %5423 = vmatprep.subr.bf16.mxu0 0
        %5424 = vmatpush2.bf16.msra.mxu0 0
        %5425 = vmatprep.subr.bf16.mxu0 0
        %5426 = vmatpush2.bf16.msra.mxu0 0
        %5427 = vmatprep.mubr.bf16.mxu0 0
        %5428 = vmatmul.mubr.bf16.gmra.mxu0 %v5328
        %v5429 = vpop.f32.mrf.mxu0
        %v5430 = vadd.f32 0.0, %v5429
        %v5431 = vpop.f32.mrf.mxu0
        %v5432 = vpop.f32.mrf.mxu0
        %v5433 = vadd.f32 0.0, %v5432
        %v5434 = vpop.f32.mrf.mxu0
        %5435 = vmatprep.mubr.bf16.mxu0 0
        %5436 = vmatmul.mubr.bf16.gmra.mxu0 %v5329
        %v5437 = vpop.f32.mrf.mxu0
        %v5438 = vadd.f32 0.0, %v5437
        %v5439 = vpop.f32.mrf.mxu0
        %v5440 = vpop.f32.mrf.mxu0
        %v5441 = vadd.f32 0.0, %v5440
        %v5442 = vpop.f32.mrf.mxu0
        %5443 = vdwg.mxu0
        %v5444 = vadd.f32 %v5162, %v5430
        %v5445 = vadd.f32 %v5163, %v5433
        %v5446 = vadd.f32 %v5164, %v5438
        %v5447 = vadd.f32 %v5165, %v5441
        %s5448 = scalar_lea.vmem %s9, 1
        %v5449 = vld [vmem:[%s5448] sm:$0x1]
        %v5451 = vlaneseq
        %v5452 = vshrl.u32 %v5451, 7
        %v5453 = vsub.s32 0, %v5452
        %v5454 = vrot.slane %v5449, %v5453
        %v5456 = vadd.f32 %v5444, %v5454
        %v5457 = vadd.f32 %v5445, %v5454
        %v5458 = vadd.f32 %v5446, %v5454
        %v5459 = vadd.f32 %v5447, %v5454
        %v5460 = vld [vmem:[%s14] sm:$0x1]
        %v5461 = vld [vmem:[%s15] sm:$0x1]
        %v5462 = vsel %vm733, %v5456, 0.0
        %5463 = vadd.xlane.f32.xlu0 %v5462
        %v5464 = vpop.xlane.xlu0 %5463
        %v5465 = vsel %vm733, %v5457, 0.0
        %5466 = vadd.xlane.f32.xlu0 %v5465
        %v5467 = vpop.xlane.xlu0 %5466
        %v5468 = vsel %vm733, %v5458, 0.0
        %5469 = vadd.xlane.f32.xlu0 %v5468
        %v5470 = vpop.xlane.xlu0 %5469
        %v5471 = vsel %vm733, %v5459, 0.0
        %5472 = vadd.xlane.f32.xlu0 %v5471
        %v5473 = vpop.xlane.xlu0 %5472
        %v5474 = vmul.f32 %v5464, %v746
        %v5475 = vmul.f32 %v5467, %v746
        %v5476 = vmul.f32 %v5470, %v746
        %v5477 = vmul.f32 %v5473, %v746
        %v5478 = vsub.f32 %v5456, %v5474
        %v5479 = vsub.f32 %v5457, %v5475
        %v5480 = vsub.f32 %v5458, %v5476
        %v5481 = vsub.f32 %v5459, %v5477
        %v5482 = vmul.f32 %v5478, %v5478
        %v5483 = vmul.f32 %v5479, %v5479
        %v5484 = vmul.f32 %v5480, %v5480
        %v5485 = vmul.f32 %v5481, %v5481
        %v5486 = vsel %vm733, %v5482, 0.0
        %5487 = vadd.xlane.f32.xlu0 %v5486
        %v5488 = vpop.xlane.xlu0 %5487
        %v5489 = vsel %vm733, %v5483, 0.0
        %5490 = vadd.xlane.f32.xlu0 %v5489
        %v5491 = vpop.xlane.xlu0 %5490
        %v5492 = vsel %vm733, %v5484, 0.0
        %5493 = vadd.xlane.f32.xlu0 %v5492
        %v5494 = vpop.xlane.xlu0 %5493
        %v5495 = vsel %vm733, %v5485, 0.0
        %5496 = vadd.xlane.f32.xlu0 %v5495
        %v5497 = vpop.xlane.xlu0 %5496
        %v5498 = vmul.f32 %v5488, %v746
        %v5499 = vmul.f32 %v5491, %v746
        %v5500 = vmul.f32 %v5494, %v746
        %v5501 = vmul.f32 %v5497, %v746
        %v5502 = vadd.f32 %v5498, 1e-05
        %v5503 = vadd.f32 %v5499, 1e-05
        %v5504 = vadd.f32 %v5500, 1e-05
        %v5505 = vadd.f32 %v5501, 1e-05
        %v5506 = vrsqrt.pop %v5502
        %v5507 = vrsqrt.pop %v5503
        %v5508 = vrsqrt.pop %v5504
        %v5509 = vrsqrt.pop %v5505
        %v5510 = vmul.f32 %v5478, %v5506
        %v5511 = vmul.f32 %v5479, %v5507
        %v5512 = vmul.f32 %v5480, %v5508
        %v5513 = vmul.f32 %v5481, %v5509
        %v5515 = vlaneseq
        %v5516 = vshrl.u32 %v5515, 7
        %v5517 = vsub.s32 0, %v5516
        %v5518 = vrot.slane %v5460, %v5517
        %v5520 = vmul.f32 %v5510, %v5518
        %v5521 = vmul.f32 %v5511, %v5518
        %v5522 = vmul.f32 %v5512, %v5518
        %v5523 = vmul.f32 %v5513, %v5518
        %v5525 = vlaneseq
        %v5526 = vshrl.u32 %v5525, 7
        %v5527 = vsub.s32 0, %v5526
        %v5528 = vrot.slane %v5461, %v5527
        %v5530 = vadd.f32 %v5520, %v5528
        %v5531 = vadd.f32 %v5521, %v5528
        %v5532 = vadd.f32 %v5522, %v5528
        %v5533 = vadd.f32 %v5523, %v5528
        %v5534 = vpack.c.bf16 %v5531, %v5530
        %v5535 = vpack.c.bf16 %v5533, %v5532
        %v5536 = vld [vmem:[%s16] sm:$0xf]
        %v5537 = vld [vmem:[%s16 + $0x4] sm:$0xf]
        %v5538 = vld [vmem:[%s16 + $0x8] sm:$0xf]
        %v5539 = vld [vmem:[%s16 + $0xc] sm:$0xf]
        %v5540 = vld [vmem:[%s17] sm:$0x1]
        %v5542 = vlaneseq
        %v5543 = vshrl.u32 %v5542, 7
        %v5544 = vsub.s32 0, %v5543
        %v5545 = vrot.slane %v5540, %v5544
        %v5551 = vunpack.c.l.b16 %v5536
        %v5552 = vunpack.c.l.b16 %v5537
        %v5553 = vunpack.c.l.b16 %v5538
        %v5554 = vunpack.c.l.b16 %v5539
        %v5555 = vpack.c.b16 %v5552, %v5551
        %v5556 = vpack.c.b16 %v5554, %v5553
        %v5560 = vsel %vm733, %v5534, 0
        %v5563 = vsel %vm733, %v5535, 0
        %5565 = vmatprep.subr.bf16.mxu0 0
        %5566 = vmatpush1.bf16.msra.mxu0 0
        %5567 = vmatprep.subr.bf16.mxu0 0
        %5568 = vmatpush1.bf16.msra.mxu0 0
        %5569 = vmatprep.subr.bf16.mxu0 0
        %5570 = vmatpush1.bf16.msra.mxu0 0
        %5571 = vmatprep.subr.bf16.mxu0 0
        %5572 = vmatpush1.bf16.msra.mxu0 0
        %5573 = vmatprep.subr.bf16.mxu0 0
        %5574 = vmatpush1.bf16.msra.mxu0 0
        %5575 = vmatprep.subr.bf16.mxu0 0
        %5576 = vmatpush1.bf16.msra.mxu0 0
        %5577 = vmatprep.subr.bf16.mxu0 0
        %5578 = vmatpush1.bf16.msra.mxu0 %v5556
        %5579 = vmatprep.subr.bf16.mxu0 0
        %5580 = vmatpush1.bf16.msra.mxu0 %v5555
        %5581 = vmatprep.subr.bf16.mxu0 0
        %5582 = vmatpush2.bf16.msra.mxu0 0
        %5583 = vmatprep.subr.bf16.mxu0 0
        %5584 = vmatpush2.bf16.msra.mxu0 0
        %5585 = vmatprep.subr.bf16.mxu0 0
        %5586 = vmatpush2.bf16.msra.mxu0 0
        %5587 = vmatprep.subr.bf16.mxu0 0
        %5588 = vmatpush2.bf16.msra.mxu0 0
        %5589 = vmatprep.subr.bf16.mxu0 0
        %5590 = vmatpush2.bf16.msra.mxu0 0
        %5591 = vmatprep.subr.bf16.mxu0 0
        %5592 = vmatpush2.bf16.msra.mxu0 0
        %5593 = vmatprep.subr.bf16.mxu0 0
        %5594 = vmatpush2.bf16.msra.mxu0 0
        %5595 = vmatprep.subr.bf16.mxu0 0
        %5596 = vmatpush2.bf16.msra.mxu0 0
        %5597 = vmatprep.mubr.bf16.mxu0 0
        %5598 = vmatmul.mubr.bf16.gmra.mxu0 %v5560
        %v5599 = vpop.f32.mrf.mxu0
        %v5600 = vadd.f32 %v5545, %v5599
        %v5601 = vpop.f32.mrf.mxu0
        %v5602 = vpop.f32.mrf.mxu0
        %v5603 = vadd.f32 %v5545, %v5602
        %v5604 = vpop.f32.mrf.mxu0
        %5605 = vmatprep.mubr.bf16.mxu0 0
        %5606 = vmatmul.mubr.bf16.gmra.mxu0 %v5563
        %v5607 = vpop.f32.mrf.mxu0
        %v5608 = vadd.f32 %v5545, %v5607
        %v5609 = vpop.f32.mrf.mxu0
        %v5610 = vpop.f32.mrf.mxu0
        %v5611 = vadd.f32 %v5545, %v5610
        %v5612 = vpop.f32.mrf.mxu0
        %5613 = vdwg.mxu0
        %5614 = vst [vmem:[%s566] sm:$0xff] %v5600
        %5615 = vst [vmem:[%s566 + $0x8] sm:$0xff] %v5603
        %5616 = vst [vmem:[%s566 + $0x10] sm:$0xff] %v5608
        %5617 = vst [vmem:[%s566 + $0x18] sm:$0xff] %v5611
        %s5618 = sand.u32 %s423, 1
        %s5619 = scalar_lea.sflag [#allocation3], %s5618
        %s5620 = sand.u32 %s423, 1
        %s5621 = smul.addr %s5620, 32
        %s5622 = scalar_lea.vmem [#allocation2], %s5621
        // Predicated region
        $region93: #{tpu_custom_call.1} parent=91 // pred_check
          %p5623 = pneg %p433
        $region94: #{tpu_custom_call.1} parent=91 // pred_check_branch
          %5625 = sbr.rel (%p5623) target = $region96
        $region95: #{tpu_custom_call.1} parent=91 // pred_region
          %s5626 = smul.u32 4, %s32
          %s5628 = ssub.s32 512, 512
          %5629 = vsyncadd %s5619, %s5628
          %s5630 = smul.addr %s5626, 128
          %s5631 = scalar_lea.hbm %s18, %s5630
          %s5632 = sshll.u32 %s5622, 4
          %s5633 = int_to_ptr.vmem [resolvable:$true] %s5632
          %5638 = dma.vmem_to_hbm [thread:$0]  %s5633, 512, %s5631, %s5619, 128, 128, 8
        $region96: #{tpu_custom_call.1} parent=91 // pred_fallthru
          _
      $region92: #{tpu_custom_call.1} parent=5 // pred_fallthru
        _
      %p5639 = scmp.le.s32.totalorder 2, %s27
      // Predicated region
      $region97: #{tpu_custom_call.1} parent=5 // pred_check
        %p5640 = pneg %p5639
      $region98: #{tpu_custom_call.1} parent=5 // pred_check_branch
        %5642 = sbr.rel (%p5640) target = $region100
      $region99: #{tpu_custom_call.1} parent=5 // pred_region
        %s5643 = ssub.s32 %s27, 2
        // Predicated region
        $region101: #{tpu_custom_call.1} parent=99 // pred_check
          %p5644 = pneg %p439
        $region102: #{tpu_custom_call.1} parent=99 // pred_check_branch
          %5646 = sbr.rel (%p5644) target = $region104
        $region103: #{tpu_custom_call.1} parent=99 // pred_region
          %s5647 = sand.u32 %s424, 1
          %s5648 = scalar_lea.sflag [#allocation3], %s5647
          %s5649 = sand.u32 %s424, 1
          %s5650 = smul.addr %s5649, 32
          %s5651 = scalar_lea.vmem [#allocation2], %s5650
          %5652 = dma.done %s5648, 512
        $region104: #{tpu_custom_call.1} parent=99 // pred_fallthru
          _
      $region100: #{tpu_custom_call.1} parent=5 // pred_fallthru
        _
    $region6: #{tpu_custom_call.1} parent=1 // loop_footer
      %s31 = sadd.s32 1, %s27
    $region7: #{tpu_custom_call.1} parent=1 // loop_footer_branch
      %26 = sbr.rel target = $region3
    $region8: #{tpu_custom_call.1} parent=1 // loop_exit
      _
    %5653 = vsyncpa [#allocation3], 1
    %s5654 = scalar_lea.sflag [#allocation3], 1
    %5655 = vsyncpa %s5654, 1

</llo_original>
